<compile_context>
chip_gen: v7x
topology: tpu7x:2x2x1
jax: 0.10.0
libtpu: 0.0.40
codegen_flags: <defaults>
</compile_context>

<pallas_src>
import jax
import jax.numpy as jnp
from jax.experimental import pallas as pl
from jax.experimental.pallas import tpu as pltpu

# ----------------------- small Llama-style config -----------------------
VOCAB = 128
HIDDEN = 64
INTER = 128
N_HEADS = 4
HEAD_DIM = HIDDEN // N_HEADS           # 16
N_LAYERS = 3
EPS = 1e-6
ROPE_THETA = 10000.0


# ----------------------------- kernel helpers ----------------------------
def _rmsnorm(x, w):
    # x: (R, H) float32, w: (1, H)
    var = jnp.mean(x * x, axis=-1, keepdims=True)
    return x * jax.lax.rsqrt(var + EPS) * w


# --------------------------- fused model kernel ---------------------------
def make_fused_kernel(b_block, seq_len):
    rows = b_block * seq_len

    def kernel(x_ref, cos_ref, sin_ref, bias_ref, norms_ref,
               w_att_ref, w_o_ref, w_gu_ref, w_down_ref, out_ref):
        x = x_ref[...].reshape(rows, HIDDEN)        # (R, H) — whole batch block stacked
        cos = cos_ref[...]                          # (R, 2H)  [cos for q | cos for k]
        sin = sin_ref[...]                          # (R, 2H)
        norms = norms_ref[...]                      # (8, H)   7 norm vectors + pad row

        for layer in range(N_LAYERS):               # fully unrolled, all VMEM-resident
            # ---------------- self attention ----------------
            h = _rmsnorm(x, norms[2 * layer:2 * layer + 1])
            # one MXU matmul: columns = [q*scale | k | rot_q*scale | rot_k | v]
            proj = jnp.dot(h, w_att_ref[layer],
                           preferred_element_type=jnp.float32)          # (R, 5H)
            # RoPE on the lane-aligned 128-wide [q|k] prefix: pure full-width VPU FMA.
            qk = proj[:, :2 * HIDDEN] * cos + proj[:, 2 * HIDDEN:4 * HIDDEN] * sin
            vv = proj[:, 4 * HIDDEN:]                                    # (R, H)
            wo = w_o_ref[layer]                                          # (H, H)

            attn_rows = []
            for b in range(b_block):                 # static loops (tiny S=8, D=16)
                r0 = b * seq_len
                bias_b = bias_ref[b]                 # (1, S) additive padding-mask bias
                acc = None
                for hh in range(N_HEADS):
                    lo = hh * HEAD_DIM
                    q_h = qk[r0:r0 + seq_len, lo:lo + HEAD_DIM]
                    k_h = qk[r0:r0 + seq_len, HIDDEN + lo:HIDDEN + lo + HEAD_DIM]
                    v_h = vv[r0:r0 + seq_len, lo:lo + HEAD_DIM]
                    # q @ k^T without an explicit transpose (contract last axes).
                    s = jax.lax.dot_general(
                        q_h, k_h, (((1,), (1,)), ((), ())),
                        preferred_element_type=jnp.float32) + bias_b
                    # Scores are pre-scaled and tiny; masked logits (-1e4) flush
                    # exp to exactly 0, so the row-max subtract is dropped.
                    p = jnp.exp(s)
                    p = p / jnp.sum(p, axis=-1, keepdims=True)           # exact softmax
                    ctx = jnp.dot(p, v_h, preferred_element_type=jnp.float32)
                    # accumulate ctx_h @ Wo[rows of head h] (no lane-concat relayout)
                    c = jnp.dot(ctx, wo[lo:lo + HEAD_DIM, :],
                                preferred_element_type=jnp.float32)
                    acc = c if acc is None else acc + c
                attn_rows.append(acc)
            attn = attn_rows[0] if b_block == 1 else jnp.concatenate(attn_rows, axis=0)
            x = x + attn

            # ---------------- SwiGLU MLP (gate/up fused) ----------------
            h2 = _rmsnorm(x, norms[2 * layer + 1:2 * layer + 2])
            gu = jnp.dot(h2, w_gu_ref[layer],
                         preferred_element_type=jnp.float32)             # (R, 2*INTER)
            g = gu[:, :INTER]
            u = gu[:, INTER:]
            mlp = jnp.dot(g * jax.nn.sigmoid(g) * u, w_down_ref[layer],
                          preferred_element_type=jnp.float32)            # (R, H)
            x = x + mlp

        # ---------------- final RMSNorm ----------------
        out = _rmsnorm(x, norms[2 * N_LAYERS:2 * N_LAYERS + 1])
        out_ref[...] = out.reshape(b_block, seq_len, HIDDEN).astype(out_ref.dtype)

    return kernel


# ------------------------------ weight prep ------------------------------
def _rotate_half_cols(w):
    """Apply rotate_half to the output columns of a (H, H) projection weight,
    per head group, so that  x @ _rotate_half_cols(W) == rotate_half(x @ W)."""
    half = HEAD_DIM // 2
    w3 = w.reshape(HIDDEN, N_HEADS, HEAD_DIM)
    w3r = jnp.concatenate([-w3[..., half:], w3[..., :half]], axis=-1)
    return w3r.reshape(HIDDEN, HIDDEN)


def rope_tables(seq_len):
    """RoPE cos/sin tables for position_ids = arange(S), tiled per head and
    duplicated across the [q | k] halves of the 128-wide RoPE prefix."""
    inv_freq = 1.0 / (ROPE_THETA ** (jnp.arange(0, HEAD_DIM, 2, dtype=jnp.float32)
                                     / HEAD_DIM))
    pos = jnp.arange(seq_len, dtype=jnp.float32)
    freqs = pos[:, None] * inv_freq[None, :]                  # (S, HEAD_DIM/2)
    emb = jnp.concatenate([freqs, freqs], axis=-1)            # (S, HEAD_DIM)
    cos_h = jnp.tile(jnp.cos(emb), (1, N_HEADS))              # (S, H)
    sin_h = jnp.tile(jnp.sin(emb), (1, N_HEADS))              # (S, H)
    cos2 = jnp.concatenate([cos_h, cos_h], axis=-1)           # (S, 2H) = (S, 128)
    sin2 = jnp.concatenate([sin_h, sin_h], axis=-1)
    return cos2, sin2


def prepare_fused_params(params, seq_len):
    """Pack per-layer weights into a few VMEM slabs, fold RoPE rotation + the
    1/sqrt(head_dim) attention scale into the projection weights, and build the
    RoPE tables once (they only depend on seq_len)."""
    embed, layers, final_w = params
    scale = 1.0 / (HEAD_DIM ** 0.5)
    att_slabs, o_slabs, gu_slabs, down_slabs, norm_rows = [], [], [], [], []
    for (ln1, wq, wk, wv, wo, ln2, wg, wu, wd) in layers:
        att_slabs.append(jnp.concatenate(
            [wq * scale, wk,
             _rotate_half_cols(wq) * scale, _rotate_half_cols(wk),
             wv], axis=1))                                    # (H, 5H) = (64, 320)
        o_slabs.append(wo)                                    # (H, H)
        gu_slabs.append(jnp.concatenate([wg, wu], axis=1))    # (H, 2*INTER)
        down_slabs.append(wd)                                 # (INTER, H)
        norm_rows.extend([ln1, ln2])
    norm_rows.append(final_w)
    norm_rows.append(jnp.ones((1, HIDDEN), jnp.float32))      # pad to 8 sublanes
    w_att = jnp.stack(att_slabs)                              # (3, 64, 320)
    w_o = jnp.stack(o_slabs)                                  # (3, 64, 64)
    w_gu = jnp.stack(gu_slabs)                                # (3, 64, 256)
    w_down = jnp.stack(down_slabs)                            # (3, 128, 64)
    norms = jnp.concatenate(norm_rows, axis=0)                # (8, 64)
    cos2, sin2 = rope_tables(seq_len)                         # (S, 128) each
    return embed, w_att, w_o, w_gu, w_down, norms, cos2, sin2


def init_params(key):
    def dense(k, shape):
        return 0.02 * jax.random.normal(k, shape, dtype=jnp.float32)
    keys = jax.random.split(key, 1 + 7 * N_LAYERS)
    embed = dense(keys[0], (VOCAB, HIDDEN))
    layers = []
    ki = 1
    for _ in range(N_LAYERS):
        layer = (
            jnp.ones((1, HIDDEN), jnp.float32),                # input_layernorm
            dense(keys[ki + 0], (HIDDEN, HIDDEN)),             # q  (in, out)
            dense(keys[ki + 1], (HIDDEN, HIDDEN)),             # k
            dense(keys[ki + 2], (HIDDEN, HIDDEN)),             # v
            dense(keys[ki + 3], (HIDDEN, HIDDEN)),             # o
            jnp.ones((1, HIDDEN), jnp.float32),                # post_attn_layernorm
            dense(keys[ki + 4], (HIDDEN, INTER)),              # gate
            dense(keys[ki + 5], (HIDDEN, INTER)),              # up
            dense(keys[ki + 6], (INTER, HIDDEN)),              # down
        )
        layers.append(layer)
        ki += 7
    final_norm_w = jnp.ones((1, HIDDEN), jnp.float32)
    return embed, layers, final_norm_w


# ------------------------------ JAX wrapper ------------------------------
def llama_sub_model(input_ids, attention_mask, fused_params, batch_parallel=None):
    embed, w_att, w_o, w_gu, w_down, norms, cos2, sin2 = fused_params
    B, S = input_ids.shape

    if batch_parallel is None:
        try:
            kind = jax.devices()[0].device_kind.lower()
        except Exception:
            kind = ""
        # v7x has 2 TensorCores/chip: shard the batch axis across them.
        # Single-TC v5e/v6e: collapse to ONE grid step (lowest fixed overhead).
        batch_parallel = (B > 1) and ("7" in kind)

    b_block = 1 if batch_parallel else B
    grid = (B // b_block,)

    # glue (jit-fused around the single pallas_call): embedding gather + mask bias
    # TODO(synk): embedding row-gather stays in plain JAX (jnp.take), not in-kernel.
    hidden = jnp.take(embed, input_ids, axis=0).astype(jnp.float32)       # (B, S, H)
    if attention_mask is None:
        attention_mask = jnp.ones((B, S), jnp.float32)
    bias = ((1.0 - attention_mask.astype(jnp.float32)) * -10000.0).reshape(B, 1, S)

    # RoPE tables are per-position only; tile over the rows of the collapsed block.
    cos_t = cos2 if b_block == 1 else jnp.concatenate([cos2] * b_block, axis=0)
    sin_t = sin2 if b_block == 1 else jnp.concatenate([sin2] * b_block, axis=0)

    def const_spec(arr):
        shape = tuple(arr.shape)
        return pl.BlockSpec(shape, lambda b, _n=len(shape): (0,) * _n)

    in_specs = [
        pl.BlockSpec((b_block, S, HIDDEN), lambda b: (b, 0, 0)),   # hidden states
        const_spec(cos_t),                                         # RoPE cos (R, 128)
        const_spec(sin_t),                                         # RoPE sin (R, 128)
        pl.BlockSpec((b_block, 1, S), lambda b: (b, 0, 0)),        # mask bias
        const_spec(norms),                                         # (8, 64)
        const_spec(w_att),                                         # (3, 64, 320)
        const_spec(w_o),                                           # (3, 64, 64)
        const_spec(w_gu),                                          # (3, 64, 256)
        const_spec(w_down),                                        # (3, 128, 64)
    ]

    return pl.pallas_call(
        make_fused_kernel(b_block, S),
        out_shape=jax.ShapeDtypeStruct((B, S, HIDDEN), jnp.float32),
        grid=grid,
        in_specs=in_specs,
        out_specs=pl.BlockSpec((b_block, S, HIDDEN), lambda b: (b, 0, 0)),
        compiler_params=pltpu.CompilerParams(dimension_semantics=("parallel",)),
    )(hidden, cos_t, sin_t, bias, norms, w_att, w_o, w_gu, w_down)


if __name__ == "__main__":
    key = jax.random.PRNGKey(0)
    k_param, k_ids = jax.random.split(key)
    params = init_params(k_param)

    B, S = 2, 8
    fused_params = prepare_fused_params(params, S)

    input_ids = jax.random.randint(k_ids, (B, S), 0, VOCAB, dtype=jnp.int32)
    attention_mask = jnp.array(
        [[1, 1, 1, 1, 1, 1, 1, 1],
         [1, 1, 1, 1, 1, 1, 0, 0]], dtype=jnp.float32)

    fwd = jax.jit(lambda ids, mask: llama_sub_model(ids, mask, fused_params))
    out = jax.block_until_ready(fwd(input_ids, attention_mask))
    assert out.shape == (B, S, HIDDEN)
    assert bool(jnp.all(jnp.isfinite(out)))
    print("KERNEL_OK")
</pallas_src>

<mosaic_0001>
module attributes {stable_mosaic.version = 11 : i64} {
  func.func @kernel(%arg0: i32, %arg1: memref<2x8x64xf32, #tpu.memory_space<vmem>>, %arg2: memref<16x128xf32, #tpu.memory_space<vmem>>, %arg3: memref<16x128xf32, #tpu.memory_space<vmem>>, %arg4: memref<2x1x8xf32, #tpu.memory_space<vmem>>, %arg5: memref<8x64xf32, #tpu.memory_space<vmem>>, %arg6: memref<3x64x320xf32, #tpu.memory_space<vmem>>, %arg7: memref<3x64x64xf32, #tpu.memory_space<vmem>>, %arg8: memref<3x64x256xf32, #tpu.memory_space<vmem>>, %arg9: memref<3x128x64xf32, #tpu.memory_space<vmem>>, %arg10: memref<2x8x64xf32, #tpu.memory_space<vmem>>) attributes {dimension_semantics = [#tpu.dimension_semantics<parallel>], iteration_bounds = array<i64: 1>, scalar_prefetch = 0 : i64, scratch_operands = 0 : i64, tpu.core_type = #tpu.core_type<tc>, window_params = [{transform_indices = @transform_0, window_bounds = array<i64: 2, 8, 64>}, {pipeline_mode = #tpu.pipeline_mode<synchronous>, transform_indices = @transform_1, window_bounds = array<i64: 16, 128>}, {pipeline_mode = #tpu.pipeline_mode<synchronous>, transform_indices = @transform_2, window_bounds = array<i64: 16, 128>}, {transform_indices = @transform_3, window_bounds = array<i64: 2, 1, 8>}, {pipeline_mode = #tpu.pipeline_mode<synchronous>, transform_indices = @transform_4, window_bounds = array<i64: 8, 64>}, {pipeline_mode = #tpu.pipeline_mode<synchronous>, transform_indices = @transform_5, window_bounds = array<i64: 3, 64, 320>}, {pipeline_mode = #tpu.pipeline_mode<synchronous>, transform_indices = @transform_6, window_bounds = array<i64: 3, 64, 64>}, {pipeline_mode = #tpu.pipeline_mode<synchronous>, transform_indices = @transform_7, window_bounds = array<i64: 3, 64, 256>}, {pipeline_mode = #tpu.pipeline_mode<synchronous>, transform_indices = @transform_8, window_bounds = array<i64: 3, 128, 64>}, {transform_indices = @transform_9, window_bounds = array<i64: 2, 8, 64>}]} {
    %c0 = arith.constant 0 : index
    %c0_0 = arith.constant 0 : index
    %c0_1 = arith.constant 0 : index
    %0 = vector.load %arg1[%c0, %c0_0, %c0_1] : memref<2x8x64xf32, #tpu.memory_space<vmem>>, vector<2x8x64xf32>
    %1 = vector.shape_cast %0 : vector<2x8x64xf32> to vector<16x64xf32>
    %c0_2 = arith.constant 0 : index
    %c0_3 = arith.constant 0 : index
    %2 = vector.load %arg2[%c0_2, %c0_3] : memref<16x128xf32, #tpu.memory_space<vmem>>, vector<16x128xf32>
    %c0_4 = arith.constant 0 : index
    %c0_5 = arith.constant 0 : index
    %3 = vector.load %arg3[%c0_4, %c0_5] : memref<16x128xf32, #tpu.memory_space<vmem>>, vector<16x128xf32>
    %c0_6 = arith.constant 0 : index
    %c0_7 = arith.constant 0 : index
    %4 = vector.load %arg5[%c0_6, %c0_7] : memref<8x64xf32, #tpu.memory_space<vmem>>, vector<8x64xf32>
    %5 = vector.extract_strided_slice %4 {offsets = [0, 0], sizes = [1, 64], strides = [1, 1]} : vector<8x64xf32> to vector<1x64xf32>
    %6 = arith.mulf %1, %1 : vector<16x64xf32>
    %cst = arith.constant dense<0.000000e+00> : vector<16xf32>
    %7 = vector.multi_reduction <add>, %6, %cst [1] : vector<16x64xf32> to vector<16xf32>
    %8 = vector.shape_cast %7 : vector<16xf32> to vector<16x1xf32>
    %cst_8 = arith.constant 6.400000e+01 : f32
    %9 = vector.broadcast %cst_8 : f32 to vector<16x1xf32>
    %10 = arith.divf %8, %9 : vector<16x1xf32>
    %cst_9 = arith.constant 9.99999997E-7 : f32
    %11 = vector.broadcast %cst_9 : f32 to vector<16x1xf32>
    %12 = arith.addf %10, %11 : vector<16x1xf32>
    %13 = math.rsqrt %12 : vector<16x1xf32>
    %14 = vector.broadcast %13 : vector<16x1xf32> to vector<16x64xf32>
    %15 = arith.mulf %1, %14 : vector<16x64xf32>
    %16 = vector.broadcast %5 : vector<1x64xf32> to vector<16x64xf32>
    %17 = arith.mulf %15, %16 : vector<16x64xf32>
    %c0_10 = arith.constant 0 : index
    %c0_11 = arith.constant 0 : index
    %c0_12 = arith.constant 0 : index
    %18 = vector.load %arg6[%c0_10, %c0_11, %c0_12] : memref<3x64x320xf32, #tpu.memory_space<vmem>>, vector<1x64x320xf32>
    %19 = vector.shape_cast %18 : vector<1x64x320xf32> to vector<64x320xf32>
    %cst_13 = arith.constant dense<0.000000e+00> : vector<16x320xf32>
    %20 = tpu.matmul %17, %19, %cst_13 {dimension_numbers = #tpu.dot_dimension_numbers<[1], [0], [0], [1], [0, 0, 1, 1], [], []>} : vector<16x64xf32>, vector<64x320xf32>, vector<16x320xf32> -> vector<16x320xf32>
    %21 = vector.extract_strided_slice %20 {offsets = [0, 0], sizes = [16, 128], strides = [1, 1]} : vector<16x320xf32> to vector<16x128xf32>
    %22 = arith.mulf %21, %2 : vector<16x128xf32>
    %23 = vector.extract_strided_slice %20 {offsets = [0, 128], sizes = [16, 128], strides = [1, 1]} : vector<16x320xf32> to vector<16x128xf32>
    %24 = arith.mulf %23, %3 : vector<16x128xf32>
    %25 = arith.addf %22, %24 : vector<16x128xf32>
    %26 = vector.extract_strided_slice %20 {offsets = [0, 256], sizes = [16, 64], strides = [1, 1]} : vector<16x320xf32> to vector<16x64xf32>
    %c0_14 = arith.constant 0 : index
    %c0_15 = arith.constant 0 : index
    %c0_16 = arith.constant 0 : index
    %27 = vector.load %arg7[%c0_14, %c0_15, %c0_16] : memref<3x64x64xf32, #tpu.memory_space<vmem>>, vector<1x64x64xf32>
    %28 = vector.shape_cast %27 : vector<1x64x64xf32> to vector<64x64xf32>
    %c0_17 = arith.constant 0 : index
    %c0_18 = arith.constant 0 : index
    %c0_19 = arith.constant 0 : index
    %29 = vector.load %arg4[%c0_17, %c0_18, %c0_19] : memref<2x1x8xf32, #tpu.memory_space<vmem>>, vector<1x1x8xf32>
    %30 = vector.shape_cast %29 : vector<1x1x8xf32> to vector<1x8xf32>
    %31 = vector.extract_strided_slice %25 {offsets = [0, 0], sizes = [8, 16], strides = [1, 1]} : vector<16x128xf32> to vector<8x16xf32>
    %32 = vector.extract_strided_slice %25 {offsets = [0, 64], sizes = [8, 16], strides = [1, 1]} : vector<16x128xf32> to vector<8x16xf32>
    %33 = vector.extract_strided_slice %26 {offsets = [0, 0], sizes = [8, 16], strides = [1, 1]} : vector<16x64xf32> to vector<8x16xf32>
    %cst_20 = arith.constant dense<0.000000e+00> : vector<8x8xf32>
    %34 = tpu.matmul %31, %32, %cst_20 {dimension_numbers = #tpu.dot_dimension_numbers<[1], [1], [0], [0], [0, 0, 1, 0], [], []>} : vector<8x16xf32>, vector<8x16xf32>, vector<8x8xf32> -> vector<8x8xf32>
    %35 = vector.broadcast %30 : vector<1x8xf32> to vector<8x8xf32>
    %36 = arith.addf %34, %35 : vector<8x8xf32>
    %37 = math.exp %36 : vector<8x8xf32>
    %cst_21 = arith.constant dense<0.000000e+00> : vector<8xf32>
    %38 = vector.multi_reduction <add>, %37, %cst_21 [1] : vector<8x8xf32> to vector<8xf32>
    %39 = vector.shape_cast %38 : vector<8xf32> to vector<8x1xf32>
    %40 = vector.broadcast %39 : vector<8x1xf32> to vector<8x8xf32>
    %41 = arith.divf %37, %40 : vector<8x8xf32>
    %cst_22 = arith.constant dense<0.000000e+00> : vector<8x16xf32>
    %42 = tpu.matmul %41, %33, %cst_22 {dimension_numbers = #tpu.dot_dimension_numbers<[1], [0], [0], [1], [0, 0, 1, 1], [], []>} : vector<8x8xf32>, vector<8x16xf32>, vector<8x16xf32> -> vector<8x16xf32>
    %43 = vector.extract_strided_slice %28 {offsets = [0, 0], sizes = [16, 64], strides = [1, 1]} : vector<64x64xf32> to vector<16x64xf32>
    %cst_23 = arith.constant dense<0.000000e+00> : vector<8x64xf32>
    %44 = tpu.matmul %42, %43, %cst_23 {dimension_numbers = #tpu.dot_dimension_numbers<[1], [0], [0], [1], [0, 0, 1, 1], [], []>} : vector<8x16xf32>, vector<16x64xf32>, vector<8x64xf32> -> vector<8x64xf32>
    %45 = vector.extract_strided_slice %25 {offsets = [0, 16], sizes = [8, 16], strides = [1, 1]} : vector<16x128xf32> to vector<8x16xf32>
    %46 = vector.extract_strided_slice %25 {offsets = [0, 80], sizes = [8, 16], strides = [1, 1]} : vector<16x128xf32> to vector<8x16xf32>
    %47 = vector.extract_strided_slice %26 {offsets = [0, 16], sizes = [8, 16], strides = [1, 1]} : vector<16x64xf32> to vector<8x16xf32>
    %cst_24 = arith.constant dense<0.000000e+00> : vector<8x8xf32>
    %48 = tpu.matmul %45, %46, %cst_24 {dimension_numbers = #tpu.dot_dimension_numbers<[1], [1], [0], [0], [0, 0, 1, 0], [], []>} : vector<8x16xf32>, vector<8x16xf32>, vector<8x8xf32> -> vector<8x8xf32>
    %49 = vector.broadcast %30 : vector<1x8xf32> to vector<8x8xf32>
    %50 = arith.addf %48, %49 : vector<8x8xf32>
    %51 = math.exp %50 : vector<8x8xf32>
    %cst_25 = arith.constant dense<0.000000e+00> : vector<8xf32>
    %52 = vector.multi_reduction <add>, %51, %cst_25 [1] : vector<8x8xf32> to vector<8xf32>
    %53 = vector.shape_cast %52 : vector<8xf32> to vector<8x1xf32>
    %54 = vector.broadcast %53 : vector<8x1xf32> to vector<8x8xf32>
    %55 = arith.divf %51, %54 : vector<8x8xf32>
    %cst_26 = arith.constant dense<0.000000e+00> : vector<8x16xf32>
    %56 = tpu.matmul %55, %47, %cst_26 {dimension_numbers = #tpu.dot_dimension_numbers<[1], [0], [0], [1], [0, 0, 1, 1], [], []>} : vector<8x8xf32>, vector<8x16xf32>, vector<8x16xf32> -> vector<8x16xf32>
    %57 = vector.extract_strided_slice %28 {offsets = [16, 0], sizes = [16, 64], strides = [1, 1]} : vector<64x64xf32> to vector<16x64xf32>
    %cst_27 = arith.constant dense<0.000000e+00> : vector<8x64xf32>
    %58 = tpu.matmul %56, %57, %cst_27 {dimension_numbers = #tpu.dot_dimension_numbers<[1], [0], [0], [1], [0, 0, 1, 1], [], []>} : vector<8x16xf32>, vector<16x64xf32>, vector<8x64xf32> -> vector<8x64xf32>
    %59 = arith.addf %44, %58 : vector<8x64xf32>
    %60 = vector.extract_strided_slice %25 {offsets = [0, 32], sizes = [8, 16], strides = [1, 1]} : vector<16x128xf32> to vector<8x16xf32>
    %61 = vector.extract_strided_slice %25 {offsets = [0, 96], sizes = [8, 16], strides = [1, 1]} : vector<16x128xf32> to vector<8x16xf32>
    %62 = vector.extract_strided_slice %26 {offsets = [0, 32], sizes = [8, 16], strides = [1, 1]} : vector<16x64xf32> to vector<8x16xf32>
    %cst_28 = arith.constant dense<0.000000e+00> : vector<8x8xf32>
    %63 = tpu.matmul %60, %61, %cst_28 {dimension_numbers = #tpu.dot_dimension_numbers<[1], [1], [0], [0], [0, 0, 1, 0], [], []>} : vector<8x16xf32>, vector<8x16xf32>, vector<8x8xf32> -> vector<8x8xf32>
    %64 = vector.broadcast %30 : vector<1x8xf32> to vector<8x8xf32>
    %65 = arith.addf %63, %64 : vector<8x8xf32>
    %66 = math.exp %65 : vector<8x8xf32>
    %cst_29 = arith.constant dense<0.000000e+00> : vector<8xf32>
    %67 = vector.multi_reduction <add>, %66, %cst_29 [1] : vector<8x8xf32> to vector<8xf32>
    %68 = vector.shape_cast %67 : vector<8xf32> to vector<8x1xf32>
    %69 = vector.broadcast %68 : vector<8x1xf32> to vector<8x8xf32>
    %70 = arith.divf %66, %69 : vector<8x8xf32>
    %cst_30 = arith.constant dense<0.000000e+00> : vector<8x16xf32>
    %71 = tpu.matmul %70, %62, %cst_30 {dimension_numbers = #tpu.dot_dimension_numbers<[1], [0], [0], [1], [0, 0, 1, 1], [], []>} : vector<8x8xf32>, vector<8x16xf32>, vector<8x16xf32> -> vector<8x16xf32>
    %72 = vector.extract_strided_slice %28 {offsets = [32, 0], sizes = [16, 64], strides = [1, 1]} : vector<64x64xf32> to vector<16x64xf32>
    %cst_31 = arith.constant dense<0.000000e+00> : vector<8x64xf32>
    %73 = tpu.matmul %71, %72, %cst_31 {dimension_numbers = #tpu.dot_dimension_numbers<[1], [0], [0], [1], [0, 0, 1, 1], [], []>} : vector<8x16xf32>, vector<16x64xf32>, vector<8x64xf32> -> vector<8x64xf32>
    %74 = arith.addf %59, %73 : vector<8x64xf32>
    %75 = vector.extract_strided_slice %25 {offsets = [0, 48], sizes = [8, 16], strides = [1, 1]} : vector<16x128xf32> to vector<8x16xf32>
    %76 = vector.extract_strided_slice %25 {offsets = [0, 112], sizes = [8, 16], strides = [1, 1]} : vector<16x128xf32> to vector<8x16xf32>
    %77 = vector.extract_strided_slice %26 {offsets = [0, 48], sizes = [8, 16], strides = [1, 1]} : vector<16x64xf32> to vector<8x16xf32>
    %cst_32 = arith.constant dense<0.000000e+00> : vector<8x8xf32>
    %78 = tpu.matmul %75, %76, %cst_32 {dimension_numbers = #tpu.dot_dimension_numbers<[1], [1], [0], [0], [0, 0, 1, 0], [], []>} : vector<8x16xf32>, vector<8x16xf32>, vector<8x8xf32> -> vector<8x8xf32>
    %79 = vector.broadcast %30 : vector<1x8xf32> to vector<8x8xf32>
    %80 = arith.addf %78, %79 : vector<8x8xf32>
    %81 = math.exp %80 : vector<8x8xf32>
    %cst_33 = arith.constant dense<0.000000e+00> : vector<8xf32>
    %82 = vector.multi_reduction <add>, %81, %cst_33 [1] : vector<8x8xf32> to vector<8xf32>
    %83 = vector.shape_cast %82 : vector<8xf32> to vector<8x1xf32>
    %84 = vector.broadcast %83 : vector<8x1xf32> to vector<8x8xf32>
    %85 = arith.divf %81, %84 : vector<8x8xf32>
    %cst_34 = arith.constant dense<0.000000e+00> : vector<8x16xf32>
    %86 = tpu.matmul %85, %77, %cst_34 {dimension_numbers = #tpu.dot_dimension_numbers<[1], [0], [0], [1], [0, 0, 1, 1], [], []>} : vector<8x8xf32>, vector<8x16xf32>, vector<8x16xf32> -> vector<8x16xf32>
    %87 = vector.extract_strided_slice %28 {offsets = [48, 0], sizes = [16, 64], strides = [1, 1]} : vector<64x64xf32> to vector<16x64xf32>
    %cst_35 = arith.constant dense<0.000000e+00> : vector<8x64xf32>
    %88 = tpu.matmul %86, %87, %cst_35 {dimension_numbers = #tpu.dot_dimension_numbers<[1], [0], [0], [1], [0, 0, 1, 1], [], []>} : vector<8x16xf32>, vector<16x64xf32>, vector<8x64xf32> -> vector<8x64xf32>
    %89 = arith.addf %74, %88 : vector<8x64xf32>
    %c1 = arith.constant 1 : index
    %c0_36 = arith.constant 0 : index
    %c0_37 = arith.constant 0 : index
    %90 = vector.load %arg4[%c1, %c0_36, %c0_37] : memref<2x1x8xf32, #tpu.memory_space<vmem>>, vector<1x1x8xf32>
    %91 = vector.shape_cast %90 : vector<1x1x8xf32> to vector<1x8xf32>
    %92 = vector.extract_strided_slice %25 {offsets = [8, 0], sizes = [8, 16], strides = [1, 1]} : vector<16x128xf32> to vector<8x16xf32>
    %93 = vector.extract_strided_slice %25 {offsets = [8, 64], sizes = [8, 16], strides = [1, 1]} : vector<16x128xf32> to vector<8x16xf32>
    %94 = vector.extract_strided_slice %26 {offsets = [8, 0], sizes = [8, 16], strides = [1, 1]} : vector<16x64xf32> to vector<8x16xf32>
    %cst_38 = arith.constant dense<0.000000e+00> : vector<8x8xf32>
    %95 = tpu.matmul %92, %93, %cst_38 {dimension_numbers = #tpu.dot_dimension_numbers<[1], [1], [0], [0], [0, 0, 1, 0], [], []>} : vector<8x16xf32>, vector<8x16xf32>, vector<8x8xf32> -> vector<8x8xf32>
    %96 = vector.broadcast %91 : vector<1x8xf32> to vector<8x8xf32>
    %97 = arith.addf %95, %96 : vector<8x8xf32>
    %98 = math.exp %97 : vector<8x8xf32>
    %cst_39 = arith.constant dense<0.000000e+00> : vector<8xf32>
    %99 = vector.multi_reduction <add>, %98, %cst_39 [1] : vector<8x8xf32> to vector<8xf32>
    %100 = vector.shape_cast %99 : vector<8xf32> to vector<8x1xf32>
    %101 = vector.broadcast %100 : vector<8x1xf32> to vector<8x8xf32>
    %102 = arith.divf %98, %101 : vector<8x8xf32>
    %cst_40 = arith.constant dense<0.000000e+00> : vector<8x16xf32>
    %103 = tpu.matmul %102, %94, %cst_40 {dimension_numbers = #tpu.dot_dimension_numbers<[1], [0], [0], [1], [0, 0, 1, 1], [], []>} : vector<8x8xf32>, vector<8x16xf32>, vector<8x16xf32> -> vector<8x16xf32>
    %104 = vector.extract_strided_slice %28 {offsets = [0, 0], sizes = [16, 64], strides = [1, 1]} : vector<64x64xf32> to vector<16x64xf32>
    %cst_41 = arith.constant dense<0.000000e+00> : vector<8x64xf32>
    %105 = tpu.matmul %103, %104, %cst_41 {dimension_numbers = #tpu.dot_dimension_numbers<[1], [0], [0], [1], [0, 0, 1, 1], [], []>} : vector<8x16xf32>, vector<16x64xf32>, vector<8x64xf32> -> vector<8x64xf32>
    %106 = vector.extract_strided_slice %25 {offsets = [8, 16], sizes = [8, 16], strides = [1, 1]} : vector<16x128xf32> to vector<8x16xf32>
    %107 = vector.extract_strided_slice %25 {offsets = [8, 80], sizes = [8, 16], strides = [1, 1]} : vector<16x128xf32> to vector<8x16xf32>
    %108 = vector.extract_strided_slice %26 {offsets = [8, 16], sizes = [8, 16], strides = [1, 1]} : vector<16x64xf32> to vector<8x16xf32>
    %cst_42 = arith.constant dense<0.000000e+00> : vector<8x8xf32>
    %109 = tpu.matmul %106, %107, %cst_42 {dimension_numbers = #tpu.dot_dimension_numbers<[1], [1], [0], [0], [0, 0, 1, 0], [], []>} : vector<8x16xf32>, vector<8x16xf32>, vector<8x8xf32> -> vector<8x8xf32>
    %110 = vector.broadcast %91 : vector<1x8xf32> to vector<8x8xf32>
    %111 = arith.addf %109, %110 : vector<8x8xf32>
    %112 = math.exp %111 : vector<8x8xf32>
    %cst_43 = arith.constant dense<0.000000e+00> : vector<8xf32>
    %113 = vector.multi_reduction <add>, %112, %cst_43 [1] : vector<8x8xf32> to vector<8xf32>
    %114 = vector.shape_cast %113 : vector<8xf32> to vector<8x1xf32>
    %115 = vector.broadcast %114 : vector<8x1xf32> to vector<8x8xf32>
    %116 = arith.divf %112, %115 : vector<8x8xf32>
    %cst_44 = arith.constant dense<0.000000e+00> : vector<8x16xf32>
    %117 = tpu.matmul %116, %108, %cst_44 {dimension_numbers = #tpu.dot_dimension_numbers<[1], [0], [0], [1], [0, 0, 1, 1], [], []>} : vector<8x8xf32>, vector<8x16xf32>, vector<8x16xf32> -> vector<8x16xf32>
    %118 = vector.extract_strided_slice %28 {offsets = [16, 0], sizes = [16, 64], strides = [1, 1]} : vector<64x64xf32> to vector<16x64xf32>
    %cst_45 = arith.constant dense<0.000000e+00> : vector<8x64xf32>
    %119 = tpu.matmul %117, %118, %cst_45 {dimension_numbers = #tpu.dot_dimension_numbers<[1], [0], [0], [1], [0, 0, 1, 1], [], []>} : vector<8x16xf32>, vector<16x64xf32>, vector<8x64xf32> -> vector<8x64xf32>
    %120 = arith.addf %105, %119 : vector<8x64xf32>
    %121 = vector.extract_strided_slice %25 {offsets = [8, 32], sizes = [8, 16], strides = [1, 1]} : vector<16x128xf32> to vector<8x16xf32>
    %122 = vector.extract_strided_slice %25 {offsets = [8, 96], sizes = [8, 16], strides = [1, 1]} : vector<16x128xf32> to vector<8x16xf32>
    %123 = vector.extract_strided_slice %26 {offsets = [8, 32], sizes = [8, 16], strides = [1, 1]} : vector<16x64xf32> to vector<8x16xf32>
    %cst_46 = arith.constant dense<0.000000e+00> : vector<8x8xf32>
    %124 = tpu.matmul %121, %122, %cst_46 {dimension_numbers = #tpu.dot_dimension_numbers<[1], [1], [0], [0], [0, 0, 1, 0], [], []>} : vector<8x16xf32>, vector<8x16xf32>, vector<8x8xf32> -> vector<8x8xf32>
    %125 = vector.broadcast %91 : vector<1x8xf32> to vector<8x8xf32>
    %126 = arith.addf %124, %125 : vector<8x8xf32>
    %127 = math.exp %126 : vector<8x8xf32>
    %cst_47 = arith.constant dense<0.000000e+00> : vector<8xf32>
    %128 = vector.multi_reduction <add>, %127, %cst_47 [1] : vector<8x8xf32> to vector<8xf32>
    %129 = vector.shape_cast %128 : vector<8xf32> to vector<8x1xf32>
    %130 = vector.broadcast %129 : vector<8x1xf32> to vector<8x8xf32>
    %131 = arith.divf %127, %130 : vector<8x8xf32>
    %cst_48 = arith.constant dense<0.000000e+00> : vector<8x16xf32>
    %132 = tpu.matmul %131, %123, %cst_48 {dimension_numbers = #tpu.dot_dimension_numbers<[1], [0], [0], [1], [0, 0, 1, 1], [], []>} : vector<8x8xf32>, vector<8x16xf32>, vector<8x16xf32> -> vector<8x16xf32>
    %133 = vector.extract_strided_slice %28 {offsets = [32, 0], sizes = [16, 64], strides = [1, 1]} : vector<64x64xf32> to vector<16x64xf32>
    %cst_49 = arith.constant dense<0.000000e+00> : vector<8x64xf32>
    %134 = tpu.matmul %132, %133, %cst_49 {dimension_numbers = #tpu.dot_dimension_numbers<[1], [0], [0], [1], [0, 0, 1, 1], [], []>} : vector<8x16xf32>, vector<16x64xf32>, vector<8x64xf32> -> vector<8x64xf32>
    %135 = arith.addf %120, %134 : vector<8x64xf32>
    %136 = vector.extract_strided_slice %25 {offsets = [8, 48], sizes = [8, 16], strides = [1, 1]} : vector<16x128xf32> to vector<8x16xf32>
    %137 = vector.extract_strided_slice %25 {offsets = [8, 112], sizes = [8, 16], strides = [1, 1]} : vector<16x128xf32> to vector<8x16xf32>
    %138 = vector.extract_strided_slice %26 {offsets = [8, 48], sizes = [8, 16], strides = [1, 1]} : vector<16x64xf32> to vector<8x16xf32>
    %cst_50 = arith.constant dense<0.000000e+00> : vector<8x8xf32>
    %139 = tpu.matmul %136, %137, %cst_50 {dimension_numbers = #tpu.dot_dimension_numbers<[1], [1], [0], [0], [0, 0, 1, 0], [], []>} : vector<8x16xf32>, vector<8x16xf32>, vector<8x8xf32> -> vector<8x8xf32>
    %140 = vector.broadcast %91 : vector<1x8xf32> to vector<8x8xf32>
    %141 = arith.addf %139, %140 : vector<8x8xf32>
    %142 = math.exp %141 : vector<8x8xf32>
    %cst_51 = arith.constant dense<0.000000e+00> : vector<8xf32>
    %143 = vector.multi_reduction <add>, %142, %cst_51 [1] : vector<8x8xf32> to vector<8xf32>
    %144 = vector.shape_cast %143 : vector<8xf32> to vector<8x1xf32>
    %145 = vector.broadcast %144 : vector<8x1xf32> to vector<8x8xf32>
    %146 = arith.divf %142, %145 : vector<8x8xf32>
    %cst_52 = arith.constant dense<0.000000e+00> : vector<8x16xf32>
    %147 = tpu.matmul %146, %138, %cst_52 {dimension_numbers = #tpu.dot_dimension_numbers<[1], [0], [0], [1], [0, 0, 1, 1], [], []>} : vector<8x8xf32>, vector<8x16xf32>, vector<8x16xf32> -> vector<8x16xf32>
    %148 = vector.extract_strided_slice %28 {offsets = [48, 0], sizes = [16, 64], strides = [1, 1]} : vector<64x64xf32> to vector<16x64xf32>
    %cst_53 = arith.constant dense<0.000000e+00> : vector<8x64xf32>
    %149 = tpu.matmul %147, %148, %cst_53 {dimension_numbers = #tpu.dot_dimension_numbers<[1], [0], [0], [1], [0, 0, 1, 1], [], []>} : vector<8x16xf32>, vector<16x64xf32>, vector<8x64xf32> -> vector<8x64xf32>
    %150 = arith.addf %135, %149 : vector<8x64xf32>
    %151 = tpu.concatenate %89, %150 in 0 : vector<8x64xf32>, vector<8x64xf32> -> vector<16x64xf32>
    %152 = arith.addf %1, %151 : vector<16x64xf32>
    %153 = vector.extract_strided_slice %4 {offsets = [1, 0], sizes = [1, 64], strides = [1, 1]} : vector<8x64xf32> to vector<1x64xf32>
    %154 = arith.mulf %152, %152 : vector<16x64xf32>
    %cst_54 = arith.constant dense<0.000000e+00> : vector<16xf32>
    %155 = vector.multi_reduction <add>, %154, %cst_54 [1] : vector<16x64xf32> to vector<16xf32>
    %156 = vector.shape_cast %155 : vector<16xf32> to vector<16x1xf32>
    %cst_55 = arith.constant 6.400000e+01 : f32
    %157 = vector.broadcast %cst_55 : f32 to vector<16x1xf32>
    %158 = arith.divf %156, %157 : vector<16x1xf32>
    %cst_56 = arith.constant 9.99999997E-7 : f32
    %159 = vector.broadcast %cst_56 : f32 to vector<16x1xf32>
    %160 = arith.addf %158, %159 : vector<16x1xf32>
    %161 = math.rsqrt %160 : vector<16x1xf32>
    %162 = vector.broadcast %161 : vector<16x1xf32> to vector<16x64xf32>
    %163 = arith.mulf %152, %162 : vector<16x64xf32>
    %164 = vector.broadcast %153 : vector<1x64xf32> to vector<16x64xf32>
    %165 = arith.mulf %163, %164 : vector<16x64xf32>
    %c0_57 = arith.constant 0 : index
    %c0_58 = arith.constant 0 : index
    %c0_59 = arith.constant 0 : index
    %166 = vector.load %arg8[%c0_57, %c0_58, %c0_59] : memref<3x64x256xf32, #tpu.memory_space<vmem>>, vector<1x64x256xf32>
    %167 = vector.shape_cast %166 : vector<1x64x256xf32> to vector<64x256xf32>
    %cst_60 = arith.constant dense<0.000000e+00> : vector<16x256xf32>
    %168 = tpu.matmul %165, %167, %cst_60 {dimension_numbers = #tpu.dot_dimension_numbers<[1], [0], [0], [1], [0, 0, 1, 1], [], []>} : vector<16x64xf32>, vector<64x256xf32>, vector<16x256xf32> -> vector<16x256xf32>
    %169 = vector.extract_strided_slice %168 {offsets = [0, 0], sizes = [16, 128], strides = [1, 1]} : vector<16x256xf32> to vector<16x128xf32>
    %170 = vector.extract_strided_slice %168 {offsets = [0, 128], sizes = [16, 128], strides = [1, 1]} : vector<16x256xf32> to vector<16x128xf32>
    %171 = arith.negf %169 : vector<16x128xf32>
    %172 = math.exp %171 : vector<16x128xf32>
    %cst_61 = arith.constant 1.000000e+00 : f32
    %173 = vector.broadcast %cst_61 : f32 to vector<16x128xf32>
    %174 = arith.addf %173, %172 : vector<16x128xf32>
    %175 = arith.divf %173, %174 : vector<16x128xf32>
    %176 = arith.mulf %169, %175 : vector<16x128xf32>
    %177 = arith.mulf %176, %170 : vector<16x128xf32>
    %c0_62 = arith.constant 0 : index
    %c0_63 = arith.constant 0 : index
    %c0_64 = arith.constant 0 : index
    %178 = vector.load %arg9[%c0_62, %c0_63, %c0_64] : memref<3x128x64xf32, #tpu.memory_space<vmem>>, vector<1x128x64xf32>
    %179 = vector.shape_cast %178 : vector<1x128x64xf32> to vector<128x64xf32>
    %cst_65 = arith.constant dense<0.000000e+00> : vector<16x64xf32>
    %180 = tpu.matmul %177, %179, %cst_65 {dimension_numbers = #tpu.dot_dimension_numbers<[1], [0], [0], [1], [0, 0, 1, 1], [], []>} : vector<16x128xf32>, vector<128x64xf32>, vector<16x64xf32> -> vector<16x64xf32>
    %181 = arith.addf %152, %180 : vector<16x64xf32>
    %182 = vector.extract_strided_slice %4 {offsets = [2, 0], sizes = [1, 64], strides = [1, 1]} : vector<8x64xf32> to vector<1x64xf32>
    %183 = arith.mulf %181, %181 : vector<16x64xf32>
    %cst_66 = arith.constant dense<0.000000e+00> : vector<16xf32>
    %184 = vector.multi_reduction <add>, %183, %cst_66 [1] : vector<16x64xf32> to vector<16xf32>
    %185 = vector.shape_cast %184 : vector<16xf32> to vector<16x1xf32>
    %cst_67 = arith.constant 6.400000e+01 : f32
    %186 = vector.broadcast %cst_67 : f32 to vector<16x1xf32>
    %187 = arith.divf %185, %186 : vector<16x1xf32>
    %cst_68 = arith.constant 9.99999997E-7 : f32
    %188 = vector.broadcast %cst_68 : f32 to vector<16x1xf32>
    %189 = arith.addf %187, %188 : vector<16x1xf32>
    %190 = math.rsqrt %189 : vector<16x1xf32>
    %191 = vector.broadcast %190 : vector<16x1xf32> to vector<16x64xf32>
    %192 = arith.mulf %181, %191 : vector<16x64xf32>
    %193 = vector.broadcast %182 : vector<1x64xf32> to vector<16x64xf32>
    %194 = arith.mulf %192, %193 : vector<16x64xf32>
    %c1_69 = arith.constant 1 : index
    %c0_70 = arith.constant 0 : index
    %c0_71 = arith.constant 0 : index
    %195 = vector.load %arg6[%c1_69, %c0_70, %c0_71] : memref<3x64x320xf32, #tpu.memory_space<vmem>>, vector<1x64x320xf32>
    %196 = vector.shape_cast %195 : vector<1x64x320xf32> to vector<64x320xf32>
    %cst_72 = arith.constant dense<0.000000e+00> : vector<16x320xf32>
    %197 = tpu.matmul %194, %196, %cst_72 {dimension_numbers = #tpu.dot_dimension_numbers<[1], [0], [0], [1], [0, 0, 1, 1], [], []>} : vector<16x64xf32>, vector<64x320xf32>, vector<16x320xf32> -> vector<16x320xf32>
    %198 = vector.extract_strided_slice %197 {offsets = [0, 0], sizes = [16, 128], strides = [1, 1]} : vector<16x320xf32> to vector<16x128xf32>
    %199 = arith.mulf %198, %2 : vector<16x128xf32>
    %200 = vector.extract_strided_slice %197 {offsets = [0, 128], sizes = [16, 128], strides = [1, 1]} : vector<16x320xf32> to vector<16x128xf32>
    %201 = arith.mulf %200, %3 : vector<16x128xf32>
    %202 = arith.addf %199, %201 : vector<16x128xf32>
    %203 = vector.extract_strided_slice %197 {offsets = [0, 256], sizes = [16, 64], strides = [1, 1]} : vector<16x320xf32> to vector<16x64xf32>
    %c1_73 = arith.constant 1 : index
    %c0_74 = arith.constant 0 : index
    %c0_75 = arith.constant 0 : index
    %204 = vector.load %arg7[%c1_73, %c0_74, %c0_75] : memref<3x64x64xf32, #tpu.memory_space<vmem>>, vector<1x64x64xf32>
    %205 = vector.shape_cast %204 : vector<1x64x64xf32> to vector<64x64xf32>
    %c0_76 = arith.constant 0 : index
    %c0_77 = arith.constant 0 : index
    %c0_78 = arith.constant 0 : index
    %206 = vector.load %arg4[%c0_76, %c0_77, %c0_78] : memref<2x1x8xf32, #tpu.memory_space<vmem>>, vector<1x1x8xf32>
    %207 = vector.shape_cast %206 : vector<1x1x8xf32> to vector<1x8xf32>
    %208 = vector.extract_strided_slice %202 {offsets = [0, 0], sizes = [8, 16], strides = [1, 1]} : vector<16x128xf32> to vector<8x16xf32>
    %209 = vector.extract_strided_slice %202 {offsets = [0, 64], sizes = [8, 16], strides = [1, 1]} : vector<16x128xf32> to vector<8x16xf32>
    %210 = vector.extract_strided_slice %203 {offsets = [0, 0], sizes = [8, 16], strides = [1, 1]} : vector<16x64xf32> to vector<8x16xf32>
    %cst_79 = arith.constant dense<0.000000e+00> : vector<8x8xf32>
    %211 = tpu.matmul %208, %209, %cst_79 {dimension_numbers = #tpu.dot_dimension_numbers<[1], [1], [0], [0], [0, 0, 1, 0], [], []>} : vector<8x16xf32>, vector<8x16xf32>, vector<8x8xf32> -> vector<8x8xf32>
    %212 = vector.broadcast %207 : vector<1x8xf32> to vector<8x8xf32>
    %213 = arith.addf %211, %212 : vector<8x8xf32>
    %214 = math.exp %213 : vector<8x8xf32>
    %cst_80 = arith.constant dense<0.000000e+00> : vector<8xf32>
    %215 = vector.multi_reduction <add>, %214, %cst_80 [1] : vector<8x8xf32> to vector<8xf32>
    %216 = vector.shape_cast %215 : vector<8xf32> to vector<8x1xf32>
    %217 = vector.broadcast %216 : vector<8x1xf32> to vector<8x8xf32>
    %218 = arith.divf %214, %217 : vector<8x8xf32>
    %cst_81 = arith.constant dense<0.000000e+00> : vector<8x16xf32>
    %219 = tpu.matmul %218, %210, %cst_81 {dimension_numbers = #tpu.dot_dimension_numbers<[1], [0], [0], [1], [0, 0, 1, 1], [], []>} : vector<8x8xf32>, vector<8x16xf32>, vector<8x16xf32> -> vector<8x16xf32>
    %220 = vector.extract_strided_slice %205 {offsets = [0, 0], sizes = [16, 64], strides = [1, 1]} : vector<64x64xf32> to vector<16x64xf32>
    %cst_82 = arith.constant dense<0.000000e+00> : vector<8x64xf32>
    %221 = tpu.matmul %219, %220, %cst_82 {dimension_numbers = #tpu.dot_dimension_numbers<[1], [0], [0], [1], [0, 0, 1, 1], [], []>} : vector<8x16xf32>, vector<16x64xf32>, vector<8x64xf32> -> vector<8x64xf32>
    %222 = vector.extract_strided_slice %202 {offsets = [0, 16], sizes = [8, 16], strides = [1, 1]} : vector<16x128xf32> to vector<8x16xf32>
    %223 = vector.extract_strided_slice %202 {offsets = [0, 80], sizes = [8, 16], strides = [1, 1]} : vector<16x128xf32> to vector<8x16xf32>
    %224 = vector.extract_strided_slice %203 {offsets = [0, 16], sizes = [8, 16], strides = [1, 1]} : vector<16x64xf32> to vector<8x16xf32>
    %cst_83 = arith.constant dense<0.000000e+00> : vector<8x8xf32>
    %225 = tpu.matmul %222, %223, %cst_83 {dimension_numbers = #tpu.dot_dimension_numbers<[1], [1], [0], [0], [0, 0, 1, 0], [], []>} : vector<8x16xf32>, vector<8x16xf32>, vector<8x8xf32> -> vector<8x8xf32>
    %226 = vector.broadcast %207 : vector<1x8xf32> to vector<8x8xf32>
    %227 = arith.addf %225, %226 : vector<8x8xf32>
    %228 = math.exp %227 : vector<8x8xf32>
    %cst_84 = arith.constant dense<0.000000e+00> : vector<8xf32>
    %229 = vector.multi_reduction <add>, %228, %cst_84 [1] : vector<8x8xf32> to vector<8xf32>
    %230 = vector.shape_cast %229 : vector<8xf32> to vector<8x1xf32>
    %231 = vector.broadcast %230 : vector<8x1xf32> to vector<8x8xf32>
    %232 = arith.divf %228, %231 : vector<8x8xf32>
    %cst_85 = arith.constant dense<0.000000e+00> : vector<8x16xf32>
    %233 = tpu.matmul %232, %224, %cst_85 {dimension_numbers = #tpu.dot_dimension_numbers<[1], [0], [0], [1], [0, 0, 1, 1], [], []>} : vector<8x8xf32>, vector<8x16xf32>, vector<8x16xf32> -> vector<8x16xf32>
    %234 = vector.extract_strided_slice %205 {offsets = [16, 0], sizes = [16, 64], strides = [1, 1]} : vector<64x64xf32> to vector<16x64xf32>
    %cst_86 = arith.constant dense<0.000000e+00> : vector<8x64xf32>
    %235 = tpu.matmul %233, %234, %cst_86 {dimension_numbers = #tpu.dot_dimension_numbers<[1], [0], [0], [1], [0, 0, 1, 1], [], []>} : vector<8x16xf32>, vector<16x64xf32>, vector<8x64xf32> -> vector<8x64xf32>
    %236 = arith.addf %221, %235 : vector<8x64xf32>
    %237 = vector.extract_strided_slice %202 {offsets = [0, 32], sizes = [8, 16], strides = [1, 1]} : vector<16x128xf32> to vector<8x16xf32>
    %238 = vector.extract_strided_slice %202 {offsets = [0, 96], sizes = [8, 16], strides = [1, 1]} : vector<16x128xf32> to vector<8x16xf32>
    %239 = vector.extract_strided_slice %203 {offsets = [0, 32], sizes = [8, 16], strides = [1, 1]} : vector<16x64xf32> to vector<8x16xf32>
    %cst_87 = arith.constant dense<0.000000e+00> : vector<8x8xf32>
    %240 = tpu.matmul %237, %238, %cst_87 {dimension_numbers = #tpu.dot_dimension_numbers<[1], [1], [0], [0], [0, 0, 1, 0], [], []>} : vector<8x16xf32>, vector<8x16xf32>, vector<8x8xf32> -> vector<8x8xf32>
    %241 = vector.broadcast %207 : vector<1x8xf32> to vector<8x8xf32>
    %242 = arith.addf %240, %241 : vector<8x8xf32>
    %243 = math.exp %242 : vector<8x8xf32>
    %cst_88 = arith.constant dense<0.000000e+00> : vector<8xf32>
    %244 = vector.multi_reduction <add>, %243, %cst_88 [1] : vector<8x8xf32> to vector<8xf32>
    %245 = vector.shape_cast %244 : vector<8xf32> to vector<8x1xf32>
    %246 = vector.broadcast %245 : vector<8x1xf32> to vector<8x8xf32>
    %247 = arith.divf %243, %246 : vector<8x8xf32>
    %cst_89 = arith.constant dense<0.000000e+00> : vector<8x16xf32>
    %248 = tpu.matmul %247, %239, %cst_89 {dimension_numbers = #tpu.dot_dimension_numbers<[1], [0], [0], [1], [0, 0, 1, 1], [], []>} : vector<8x8xf32>, vector<8x16xf32>, vector<8x16xf32> -> vector<8x16xf32>
    %249 = vector.extract_strided_slice %205 {offsets = [32, 0], sizes = [16, 64], strides = [1, 1]} : vector<64x64xf32> to vector<16x64xf32>
    %cst_90 = arith.constant dense<0.000000e+00> : vector<8x64xf32>
    %250 = tpu.matmul %248, %249, %cst_90 {dimension_numbers = #tpu.dot_dimension_numbers<[1], [0], [0], [1], [0, 0, 1, 1], [], []>} : vector<8x16xf32>, vector<16x64xf32>, vector<8x64xf32> -> vector<8x64xf32>
    %251 = arith.addf %236, %250 : vector<8x64xf32>
    %252 = vector.extract_strided_slice %202 {offsets = [0, 48], sizes = [8, 16], strides = [1, 1]} : vector<16x128xf32> to vector<8x16xf32>
    %253 = vector.extract_strided_slice %202 {offsets = [0, 112], sizes = [8, 16], strides = [1, 1]} : vector<16x128xf32> to vector<8x16xf32>
    %254 = vector.extract_strided_slice %203 {offsets = [0, 48], sizes = [8, 16], strides = [1, 1]} : vector<16x64xf32> to vector<8x16xf32>
    %cst_91 = arith.constant dense<0.000000e+00> : vector<8x8xf32>
    %255 = tpu.matmul %252, %253, %cst_91 {dimension_numbers = #tpu.dot_dimension_numbers<[1], [1], [0], [0], [0, 0, 1, 0], [], []>} : vector<8x16xf32>, vector<8x16xf32>, vector<8x8xf32> -> vector<8x8xf32>
    %256 = vector.broadcast %207 : vector<1x8xf32> to vector<8x8xf32>
    %257 = arith.addf %255, %256 : vector<8x8xf32>
    %258 = math.exp %257 : vector<8x8xf32>
    %cst_92 = arith.constant dense<0.000000e+00> : vector<8xf32>
    %259 = vector.multi_reduction <add>, %258, %cst_92 [1] : vector<8x8xf32> to vector<8xf32>
    %260 = vector.shape_cast %259 : vector<8xf32> to vector<8x1xf32>
    %261 = vector.broadcast %260 : vector<8x1xf32> to vector<8x8xf32>
    %262 = arith.divf %258, %261 : vector<8x8xf32>
    %cst_93 = arith.constant dense<0.000000e+00> : vector<8x16xf32>
    %263 = tpu.matmul %262, %254, %cst_93 {dimension_numbers = #tpu.dot_dimension_numbers<[1], [0], [0], [1], [0, 0, 1, 1], [], []>} : vector<8x8xf32>, vector<8x16xf32>, vector<8x16xf32> -> vector<8x16xf32>
    %264 = vector.extract_strided_slice %205 {offsets = [48, 0], sizes = [16, 64], strides = [1, 1]} : vector<64x64xf32> to vector<16x64xf32>
    %cst_94 = arith.constant dense<0.000000e+00> : vector<8x64xf32>
    %265 = tpu.matmul %263, %264, %cst_94 {dimension_numbers = #tpu.dot_dimension_numbers<[1], [0], [0], [1], [0, 0, 1, 1], [], []>} : vector<8x16xf32>, vector<16x64xf32>, vector<8x64xf32> -> vector<8x64xf32>
    %266 = arith.addf %251, %265 : vector<8x64xf32>
    %c1_95 = arith.constant 1 : index
    %c0_96 = arith.constant 0 : index
    %c0_97 = arith.constant 0 : index
    %267 = vector.load %arg4[%c1_95, %c0_96, %c0_97] : memref<2x1x8xf32, #tpu.memory_space<vmem>>, vector<1x1x8xf32>
    %268 = vector.shape_cast %267 : vector<1x1x8xf32> to vector<1x8xf32>
    %269 = vector.extract_strided_slice %202 {offsets = [8, 0], sizes = [8, 16], strides = [1, 1]} : vector<16x128xf32> to vector<8x16xf32>
    %270 = vector.extract_strided_slice %202 {offsets = [8, 64], sizes = [8, 16], strides = [1, 1]} : vector<16x128xf32> to vector<8x16xf32>
    %271 = vector.extract_strided_slice %203 {offsets = [8, 0], sizes = [8, 16], strides = [1, 1]} : vector<16x64xf32> to vector<8x16xf32>
    %cst_98 = arith.constant dense<0.000000e+00> : vector<8x8xf32>
    %272 = tpu.matmul %269, %270, %cst_98 {dimension_numbers = #tpu.dot_dimension_numbers<[1], [1], [0], [0], [0, 0, 1, 0], [], []>} : vector<8x16xf32>, vector<8x16xf32>, vector<8x8xf32> -> vector<8x8xf32>
    %273 = vector.broadcast %268 : vector<1x8xf32> to vector<8x8xf32>
    %274 = arith.addf %272, %273 : vector<8x8xf32>
    %275 = math.exp %274 : vector<8x8xf32>
    %cst_99 = arith.constant dense<0.000000e+00> : vector<8xf32>
    %276 = vector.multi_reduction <add>, %275, %cst_99 [1] : vector<8x8xf32> to vector<8xf32>
    %277 = vector.shape_cast %276 : vector<8xf32> to vector<8x1xf32>
    %278 = vector.broadcast %277 : vector<8x1xf32> to vector<8x8xf32>
    %279 = arith.divf %275, %278 : vector<8x8xf32>
    %cst_100 = arith.constant dense<0.000000e+00> : vector<8x16xf32>
    %280 = tpu.matmul %279, %271, %cst_100 {dimension_numbers = #tpu.dot_dimension_numbers<[1], [0], [0], [1], [0, 0, 1, 1], [], []>} : vector<8x8xf32>, vector<8x16xf32>, vector<8x16xf32> -> vector<8x16xf32>
    %281 = vector.extract_strided_slice %205 {offsets = [0, 0], sizes = [16, 64], strides = [1, 1]} : vector<64x64xf32> to vector<16x64xf32>
    %cst_101 = arith.constant dense<0.000000e+00> : vector<8x64xf32>
    %282 = tpu.matmul %280, %281, %cst_101 {dimension_numbers = #tpu.dot_dimension_numbers<[1], [0], [0], [1], [0, 0, 1, 1], [], []>} : vector<8x16xf32>, vector<16x64xf32>, vector<8x64xf32> -> vector<8x64xf32>
    %283 = vector.extract_strided_slice %202 {offsets = [8, 16], sizes = [8, 16], strides = [1, 1]} : vector<16x128xf32> to vector<8x16xf32>
    %284 = vector.extract_strided_slice %202 {offsets = [8, 80], sizes = [8, 16], strides = [1, 1]} : vector<16x128xf32> to vector<8x16xf32>
    %285 = vector.extract_strided_slice %203 {offsets = [8, 16], sizes = [8, 16], strides = [1, 1]} : vector<16x64xf32> to vector<8x16xf32>
    %cst_102 = arith.constant dense<0.000000e+00> : vector<8x8xf32>
    %286 = tpu.matmul %283, %284, %cst_102 {dimension_numbers = #tpu.dot_dimension_numbers<[1], [1], [0], [0], [0, 0, 1, 0], [], []>} : vector<8x16xf32>, vector<8x16xf32>, vector<8x8xf32> -> vector<8x8xf32>
    %287 = vector.broadcast %268 : vector<1x8xf32> to vector<8x8xf32>
    %288 = arith.addf %286, %287 : vector<8x8xf32>
    %289 = math.exp %288 : vector<8x8xf32>
    %cst_103 = arith.constant dense<0.000000e+00> : vector<8xf32>
    %290 = vector.multi_reduction <add>, %289, %cst_103 [1] : vector<8x8xf32> to vector<8xf32>
    %291 = vector.shape_cast %290 : vector<8xf32> to vector<8x1xf32>
    %292 = vector.broadcast %291 : vector<8x1xf32> to vector<8x8xf32>
    %293 = arith.divf %289, %292 : vector<8x8xf32>
    %cst_104 = arith.constant dense<0.000000e+00> : vector<8x16xf32>
    %294 = tpu.matmul %293, %285, %cst_104 {dimension_numbers = #tpu.dot_dimension_numbers<[1], [0], [0], [1], [0, 0, 1, 1], [], []>} : vector<8x8xf32>, vector<8x16xf32>, vector<8x16xf32> -> vector<8x16xf32>
    %295 = vector.extract_strided_slice %205 {offsets = [16, 0], sizes = [16, 64], strides = [1, 1]} : vector<64x64xf32> to vector<16x64xf32>
    %cst_105 = arith.constant dense<0.000000e+00> : vector<8x64xf32>
    %296 = tpu.matmul %294, %295, %cst_105 {dimension_numbers = #tpu.dot_dimension_numbers<[1], [0], [0], [1], [0, 0, 1, 1], [], []>} : vector<8x16xf32>, vector<16x64xf32>, vector<8x64xf32> -> vector<8x64xf32>
    %297 = arith.addf %282, %296 : vector<8x64xf32>
    %298 = vector.extract_strided_slice %202 {offsets = [8, 32], sizes = [8, 16], strides = [1, 1]} : vector<16x128xf32> to vector<8x16xf32>
    %299 = vector.extract_strided_slice %202 {offsets = [8, 96], sizes = [8, 16], strides = [1, 1]} : vector<16x128xf32> to vector<8x16xf32>
    %300 = vector.extract_strided_slice %203 {offsets = [8, 32], sizes = [8, 16], strides = [1, 1]} : vector<16x64xf32> to vector<8x16xf32>
    %cst_106 = arith.constant dense<0.000000e+00> : vector<8x8xf32>
    %301 = tpu.matmul %298, %299, %cst_106 {dimension_numbers = #tpu.dot_dimension_numbers<[1], [1], [0], [0], [0, 0, 1, 0], [], []>} : vector<8x16xf32>, vector<8x16xf32>, vector<8x8xf32> -> vector<8x8xf32>
    %302 = vector.broadcast %268 : vector<1x8xf32> to vector<8x8xf32>
    %303 = arith.addf %301, %302 : vector<8x8xf32>
    %304 = math.exp %303 : vector<8x8xf32>
    %cst_107 = arith.constant dense<0.000000e+00> : vector<8xf32>
    %305 = vector.multi_reduction <add>, %304, %cst_107 [1] : vector<8x8xf32> to vector<8xf32>
    %306 = vector.shape_cast %305 : vector<8xf32> to vector<8x1xf32>
    %307 = vector.broadcast %306 : vector<8x1xf32> to vector<8x8xf32>
    %308 = arith.divf %304, %307 : vector<8x8xf32>
    %cst_108 = arith.constant dense<0.000000e+00> : vector<8x16xf32>
    %309 = tpu.matmul %308, %300, %cst_108 {dimension_numbers = #tpu.dot_dimension_numbers<[1], [0], [0], [1], [0, 0, 1, 1], [], []>} : vector<8x8xf32>, vector<8x16xf32>, vector<8x16xf32> -> vector<8x16xf32>
    %310 = vector.extract_strided_slice %205 {offsets = [32, 0], sizes = [16, 64], strides = [1, 1]} : vector<64x64xf32> to vector<16x64xf32>
    %cst_109 = arith.constant dense<0.000000e+00> : vector<8x64xf32>
    %311 = tpu.matmul %309, %310, %cst_109 {dimension_numbers = #tpu.dot_dimension_numbers<[1], [0], [0], [1], [0, 0, 1, 1], [], []>} : vector<8x16xf32>, vector<16x64xf32>, vector<8x64xf32> -> vector<8x64xf32>
    %312 = arith.addf %297, %311 : vector<8x64xf32>
    %313 = vector.extract_strided_slice %202 {offsets = [8, 48], sizes = [8, 16], strides = [1, 1]} : vector<16x128xf32> to vector<8x16xf32>
    %314 = vector.extract_strided_slice %202 {offsets = [8, 112], sizes = [8, 16], strides = [1, 1]} : vector<16x128xf32> to vector<8x16xf32>
    %315 = vector.extract_strided_slice %203 {offsets = [8, 48], sizes = [8, 16], strides = [1, 1]} : vector<16x64xf32> to vector<8x16xf32>
    %cst_110 = arith.constant dense<0.000000e+00> : vector<8x8xf32>
    %316 = tpu.matmul %313, %314, %cst_110 {dimension_numbers = #tpu.dot_dimension_numbers<[1], [1], [0], [0], [0, 0, 1, 0], [], []>} : vector<8x16xf32>, vector<8x16xf32>, vector<8x8xf32> -> vector<8x8xf32>
    %317 = vector.broadcast %268 : vector<1x8xf32> to vector<8x8xf32>
    %318 = arith.addf %316, %317 : vector<8x8xf32>
    %319 = math.exp %318 : vector<8x8xf32>
    %cst_111 = arith.constant dense<0.000000e+00> : vector<8xf32>
    %320 = vector.multi_reduction <add>, %319, %cst_111 [1] : vector<8x8xf32> to vector<8xf32>
    %321 = vector.shape_cast %320 : vector<8xf32> to vector<8x1xf32>
    %322 = vector.broadcast %321 : vector<8x1xf32> to vector<8x8xf32>
    %323 = arith.divf %319, %322 : vector<8x8xf32>
    %cst_112 = arith.constant dense<0.000000e+00> : vector<8x16xf32>
    %324 = tpu.matmul %323, %315, %cst_112 {dimension_numbers = #tpu.dot_dimension_numbers<[1], [0], [0], [1], [0, 0, 1, 1], [], []>} : vector<8x8xf32>, vector<8x16xf32>, vector<8x16xf32> -> vector<8x16xf32>
    %325 = vector.extract_strided_slice %205 {offsets = [48, 0], sizes = [16, 64], strides = [1, 1]} : vector<64x64xf32> to vector<16x64xf32>
    %cst_113 = arith.constant dense<0.000000e+00> : vector<8x64xf32>
    %326 = tpu.matmul %324, %325, %cst_113 {dimension_numbers = #tpu.dot_dimension_numbers<[1], [0], [0], [1], [0, 0, 1, 1], [], []>} : vector<8x16xf32>, vector<16x64xf32>, vector<8x64xf32> -> vector<8x64xf32>
    %327 = arith.addf %312, %326 : vector<8x64xf32>
    %328 = tpu.concatenate %266, %327 in 0 : vector<8x64xf32>, vector<8x64xf32> -> vector<16x64xf32>
    %329 = arith.addf %181, %328 : vector<16x64xf32>
    %330 = vector.extract_strided_slice %4 {offsets = [3, 0], sizes = [1, 64], strides = [1, 1]} : vector<8x64xf32> to vector<1x64xf32>
    %331 = arith.mulf %329, %329 : vector<16x64xf32>
    %cst_114 = arith.constant dense<0.000000e+00> : vector<16xf32>
    %332 = vector.multi_reduction <add>, %331, %cst_114 [1] : vector<16x64xf32> to vector<16xf32>
    %333 = vector.shape_cast %332 : vector<16xf32> to vector<16x1xf32>
    %cst_115 = arith.constant 6.400000e+01 : f32
    %334 = vector.broadcast %cst_115 : f32 to vector<16x1xf32>
    %335 = arith.divf %333, %334 : vector<16x1xf32>
    %cst_116 = arith.constant 9.99999997E-7 : f32
    %336 = vector.broadcast %cst_116 : f32 to vector<16x1xf32>
    %337 = arith.addf %335, %336 : vector<16x1xf32>
    %338 = math.rsqrt %337 : vector<16x1xf32>
    %339 = vector.broadcast %338 : vector<16x1xf32> to vector<16x64xf32>
    %340 = arith.mulf %329, %339 : vector<16x64xf32>
    %341 = vector.broadcast %330 : vector<1x64xf32> to vector<16x64xf32>
    %342 = arith.mulf %340, %341 : vector<16x64xf32>
    %c1_117 = arith.constant 1 : index
    %c0_118 = arith.constant 0 : index
    %c0_119 = arith.constant 0 : index
    %343 = vector.load %arg8[%c1_117, %c0_118, %c0_119] : memref<3x64x256xf32, #tpu.memory_space<vmem>>, vector<1x64x256xf32>
    %344 = vector.shape_cast %343 : vector<1x64x256xf32> to vector<64x256xf32>
    %cst_120 = arith.constant dense<0.000000e+00> : vector<16x256xf32>
    %345 = tpu.matmul %342, %344, %cst_120 {dimension_numbers = #tpu.dot_dimension_numbers<[1], [0], [0], [1], [0, 0, 1, 1], [], []>} : vector<16x64xf32>, vector<64x256xf32>, vector<16x256xf32> -> vector<16x256xf32>
    %346 = vector.extract_strided_slice %345 {offsets = [0, 0], sizes = [16, 128], strides = [1, 1]} : vector<16x256xf32> to vector<16x128xf32>
    %347 = vector.extract_strided_slice %345 {offsets = [0, 128], sizes = [16, 128], strides = [1, 1]} : vector<16x256xf32> to vector<16x128xf32>
    %348 = arith.negf %346 : vector<16x128xf32>
    %349 = math.exp %348 : vector<16x128xf32>
    %cst_121 = arith.constant 1.000000e+00 : f32
    %350 = vector.broadcast %cst_121 : f32 to vector<16x128xf32>
    %351 = arith.addf %350, %349 : vector<16x128xf32>
    %352 = arith.divf %350, %351 : vector<16x128xf32>
    %353 = arith.mulf %346, %352 : vector<16x128xf32>
    %354 = arith.mulf %353, %347 : vector<16x128xf32>
    %c1_122 = arith.constant 1 : index
    %c0_123 = arith.constant 0 : index
    %c0_124 = arith.constant 0 : index
    %355 = vector.load %arg9[%c1_122, %c0_123, %c0_124] : memref<3x128x64xf32, #tpu.memory_space<vmem>>, vector<1x128x64xf32>
    %356 = vector.shape_cast %355 : vector<1x128x64xf32> to vector<128x64xf32>
    %cst_125 = arith.constant dense<0.000000e+00> : vector<16x64xf32>
    %357 = tpu.matmul %354, %356, %cst_125 {dimension_numbers = #tpu.dot_dimension_numbers<[1], [0], [0], [1], [0, 0, 1, 1], [], []>} : vector<16x128xf32>, vector<128x64xf32>, vector<16x64xf32> -> vector<16x64xf32>
    %358 = arith.addf %329, %357 : vector<16x64xf32>
    %359 = vector.extract_strided_slice %4 {offsets = [4, 0], sizes = [1, 64], strides = [1, 1]} : vector<8x64xf32> to vector<1x64xf32>
    %360 = arith.mulf %358, %358 : vector<16x64xf32>
    %cst_126 = arith.constant dense<0.000000e+00> : vector<16xf32>
    %361 = vector.multi_reduction <add>, %360, %cst_126 [1] : vector<16x64xf32> to vector<16xf32>
    %362 = vector.shape_cast %361 : vector<16xf32> to vector<16x1xf32>
    %cst_127 = arith.constant 6.400000e+01 : f32
    %363 = vector.broadcast %cst_127 : f32 to vector<16x1xf32>
    %364 = arith.divf %362, %363 : vector<16x1xf32>
    %cst_128 = arith.constant 9.99999997E-7 : f32
    %365 = vector.broadcast %cst_128 : f32 to vector<16x1xf32>
    %366 = arith.addf %364, %365 : vector<16x1xf32>
    %367 = math.rsqrt %366 : vector<16x1xf32>
    %368 = vector.broadcast %367 : vector<16x1xf32> to vector<16x64xf32>
    %369 = arith.mulf %358, %368 : vector<16x64xf32>
    %370 = vector.broadcast %359 : vector<1x64xf32> to vector<16x64xf32>
    %371 = arith.mulf %369, %370 : vector<16x64xf32>
    %c2 = arith.constant 2 : index
    %c0_129 = arith.constant 0 : index
    %c0_130 = arith.constant 0 : index
    %372 = vector.load %arg6[%c2, %c0_129, %c0_130] : memref<3x64x320xf32, #tpu.memory_space<vmem>>, vector<1x64x320xf32>
    %373 = vector.shape_cast %372 : vector<1x64x320xf32> to vector<64x320xf32>
    %cst_131 = arith.constant dense<0.000000e+00> : vector<16x320xf32>
    %374 = tpu.matmul %371, %373, %cst_131 {dimension_numbers = #tpu.dot_dimension_numbers<[1], [0], [0], [1], [0, 0, 1, 1], [], []>} : vector<16x64xf32>, vector<64x320xf32>, vector<16x320xf32> -> vector<16x320xf32>
    %375 = vector.extract_strided_slice %374 {offsets = [0, 0], sizes = [16, 128], strides = [1, 1]} : vector<16x320xf32> to vector<16x128xf32>
    %376 = arith.mulf %375, %2 : vector<16x128xf32>
    %377 = vector.extract_strided_slice %374 {offsets = [0, 128], sizes = [16, 128], strides = [1, 1]} : vector<16x320xf32> to vector<16x128xf32>
    %378 = arith.mulf %377, %3 : vector<16x128xf32>
    %379 = arith.addf %376, %378 : vector<16x128xf32>
    %380 = vector.extract_strided_slice %374 {offsets = [0, 256], sizes = [16, 64], strides = [1, 1]} : vector<16x320xf32> to vector<16x64xf32>
    %c2_132 = arith.constant 2 : index
    %c0_133 = arith.constant 0 : index
    %c0_134 = arith.constant 0 : index
    %381 = vector.load %arg7[%c2_132, %c0_133, %c0_134] : memref<3x64x64xf32, #tpu.memory_space<vmem>>, vector<1x64x64xf32>
    %382 = vector.shape_cast %381 : vector<1x64x64xf32> to vector<64x64xf32>
    %c0_135 = arith.constant 0 : index
    %c0_136 = arith.constant 0 : index
    %c0_137 = arith.constant 0 : index
    %383 = vector.load %arg4[%c0_135, %c0_136, %c0_137] : memref<2x1x8xf32, #tpu.memory_space<vmem>>, vector<1x1x8xf32>
    %384 = vector.shape_cast %383 : vector<1x1x8xf32> to vector<1x8xf32>
    %385 = vector.extract_strided_slice %379 {offsets = [0, 0], sizes = [8, 16], strides = [1, 1]} : vector<16x128xf32> to vector<8x16xf32>
    %386 = vector.extract_strided_slice %379 {offsets = [0, 64], sizes = [8, 16], strides = [1, 1]} : vector<16x128xf32> to vector<8x16xf32>
    %387 = vector.extract_strided_slice %380 {offsets = [0, 0], sizes = [8, 16], strides = [1, 1]} : vector<16x64xf32> to vector<8x16xf32>
    %cst_138 = arith.constant dense<0.000000e+00> : vector<8x8xf32>
    %388 = tpu.matmul %385, %386, %cst_138 {dimension_numbers = #tpu.dot_dimension_numbers<[1], [1], [0], [0], [0, 0, 1, 0], [], []>} : vector<8x16xf32>, vector<8x16xf32>, vector<8x8xf32> -> vector<8x8xf32>
    %389 = vector.broadcast %384 : vector<1x8xf32> to vector<8x8xf32>
    %390 = arith.addf %388, %389 : vector<8x8xf32>
    %391 = math.exp %390 : vector<8x8xf32>
    %cst_139 = arith.constant dense<0.000000e+00> : vector<8xf32>
    %392 = vector.multi_reduction <add>, %391, %cst_139 [1] : vector<8x8xf32> to vector<8xf32>
    %393 = vector.shape_cast %392 : vector<8xf32> to vector<8x1xf32>
    %394 = vector.broadcast %393 : vector<8x1xf32> to vector<8x8xf32>
    %395 = arith.divf %391, %394 : vector<8x8xf32>
    %cst_140 = arith.constant dense<0.000000e+00> : vector<8x16xf32>
    %396 = tpu.matmul %395, %387, %cst_140 {dimension_numbers = #tpu.dot_dimension_numbers<[1], [0], [0], [1], [0, 0, 1, 1], [], []>} : vector<8x8xf32>, vector<8x16xf32>, vector<8x16xf32> -> vector<8x16xf32>
    %397 = vector.extract_strided_slice %382 {offsets = [0, 0], sizes = [16, 64], strides = [1, 1]} : vector<64x64xf32> to vector<16x64xf32>
    %cst_141 = arith.constant dense<0.000000e+00> : vector<8x64xf32>
    %398 = tpu.matmul %396, %397, %cst_141 {dimension_numbers = #tpu.dot_dimension_numbers<[1], [0], [0], [1], [0, 0, 1, 1], [], []>} : vector<8x16xf32>, vector<16x64xf32>, vector<8x64xf32> -> vector<8x64xf32>
    %399 = vector.extract_strided_slice %379 {offsets = [0, 16], sizes = [8, 16], strides = [1, 1]} : vector<16x128xf32> to vector<8x16xf32>
    %400 = vector.extract_strided_slice %379 {offsets = [0, 80], sizes = [8, 16], strides = [1, 1]} : vector<16x128xf32> to vector<8x16xf32>
    %401 = vector.extract_strided_slice %380 {offsets = [0, 16], sizes = [8, 16], strides = [1, 1]} : vector<16x64xf32> to vector<8x16xf32>
    %cst_142 = arith.constant dense<0.000000e+00> : vector<8x8xf32>
    %402 = tpu.matmul %399, %400, %cst_142 {dimension_numbers = #tpu.dot_dimension_numbers<[1], [1], [0], [0], [0, 0, 1, 0], [], []>} : vector<8x16xf32>, vector<8x16xf32>, vector<8x8xf32> -> vector<8x8xf32>
    %403 = vector.broadcast %384 : vector<1x8xf32> to vector<8x8xf32>
    %404 = arith.addf %402, %403 : vector<8x8xf32>
    %405 = math.exp %404 : vector<8x8xf32>
    %cst_143 = arith.constant dense<0.000000e+00> : vector<8xf32>
    %406 = vector.multi_reduction <add>, %405, %cst_143 [1] : vector<8x8xf32> to vector<8xf32>
    %407 = vector.shape_cast %406 : vector<8xf32> to vector<8x1xf32>
    %408 = vector.broadcast %407 : vector<8x1xf32> to vector<8x8xf32>
    %409 = arith.divf %405, %408 : vector<8x8xf32>
    %cst_144 = arith.constant dense<0.000000e+00> : vector<8x16xf32>
    %410 = tpu.matmul %409, %401, %cst_144 {dimension_numbers = #tpu.dot_dimension_numbers<[1], [0], [0], [1], [0, 0, 1, 1], [], []>} : vector<8x8xf32>, vector<8x16xf32>, vector<8x16xf32> -> vector<8x16xf32>
    %411 = vector.extract_strided_slice %382 {offsets = [16, 0], sizes = [16, 64], strides = [1, 1]} : vector<64x64xf32> to vector<16x64xf32>
    %cst_145 = arith.constant dense<0.000000e+00> : vector<8x64xf32>
    %412 = tpu.matmul %410, %411, %cst_145 {dimension_numbers = #tpu.dot_dimension_numbers<[1], [0], [0], [1], [0, 0, 1, 1], [], []>} : vector<8x16xf32>, vector<16x64xf32>, vector<8x64xf32> -> vector<8x64xf32>
    %413 = arith.addf %398, %412 : vector<8x64xf32>
    %414 = vector.extract_strided_slice %379 {offsets = [0, 32], sizes = [8, 16], strides = [1, 1]} : vector<16x128xf32> to vector<8x16xf32>
    %415 = vector.extract_strided_slice %379 {offsets = [0, 96], sizes = [8, 16], strides = [1, 1]} : vector<16x128xf32> to vector<8x16xf32>
    %416 = vector.extract_strided_slice %380 {offsets = [0, 32], sizes = [8, 16], strides = [1, 1]} : vector<16x64xf32> to vector<8x16xf32>
    %cst_146 = arith.constant dense<0.000000e+00> : vector<8x8xf32>
    %417 = tpu.matmul %414, %415, %cst_146 {dimension_numbers = #tpu.dot_dimension_numbers<[1], [1], [0], [0], [0, 0, 1, 0], [], []>} : vector<8x16xf32>, vector<8x16xf32>, vector<8x8xf32> -> vector<8x8xf32>
    %418 = vector.broadcast %384 : vector<1x8xf32> to vector<8x8xf32>
    %419 = arith.addf %417, %418 : vector<8x8xf32>
    %420 = math.exp %419 : vector<8x8xf32>
    %cst_147 = arith.constant dense<0.000000e+00> : vector<8xf32>
    %421 = vector.multi_reduction <add>, %420, %cst_147 [1] : vector<8x8xf32> to vector<8xf32>
    %422 = vector.shape_cast %421 : vector<8xf32> to vector<8x1xf32>
    %423 = vector.broadcast %422 : vector<8x1xf32> to vector<8x8xf32>
    %424 = arith.divf %420, %423 : vector<8x8xf32>
    %cst_148 = arith.constant dense<0.000000e+00> : vector<8x16xf32>
    %425 = tpu.matmul %424, %416, %cst_148 {dimension_numbers = #tpu.dot_dimension_numbers<[1], [0], [0], [1], [0, 0, 1, 1], [], []>} : vector<8x8xf32>, vector<8x16xf32>, vector<8x16xf32> -> vector<8x16xf32>
    %426 = vector.extract_strided_slice %382 {offsets = [32, 0], sizes = [16, 64], strides = [1, 1]} : vector<64x64xf32> to vector<16x64xf32>
    %cst_149 = arith.constant dense<0.000000e+00> : vector<8x64xf32>
    %427 = tpu.matmul %425, %426, %cst_149 {dimension_numbers = #tpu.dot_dimension_numbers<[1], [0], [0], [1], [0, 0, 1, 1], [], []>} : vector<8x16xf32>, vector<16x64xf32>, vector<8x64xf32> -> vector<8x64xf32>
    %428 = arith.addf %413, %427 : vector<8x64xf32>
    %429 = vector.extract_strided_slice %379 {offsets = [0, 48], sizes = [8, 16], strides = [1, 1]} : vector<16x128xf32> to vector<8x16xf32>
    %430 = vector.extract_strided_slice %379 {offsets = [0, 112], sizes = [8, 16], strides = [1, 1]} : vector<16x128xf32> to vector<8x16xf32>
    %431 = vector.extract_strided_slice %380 {offsets = [0, 48], sizes = [8, 16], strides = [1, 1]} : vector<16x64xf32> to vector<8x16xf32>
    %cst_150 = arith.constant dense<0.000000e+00> : vector<8x8xf32>
    %432 = tpu.matmul %429, %430, %cst_150 {dimension_numbers = #tpu.dot_dimension_numbers<[1], [1], [0], [0], [0, 0, 1, 0], [], []>} : vector<8x16xf32>, vector<8x16xf32>, vector<8x8xf32> -> vector<8x8xf32>
    %433 = vector.broadcast %384 : vector<1x8xf32> to vector<8x8xf32>
    %434 = arith.addf %432, %433 : vector<8x8xf32>
    %435 = math.exp %434 : vector<8x8xf32>
    %cst_151 = arith.constant dense<0.000000e+00> : vector<8xf32>
    %436 = vector.multi_reduction <add>, %435, %cst_151 [1] : vector<8x8xf32> to vector<8xf32>
    %437 = vector.shape_cast %436 : vector<8xf32> to vector<8x1xf32>
    %438 = vector.broadcast %437 : vector<8x1xf32> to vector<8x8xf32>
    %439 = arith.divf %435, %438 : vector<8x8xf32>
    %cst_152 = arith.constant dense<0.000000e+00> : vector<8x16xf32>
    %440 = tpu.matmul %439, %431, %cst_152 {dimension_numbers = #tpu.dot_dimension_numbers<[1], [0], [0], [1], [0, 0, 1, 1], [], []>} : vector<8x8xf32>, vector<8x16xf32>, vector<8x16xf32> -> vector<8x16xf32>
    %441 = vector.extract_strided_slice %382 {offsets = [48, 0], sizes = [16, 64], strides = [1, 1]} : vector<64x64xf32> to vector<16x64xf32>
    %cst_153 = arith.constant dense<0.000000e+00> : vector<8x64xf32>
    %442 = tpu.matmul %440, %441, %cst_153 {dimension_numbers = #tpu.dot_dimension_numbers<[1], [0], [0], [1], [0, 0, 1, 1], [], []>} : vector<8x16xf32>, vector<16x64xf32>, vector<8x64xf32> -> vector<8x64xf32>
    %443 = arith.addf %428, %442 : vector<8x64xf32>
    %c1_154 = arith.constant 1 : index
    %c0_155 = arith.constant 0 : index
    %c0_156 = arith.constant 0 : index
    %444 = vector.load %arg4[%c1_154, %c0_155, %c0_156] : memref<2x1x8xf32, #tpu.memory_space<vmem>>, vector<1x1x8xf32>
    %445 = vector.shape_cast %444 : vector<1x1x8xf32> to vector<1x8xf32>
    %446 = vector.extract_strided_slice %379 {offsets = [8, 0], sizes = [8, 16], strides = [1, 1]} : vector<16x128xf32> to vector<8x16xf32>
    %447 = vector.extract_strided_slice %379 {offsets = [8, 64], sizes = [8, 16], strides = [1, 1]} : vector<16x128xf32> to vector<8x16xf32>
    %448 = vector.extract_strided_slice %380 {offsets = [8, 0], sizes = [8, 16], strides = [1, 1]} : vector<16x64xf32> to vector<8x16xf32>
    %cst_157 = arith.constant dense<0.000000e+00> : vector<8x8xf32>
    %449 = tpu.matmul %446, %447, %cst_157 {dimension_numbers = #tpu.dot_dimension_numbers<[1], [1], [0], [0], [0, 0, 1, 0], [], []>} : vector<8x16xf32>, vector<8x16xf32>, vector<8x8xf32> -> vector<8x8xf32>
    %450 = vector.broadcast %445 : vector<1x8xf32> to vector<8x8xf32>
    %451 = arith.addf %449, %450 : vector<8x8xf32>
    %452 = math.exp %451 : vector<8x8xf32>
    %cst_158 = arith.constant dense<0.000000e+00> : vector<8xf32>
    %453 = vector.multi_reduction <add>, %452, %cst_158 [1] : vector<8x8xf32> to vector<8xf32>
    %454 = vector.shape_cast %453 : vector<8xf32> to vector<8x1xf32>
    %455 = vector.broadcast %454 : vector<8x1xf32> to vector<8x8xf32>
    %456 = arith.divf %452, %455 : vector<8x8xf32>
    %cst_159 = arith.constant dense<0.000000e+00> : vector<8x16xf32>
    %457 = tpu.matmul %456, %448, %cst_159 {dimension_numbers = #tpu.dot_dimension_numbers<[1], [0], [0], [1], [0, 0, 1, 1], [], []>} : vector<8x8xf32>, vector<8x16xf32>, vector<8x16xf32> -> vector<8x16xf32>
    %458 = vector.extract_strided_slice %382 {offsets = [0, 0], sizes = [16, 64], strides = [1, 1]} : vector<64x64xf32> to vector<16x64xf32>
    %cst_160 = arith.constant dense<0.000000e+00> : vector<8x64xf32>
    %459 = tpu.matmul %457, %458, %cst_160 {dimension_numbers = #tpu.dot_dimension_numbers<[1], [0], [0], [1], [0, 0, 1, 1], [], []>} : vector<8x16xf32>, vector<16x64xf32>, vector<8x64xf32> -> vector<8x64xf32>
    %460 = vector.extract_strided_slice %379 {offsets = [8, 16], sizes = [8, 16], strides = [1, 1]} : vector<16x128xf32> to vector<8x16xf32>
    %461 = vector.extract_strided_slice %379 {offsets = [8, 80], sizes = [8, 16], strides = [1, 1]} : vector<16x128xf32> to vector<8x16xf32>
    %462 = vector.extract_strided_slice %380 {offsets = [8, 16], sizes = [8, 16], strides = [1, 1]} : vector<16x64xf32> to vector<8x16xf32>
    %cst_161 = arith.constant dense<0.000000e+00> : vector<8x8xf32>
    %463 = tpu.matmul %460, %461, %cst_161 {dimension_numbers = #tpu.dot_dimension_numbers<[1], [1], [0], [0], [0, 0, 1, 0], [], []>} : vector<8x16xf32>, vector<8x16xf32>, vector<8x8xf32> -> vector<8x8xf32>
    %464 = vector.broadcast %445 : vector<1x8xf32> to vector<8x8xf32>
    %465 = arith.addf %463, %464 : vector<8x8xf32>
    %466 = math.exp %465 : vector<8x8xf32>
    %cst_162 = arith.constant dense<0.000000e+00> : vector<8xf32>
    %467 = vector.multi_reduction <add>, %466, %cst_162 [1] : vector<8x8xf32> to vector<8xf32>
    %468 = vector.shape_cast %467 : vector<8xf32> to vector<8x1xf32>
    %469 = vector.broadcast %468 : vector<8x1xf32> to vector<8x8xf32>
    %470 = arith.divf %466, %469 : vector<8x8xf32>
    %cst_163 = arith.constant dense<0.000000e+00> : vector<8x16xf32>
    %471 = tpu.matmul %470, %462, %cst_163 {dimension_numbers = #tpu.dot_dimension_numbers<[1], [0], [0], [1], [0, 0, 1, 1], [], []>} : vector<8x8xf32>, vector<8x16xf32>, vector<8x16xf32> -> vector<8x16xf32>
    %472 = vector.extract_strided_slice %382 {offsets = [16, 0], sizes = [16, 64], strides = [1, 1]} : vector<64x64xf32> to vector<16x64xf32>
    %cst_164 = arith.constant dense<0.000000e+00> : vector<8x64xf32>
    %473 = tpu.matmul %471, %472, %cst_164 {dimension_numbers = #tpu.dot_dimension_numbers<[1], [0], [0], [1], [0, 0, 1, 1], [], []>} : vector<8x16xf32>, vector<16x64xf32>, vector<8x64xf32> -> vector<8x64xf32>
    %474 = arith.addf %459, %473 : vector<8x64xf32>
    %475 = vector.extract_strided_slice %379 {offsets = [8, 32], sizes = [8, 16], strides = [1, 1]} : vector<16x128xf32> to vector<8x16xf32>
    %476 = vector.extract_strided_slice %379 {offsets = [8, 96], sizes = [8, 16], strides = [1, 1]} : vector<16x128xf32> to vector<8x16xf32>
    %477 = vector.extract_strided_slice %380 {offsets = [8, 32], sizes = [8, 16], strides = [1, 1]} : vector<16x64xf32> to vector<8x16xf32>
    %cst_165 = arith.constant dense<0.000000e+00> : vector<8x8xf32>
    %478 = tpu.matmul %475, %476, %cst_165 {dimension_numbers = #tpu.dot_dimension_numbers<[1], [1], [0], [0], [0, 0, 1, 0], [], []>} : vector<8x16xf32>, vector<8x16xf32>, vector<8x8xf32> -> vector<8x8xf32>
    %479 = vector.broadcast %445 : vector<1x8xf32> to vector<8x8xf32>
    %480 = arith.addf %478, %479 : vector<8x8xf32>
    %481 = math.exp %480 : vector<8x8xf32>
    %cst_166 = arith.constant dense<0.000000e+00> : vector<8xf32>
    %482 = vector.multi_reduction <add>, %481, %cst_166 [1] : vector<8x8xf32> to vector<8xf32>
    %483 = vector.shape_cast %482 : vector<8xf32> to vector<8x1xf32>
    %484 = vector.broadcast %483 : vector<8x1xf32> to vector<8x8xf32>
    %485 = arith.divf %481, %484 : vector<8x8xf32>
    %cst_167 = arith.constant dense<0.000000e+00> : vector<8x16xf32>
    %486 = tpu.matmul %485, %477, %cst_167 {dimension_numbers = #tpu.dot_dimension_numbers<[1], [0], [0], [1], [0, 0, 1, 1], [], []>} : vector<8x8xf32>, vector<8x16xf32>, vector<8x16xf32> -> vector<8x16xf32>
    %487 = vector.extract_strided_slice %382 {offsets = [32, 0], sizes = [16, 64], strides = [1, 1]} : vector<64x64xf32> to vector<16x64xf32>
    %cst_168 = arith.constant dense<0.000000e+00> : vector<8x64xf32>
    %488 = tpu.matmul %486, %487, %cst_168 {dimension_numbers = #tpu.dot_dimension_numbers<[1], [0], [0], [1], [0, 0, 1, 1], [], []>} : vector<8x16xf32>, vector<16x64xf32>, vector<8x64xf32> -> vector<8x64xf32>
    %489 = arith.addf %474, %488 : vector<8x64xf32>
    %490 = vector.extract_strided_slice %379 {offsets = [8, 48], sizes = [8, 16], strides = [1, 1]} : vector<16x128xf32> to vector<8x16xf32>
    %491 = vector.extract_strided_slice %379 {offsets = [8, 112], sizes = [8, 16], strides = [1, 1]} : vector<16x128xf32> to vector<8x16xf32>
    %492 = vector.extract_strided_slice %380 {offsets = [8, 48], sizes = [8, 16], strides = [1, 1]} : vector<16x64xf32> to vector<8x16xf32>
    %cst_169 = arith.constant dense<0.000000e+00> : vector<8x8xf32>
    %493 = tpu.matmul %490, %491, %cst_169 {dimension_numbers = #tpu.dot_dimension_numbers<[1], [1], [0], [0], [0, 0, 1, 0], [], []>} : vector<8x16xf32>, vector<8x16xf32>, vector<8x8xf32> -> vector<8x8xf32>
    %494 = vector.broadcast %445 : vector<1x8xf32> to vector<8x8xf32>
    %495 = arith.addf %493, %494 : vector<8x8xf32>
    %496 = math.exp %495 : vector<8x8xf32>
    %cst_170 = arith.constant dense<0.000000e+00> : vector<8xf32>
    %497 = vector.multi_reduction <add>, %496, %cst_170 [1] : vector<8x8xf32> to vector<8xf32>
    %498 = vector.shape_cast %497 : vector<8xf32> to vector<8x1xf32>
    %499 = vector.broadcast %498 : vector<8x1xf32> to vector<8x8xf32>
    %500 = arith.divf %496, %499 : vector<8x8xf32>
    %cst_171 = arith.constant dense<0.000000e+00> : vector<8x16xf32>
    %501 = tpu.matmul %500, %492, %cst_171 {dimension_numbers = #tpu.dot_dimension_numbers<[1], [0], [0], [1], [0, 0, 1, 1], [], []>} : vector<8x8xf32>, vector<8x16xf32>, vector<8x16xf32> -> vector<8x16xf32>
    %502 = vector.extract_strided_slice %382 {offsets = [48, 0], sizes = [16, 64], strides = [1, 1]} : vector<64x64xf32> to vector<16x64xf32>
    %cst_172 = arith.constant dense<0.000000e+00> : vector<8x64xf32>
    %503 = tpu.matmul %501, %502, %cst_172 {dimension_numbers = #tpu.dot_dimension_numbers<[1], [0], [0], [1], [0, 0, 1, 1], [], []>} : vector<8x16xf32>, vector<16x64xf32>, vector<8x64xf32> -> vector<8x64xf32>
    %504 = arith.addf %489, %503 : vector<8x64xf32>
    %505 = tpu.concatenate %443, %504 in 0 : vector<8x64xf32>, vector<8x64xf32> -> vector<16x64xf32>
    %506 = arith.addf %358, %505 : vector<16x64xf32>
    %507 = vector.extract_strided_slice %4 {offsets = [5, 0], sizes = [1, 64], strides = [1, 1]} : vector<8x64xf32> to vector<1x64xf32>
    %508 = arith.mulf %506, %506 : vector<16x64xf32>
    %cst_173 = arith.constant dense<0.000000e+00> : vector<16xf32>
    %509 = vector.multi_reduction <add>, %508, %cst_173 [1] : vector<16x64xf32> to vector<16xf32>
    %510 = vector.shape_cast %509 : vector<16xf32> to vector<16x1xf32>
    %cst_174 = arith.constant 6.400000e+01 : f32
    %511 = vector.broadcast %cst_174 : f32 to vector<16x1xf32>
    %512 = arith.divf %510, %511 : vector<16x1xf32>
    %cst_175 = arith.constant 9.99999997E-7 : f32
    %513 = vector.broadcast %cst_175 : f32 to vector<16x1xf32>
    %514 = arith.addf %512, %513 : vector<16x1xf32>
    %515 = math.rsqrt %514 : vector<16x1xf32>
    %516 = vector.broadcast %515 : vector<16x1xf32> to vector<16x64xf32>
    %517 = arith.mulf %506, %516 : vector<16x64xf32>
    %518 = vector.broadcast %507 : vector<1x64xf32> to vector<16x64xf32>
    %519 = arith.mulf %517, %518 : vector<16x64xf32>
    %c2_176 = arith.constant 2 : index
    %c0_177 = arith.constant 0 : index
    %c0_178 = arith.constant 0 : index
    %520 = vector.load %arg8[%c2_176, %c0_177, %c0_178] : memref<3x64x256xf32, #tpu.memory_space<vmem>>, vector<1x64x256xf32>
    %521 = vector.shape_cast %520 : vector<1x64x256xf32> to vector<64x256xf32>
    %cst_179 = arith.constant dense<0.000000e+00> : vector<16x256xf32>
    %522 = tpu.matmul %519, %521, %cst_179 {dimension_numbers = #tpu.dot_dimension_numbers<[1], [0], [0], [1], [0, 0, 1, 1], [], []>} : vector<16x64xf32>, vector<64x256xf32>, vector<16x256xf32> -> vector<16x256xf32>
    %523 = vector.extract_strided_slice %522 {offsets = [0, 0], sizes = [16, 128], strides = [1, 1]} : vector<16x256xf32> to vector<16x128xf32>
    %524 = vector.extract_strided_slice %522 {offsets = [0, 128], sizes = [16, 128], strides = [1, 1]} : vector<16x256xf32> to vector<16x128xf32>
    %525 = arith.negf %523 : vector<16x128xf32>
    %526 = math.exp %525 : vector<16x128xf32>
    %cst_180 = arith.constant 1.000000e+00 : f32
    %527 = vector.broadcast %cst_180 : f32 to vector<16x128xf32>
    %528 = arith.addf %527, %526 : vector<16x128xf32>
    %529 = arith.divf %527, %528 : vector<16x128xf32>
    %530 = arith.mulf %523, %529 : vector<16x128xf32>
    %531 = arith.mulf %530, %524 : vector<16x128xf32>
    %c2_181 = arith.constant 2 : index
    %c0_182 = arith.constant 0 : index
    %c0_183 = arith.constant 0 : index
    %532 = vector.load %arg9[%c2_181, %c0_182, %c0_183] : memref<3x128x64xf32, #tpu.memory_space<vmem>>, vector<1x128x64xf32>
    %533 = vector.shape_cast %532 : vector<1x128x64xf32> to vector<128x64xf32>
    %cst_184 = arith.constant dense<0.000000e+00> : vector<16x64xf32>
    %534 = tpu.matmul %531, %533, %cst_184 {dimension_numbers = #tpu.dot_dimension_numbers<[1], [0], [0], [1], [0, 0, 1, 1], [], []>} : vector<16x128xf32>, vector<128x64xf32>, vector<16x64xf32> -> vector<16x64xf32>
    %535 = arith.addf %506, %534 : vector<16x64xf32>
    %536 = vector.extract_strided_slice %4 {offsets = [6, 0], sizes = [1, 64], strides = [1, 1]} : vector<8x64xf32> to vector<1x64xf32>
    %537 = arith.mulf %535, %535 : vector<16x64xf32>
    %cst_185 = arith.constant dense<0.000000e+00> : vector<16xf32>
    %538 = vector.multi_reduction <add>, %537, %cst_185 [1] : vector<16x64xf32> to vector<16xf32>
    %539 = vector.shape_cast %538 : vector<16xf32> to vector<16x1xf32>
    %cst_186 = arith.constant 6.400000e+01 : f32
    %540 = vector.broadcast %cst_186 : f32 to vector<16x1xf32>
    %541 = arith.divf %539, %540 : vector<16x1xf32>
    %cst_187 = arith.constant 9.99999997E-7 : f32
    %542 = vector.broadcast %cst_187 : f32 to vector<16x1xf32>
    %543 = arith.addf %541, %542 : vector<16x1xf32>
    %544 = math.rsqrt %543 : vector<16x1xf32>
    %545 = vector.broadcast %544 : vector<16x1xf32> to vector<16x64xf32>
    %546 = arith.mulf %535, %545 : vector<16x64xf32>
    %547 = vector.broadcast %536 : vector<1x64xf32> to vector<16x64xf32>
    %548 = arith.mulf %546, %547 : vector<16x64xf32>
    %549 = vector.shape_cast %548 : vector<16x64xf32> to vector<2x8x64xf32>
    %c0_188 = arith.constant 0 : index
    %c0_189 = arith.constant 0 : index
    %c0_190 = arith.constant 0 : index
    %550 = vector.load %arg10[%c0_188, %c0_189, %c0_190] : memref<2x8x64xf32, #tpu.memory_space<vmem>>, vector<2x8x64xf32>
    tpu.vector_store %arg10[%c0_188, %c0_189, %c0_190], %549 {strides = array<i32>} : memref<2x8x64xf32, #tpu.memory_space<vmem>>, vector<2x8x64xf32>,
    return
  }
  func.func @transform_0(%arg0: i32) -> (i32, i32, i32) {
    %c0_i32 = arith.constant 0 : i32
    %c0_i32_0 = arith.constant 0 : i32
    %c0_i32_1 = arith.constant 0 : i32
    return %arg0, %c0_i32, %c0_i32_0 : i32, i32, i32
  }
  func.func @transform_1(%arg0: i32) -> (i32, i32) {
    %c0_i32 = arith.constant 0 : i32
    %c0_i32_0 = arith.constant 0 : i32
    %c0_i32_1 = arith.constant 0 : i32
    return %c0_i32, %c0_i32_0 : i32, i32
  }
  func.func @transform_2(%arg0: i32) -> (i32, i32) {
    %c0_i32 = arith.constant 0 : i32
    %c0_i32_0 = arith.constant 0 : i32
    %c0_i32_1 = arith.constant 0 : i32
    return %c0_i32, %c0_i32_0 : i32, i32
  }
  func.func @transform_3(%arg0: i32) -> (i32, i32, i32) {
    %c0_i32 = arith.constant 0 : i32
    %c0_i32_0 = arith.constant 0 : i32
    %c0_i32_1 = arith.constant 0 : i32
    return %arg0, %c0_i32, %c0_i32_0 : i32, i32, i32
  }
  func.func @transform_4(%arg0: i32) -> (i32, i32) {
    %c0_i32 = arith.constant 0 : i32
    %c0_i32_0 = arith.constant 0 : i32
    %c0_i32_1 = arith.constant 0 : i32
    return %c0_i32, %c0_i32_0 : i32, i32
  }
  func.func @transform_5(%arg0: i32) -> (i32, i32, i32) {
    %c0_i32 = arith.constant 0 : i32
    %c0_i32_0 = arith.constant 0 : i32
    %c0_i32_1 = arith.constant 0 : i32
    %c0_i32_2 = arith.constant 0 : i32
    return %c0_i32, %c0_i32_0, %c0_i32_1 : i32, i32, i32
  }
  func.func @transform_6(%arg0: i32) -> (i32, i32, i32) {
    %c0_i32 = arith.constant 0 : i32
    %c0_i32_0 = arith.constant 0 : i32
    %c0_i32_1 = arith.constant 0 : i32
    %c0_i32_2 = arith.constant 0 : i32
    return %c0_i32, %c0_i32_0, %c0_i32_1 : i32, i32, i32
  }
  func.func @transform_7(%arg0: i32) -> (i32, i32, i32) {
    %c0_i32 = arith.constant 0 : i32
    %c0_i32_0 = arith.constant 0 : i32
    %c0_i32_1 = arith.constant 0 : i32
    %c0_i32_2 = arith.constant 0 : i32
    return %c0_i32, %c0_i32_0, %c0_i32_1 : i32, i32, i32
  }
  func.func @transform_8(%arg0: i32) -> (i32, i32, i32) {
    %c0_i32 = arith.constant 0 : i32
    %c0_i32_0 = arith.constant 0 : i32
    %c0_i32_1 = arith.constant 0 : i32
    %c0_i32_2 = arith.constant 0 : i32
    return %c0_i32, %c0_i32_0, %c0_i32_1 : i32, i32, i32
  }
  func.func @transform_9(%arg0: i32) -> (i32, i32, i32) {
    %c0_i32 = arith.constant 0 : i32
    %c0_i32_0 = arith.constant 0 : i32
    %c0_i32_1 = arith.constant 0 : i32
    return %arg0, %c0_i32, %c0_i32_0 : i32, i32, i32
  }
}

</mosaic_0001>

<llo_original>
// kernel: _lambda_.1
$region0: #{_lambda_.1}
  #allocation0 [shape = 'u32[]', space=smem, size = 0x4, offset = 0x4, fixed_abs, tag = 'smem constant byte address 0x4 - core index']
  #allocation1 [shape = 'u32[144,128]{1,0:T(1,128)}', space=vmem, size = 0x12000, scoped, tag = 'internal scratch']
  %s0 = inlined_call_operand.vmem [shape: f32[2,8,64], index: 0, kind: input, shape index: {}]
  %s1 = inlined_call_operand.vmem [shape: f32[16,128], index: 1, kind: input, shape index: {}]
  %s2 = inlined_call_operand.vmem [shape: f32[16,128], index: 2, kind: input, shape index: {}]
  %s3 = inlined_call_operand.vmem [shape: f32[2,1,8], index: 3, kind: input, shape index: {}]
  %s4 = inlined_call_operand.vmem [shape: f32[8,64], index: 4, kind: input, shape index: {}]
  %s5 = inlined_call_operand.hbm [shape: f32[3,64,320], index: 5, kind: input, shape index: {}]
  %s6 = inlined_call_operand.vmem [shape: f32[3,64,64], index: 6, kind: input, shape index: {}]
  %s7 = inlined_call_operand.hbm [shape: f32[3,64,256], index: 7, kind: input, shape index: {}]
  %s8 = inlined_call_operand.hbm [shape: f32[3,128,64], index: 8, kind: input, shape index: {}]
  %s9 = inlined_call_operand.hbm [shape: f32[2,8,64], index: 9, kind: output, shape index: {}]
  %s10 = sld [smem:[#allocation0]]
  $region58: #{_lambda_.1} parent=0
    _
  %s12 = ssub.s32 1, %s10
  %s13 = scalar_select 0, %s12, %s10
  $region1: #{_lambda_.1} parent=0
    #allocation2 [shape = 'u8[294912]{0}', space=vmem, size = 0x48000, scoped, tag = 'input window, operand 5, single buffered']
    #allocation3 [shape = 's32[1]{0}', space=sflag, size = 0x4, scoped, tag = 'scoped memory for _lambda_.1']
    #allocation4 [shape = 's32[1]{0}', space=sflag, size = 0x4, scoped, tag = 'scoped memory for _lambda_.1']
    #allocation5 [shape = 'u8[196608]{0}', space=vmem, size = 0x30000, scoped, tag = 'input window, operand 7, single buffered']
    #allocation6 [shape = 's32[1]{0}', space=sflag, size = 0x4, scoped, tag = 'scoped memory for _lambda_.1']
    #allocation7 [shape = 'u8[196608]{0}', space=vmem, size = 0x30000, scoped, tag = 'input window, operand 8, single buffered']
    #allocation8 [shape = 'u8[8192]{0}', space=vmem, size = 0x2000, scoped, tag = 'output window, operand 0, single buffered']
    %14 = vsyncpa [#allocation3], 0
    %15 = vsyncpa [#allocation6], 0
    %16 = vsyncpa [#allocation4], 0
    // Predicated region
    $region2: #{_lambda_.1} parent=1 // pred_check
      _
    $region3: #{_lambda_.1} parent=1 // pred_check_branch
      %18 = sbr.rel (0) target = $region5
    $region4: #{_lambda_.1} parent=1 // pred_region
      _
    $region5: #{_lambda_.1} parent=1 // pred_fallthru
      _
    // Predicated region
    $region6: #{_lambda_.1} parent=1 // pred_check
      _
    $region7: #{_lambda_.1} parent=1 // pred_check_branch
      %20 = sbr.rel (0) target = $region9
    $region8: #{_lambda_.1} parent=1 // pred_region
      _
    $region9: #{_lambda_.1} parent=1 // pred_fallthru
      _
    // Predicated region
    $region10: #{_lambda_.1} parent=1 // pred_check
      _
    $region11: #{_lambda_.1} parent=1 // pred_check_branch
      %22 = sbr.rel (0) target = $region13
    $region12: #{_lambda_.1} parent=1 // pred_region
      _
    $region13: #{_lambda_.1} parent=1 // pred_fallthru
      _
    // Predicated region
    $region14: #{_lambda_.1} parent=1 // pred_check
      _
    $region15: #{_lambda_.1} parent=1 // pred_check_branch
      %24 = sbr.rel (0) target = $region17
    $region16: #{_lambda_.1} parent=1 // pred_region
      _
    $region17: #{_lambda_.1} parent=1 // pred_fallthru
      _
    // Predicated region
    $region18: #{_lambda_.1} parent=1 // pred_check
      _
    $region19: #{_lambda_.1} parent=1 // pred_check_branch
      %26 = sbr.rel (0) target = $region21
    $region20: #{_lambda_.1} parent=1 // pred_region
      _
    $region21: #{_lambda_.1} parent=1 // pred_fallthru
      _
    // Predicated region
    $region22: #{_lambda_.1} parent=1 // pred_check
      _
    $region23: #{_lambda_.1} parent=1 // pred_check_branch
      %28 = sbr.rel (0) target = $region25
    $region24: #{_lambda_.1} parent=1 // pred_region
      %s30 = ssub.s32 9216, 9216
      %31 = vsyncadd [#allocation3], %s30
      %s32 = sshll.u32 [#allocation2], 4
      %s33 = int_to_ptr.vmem [resolvable:$true] %s32
      %38 = dma.hbm_to_vmem [thread:$0]  %s5, 9216, %s33, [#allocation3], 384, 384, 24
    $region25: #{_lambda_.1} parent=1 // pred_fallthru
      _
    // Predicated region
    $region26: #{_lambda_.1} parent=1 // pred_check
      _
    $region27: #{_lambda_.1} parent=1 // pred_check_branch
      %40 = sbr.rel (0) target = $region29
    $region28: #{_lambda_.1} parent=1 // pred_region
      _
    $region29: #{_lambda_.1} parent=1 // pred_fallthru
      _
    // Predicated region
    $region30: #{_lambda_.1} parent=1 // pred_check
      _
    $region31: #{_lambda_.1} parent=1 // pred_check_branch
      %42 = sbr.rel (0) target = $region33
    $region32: #{_lambda_.1} parent=1 // pred_region
      %s44 = ssub.s32 6144, 6144
      %45 = vsyncadd [#allocation6], %s44
      %s46 = sshll.u32 [#allocation5], 4
      %s47 = int_to_ptr.vmem [resolvable:$true] %s46
      %52 = dma.hbm_to_vmem [thread:$0]  %s7, 6144, %s47, [#allocation6], 256, 256, 16
    $region33: #{_lambda_.1} parent=1 // pred_fallthru
      _
    // Predicated region
    $region34: #{_lambda_.1} parent=1 // pred_check
      _
    $region35: #{_lambda_.1} parent=1 // pred_check_branch
      %54 = sbr.rel (0) target = $region37
    $region36: #{_lambda_.1} parent=1 // pred_region
      %s56 = ssub.s32 6144, 6144
      %57 = vsyncadd [#allocation6], %s56
      %s58 = sshll.u32 [#allocation7], 4
      %s59 = int_to_ptr.vmem [resolvable:$true] %s58
      %64 = dma.hbm_to_vmem [thread:$0]  %s8, 6144, %s59, [#allocation6], 128, 128, 8
    $region37: #{_lambda_.1} parent=1 // pred_fallthru
      _
    // Predicated region
    $region38: #{_lambda_.1} parent=1 // pred_check
      _
    $region39: #{_lambda_.1} parent=1 // pred_check_branch
      %66 = sbr.rel (0) target = $region41
    $region40: #{_lambda_.1} parent=1 // pred_region
      %67 = dma.done [#allocation3], 9216
    $region41: #{_lambda_.1} parent=1 // pred_fallthru
      _
    // Predicated region
    $region42: #{_lambda_.1} parent=1 // pred_check
      _
    $region43: #{_lambda_.1} parent=1 // pred_check_branch
      %69 = sbr.rel (0) target = $region45
    $region44: #{_lambda_.1} parent=1 // pred_region
      %70 = dma.done [#allocation6], 6144
    $region45: #{_lambda_.1} parent=1 // pred_fallthru
      _
    // Predicated region
    $region46: #{_lambda_.1} parent=1 // pred_check
      _
    $region47: #{_lambda_.1} parent=1 // pred_check_branch
      %72 = sbr.rel (0) target = $region49
    $region48: #{_lambda_.1} parent=1 // pred_region
      %73 = dma.done [#allocation6], 6144
    $region49: #{_lambda_.1} parent=1 // pred_fallthru
      _
    %v74 = vld [vmem:[%s0] sm:$0xff]
    %v75 = vld [vmem:[%s0 + $0x8] sm:$0xff]
    %v76 = vld [vmem:[%s1] sm:$0xff]
    %v77 = vld [vmem:[%s1 + $0x8] sm:$0xff]
    %v78 = vld [vmem:[%s2] sm:$0xff]
    %v79 = vld [vmem:[%s2 + $0x8] sm:$0xff]
    %v80 = vld [vmem:[%s4] sm:$0xff]
    %v81 = vmul.f32 %v74, %v74
    %v82 = vmul.f32 %v75, %v75
    %vm83 = vcmask 523264
    %v84 = vsel %vm83, %v81, 0.0
    %85 = vadd.xlane.f32.xlu0 %v84
    %v86 = vpop.xlane.xlu0 %85
    %v87 = vsel %vm83, %v82, 0.0
    %88 = vadd.xlane.f32.xlu0 %v87
    %v89 = vpop.xlane.xlu0 %88
    %v90 = vrcp.pop 64.0
    %v91 = vmul.f32 %v86, %v90
    %v92 = vmul.f32 %v89, %v90
    %v93 = vadd.f32 %v91, 1e-06
    %v94 = vadd.f32 %v92, 1e-06
    %v95 = vrsqrt.pop %v93
    %v96 = vrsqrt.pop %v94
    %v97 = vmul.f32 %v74, %v95
    %v98 = vmul.f32 %v75, %v96
    %v99 = vlaneseq
    %v100 = vshrl.u32 %v99, 7
    %v101 = vsub.s32 0, %v100
    %v102 = vrot.slane %v80, %v101
    %v103 = vmul.f32 %v97, %v102
    %v104 = vmul.f32 %v98, %v102
    %v105 = vld [vmem:[#allocation2] sm:$0xff]
    %v106 = vld [vmem:[#allocation2 + $0x8] sm:$0xff]
    %v107 = vld [vmem:[#allocation2 + $0x10] sm:$0xff]
    %v108 = vld [vmem:[#allocation2 + $0x18] sm:$0xff]
    %v109 = vld [vmem:[#allocation2 + $0x20] sm:$0xff]
    %v110 = vld [vmem:[#allocation2 + $0x28] sm:$0xff]
    %v111 = vld [vmem:[#allocation2 + $0x30] sm:$0xff]
    %v112 = vld [vmem:[#allocation2 + $0x38] sm:$0xff]
    %v113 = vld [vmem:[#allocation2 + $0x40] sm:$0xff]
    %v114 = vld [vmem:[#allocation2 + $0x48] sm:$0xff]
    %v115 = vld [vmem:[#allocation2 + $0x50] sm:$0xff]
    %v116 = vld [vmem:[#allocation2 + $0x58] sm:$0xff]
    %v117 = vld [vmem:[#allocation2 + $0x60] sm:$0xff]
    %v118 = vld [vmem:[#allocation2 + $0x68] sm:$0xff]
    %v119 = vld [vmem:[#allocation2 + $0x70] sm:$0xff]
    %v120 = vld [vmem:[#allocation2 + $0x78] sm:$0xff]
    %v121 = vld [vmem:[#allocation2 + $0x80] sm:$0xff]
    %v122 = vld [vmem:[#allocation2 + $0x88] sm:$0xff]
    %v123 = vld [vmem:[#allocation2 + $0x90] sm:$0xff]
    %v124 = vld [vmem:[#allocation2 + $0x98] sm:$0xff]
    %v125 = vld [vmem:[#allocation2 + $0xa0] sm:$0xff]
    %v126 = vld [vmem:[#allocation2 + $0xa8] sm:$0xff]
    %v127 = vld [vmem:[#allocation2 + $0xb0] sm:$0xff]
    %v128 = vld [vmem:[#allocation2 + $0xb8] sm:$0xff]
    %v130 = vsel %vm83, %v103, 0
    %v133 = vsel %vm83, %v104, 0
    %135 = vmatprep.subr.mxu0 %v106
    %136 = vmatpush1.msra.mxu0 %v105
    %137 = vmatprep.subr.mxu0 %v109
    %138 = vmatpush1.msra.mxu0 %v108
    %139 = vmatprep.subr.mxu0 %v112
    %140 = vmatpush1.msra.mxu0 %v111
    %141 = vmatprep.subr.mxu0 %v115
    %142 = vmatpush1.msra.mxu0 %v114
    %143 = vmatprep.subr.mxu0 %v118
    %144 = vmatpush1.msra.mxu0 %v117
    %145 = vmatprep.subr.mxu0 %v121
    %146 = vmatpush1.msra.mxu0 %v120
    %147 = vmatprep.subr.mxu0 %v124
    %148 = vmatpush1.msra.mxu0 %v123
    %149 = vmatprep.subr.mxu0 %v127
    %150 = vmatpush1.msra.mxu0 %v126
    %151 = vmatprep.subr.mxu0 0.0
    %152 = vmatpush1.msra.mxu0 0.0
    %153 = vmatprep.subr.mxu0 0.0
    %154 = vmatpush1.msra.mxu0 0.0
    %155 = vmatprep.subr.mxu0 0.0
    %156 = vmatpush1.msra.mxu0 0.0
    %157 = vmatprep.subr.mxu0 0.0
    %158 = vmatpush1.msra.mxu0 0.0
    %159 = vmatprep.subr.mxu0 0.0
    %160 = vmatpush1.msra.mxu0 0.0
    %161 = vmatprep.subr.mxu0 0.0
    %162 = vmatpush1.msra.mxu0 0.0
    %163 = vmatprep.subr.mxu0 0.0
    %164 = vmatpush1.msra.mxu0 0.0
    %165 = vmatprep.subr.mxu0 0.0
    %166 = vmatpush1.msra.mxu0 0.0
    %167 = vmatprep.subr.mxu0 0.0
    %168 = vmatpush1.msra.mxu0 0.0
    %169 = vmatprep.subr.mxu0 0.0
    %170 = vmatpush1.msra.mxu0 0.0
    %171 = vmatprep.subr.mxu0 0.0
    %172 = vmatpush1.msra.mxu0 0.0
    %173 = vmatprep.subr.mxu0 0.0
    %174 = vmatpush1.msra.mxu0 0.0
    %175 = vmatprep.subr.mxu0 0.0
    %176 = vmatpush1.msra.mxu0 0.0
    %177 = vmatprep.subr.mxu0 0.0
    %178 = vmatpush1.msra.mxu0 0.0
    %179 = vmatprep.subr.mxu0 0.0
    %180 = vmatpush1.msra.mxu0 0.0
    %181 = vmatprep.subr.mxu0 0.0
    %182 = vmatpush1.msra.mxu0 0.0
    %183 = vmatprep.subr.mxu0 0.0
    %184 = vmatpush1.msra.mxu0 0.0
    %185 = vmatprep.subr.mxu0 0.0
    %186 = vmatpush1.msra.mxu0 0.0
    %187 = vmatprep.subr.mxu0 0.0
    %188 = vmatpush1.msra.mxu0 0.0
    %189 = vmatprep.subr.mxu0 0.0
    %190 = vmatpush1.msra.mxu0 0.0
    %191 = vmatprep.subr.mxu0 0.0
    %192 = vmatpush1.msra.mxu0 0.0
    %193 = vmatprep.subr.mxu0 0.0
    %194 = vmatpush1.msra.mxu0 0.0
    %195 = vmatprep.subr.mxu0 0.0
    %196 = vmatpush1.msra.mxu0 0.0
    %197 = vmatprep.subr.mxu0 0.0
    %198 = vmatpush1.msra.mxu0 0.0
    %199 = vmatprep.mubr.f32.mxu0 0.0
    %200 = vmatmul.mubr.f32.gmra.mrb[0].mxu0 %v130
    %v201 = vpop.f32.mrb[0].mxu0
    %v202 = vadd.f32 0.0, %v201
    %v203 = vpop.f32.mrb[0].mxu0
    %v204 = vadd.f32 0.0, %v203
    %205 = vmatprep.mubr.f32.mxu0 0.0
    %206 = vmatmul.mubr.f32.gmra.mrb[0].mxu0 %v133
    %v207 = vpop.f32.mrb[0].mxu0
    %v208 = vadd.f32 0.0, %v207
    %v209 = vpop.f32.mrb[0].mxu0
    %v210 = vadd.f32 0.0, %v209
    %211 = vdwg.mxu0
    %212 = vmatprep.subr.mxu0 0.0
    %213 = vmatpush1.msra.mxu0 %v107
    %214 = vmatprep.subr.mxu0 0.0
    %215 = vmatpush1.msra.mxu0 %v110
    %216 = vmatprep.subr.mxu0 0.0
    %217 = vmatpush1.msra.mxu0 %v113
    %218 = vmatprep.subr.mxu0 0.0
    %219 = vmatpush1.msra.mxu0 %v116
    %220 = vmatprep.subr.mxu0 0.0
    %221 = vmatpush1.msra.mxu0 %v119
    %222 = vmatprep.subr.mxu0 0.0
    %223 = vmatpush1.msra.mxu0 %v122
    %224 = vmatprep.subr.mxu0 0.0
    %225 = vmatpush1.msra.mxu0 %v125
    %226 = vmatprep.subr.mxu0 0.0
    %227 = vmatpush1.msra.mxu0 %v128
    %228 = vmatprep.subr.mxu0 0.0
    %229 = vmatpush1.msra.mxu0 0.0
    %230 = vmatprep.subr.mxu0 0.0
    %231 = vmatpush1.msra.mxu0 0.0
    %232 = vmatprep.subr.mxu0 0.0
    %233 = vmatpush1.msra.mxu0 0.0
    %234 = vmatprep.subr.mxu0 0.0
    %235 = vmatpush1.msra.mxu0 0.0
    %236 = vmatprep.subr.mxu0 0.0
    %237 = vmatpush1.msra.mxu0 0.0
    %238 = vmatprep.subr.mxu0 0.0
    %239 = vmatpush1.msra.mxu0 0.0
    %240 = vmatprep.subr.mxu0 0.0
    %241 = vmatpush1.msra.mxu0 0.0
    %242 = vmatprep.subr.mxu0 0.0
    %243 = vmatpush1.msra.mxu0 0.0
    %244 = vmatprep.subr.mxu0 0.0
    %245 = vmatpush1.msra.mxu0 0.0
    %246 = vmatprep.subr.mxu0 0.0
    %247 = vmatpush1.msra.mxu0 0.0
    %248 = vmatprep.subr.mxu0 0.0
    %249 = vmatpush1.msra.mxu0 0.0
    %250 = vmatprep.subr.mxu0 0.0
    %251 = vmatpush1.msra.mxu0 0.0
    %252 = vmatprep.subr.mxu0 0.0
    %253 = vmatpush1.msra.mxu0 0.0
    %254 = vmatprep.subr.mxu0 0.0
    %255 = vmatpush1.msra.mxu0 0.0
    %256 = vmatprep.subr.mxu0 0.0
    %257 = vmatpush1.msra.mxu0 0.0
    %258 = vmatprep.subr.mxu0 0.0
    %259 = vmatpush1.msra.mxu0 0.0
    %260 = vmatprep.subr.mxu0 0.0
    %261 = vmatpush1.msra.mxu0 0.0
    %262 = vmatprep.subr.mxu0 0.0
    %263 = vmatpush1.msra.mxu0 0.0
    %264 = vmatprep.subr.mxu0 0.0
    %265 = vmatpush1.msra.mxu0 0.0
    %266 = vmatprep.subr.mxu0 0.0
    %267 = vmatpush1.msra.mxu0 0.0
    %268 = vmatprep.subr.mxu0 0.0
    %269 = vmatpush1.msra.mxu0 0.0
    %270 = vmatprep.subr.mxu0 0.0
    %271 = vmatpush1.msra.mxu0 0.0
    %272 = vmatprep.subr.mxu0 0.0
    %273 = vmatpush1.msra.mxu0 0.0
    %274 = vmatprep.subr.mxu0 0.0
    %275 = vmatpush1.msra.mxu0 0.0
    %276 = vmatprep.mubr.f32.mxu0 0.0
    %277 = vmatmul.mubr.f32.gmra.mrb[0].mxu0 %v130
    %v278 = vpop.f32.mrb[0].mxu0
    %v279 = vadd.f32 0.0, %v278
    %v280 = vpop.f32.mrb[0].mxu0
    %281 = vmatprep.mubr.f32.mxu0 0.0
    %282 = vmatmul.mubr.f32.gmra.mrb[0].mxu0 %v133
    %v283 = vpop.f32.mrb[0].mxu0
    %v284 = vadd.f32 0.0, %v283
    %v285 = vpop.f32.mrb[0].mxu0
    %286 = vdwg.mxu0
    %v287 = vmul.f32 %v202, %v76
    %v288 = vmul.f32 %v208, %v77
    %v289 = vmul.f32 %v204, %v78
    %v290 = vmul.f32 %v210, %v79
    %v291 = vadd.f32 %v287, %v289
    %v292 = vadd.f32 %v288, %v290
    %v293 = vld [vmem:[%s6] sm:$0xff]
    %v294 = vld [vmem:[%s6 + $0x8] sm:$0xff]
    %v295 = vld [vmem:[%s6 + $0x10] sm:$0xff]
    %v296 = vld [vmem:[%s6 + $0x18] sm:$0xff]
    %v297 = vld [vmem:[%s6 + $0x20] sm:$0xff]
    %v298 = vld [vmem:[%s6 + $0x28] sm:$0xff]
    %v299 = vld [vmem:[%s6 + $0x30] sm:$0xff]
    %v300 = vld [vmem:[%s6 + $0x38] sm:$0xff]
    %v301 = vld [vmem:[%s3] sm:$0x1]
    %v303 = vlaneseq
    %v304 = vshrl.u32 %v303, 7
    %v305 = vsub.s32 0, %v304
    %v306 = vrot.slane %v301, %v305
    %309 = vrot.lane.b32.xlu0 %v291, 64
    %v310 = vpop.permute.xlu0 %309
    %vm311 = vcmask 130048
    %v312 = vsel %vm311, %v291, 0
    %v314 = vsel %vm311, %v310, 0
    %316 = vmatprep.subr.mxu0 0.0
    %317 = vmatpush1.xpose.msra.mxu0 %v314
    %318 = vmatprep.subr.mxu0 0.0
    %319 = vmatpush1.xpose.msra.mxu0 0.0
    %320 = vmatprep.subr.mxu0 0.0
    %321 = vmatpush1.xpose.msra.mxu0 0.0
    %322 = vmatprep.subr.mxu0 0.0
    %323 = vmatpush1.xpose.msra.mxu0 0.0
    %324 = vmatprep.subr.mxu0 0.0
    %325 = vmatpush1.xpose.msra.mxu0 0.0
    %326 = vmatprep.subr.mxu0 0.0
    %327 = vmatpush1.xpose.msra.mxu0 0.0
    %328 = vmatprep.subr.mxu0 0.0
    %329 = vmatpush1.xpose.msra.mxu0 0.0
    %330 = vmatprep.subr.mxu0 0.0
    %331 = vmatpush1.xpose.msra.mxu0 0.0
    %332 = vmatprep.subr.mxu0 0.0
    %333 = vmatpush1.xpose.msra.mxu0 0.0
    %334 = vmatprep.subr.mxu0 0.0
    %335 = vmatpush1.xpose.msra.mxu0 0.0
    %336 = vmatprep.subr.mxu0 0.0
    %337 = vmatpush1.xpose.msra.mxu0 0.0
    %338 = vmatprep.subr.mxu0 0.0
    %339 = vmatpush1.xpose.msra.mxu0 0.0
    %340 = vmatprep.subr.mxu0 0.0
    %341 = vmatpush1.xpose.msra.mxu0 0.0
    %342 = vmatprep.subr.mxu0 0.0
    %343 = vmatpush1.xpose.msra.mxu0 0.0
    %344 = vmatprep.subr.mxu0 0.0
    %345 = vmatpush1.xpose.msra.mxu0 0.0
    %346 = vmatprep.subr.mxu0 0.0
    %347 = vmatpush1.xpose.msra.mxu0 0.0
    %348 = vmatprep.subr.mxu0 0.0
    %349 = vmatpush1.xpose.msra.mxu0 0.0
    %350 = vmatprep.subr.mxu0 0.0
    %351 = vmatpush1.xpose.msra.mxu0 0.0
    %352 = vmatprep.subr.mxu0 0.0
    %353 = vmatpush1.xpose.msra.mxu0 0.0
    %354 = vmatprep.subr.mxu0 0.0
    %355 = vmatpush1.xpose.msra.mxu0 0.0
    %356 = vmatprep.subr.mxu0 0.0
    %357 = vmatpush1.xpose.msra.mxu0 0.0
    %358 = vmatprep.subr.mxu0 0.0
    %359 = vmatpush1.xpose.msra.mxu0 0.0
    %360 = vmatprep.subr.mxu0 0.0
    %361 = vmatpush1.xpose.msra.mxu0 0.0
    %362 = vmatprep.subr.mxu0 0.0
    %363 = vmatpush1.xpose.msra.mxu0 0.0
    %364 = vmatprep.subr.mxu0 0.0
    %365 = vmatpush1.xpose.msra.mxu0 0.0
    %366 = vmatprep.subr.mxu0 0.0
    %367 = vmatpush1.xpose.msra.mxu0 0.0
    %368 = vmatprep.subr.mxu0 0.0
    %369 = vmatpush1.xpose.msra.mxu0 0.0
    %370 = vmatprep.subr.mxu0 0.0
    %371 = vmatpush1.xpose.msra.mxu0 0.0
    %372 = vmatprep.subr.mxu0 0.0
    %373 = vmatpush1.xpose.msra.mxu0 0.0
    %374 = vmatprep.subr.mxu0 0.0
    %375 = vmatpush1.xpose.msra.mxu0 0.0
    %376 = vmatprep.subr.mxu0 0.0
    %377 = vmatpush1.xpose.msra.mxu0 0.0
    %378 = vmatprep.subr.mxu0 0.0
    %379 = vmatpush1.xpose.msra.mxu0 0.0
    %380 = vmatprep.mubr.f32.mxu0 0.0
    %381 = vmatmul.mubr.f32.gmra.mrb[0].mxu0 %v312
    %v382 = vpop.f32.mrb[0].mxu0
    %v383 = vadd.f32 %v306, %v382
    %v384 = vpop.f32.mrb[0].mxu0
    %385 = vdwg.mxu0
    %v386 = vmul.f32 %v383, 1.442695
    %v387 = vpow.pop %v386
    %vm388 = vcmask 64512
    %v389 = vsel %vm388, %v387, 0.0
    %390 = vadd.xlane.f32.xlu0 %v389
    %v391 = vpop.xlane.xlu0 %390
    %v392 = vrcp.pop %v391
    %v393 = vmul.f32 %v387, %v392
    %v395 = vsel %vm388, %v393, 0
    %397 = vmatprep.subr.mxu0 0.0
    %398 = vmatpush1.msra.mxu0 %v279
    %399 = vmatprep.subr.mxu0 0.0
    %400 = vmatpush1.msra.mxu0 0.0
    %401 = vmatprep.subr.mxu0 0.0
    %402 = vmatpush1.msra.mxu0 0.0
    %403 = vmatprep.subr.mxu0 0.0
    %404 = vmatpush1.msra.mxu0 0.0
    %405 = vmatprep.subr.mxu0 0.0
    %406 = vmatpush1.msra.mxu0 0.0
    %407 = vmatprep.subr.mxu0 0.0
    %408 = vmatpush1.msra.mxu0 0.0
    %409 = vmatprep.subr.mxu0 0.0
    %410 = vmatpush1.msra.mxu0 0.0
    %411 = vmatprep.subr.mxu0 0.0
    %412 = vmatpush1.msra.mxu0 0.0
    %413 = vmatprep.subr.mxu0 0.0
    %414 = vmatpush1.msra.mxu0 0.0
    %415 = vmatprep.subr.mxu0 0.0
    %416 = vmatpush1.msra.mxu0 0.0
    %417 = vmatprep.subr.mxu0 0.0
    %418 = vmatpush1.msra.mxu0 0.0
    %419 = vmatprep.subr.mxu0 0.0
    %420 = vmatpush1.msra.mxu0 0.0
    %421 = vmatprep.subr.mxu0 0.0
    %422 = vmatpush1.msra.mxu0 0.0
    %423 = vmatprep.subr.mxu0 0.0
    %424 = vmatpush1.msra.mxu0 0.0
    %425 = vmatprep.subr.mxu0 0.0
    %426 = vmatpush1.msra.mxu0 0.0
    %427 = vmatprep.subr.mxu0 0.0
    %428 = vmatpush1.msra.mxu0 0.0
    %429 = vmatprep.subr.mxu0 0.0
    %430 = vmatpush1.msra.mxu0 0.0
    %431 = vmatprep.subr.mxu0 0.0
    %432 = vmatpush1.msra.mxu0 0.0
    %433 = vmatprep.subr.mxu0 0.0
    %434 = vmatpush1.msra.mxu0 0.0
    %435 = vmatprep.subr.mxu0 0.0
    %436 = vmatpush1.msra.mxu0 0.0
    %437 = vmatprep.subr.mxu0 0.0
    %438 = vmatpush1.msra.mxu0 0.0
    %439 = vmatprep.subr.mxu0 0.0
    %440 = vmatpush1.msra.mxu0 0.0
    %441 = vmatprep.subr.mxu0 0.0
    %442 = vmatpush1.msra.mxu0 0.0
    %443 = vmatprep.subr.mxu0 0.0
    %444 = vmatpush1.msra.mxu0 0.0
    %445 = vmatprep.subr.mxu0 0.0
    %446 = vmatpush1.msra.mxu0 0.0
    %447 = vmatprep.subr.mxu0 0.0
    %448 = vmatpush1.msra.mxu0 0.0
    %449 = vmatprep.subr.mxu0 0.0
    %450 = vmatpush1.msra.mxu0 0.0
    %451 = vmatprep.subr.mxu0 0.0
    %452 = vmatpush1.msra.mxu0 0.0
    %453 = vmatprep.subr.mxu0 0.0
    %454 = vmatpush1.msra.mxu0 0.0
    %455 = vmatprep.subr.mxu0 0.0
    %456 = vmatpush1.msra.mxu0 0.0
    %457 = vmatprep.subr.mxu0 0.0
    %458 = vmatpush1.msra.mxu0 0.0
    %459 = vmatprep.subr.mxu0 0.0
    %460 = vmatpush1.msra.mxu0 0.0
    %461 = vmatprep.mubr.f32.mxu0 0.0
    %462 = vmatmul.mubr.f32.gmra.mrb[0].mxu0 %v395
    %v463 = vpop.f32.mrb[0].mxu0
    %v464 = vadd.f32 0.0, %v463
    %v465 = vpop.f32.mrb[0].mxu0
    %466 = vdwg.mxu0
    %467 = vrot.lane.b32.xlu0 %v291, 112
    %v468 = vpop.permute.xlu0 %467
    %469 = vrot.lane.b32.xlu0 %v291, 48
    %v470 = vpop.permute.xlu0 %469
    %v471 = vsel %vm311, %v468, 0
    %v473 = vsel %vm311, %v470, 0
    %475 = vmatprep.subr.mxu0 0.0
    %476 = vmatpush1.xpose.msra.mxu0 %v473
    %477 = vmatprep.subr.mxu0 0.0
    %478 = vmatpush1.xpose.msra.mxu0 0.0
    %479 = vmatprep.subr.mxu0 0.0
    %480 = vmatpush1.xpose.msra.mxu0 0.0
    %481 = vmatprep.subr.mxu0 0.0
    %482 = vmatpush1.xpose.msra.mxu0 0.0
    %483 = vmatprep.subr.mxu0 0.0
    %484 = vmatpush1.xpose.msra.mxu0 0.0
    %485 = vmatprep.subr.mxu0 0.0
    %486 = vmatpush1.xpose.msra.mxu0 0.0
    %487 = vmatprep.subr.mxu0 0.0
    %488 = vmatpush1.xpose.msra.mxu0 0.0
    %489 = vmatprep.subr.mxu0 0.0
    %490 = vmatpush1.xpose.msra.mxu0 0.0
    %491 = vmatprep.subr.mxu0 0.0
    %492 = vmatpush1.xpose.msra.mxu0 0.0
    %493 = vmatprep.subr.mxu0 0.0
    %494 = vmatpush1.xpose.msra.mxu0 0.0
    %495 = vmatprep.subr.mxu0 0.0
    %496 = vmatpush1.xpose.msra.mxu0 0.0
    %497 = vmatprep.subr.mxu0 0.0
    %498 = vmatpush1.xpose.msra.mxu0 0.0
    %499 = vmatprep.subr.mxu0 0.0
    %500 = vmatpush1.xpose.msra.mxu0 0.0
    %501 = vmatprep.subr.mxu0 0.0
    %502 = vmatpush1.xpose.msra.mxu0 0.0
    %503 = vmatprep.subr.mxu0 0.0
    %504 = vmatpush1.xpose.msra.mxu0 0.0
    %505 = vmatprep.subr.mxu0 0.0
    %506 = vmatpush1.xpose.msra.mxu0 0.0
    %507 = vmatprep.subr.mxu0 0.0
    %508 = vmatpush1.xpose.msra.mxu0 0.0
    %509 = vmatprep.subr.mxu0 0.0
    %510 = vmatpush1.xpose.msra.mxu0 0.0
    %511 = vmatprep.subr.mxu0 0.0
    %512 = vmatpush1.xpose.msra.mxu0 0.0
    %513 = vmatprep.subr.mxu0 0.0
    %514 = vmatpush1.xpose.msra.mxu0 0.0
    %515 = vmatprep.subr.mxu0 0.0
    %516 = vmatpush1.xpose.msra.mxu0 0.0
    %517 = vmatprep.subr.mxu0 0.0
    %518 = vmatpush1.xpose.msra.mxu0 0.0
    %519 = vmatprep.subr.mxu0 0.0
    %520 = vmatpush1.xpose.msra.mxu0 0.0
    %521 = vmatprep.subr.mxu0 0.0
    %522 = vmatpush1.xpose.msra.mxu0 0.0
    %523 = vmatprep.subr.mxu0 0.0
    %524 = vmatpush1.xpose.msra.mxu0 0.0
    %525 = vmatprep.subr.mxu0 0.0
    %526 = vmatpush1.xpose.msra.mxu0 0.0
    %527 = vmatprep.subr.mxu0 0.0
    %528 = vmatpush1.xpose.msra.mxu0 0.0
    %529 = vmatprep.subr.mxu0 0.0
    %530 = vmatpush1.xpose.msra.mxu0 0.0
    %531 = vmatprep.subr.mxu0 0.0
    %532 = vmatpush1.xpose.msra.mxu0 0.0
    %533 = vmatprep.subr.mxu0 0.0
    %534 = vmatpush1.xpose.msra.mxu0 0.0
    %535 = vmatprep.subr.mxu0 0.0
    %536 = vmatpush1.xpose.msra.mxu0 0.0
    %537 = vmatprep.subr.mxu0 0.0
    %538 = vmatpush1.xpose.msra.mxu0 0.0
    %539 = vmatprep.mubr.f32.mxu0 0.0
    %540 = vmatmul.mubr.f32.gmra.mrb[0].mxu0 %v471
    %v541 = vpop.f32.mrb[0].mxu0
    %v542 = vadd.f32 %v306, %v541
    %v543 = vpop.f32.mrb[0].mxu0
    %544 = vdwg.mxu0
    %v545 = vmul.f32 %v542, 1.442695
    %v546 = vpow.pop %v545
    %v547 = vsel %vm388, %v546, 0.0
    %548 = vadd.xlane.f32.xlu0 %v547
    %v549 = vpop.xlane.xlu0 %548
    %v550 = vrcp.pop %v549
    %v551 = vmul.f32 %v546, %v550
    %553 = vrot.lane.b32.xlu0 %v279, 112
    %v554 = vpop.permute.xlu0 %553
    %v557 = vsel %vm388, %v551, 0
    %559 = vmatprep.subr.mxu0 0.0
    %560 = vmatpush1.msra.mxu0 %v554
    %561 = vmatprep.subr.mxu0 0.0
    %562 = vmatpush1.msra.mxu0 0.0
    %563 = vmatprep.subr.mxu0 0.0
    %564 = vmatpush1.msra.mxu0 0.0
    %565 = vmatprep.subr.mxu0 0.0
    %566 = vmatpush1.msra.mxu0 0.0
    %567 = vmatprep.subr.mxu0 0.0
    %568 = vmatpush1.msra.mxu0 0.0
    %569 = vmatprep.subr.mxu0 0.0
    %570 = vmatpush1.msra.mxu0 0.0
    %571 = vmatprep.subr.mxu0 0.0
    %572 = vmatpush1.msra.mxu0 0.0
    %573 = vmatprep.subr.mxu0 0.0
    %574 = vmatpush1.msra.mxu0 0.0
    %575 = vmatprep.subr.mxu0 0.0
    %576 = vmatpush1.msra.mxu0 0.0
    %577 = vmatprep.subr.mxu0 0.0
    %578 = vmatpush1.msra.mxu0 0.0
    %579 = vmatprep.subr.mxu0 0.0
    %580 = vmatpush1.msra.mxu0 0.0
    %581 = vmatprep.subr.mxu0 0.0
    %582 = vmatpush1.msra.mxu0 0.0
    %583 = vmatprep.subr.mxu0 0.0
    %584 = vmatpush1.msra.mxu0 0.0
    %585 = vmatprep.subr.mxu0 0.0
    %586 = vmatpush1.msra.mxu0 0.0
    %587 = vmatprep.subr.mxu0 0.0
    %588 = vmatpush1.msra.mxu0 0.0
    %589 = vmatprep.subr.mxu0 0.0
    %590 = vmatpush1.msra.mxu0 0.0
    %591 = vmatprep.subr.mxu0 0.0
    %592 = vmatpush1.msra.mxu0 0.0
    %593 = vmatprep.subr.mxu0 0.0
    %594 = vmatpush1.msra.mxu0 0.0
    %595 = vmatprep.subr.mxu0 0.0
    %596 = vmatpush1.msra.mxu0 0.0
    %597 = vmatprep.subr.mxu0 0.0
    %598 = vmatpush1.msra.mxu0 0.0
    %599 = vmatprep.subr.mxu0 0.0
    %600 = vmatpush1.msra.mxu0 0.0
    %601 = vmatprep.subr.mxu0 0.0
    %602 = vmatpush1.msra.mxu0 0.0
    %603 = vmatprep.subr.mxu0 0.0
    %604 = vmatpush1.msra.mxu0 0.0
    %605 = vmatprep.subr.mxu0 0.0
    %606 = vmatpush1.msra.mxu0 0.0
    %607 = vmatprep.subr.mxu0 0.0
    %608 = vmatpush1.msra.mxu0 0.0
    %609 = vmatprep.subr.mxu0 0.0
    %610 = vmatpush1.msra.mxu0 0.0
    %611 = vmatprep.subr.mxu0 0.0
    %612 = vmatpush1.msra.mxu0 0.0
    %613 = vmatprep.subr.mxu0 0.0
    %614 = vmatpush1.msra.mxu0 0.0
    %615 = vmatprep.subr.mxu0 0.0
    %616 = vmatpush1.msra.mxu0 0.0
    %617 = vmatprep.subr.mxu0 0.0
    %618 = vmatpush1.msra.mxu0 0.0
    %619 = vmatprep.subr.mxu0 0.0
    %620 = vmatpush1.msra.mxu0 0.0
    %621 = vmatprep.subr.mxu0 0.0
    %622 = vmatpush1.msra.mxu0 0.0
    %623 = vmatprep.mubr.f32.mxu0 0.0
    %624 = vmatmul.mubr.f32.gmra.mrb[0].mxu0 %v557
    %v625 = vpop.f32.mrb[0].mxu0
    %v626 = vadd.f32 0.0, %v625
    %v627 = vpop.f32.mrb[0].mxu0
    %628 = vdwg.mxu0
    %v630 = vsel %vm311, %v626, 0
    %632 = vmatprep.subr.mxu0 0.0
    %633 = vmatpush1.msra.mxu0 %v295
    %634 = vmatprep.subr.mxu0 0.0
    %635 = vmatpush1.msra.mxu0 %v296
    %636 = vmatprep.subr.mxu0 0.0
    %637 = vmatpush1.msra.mxu0 0.0
    %638 = vmatprep.subr.mxu0 0.0
    %639 = vmatpush1.msra.mxu0 0.0
    %640 = vmatprep.subr.mxu0 0.0
    %641 = vmatpush1.msra.mxu0 0.0
    %642 = vmatprep.subr.mxu0 0.0
    %643 = vmatpush1.msra.mxu0 0.0
    %644 = vmatprep.subr.mxu0 0.0
    %645 = vmatpush1.msra.mxu0 0.0
    %646 = vmatprep.subr.mxu0 0.0
    %647 = vmatpush1.msra.mxu0 0.0
    %648 = vmatprep.subr.mxu0 0.0
    %649 = vmatpush1.msra.mxu0 0.0
    %650 = vmatprep.subr.mxu0 0.0
    %651 = vmatpush1.msra.mxu0 0.0
    %652 = vmatprep.subr.mxu0 0.0
    %653 = vmatpush1.msra.mxu0 0.0
    %654 = vmatprep.subr.mxu0 0.0
    %655 = vmatpush1.msra.mxu0 0.0
    %656 = vmatprep.subr.mxu0 0.0
    %657 = vmatpush1.msra.mxu0 0.0
    %658 = vmatprep.subr.mxu0 0.0
    %659 = vmatpush1.msra.mxu0 0.0
    %660 = vmatprep.subr.mxu0 0.0
    %661 = vmatpush1.msra.mxu0 0.0
    %662 = vmatprep.subr.mxu0 0.0
    %663 = vmatpush1.msra.mxu0 0.0
    %664 = vmatprep.subr.mxu0 0.0
    %665 = vmatpush1.msra.mxu0 0.0
    %666 = vmatprep.subr.mxu0 0.0
    %667 = vmatpush1.msra.mxu0 0.0
    %668 = vmatprep.subr.mxu0 0.0
    %669 = vmatpush1.msra.mxu0 0.0
    %670 = vmatprep.subr.mxu0 0.0
    %671 = vmatpush1.msra.mxu0 0.0
    %672 = vmatprep.subr.mxu0 0.0
    %673 = vmatpush1.msra.mxu0 0.0
    %674 = vmatprep.subr.mxu0 0.0
    %675 = vmatpush1.msra.mxu0 0.0
    %676 = vmatprep.subr.mxu0 0.0
    %677 = vmatpush1.msra.mxu0 0.0
    %678 = vmatprep.subr.mxu0 0.0
    %679 = vmatpush1.msra.mxu0 0.0
    %680 = vmatprep.subr.mxu0 0.0
    %681 = vmatpush1.msra.mxu0 0.0
    %682 = vmatprep.subr.mxu0 0.0
    %683 = vmatpush1.msra.mxu0 0.0
    %684 = vmatprep.subr.mxu0 0.0
    %685 = vmatpush1.msra.mxu0 0.0
    %686 = vmatprep.subr.mxu0 0.0
    %687 = vmatpush1.msra.mxu0 0.0
    %688 = vmatprep.subr.mxu0 0.0
    %689 = vmatpush1.msra.mxu0 0.0
    %690 = vmatprep.subr.mxu0 0.0
    %691 = vmatpush1.msra.mxu0 0.0
    %692 = vmatprep.subr.mxu0 0.0
    %693 = vmatpush1.msra.mxu0 0.0
    %694 = vmatprep.subr.mxu0 0.0
    %695 = vmatpush1.msra.mxu0 0.0
    %696 = vmatprep.mubr.f32.mxu0 0.0
    %697 = vmatmul.mubr.f32.gmra.mrb[0].mxu0 %v630
    %v698 = vpop.f32.mrb[0].mxu0
    %v699 = vadd.f32 0.0, %v698
    %v700 = vpop.f32.mrb[0].mxu0
    %701 = vdwg.mxu0
    %v703 = vsel %vm311, %v464, 0
    %705 = vmatprep.subr.mxu0 0.0
    %706 = vmatpush1.msra.mxu0 %v293
    %707 = vmatprep.subr.mxu0 0.0
    %708 = vmatpush1.msra.mxu0 %v294
    %709 = vmatprep.subr.mxu0 0.0
    %710 = vmatpush1.msra.mxu0 0.0
    %711 = vmatprep.subr.mxu0 0.0
    %712 = vmatpush1.msra.mxu0 0.0
    %713 = vmatprep.subr.mxu0 0.0
    %714 = vmatpush1.msra.mxu0 0.0
    %715 = vmatprep.subr.mxu0 0.0
    %716 = vmatpush1.msra.mxu0 0.0
    %717 = vmatprep.subr.mxu0 0.0
    %718 = vmatpush1.msra.mxu0 0.0
    %719 = vmatprep.subr.mxu0 0.0
    %720 = vmatpush1.msra.mxu0 0.0
    %721 = vmatprep.subr.mxu0 0.0
    %722 = vmatpush1.msra.mxu0 0.0
    %723 = vmatprep.subr.mxu0 0.0
    %724 = vmatpush1.msra.mxu0 0.0
    %725 = vmatprep.subr.mxu0 0.0
    %726 = vmatpush1.msra.mxu0 0.0
    %727 = vmatprep.subr.mxu0 0.0
    %728 = vmatpush1.msra.mxu0 0.0
    %729 = vmatprep.subr.mxu0 0.0
    %730 = vmatpush1.msra.mxu0 0.0
    %731 = vmatprep.subr.mxu0 0.0
    %732 = vmatpush1.msra.mxu0 0.0
    %733 = vmatprep.subr.mxu0 0.0
    %734 = vmatpush1.msra.mxu0 0.0
    %735 = vmatprep.subr.mxu0 0.0
    %736 = vmatpush1.msra.mxu0 0.0
    %737 = vmatprep.subr.mxu0 0.0
    %738 = vmatpush1.msra.mxu0 0.0
    %739 = vmatprep.subr.mxu0 0.0
    %740 = vmatpush1.msra.mxu0 0.0
    %741 = vmatprep.subr.mxu0 0.0
    %742 = vmatpush1.msra.mxu0 0.0
    %743 = vmatprep.subr.mxu0 0.0
    %744 = vmatpush1.msra.mxu0 0.0
    %745 = vmatprep.subr.mxu0 0.0
    %746 = vmatpush1.msra.mxu0 0.0
    %747 = vmatprep.subr.mxu0 0.0
    %748 = vmatpush1.msra.mxu0 0.0
    %749 = vmatprep.subr.mxu0 0.0
    %750 = vmatpush1.msra.mxu0 0.0
    %751 = vmatprep.subr.mxu0 0.0
    %752 = vmatpush1.msra.mxu0 0.0
    %753 = vmatprep.subr.mxu0 0.0
    %754 = vmatpush1.msra.mxu0 0.0
    %755 = vmatprep.subr.mxu0 0.0
    %756 = vmatpush1.msra.mxu0 0.0
    %757 = vmatprep.subr.mxu0 0.0
    %758 = vmatpush1.msra.mxu0 0.0
    %759 = vmatprep.subr.mxu0 0.0
    %760 = vmatpush1.msra.mxu0 0.0
    %761 = vmatprep.subr.mxu0 0.0
    %762 = vmatpush1.msra.mxu0 0.0
    %763 = vmatprep.subr.mxu0 0.0
    %764 = vmatpush1.msra.mxu0 0.0
    %765 = vmatprep.subr.mxu0 0.0
    %766 = vmatpush1.msra.mxu0 0.0
    %767 = vmatprep.subr.mxu0 0.0
    %768 = vmatpush1.msra.mxu0 0.0
    %769 = vmatprep.mubr.f32.mxu0 0.0
    %770 = vmatmul.mubr.f32.gmra.mrb[0].mxu0 %v703
    %v771 = vpop.f32.mrb[0].mxu0
    %v772 = vadd.f32 %v699, %v771
    %v773 = vpop.f32.mrb[0].mxu0
    %774 = vdwg.mxu0
    %775 = vrot.lane.b32.xlu0 %v291, 96
    %v776 = vpop.permute.xlu0 %775
    %777 = vrot.lane.b32.xlu0 %v291, 32
    %v778 = vpop.permute.xlu0 %777
    %v779 = vsel %vm311, %v776, 0
    %v781 = vsel %vm311, %v778, 0
    %783 = vmatprep.subr.mxu0 0.0
    %784 = vmatpush1.xpose.msra.mxu0 %v781
    %785 = vmatprep.subr.mxu0 0.0
    %786 = vmatpush1.xpose.msra.mxu0 0.0
    %787 = vmatprep.subr.mxu0 0.0
    %788 = vmatpush1.xpose.msra.mxu0 0.0
    %789 = vmatprep.subr.mxu0 0.0
    %790 = vmatpush1.xpose.msra.mxu0 0.0
    %791 = vmatprep.subr.mxu0 0.0
    %792 = vmatpush1.xpose.msra.mxu0 0.0
    %793 = vmatprep.subr.mxu0 0.0
    %794 = vmatpush1.xpose.msra.mxu0 0.0
    %795 = vmatprep.subr.mxu0 0.0
    %796 = vmatpush1.xpose.msra.mxu0 0.0
    %797 = vmatprep.subr.mxu0 0.0
    %798 = vmatpush1.xpose.msra.mxu0 0.0
    %799 = vmatprep.subr.mxu0 0.0
    %800 = vmatpush1.xpose.msra.mxu0 0.0
    %801 = vmatprep.subr.mxu0 0.0
    %802 = vmatpush1.xpose.msra.mxu0 0.0
    %803 = vmatprep.subr.mxu0 0.0
    %804 = vmatpush1.xpose.msra.mxu0 0.0
    %805 = vmatprep.subr.mxu0 0.0
    %806 = vmatpush1.xpose.msra.mxu0 0.0
    %807 = vmatprep.subr.mxu0 0.0
    %808 = vmatpush1.xpose.msra.mxu0 0.0
    %809 = vmatprep.subr.mxu0 0.0
    %810 = vmatpush1.xpose.msra.mxu0 0.0
    %811 = vmatprep.subr.mxu0 0.0
    %812 = vmatpush1.xpose.msra.mxu0 0.0
    %813 = vmatprep.subr.mxu0 0.0
    %814 = vmatpush1.xpose.msra.mxu0 0.0
    %815 = vmatprep.subr.mxu0 0.0
    %816 = vmatpush1.xpose.msra.mxu0 0.0
    %817 = vmatprep.subr.mxu0 0.0
    %818 = vmatpush1.xpose.msra.mxu0 0.0
    %819 = vmatprep.subr.mxu0 0.0
    %820 = vmatpush1.xpose.msra.mxu0 0.0
    %821 = vmatprep.subr.mxu0 0.0
    %822 = vmatpush1.xpose.msra.mxu0 0.0
    %823 = vmatprep.subr.mxu0 0.0
    %824 = vmatpush1.xpose.msra.mxu0 0.0
    %825 = vmatprep.subr.mxu0 0.0
    %826 = vmatpush1.xpose.msra.mxu0 0.0
    %827 = vmatprep.subr.mxu0 0.0
    %828 = vmatpush1.xpose.msra.mxu0 0.0
    %829 = vmatprep.subr.mxu0 0.0
    %830 = vmatpush1.xpose.msra.mxu0 0.0
    %831 = vmatprep.subr.mxu0 0.0
    %832 = vmatpush1.xpose.msra.mxu0 0.0
    %833 = vmatprep.subr.mxu0 0.0
    %834 = vmatpush1.xpose.msra.mxu0 0.0
    %835 = vmatprep.subr.mxu0 0.0
    %836 = vmatpush1.xpose.msra.mxu0 0.0
    %837 = vmatprep.subr.mxu0 0.0
    %838 = vmatpush1.xpose.msra.mxu0 0.0
    %839 = vmatprep.subr.mxu0 0.0
    %840 = vmatpush1.xpose.msra.mxu0 0.0
    %841 = vmatprep.subr.mxu0 0.0
    %842 = vmatpush1.xpose.msra.mxu0 0.0
    %843 = vmatprep.subr.mxu0 0.0
    %844 = vmatpush1.xpose.msra.mxu0 0.0
    %845 = vmatprep.subr.mxu0 0.0
    %846 = vmatpush1.xpose.msra.mxu0 0.0
    %847 = vmatprep.mubr.f32.mxu0 0.0
    %848 = vmatmul.mubr.f32.gmra.mrb[0].mxu0 %v779
    %v849 = vpop.f32.mrb[0].mxu0
    %v850 = vadd.f32 %v306, %v849
    %v851 = vpop.f32.mrb[0].mxu0
    %852 = vdwg.mxu0
    %v853 = vmul.f32 %v850, 1.442695
    %v854 = vpow.pop %v853
    %v855 = vsel %vm388, %v854, 0.0
    %856 = vadd.xlane.f32.xlu0 %v855
    %v857 = vpop.xlane.xlu0 %856
    %v858 = vrcp.pop %v857
    %v859 = vmul.f32 %v854, %v858
    %860 = vrot.lane.b32.xlu0 %v279, 96
    %v861 = vpop.permute.xlu0 %860
    %v864 = vsel %vm388, %v859, 0
    %866 = vmatprep.subr.mxu0 0.0
    %867 = vmatpush1.msra.mxu0 %v861
    %868 = vmatprep.subr.mxu0 0.0
    %869 = vmatpush1.msra.mxu0 0.0
    %870 = vmatprep.subr.mxu0 0.0
    %871 = vmatpush1.msra.mxu0 0.0
    %872 = vmatprep.subr.mxu0 0.0
    %873 = vmatpush1.msra.mxu0 0.0
    %874 = vmatprep.subr.mxu0 0.0
    %875 = vmatpush1.msra.mxu0 0.0
    %876 = vmatprep.subr.mxu0 0.0
    %877 = vmatpush1.msra.mxu0 0.0
    %878 = vmatprep.subr.mxu0 0.0
    %879 = vmatpush1.msra.mxu0 0.0
    %880 = vmatprep.subr.mxu0 0.0
    %881 = vmatpush1.msra.mxu0 0.0
    %882 = vmatprep.subr.mxu0 0.0
    %883 = vmatpush1.msra.mxu0 0.0
    %884 = vmatprep.subr.mxu0 0.0
    %885 = vmatpush1.msra.mxu0 0.0
    %886 = vmatprep.subr.mxu0 0.0
    %887 = vmatpush1.msra.mxu0 0.0
    %888 = vmatprep.subr.mxu0 0.0
    %889 = vmatpush1.msra.mxu0 0.0
    %890 = vmatprep.subr.mxu0 0.0
    %891 = vmatpush1.msra.mxu0 0.0
    %892 = vmatprep.subr.mxu0 0.0
    %893 = vmatpush1.msra.mxu0 0.0
    %894 = vmatprep.subr.mxu0 0.0
    %895 = vmatpush1.msra.mxu0 0.0
    %896 = vmatprep.subr.mxu0 0.0
    %897 = vmatpush1.msra.mxu0 0.0
    %898 = vmatprep.subr.mxu0 0.0
    %899 = vmatpush1.msra.mxu0 0.0
    %900 = vmatprep.subr.mxu0 0.0
    %901 = vmatpush1.msra.mxu0 0.0
    %902 = vmatprep.subr.mxu0 0.0
    %903 = vmatpush1.msra.mxu0 0.0
    %904 = vmatprep.subr.mxu0 0.0
    %905 = vmatpush1.msra.mxu0 0.0
    %906 = vmatprep.subr.mxu0 0.0
    %907 = vmatpush1.msra.mxu0 0.0
    %908 = vmatprep.subr.mxu0 0.0
    %909 = vmatpush1.msra.mxu0 0.0
    %910 = vmatprep.subr.mxu0 0.0
    %911 = vmatpush1.msra.mxu0 0.0
    %912 = vmatprep.subr.mxu0 0.0
    %913 = vmatpush1.msra.mxu0 0.0
    %914 = vmatprep.subr.mxu0 0.0
    %915 = vmatpush1.msra.mxu0 0.0
    %916 = vmatprep.subr.mxu0 0.0
    %917 = vmatpush1.msra.mxu0 0.0
    %918 = vmatprep.subr.mxu0 0.0
    %919 = vmatpush1.msra.mxu0 0.0
    %920 = vmatprep.subr.mxu0 0.0
    %921 = vmatpush1.msra.mxu0 0.0
    %922 = vmatprep.subr.mxu0 0.0
    %923 = vmatpush1.msra.mxu0 0.0
    %924 = vmatprep.subr.mxu0 0.0
    %925 = vmatpush1.msra.mxu0 0.0
    %926 = vmatprep.subr.mxu0 0.0
    %927 = vmatpush1.msra.mxu0 0.0
    %928 = vmatprep.subr.mxu0 0.0
    %929 = vmatpush1.msra.mxu0 0.0
    %930 = vmatprep.mubr.f32.mxu0 0.0
    %931 = vmatmul.mubr.f32.gmra.mrb[0].mxu0 %v864
    %v932 = vpop.f32.mrb[0].mxu0
    %v933 = vadd.f32 0.0, %v932
    %v934 = vpop.f32.mrb[0].mxu0
    %935 = vdwg.mxu0
    %v937 = vsel %vm311, %v933, 0
    %939 = vmatprep.subr.mxu0 0.0
    %940 = vmatpush1.msra.mxu0 %v297
    %941 = vmatprep.subr.mxu0 0.0
    %942 = vmatpush1.msra.mxu0 %v298
    %943 = vmatprep.subr.mxu0 0.0
    %944 = vmatpush1.msra.mxu0 0.0
    %945 = vmatprep.subr.mxu0 0.0
    %946 = vmatpush1.msra.mxu0 0.0
    %947 = vmatprep.subr.mxu0 0.0
    %948 = vmatpush1.msra.mxu0 0.0
    %949 = vmatprep.subr.mxu0 0.0
    %950 = vmatpush1.msra.mxu0 0.0
    %951 = vmatprep.subr.mxu0 0.0
    %952 = vmatpush1.msra.mxu0 0.0
    %953 = vmatprep.subr.mxu0 0.0
    %954 = vmatpush1.msra.mxu0 0.0
    %955 = vmatprep.subr.mxu0 0.0
    %956 = vmatpush1.msra.mxu0 0.0
    %957 = vmatprep.subr.mxu0 0.0
    %958 = vmatpush1.msra.mxu0 0.0
    %959 = vmatprep.subr.mxu0 0.0
    %960 = vmatpush1.msra.mxu0 0.0
    %961 = vmatprep.subr.mxu0 0.0
    %962 = vmatpush1.msra.mxu0 0.0
    %963 = vmatprep.subr.mxu0 0.0
    %964 = vmatpush1.msra.mxu0 0.0
    %965 = vmatprep.subr.mxu0 0.0
    %966 = vmatpush1.msra.mxu0 0.0
    %967 = vmatprep.subr.mxu0 0.0
    %968 = vmatpush1.msra.mxu0 0.0
    %969 = vmatprep.subr.mxu0 0.0
    %970 = vmatpush1.msra.mxu0 0.0
    %971 = vmatprep.subr.mxu0 0.0
    %972 = vmatpush1.msra.mxu0 0.0
    %973 = vmatprep.subr.mxu0 0.0
    %974 = vmatpush1.msra.mxu0 0.0
    %975 = vmatprep.subr.mxu0 0.0
    %976 = vmatpush1.msra.mxu0 0.0
    %977 = vmatprep.subr.mxu0 0.0
    %978 = vmatpush1.msra.mxu0 0.0
    %979 = vmatprep.subr.mxu0 0.0
    %980 = vmatpush1.msra.mxu0 0.0
    %981 = vmatprep.subr.mxu0 0.0
    %982 = vmatpush1.msra.mxu0 0.0
    %983 = vmatprep.subr.mxu0 0.0
    %984 = vmatpush1.msra.mxu0 0.0
    %985 = vmatprep.subr.mxu0 0.0
    %986 = vmatpush1.msra.mxu0 0.0
    %987 = vmatprep.subr.mxu0 0.0
    %988 = vmatpush1.msra.mxu0 0.0
    %989 = vmatprep.subr.mxu0 0.0
    %990 = vmatpush1.msra.mxu0 0.0
    %991 = vmatprep.subr.mxu0 0.0
    %992 = vmatpush1.msra.mxu0 0.0
    %993 = vmatprep.subr.mxu0 0.0
    %994 = vmatpush1.msra.mxu0 0.0
    %995 = vmatprep.subr.mxu0 0.0
    %996 = vmatpush1.msra.mxu0 0.0
    %997 = vmatprep.subr.mxu0 0.0
    %998 = vmatpush1.msra.mxu0 0.0
    %999 = vmatprep.subr.mxu0 0.0
    %1000 = vmatpush1.msra.mxu0 0.0
    %1001 = vmatprep.subr.mxu0 0.0
    %1002 = vmatpush1.msra.mxu0 0.0
    %1003 = vmatprep.mubr.f32.mxu0 0.0
    %1004 = vmatmul.mubr.f32.gmra.mrb[0].mxu0 %v937
    %v1005 = vpop.f32.mrb[0].mxu0
    %v1006 = vadd.f32 0.0, %v1005
    %v1007 = vpop.f32.mrb[0].mxu0
    %1008 = vdwg.mxu0
    %v1009 = vadd.f32 %v772, %v1006
    %1010 = vrot.lane.b32.xlu0 %v291, 80
    %v1011 = vpop.permute.xlu0 %1010
    %1012 = vrot.lane.b32.xlu0 %v291, 16
    %v1013 = vpop.permute.xlu0 %1012
    %v1014 = vsel %vm311, %v1011, 0
    %v1016 = vsel %vm311, %v1013, 0
    %1018 = vmatprep.subr.mxu0 0.0
    %1019 = vmatpush1.xpose.msra.mxu0 %v1016
    %1020 = vmatprep.subr.mxu0 0.0
    %1021 = vmatpush1.xpose.msra.mxu0 0.0
    %1022 = vmatprep.subr.mxu0 0.0
    %1023 = vmatpush1.xpose.msra.mxu0 0.0
    %1024 = vmatprep.subr.mxu0 0.0
    %1025 = vmatpush1.xpose.msra.mxu0 0.0
    %1026 = vmatprep.subr.mxu0 0.0
    %1027 = vmatpush1.xpose.msra.mxu0 0.0
    %1028 = vmatprep.subr.mxu0 0.0
    %1029 = vmatpush1.xpose.msra.mxu0 0.0
    %1030 = vmatprep.subr.mxu0 0.0
    %1031 = vmatpush1.xpose.msra.mxu0 0.0
    %1032 = vmatprep.subr.mxu0 0.0
    %1033 = vmatpush1.xpose.msra.mxu0 0.0
    %1034 = vmatprep.subr.mxu0 0.0
    %1035 = vmatpush1.xpose.msra.mxu0 0.0
    %1036 = vmatprep.subr.mxu0 0.0
    %1037 = vmatpush1.xpose.msra.mxu0 0.0
    %1038 = vmatprep.subr.mxu0 0.0
    %1039 = vmatpush1.xpose.msra.mxu0 0.0
    %1040 = vmatprep.subr.mxu0 0.0
    %1041 = vmatpush1.xpose.msra.mxu0 0.0
    %1042 = vmatprep.subr.mxu0 0.0
    %1043 = vmatpush1.xpose.msra.mxu0 0.0
    %1044 = vmatprep.subr.mxu0 0.0
    %1045 = vmatpush1.xpose.msra.mxu0 0.0
    %1046 = vmatprep.subr.mxu0 0.0
    %1047 = vmatpush1.xpose.msra.mxu0 0.0
    %1048 = vmatprep.subr.mxu0 0.0
    %1049 = vmatpush1.xpose.msra.mxu0 0.0
    %1050 = vmatprep.subr.mxu0 0.0
    %1051 = vmatpush1.xpose.msra.mxu0 0.0
    %1052 = vmatprep.subr.mxu0 0.0
    %1053 = vmatpush1.xpose.msra.mxu0 0.0
    %1054 = vmatprep.subr.mxu0 0.0
    %1055 = vmatpush1.xpose.msra.mxu0 0.0
    %1056 = vmatprep.subr.mxu0 0.0
    %1057 = vmatpush1.xpose.msra.mxu0 0.0
    %1058 = vmatprep.subr.mxu0 0.0
    %1059 = vmatpush1.xpose.msra.mxu0 0.0
    %1060 = vmatprep.subr.mxu0 0.0
    %1061 = vmatpush1.xpose.msra.mxu0 0.0
    %1062 = vmatprep.subr.mxu0 0.0
    %1063 = vmatpush1.xpose.msra.mxu0 0.0
    %1064 = vmatprep.subr.mxu0 0.0
    %1065 = vmatpush1.xpose.msra.mxu0 0.0
    %1066 = vmatprep.subr.mxu0 0.0
    %1067 = vmatpush1.xpose.msra.mxu0 0.0
    %1068 = vmatprep.subr.mxu0 0.0
    %1069 = vmatpush1.xpose.msra.mxu0 0.0
    %1070 = vmatprep.subr.mxu0 0.0
    %1071 = vmatpush1.xpose.msra.mxu0 0.0
    %1072 = vmatprep.subr.mxu0 0.0
    %1073 = vmatpush1.xpose.msra.mxu0 0.0
    %1074 = vmatprep.subr.mxu0 0.0
    %1075 = vmatpush1.xpose.msra.mxu0 0.0
    %1076 = vmatprep.subr.mxu0 0.0
    %1077 = vmatpush1.xpose.msra.mxu0 0.0
    %1078 = vmatprep.subr.mxu0 0.0
    %1079 = vmatpush1.xpose.msra.mxu0 0.0
    %1080 = vmatprep.subr.mxu0 0.0
    %1081 = vmatpush1.xpose.msra.mxu0 0.0
    %1082 = vmatprep.mubr.f32.mxu0 0.0
    %1083 = vmatmul.mubr.f32.gmra.mrb[0].mxu0 %v1014
    %v1084 = vpop.f32.mrb[0].mxu0
    %v1085 = vadd.f32 %v306, %v1084
    %v1086 = vpop.f32.mrb[0].mxu0
    %1087 = vdwg.mxu0
    %v1088 = vmul.f32 %v1085, 1.442695
    %v1089 = vpow.pop %v1088
    %v1090 = vsel %vm388, %v1089, 0.0
    %1091 = vadd.xlane.f32.xlu0 %v1090
    %v1092 = vpop.xlane.xlu0 %1091
    %v1093 = vrcp.pop %v1092
    %v1094 = vmul.f32 %v1089, %v1093
    %1095 = vrot.lane.b32.xlu0 %v279, 80
    %v1096 = vpop.permute.xlu0 %1095
    %v1099 = vsel %vm388, %v1094, 0
    %1101 = vmatprep.subr.mxu0 0.0
    %1102 = vmatpush1.msra.mxu0 %v1096
    %1103 = vmatprep.subr.mxu0 0.0
    %1104 = vmatpush1.msra.mxu0 0.0
    %1105 = vmatprep.subr.mxu0 0.0
    %1106 = vmatpush1.msra.mxu0 0.0
    %1107 = vmatprep.subr.mxu0 0.0
    %1108 = vmatpush1.msra.mxu0 0.0
    %1109 = vmatprep.subr.mxu0 0.0
    %1110 = vmatpush1.msra.mxu0 0.0
    %1111 = vmatprep.subr.mxu0 0.0
    %1112 = vmatpush1.msra.mxu0 0.0
    %1113 = vmatprep.subr.mxu0 0.0
    %1114 = vmatpush1.msra.mxu0 0.0
    %1115 = vmatprep.subr.mxu0 0.0
    %1116 = vmatpush1.msra.mxu0 0.0
    %1117 = vmatprep.subr.mxu0 0.0
    %1118 = vmatpush1.msra.mxu0 0.0
    %1119 = vmatprep.subr.mxu0 0.0
    %1120 = vmatpush1.msra.mxu0 0.0
    %1121 = vmatprep.subr.mxu0 0.0
    %1122 = vmatpush1.msra.mxu0 0.0
    %1123 = vmatprep.subr.mxu0 0.0
    %1124 = vmatpush1.msra.mxu0 0.0
    %1125 = vmatprep.subr.mxu0 0.0
    %1126 = vmatpush1.msra.mxu0 0.0
    %1127 = vmatprep.subr.mxu0 0.0
    %1128 = vmatpush1.msra.mxu0 0.0
    %1129 = vmatprep.subr.mxu0 0.0
    %1130 = vmatpush1.msra.mxu0 0.0
    %1131 = vmatprep.subr.mxu0 0.0
    %1132 = vmatpush1.msra.mxu0 0.0
    %1133 = vmatprep.subr.mxu0 0.0
    %1134 = vmatpush1.msra.mxu0 0.0
    %1135 = vmatprep.subr.mxu0 0.0
    %1136 = vmatpush1.msra.mxu0 0.0
    %1137 = vmatprep.subr.mxu0 0.0
    %1138 = vmatpush1.msra.mxu0 0.0
    %1139 = vmatprep.subr.mxu0 0.0
    %1140 = vmatpush1.msra.mxu0 0.0
    %1141 = vmatprep.subr.mxu0 0.0
    %1142 = vmatpush1.msra.mxu0 0.0
    %1143 = vmatprep.subr.mxu0 0.0
    %1144 = vmatpush1.msra.mxu0 0.0
    %1145 = vmatprep.subr.mxu0 0.0
    %1146 = vmatpush1.msra.mxu0 0.0
    %1147 = vmatprep.subr.mxu0 0.0
    %1148 = vmatpush1.msra.mxu0 0.0
    %1149 = vmatprep.subr.mxu0 0.0
    %1150 = vmatpush1.msra.mxu0 0.0
    %1151 = vmatprep.subr.mxu0 0.0
    %1152 = vmatpush1.msra.mxu0 0.0
    %1153 = vmatprep.subr.mxu0 0.0
    %1154 = vmatpush1.msra.mxu0 0.0
    %1155 = vmatprep.subr.mxu0 0.0
    %1156 = vmatpush1.msra.mxu0 0.0
    %1157 = vmatprep.subr.mxu0 0.0
    %1158 = vmatpush1.msra.mxu0 0.0
    %1159 = vmatprep.subr.mxu0 0.0
    %1160 = vmatpush1.msra.mxu0 0.0
    %1161 = vmatprep.subr.mxu0 0.0
    %1162 = vmatpush1.msra.mxu0 0.0
    %1163 = vmatprep.subr.mxu0 0.0
    %1164 = vmatpush1.msra.mxu0 0.0
    %1165 = vmatprep.mubr.f32.mxu0 0.0
    %1166 = vmatmul.mubr.f32.gmra.mrb[0].mxu0 %v1099
    %v1167 = vpop.f32.mrb[0].mxu0
    %v1168 = vadd.f32 0.0, %v1167
    %v1169 = vpop.f32.mrb[0].mxu0
    %1170 = vdwg.mxu0
    %v1172 = vsel %vm311, %v1168, 0
    %1174 = vmatprep.subr.mxu0 0.0
    %1175 = vmatpush1.msra.mxu0 %v299
    %1176 = vmatprep.subr.mxu0 0.0
    %1177 = vmatpush1.msra.mxu0 %v300
    %1178 = vmatprep.subr.mxu0 0.0
    %1179 = vmatpush1.msra.mxu0 0.0
    %1180 = vmatprep.subr.mxu0 0.0
    %1181 = vmatpush1.msra.mxu0 0.0
    %1182 = vmatprep.subr.mxu0 0.0
    %1183 = vmatpush1.msra.mxu0 0.0
    %1184 = vmatprep.subr.mxu0 0.0
    %1185 = vmatpush1.msra.mxu0 0.0
    %1186 = vmatprep.subr.mxu0 0.0
    %1187 = vmatpush1.msra.mxu0 0.0
    %1188 = vmatprep.subr.mxu0 0.0
    %1189 = vmatpush1.msra.mxu0 0.0
    %1190 = vmatprep.subr.mxu0 0.0
    %1191 = vmatpush1.msra.mxu0 0.0
    %1192 = vmatprep.subr.mxu0 0.0
    %1193 = vmatpush1.msra.mxu0 0.0
    %1194 = vmatprep.subr.mxu0 0.0
    %1195 = vmatpush1.msra.mxu0 0.0
    %1196 = vmatprep.subr.mxu0 0.0
    %1197 = vmatpush1.msra.mxu0 0.0
    %1198 = vmatprep.subr.mxu0 0.0
    %1199 = vmatpush1.msra.mxu0 0.0
    %1200 = vmatprep.subr.mxu0 0.0
    %1201 = vmatpush1.msra.mxu0 0.0
    %1202 = vmatprep.subr.mxu0 0.0
    %1203 = vmatpush1.msra.mxu0 0.0
    %1204 = vmatprep.subr.mxu0 0.0
    %1205 = vmatpush1.msra.mxu0 0.0
    %1206 = vmatprep.subr.mxu0 0.0
    %1207 = vmatpush1.msra.mxu0 0.0
    %1208 = vmatprep.subr.mxu0 0.0
    %1209 = vmatpush1.msra.mxu0 0.0
    %1210 = vmatprep.subr.mxu0 0.0
    %1211 = vmatpush1.msra.mxu0 0.0
    %1212 = vmatprep.subr.mxu0 0.0
    %1213 = vmatpush1.msra.mxu0 0.0
    %1214 = vmatprep.subr.mxu0 0.0
    %1215 = vmatpush1.msra.mxu0 0.0
    %1216 = vmatprep.subr.mxu0 0.0
    %1217 = vmatpush1.msra.mxu0 0.0
    %1218 = vmatprep.subr.mxu0 0.0
    %1219 = vmatpush1.msra.mxu0 0.0
    %1220 = vmatprep.subr.mxu0 0.0
    %1221 = vmatpush1.msra.mxu0 0.0
    %1222 = vmatprep.subr.mxu0 0.0
    %1223 = vmatpush1.msra.mxu0 0.0
    %1224 = vmatprep.subr.mxu0 0.0
    %1225 = vmatpush1.msra.mxu0 0.0
    %1226 = vmatprep.subr.mxu0 0.0
    %1227 = vmatpush1.msra.mxu0 0.0
    %1228 = vmatprep.subr.mxu0 0.0
    %1229 = vmatpush1.msra.mxu0 0.0
    %1230 = vmatprep.subr.mxu0 0.0
    %1231 = vmatpush1.msra.mxu0 0.0
    %1232 = vmatprep.subr.mxu0 0.0
    %1233 = vmatpush1.msra.mxu0 0.0
    %1234 = vmatprep.subr.mxu0 0.0
    %1235 = vmatpush1.msra.mxu0 0.0
    %1236 = vmatprep.subr.mxu0 0.0
    %1237 = vmatpush1.msra.mxu0 0.0
    %1238 = vmatprep.mubr.f32.mxu0 0.0
    %1239 = vmatmul.mubr.f32.gmra.mrb[0].mxu0 %v1172
    %v1240 = vpop.f32.mrb[0].mxu0
    %v1241 = vadd.f32 0.0, %v1240
    %v1242 = vpop.f32.mrb[0].mxu0
    %1243 = vdwg.mxu0
    %v1244 = vadd.f32 %v1009, %v1241
    %s1245 = scalar_lea.vmem %s3, 1
    %v1246 = vld [vmem:[%s1245] sm:$0x1]
    %v1248 = vlaneseq
    %v1249 = vshrl.u32 %v1248, 7
    %v1250 = vsub.s32 0, %v1249
    %v1251 = vrot.slane %v1246, %v1250
    %1254 = vrot.lane.b32.xlu0 %v292, 64
    %v1255 = vpop.permute.xlu0 %1254
    %v1256 = vsel %vm311, %v292, 0
    %v1258 = vsel %vm311, %v1255, 0
    %1260 = vmatprep.subr.mxu0 0.0
    %1261 = vmatpush1.xpose.msra.mxu0 %v1258
    %1262 = vmatprep.subr.mxu0 0.0
    %1263 = vmatpush1.xpose.msra.mxu0 0.0
    %1264 = vmatprep.subr.mxu0 0.0
    %1265 = vmatpush1.xpose.msra.mxu0 0.0
    %1266 = vmatprep.subr.mxu0 0.0
    %1267 = vmatpush1.xpose.msra.mxu0 0.0
    %1268 = vmatprep.subr.mxu0 0.0
    %1269 = vmatpush1.xpose.msra.mxu0 0.0
    %1270 = vmatprep.subr.mxu0 0.0
    %1271 = vmatpush1.xpose.msra.mxu0 0.0
    %1272 = vmatprep.subr.mxu0 0.0
    %1273 = vmatpush1.xpose.msra.mxu0 0.0
    %1274 = vmatprep.subr.mxu0 0.0
    %1275 = vmatpush1.xpose.msra.mxu0 0.0
    %1276 = vmatprep.subr.mxu0 0.0
    %1277 = vmatpush1.xpose.msra.mxu0 0.0
    %1278 = vmatprep.subr.mxu0 0.0
    %1279 = vmatpush1.xpose.msra.mxu0 0.0
    %1280 = vmatprep.subr.mxu0 0.0
    %1281 = vmatpush1.xpose.msra.mxu0 0.0
    %1282 = vmatprep.subr.mxu0 0.0
    %1283 = vmatpush1.xpose.msra.mxu0 0.0
    %1284 = vmatprep.subr.mxu0 0.0
    %1285 = vmatpush1.xpose.msra.mxu0 0.0
    %1286 = vmatprep.subr.mxu0 0.0
    %1287 = vmatpush1.xpose.msra.mxu0 0.0
    %1288 = vmatprep.subr.mxu0 0.0
    %1289 = vmatpush1.xpose.msra.mxu0 0.0
    %1290 = vmatprep.subr.mxu0 0.0
    %1291 = vmatpush1.xpose.msra.mxu0 0.0
    %1292 = vmatprep.subr.mxu0 0.0
    %1293 = vmatpush1.xpose.msra.mxu0 0.0
    %1294 = vmatprep.subr.mxu0 0.0
    %1295 = vmatpush1.xpose.msra.mxu0 0.0
    %1296 = vmatprep.subr.mxu0 0.0
    %1297 = vmatpush1.xpose.msra.mxu0 0.0
    %1298 = vmatprep.subr.mxu0 0.0
    %1299 = vmatpush1.xpose.msra.mxu0 0.0
    %1300 = vmatprep.subr.mxu0 0.0
    %1301 = vmatpush1.xpose.msra.mxu0 0.0
    %1302 = vmatprep.subr.mxu0 0.0
    %1303 = vmatpush1.xpose.msra.mxu0 0.0
    %1304 = vmatprep.subr.mxu0 0.0
    %1305 = vmatpush1.xpose.msra.mxu0 0.0
    %1306 = vmatprep.subr.mxu0 0.0
    %1307 = vmatpush1.xpose.msra.mxu0 0.0
    %1308 = vmatprep.subr.mxu0 0.0
    %1309 = vmatpush1.xpose.msra.mxu0 0.0
    %1310 = vmatprep.subr.mxu0 0.0
    %1311 = vmatpush1.xpose.msra.mxu0 0.0
    %1312 = vmatprep.subr.mxu0 0.0
    %1313 = vmatpush1.xpose.msra.mxu0 0.0
    %1314 = vmatprep.subr.mxu0 0.0
    %1315 = vmatpush1.xpose.msra.mxu0 0.0
    %1316 = vmatprep.subr.mxu0 0.0
    %1317 = vmatpush1.xpose.msra.mxu0 0.0
    %1318 = vmatprep.subr.mxu0 0.0
    %1319 = vmatpush1.xpose.msra.mxu0 0.0
    %1320 = vmatprep.subr.mxu0 0.0
    %1321 = vmatpush1.xpose.msra.mxu0 0.0
    %1322 = vmatprep.subr.mxu0 0.0
    %1323 = vmatpush1.xpose.msra.mxu0 0.0
    %1324 = vmatprep.mubr.f32.mxu0 0.0
    %1325 = vmatmul.mubr.f32.gmra.mrb[0].mxu0 %v1256
    %v1326 = vpop.f32.mrb[0].mxu0
    %v1327 = vadd.f32 %v1251, %v1326
    %v1328 = vpop.f32.mrb[0].mxu0
    %1329 = vdwg.mxu0
    %v1330 = vmul.f32 %v1327, 1.442695
    %v1331 = vpow.pop %v1330
    %v1332 = vsel %vm388, %v1331, 0.0
    %1333 = vadd.xlane.f32.xlu0 %v1332
    %v1334 = vpop.xlane.xlu0 %1333
    %v1335 = vrcp.pop %v1334
    %v1336 = vmul.f32 %v1331, %v1335
    %v1338 = vsel %vm388, %v1336, 0
    %1340 = vmatprep.subr.mxu0 0.0
    %1341 = vmatpush1.msra.mxu0 %v284
    %1342 = vmatprep.subr.mxu0 0.0
    %1343 = vmatpush1.msra.mxu0 0.0
    %1344 = vmatprep.subr.mxu0 0.0
    %1345 = vmatpush1.msra.mxu0 0.0
    %1346 = vmatprep.subr.mxu0 0.0
    %1347 = vmatpush1.msra.mxu0 0.0
    %1348 = vmatprep.subr.mxu0 0.0
    %1349 = vmatpush1.msra.mxu0 0.0
    %1350 = vmatprep.subr.mxu0 0.0
    %1351 = vmatpush1.msra.mxu0 0.0
    %1352 = vmatprep.subr.mxu0 0.0
    %1353 = vmatpush1.msra.mxu0 0.0
    %1354 = vmatprep.subr.mxu0 0.0
    %1355 = vmatpush1.msra.mxu0 0.0
    %1356 = vmatprep.subr.mxu0 0.0
    %1357 = vmatpush1.msra.mxu0 0.0
    %1358 = vmatprep.subr.mxu0 0.0
    %1359 = vmatpush1.msra.mxu0 0.0
    %1360 = vmatprep.subr.mxu0 0.0
    %1361 = vmatpush1.msra.mxu0 0.0
    %1362 = vmatprep.subr.mxu0 0.0
    %1363 = vmatpush1.msra.mxu0 0.0
    %1364 = vmatprep.subr.mxu0 0.0
    %1365 = vmatpush1.msra.mxu0 0.0
    %1366 = vmatprep.subr.mxu0 0.0
    %1367 = vmatpush1.msra.mxu0 0.0
    %1368 = vmatprep.subr.mxu0 0.0
    %1369 = vmatpush1.msra.mxu0 0.0
    %1370 = vmatprep.subr.mxu0 0.0
    %1371 = vmatpush1.msra.mxu0 0.0
    %1372 = vmatprep.subr.mxu0 0.0
    %1373 = vmatpush1.msra.mxu0 0.0
    %1374 = vmatprep.subr.mxu0 0.0
    %1375 = vmatpush1.msra.mxu0 0.0
    %1376 = vmatprep.subr.mxu0 0.0
    %1377 = vmatpush1.msra.mxu0 0.0
    %1378 = vmatprep.subr.mxu0 0.0
    %1379 = vmatpush1.msra.mxu0 0.0
    %1380 = vmatprep.subr.mxu0 0.0
    %1381 = vmatpush1.msra.mxu0 0.0
    %1382 = vmatprep.subr.mxu0 0.0
    %1383 = vmatpush1.msra.mxu0 0.0
    %1384 = vmatprep.subr.mxu0 0.0
    %1385 = vmatpush1.msra.mxu0 0.0
    %1386 = vmatprep.subr.mxu0 0.0
    %1387 = vmatpush1.msra.mxu0 0.0
    %1388 = vmatprep.subr.mxu0 0.0
    %1389 = vmatpush1.msra.mxu0 0.0
    %1390 = vmatprep.subr.mxu0 0.0
    %1391 = vmatpush1.msra.mxu0 0.0
    %1392 = vmatprep.subr.mxu0 0.0
    %1393 = vmatpush1.msra.mxu0 0.0
    %1394 = vmatprep.subr.mxu0 0.0
    %1395 = vmatpush1.msra.mxu0 0.0
    %1396 = vmatprep.subr.mxu0 0.0
    %1397 = vmatpush1.msra.mxu0 0.0
    %1398 = vmatprep.subr.mxu0 0.0
    %1399 = vmatpush1.msra.mxu0 0.0
    %1400 = vmatprep.subr.mxu0 0.0
    %1401 = vmatpush1.msra.mxu0 0.0
    %1402 = vmatprep.subr.mxu0 0.0
    %1403 = vmatpush1.msra.mxu0 0.0
    %1404 = vmatprep.mubr.f32.mxu0 0.0
    %1405 = vmatmul.mubr.f32.gmra.mrb[0].mxu0 %v1338
    %v1406 = vpop.f32.mrb[0].mxu0
    %v1407 = vadd.f32 0.0, %v1406
    %v1408 = vpop.f32.mrb[0].mxu0
    %1409 = vdwg.mxu0
    %1410 = vrot.lane.b32.xlu0 %v292, 112
    %v1411 = vpop.permute.xlu0 %1410
    %1412 = vrot.lane.b32.xlu0 %v292, 48
    %v1413 = vpop.permute.xlu0 %1412
    %v1414 = vsel %vm311, %v1411, 0
    %v1416 = vsel %vm311, %v1413, 0
    %1418 = vmatprep.subr.mxu0 0.0
    %1419 = vmatpush1.xpose.msra.mxu0 %v1416
    %1420 = vmatprep.subr.mxu0 0.0
    %1421 = vmatpush1.xpose.msra.mxu0 0.0
    %1422 = vmatprep.subr.mxu0 0.0
    %1423 = vmatpush1.xpose.msra.mxu0 0.0
    %1424 = vmatprep.subr.mxu0 0.0
    %1425 = vmatpush1.xpose.msra.mxu0 0.0
    %1426 = vmatprep.subr.mxu0 0.0
    %1427 = vmatpush1.xpose.msra.mxu0 0.0
    %1428 = vmatprep.subr.mxu0 0.0
    %1429 = vmatpush1.xpose.msra.mxu0 0.0
    %1430 = vmatprep.subr.mxu0 0.0
    %1431 = vmatpush1.xpose.msra.mxu0 0.0
    %1432 = vmatprep.subr.mxu0 0.0
    %1433 = vmatpush1.xpose.msra.mxu0 0.0
    %1434 = vmatprep.subr.mxu0 0.0
    %1435 = vmatpush1.xpose.msra.mxu0 0.0
    %1436 = vmatprep.subr.mxu0 0.0
    %1437 = vmatpush1.xpose.msra.mxu0 0.0
    %1438 = vmatprep.subr.mxu0 0.0
    %1439 = vmatpush1.xpose.msra.mxu0 0.0
    %1440 = vmatprep.subr.mxu0 0.0
    %1441 = vmatpush1.xpose.msra.mxu0 0.0
    %1442 = vmatprep.subr.mxu0 0.0
    %1443 = vmatpush1.xpose.msra.mxu0 0.0
    %1444 = vmatprep.subr.mxu0 0.0
    %1445 = vmatpush1.xpose.msra.mxu0 0.0
    %1446 = vmatprep.subr.mxu0 0.0
    %1447 = vmatpush1.xpose.msra.mxu0 0.0
    %1448 = vmatprep.subr.mxu0 0.0
    %1449 = vmatpush1.xpose.msra.mxu0 0.0
    %1450 = vmatprep.subr.mxu0 0.0
    %1451 = vmatpush1.xpose.msra.mxu0 0.0
    %1452 = vmatprep.subr.mxu0 0.0
    %1453 = vmatpush1.xpose.msra.mxu0 0.0
    %1454 = vmatprep.subr.mxu0 0.0
    %1455 = vmatpush1.xpose.msra.mxu0 0.0
    %1456 = vmatprep.subr.mxu0 0.0
    %1457 = vmatpush1.xpose.msra.mxu0 0.0
    %1458 = vmatprep.subr.mxu0 0.0
    %1459 = vmatpush1.xpose.msra.mxu0 0.0
    %1460 = vmatprep.subr.mxu0 0.0
    %1461 = vmatpush1.xpose.msra.mxu0 0.0
    %1462 = vmatprep.subr.mxu0 0.0
    %1463 = vmatpush1.xpose.msra.mxu0 0.0
    %1464 = vmatprep.subr.mxu0 0.0
    %1465 = vmatpush1.xpose.msra.mxu0 0.0
    %1466 = vmatprep.subr.mxu0 0.0
    %1467 = vmatpush1.xpose.msra.mxu0 0.0
    %1468 = vmatprep.subr.mxu0 0.0
    %1469 = vmatpush1.xpose.msra.mxu0 0.0
    %1470 = vmatprep.subr.mxu0 0.0
    %1471 = vmatpush1.xpose.msra.mxu0 0.0
    %1472 = vmatprep.subr.mxu0 0.0
    %1473 = vmatpush1.xpose.msra.mxu0 0.0
    %1474 = vmatprep.subr.mxu0 0.0
    %1475 = vmatpush1.xpose.msra.mxu0 0.0
    %1476 = vmatprep.subr.mxu0 0.0
    %1477 = vmatpush1.xpose.msra.mxu0 0.0
    %1478 = vmatprep.subr.mxu0 0.0
    %1479 = vmatpush1.xpose.msra.mxu0 0.0
    %1480 = vmatprep.subr.mxu0 0.0
    %1481 = vmatpush1.xpose.msra.mxu0 0.0
    %1482 = vmatprep.mubr.f32.mxu0 0.0
    %1483 = vmatmul.mubr.f32.gmra.mrb[0].mxu0 %v1414
    %v1484 = vpop.f32.mrb[0].mxu0
    %v1485 = vadd.f32 %v1251, %v1484
    %v1486 = vpop.f32.mrb[0].mxu0
    %1487 = vdwg.mxu0
    %v1488 = vmul.f32 %v1485, 1.442695
    %v1489 = vpow.pop %v1488
    %v1490 = vsel %vm388, %v1489, 0.0
    %1491 = vadd.xlane.f32.xlu0 %v1490
    %v1492 = vpop.xlane.xlu0 %1491
    %v1493 = vrcp.pop %v1492
    %v1494 = vmul.f32 %v1489, %v1493
    %1496 = vrot.lane.b32.xlu0 %v284, 112
    %v1497 = vpop.permute.xlu0 %1496
    %v1500 = vsel %vm388, %v1494, 0
    %1502 = vmatprep.subr.mxu0 0.0
    %1503 = vmatpush1.msra.mxu0 %v1497
    %1504 = vmatprep.subr.mxu0 0.0
    %1505 = vmatpush1.msra.mxu0 0.0
    %1506 = vmatprep.subr.mxu0 0.0
    %1507 = vmatpush1.msra.mxu0 0.0
    %1508 = vmatprep.subr.mxu0 0.0
    %1509 = vmatpush1.msra.mxu0 0.0
    %1510 = vmatprep.subr.mxu0 0.0
    %1511 = vmatpush1.msra.mxu0 0.0
    %1512 = vmatprep.subr.mxu0 0.0
    %1513 = vmatpush1.msra.mxu0 0.0
    %1514 = vmatprep.subr.mxu0 0.0
    %1515 = vmatpush1.msra.mxu0 0.0
    %1516 = vmatprep.subr.mxu0 0.0
    %1517 = vmatpush1.msra.mxu0 0.0
    %1518 = vmatprep.subr.mxu0 0.0
    %1519 = vmatpush1.msra.mxu0 0.0
    %1520 = vmatprep.subr.mxu0 0.0
    %1521 = vmatpush1.msra.mxu0 0.0
    %1522 = vmatprep.subr.mxu0 0.0
    %1523 = vmatpush1.msra.mxu0 0.0
    %1524 = vmatprep.subr.mxu0 0.0
    %1525 = vmatpush1.msra.mxu0 0.0
    %1526 = vmatprep.subr.mxu0 0.0
    %1527 = vmatpush1.msra.mxu0 0.0
    %1528 = vmatprep.subr.mxu0 0.0
    %1529 = vmatpush1.msra.mxu0 0.0
    %1530 = vmatprep.subr.mxu0 0.0
    %1531 = vmatpush1.msra.mxu0 0.0
    %1532 = vmatprep.subr.mxu0 0.0
    %1533 = vmatpush1.msra.mxu0 0.0
    %1534 = vmatprep.subr.mxu0 0.0
    %1535 = vmatpush1.msra.mxu0 0.0
    %1536 = vmatprep.subr.mxu0 0.0
    %1537 = vmatpush1.msra.mxu0 0.0
    %1538 = vmatprep.subr.mxu0 0.0
    %1539 = vmatpush1.msra.mxu0 0.0
    %1540 = vmatprep.subr.mxu0 0.0
    %1541 = vmatpush1.msra.mxu0 0.0
    %1542 = vmatprep.subr.mxu0 0.0
    %1543 = vmatpush1.msra.mxu0 0.0
    %1544 = vmatprep.subr.mxu0 0.0
    %1545 = vmatpush1.msra.mxu0 0.0
    %1546 = vmatprep.subr.mxu0 0.0
    %1547 = vmatpush1.msra.mxu0 0.0
    %1548 = vmatprep.subr.mxu0 0.0
    %1549 = vmatpush1.msra.mxu0 0.0
    %1550 = vmatprep.subr.mxu0 0.0
    %1551 = vmatpush1.msra.mxu0 0.0
    %1552 = vmatprep.subr.mxu0 0.0
    %1553 = vmatpush1.msra.mxu0 0.0
    %1554 = vmatprep.subr.mxu0 0.0
    %1555 = vmatpush1.msra.mxu0 0.0
    %1556 = vmatprep.subr.mxu0 0.0
    %1557 = vmatpush1.msra.mxu0 0.0
    %1558 = vmatprep.subr.mxu0 0.0
    %1559 = vmatpush1.msra.mxu0 0.0
    %1560 = vmatprep.subr.mxu0 0.0
    %1561 = vmatpush1.msra.mxu0 0.0
    %1562 = vmatprep.subr.mxu0 0.0
    %1563 = vmatpush1.msra.mxu0 0.0
    %1564 = vmatprep.subr.mxu0 0.0
    %1565 = vmatpush1.msra.mxu0 0.0
    %1566 = vmatprep.mubr.f32.mxu0 0.0
    %1567 = vmatmul.mubr.f32.gmra.mrb[0].mxu0 %v1500
    %v1568 = vpop.f32.mrb[0].mxu0
    %v1569 = vadd.f32 0.0, %v1568
    %v1570 = vpop.f32.mrb[0].mxu0
    %1571 = vdwg.mxu0
    %v1573 = vsel %vm311, %v1569, 0
    %1575 = vmatprep.subr.mxu0 0.0
    %1576 = vmatpush1.msra.mxu0 %v295
    %1577 = vmatprep.subr.mxu0 0.0
    %1578 = vmatpush1.msra.mxu0 %v296
    %1579 = vmatprep.subr.mxu0 0.0
    %1580 = vmatpush1.msra.mxu0 0.0
    %1581 = vmatprep.subr.mxu0 0.0
    %1582 = vmatpush1.msra.mxu0 0.0
    %1583 = vmatprep.subr.mxu0 0.0
    %1584 = vmatpush1.msra.mxu0 0.0
    %1585 = vmatprep.subr.mxu0 0.0
    %1586 = vmatpush1.msra.mxu0 0.0
    %1587 = vmatprep.subr.mxu0 0.0
    %1588 = vmatpush1.msra.mxu0 0.0
    %1589 = vmatprep.subr.mxu0 0.0
    %1590 = vmatpush1.msra.mxu0 0.0
    %1591 = vmatprep.subr.mxu0 0.0
    %1592 = vmatpush1.msra.mxu0 0.0
    %1593 = vmatprep.subr.mxu0 0.0
    %1594 = vmatpush1.msra.mxu0 0.0
    %1595 = vmatprep.subr.mxu0 0.0
    %1596 = vmatpush1.msra.mxu0 0.0
    %1597 = vmatprep.subr.mxu0 0.0
    %1598 = vmatpush1.msra.mxu0 0.0
    %1599 = vmatprep.subr.mxu0 0.0
    %1600 = vmatpush1.msra.mxu0 0.0
    %1601 = vmatprep.subr.mxu0 0.0
    %1602 = vmatpush1.msra.mxu0 0.0
    %1603 = vmatprep.subr.mxu0 0.0
    %1604 = vmatpush1.msra.mxu0 0.0
    %1605 = vmatprep.subr.mxu0 0.0
    %1606 = vmatpush1.msra.mxu0 0.0
    %1607 = vmatprep.subr.mxu0 0.0
    %1608 = vmatpush1.msra.mxu0 0.0
    %1609 = vmatprep.subr.mxu0 0.0
    %1610 = vmatpush1.msra.mxu0 0.0
    %1611 = vmatprep.subr.mxu0 0.0
    %1612 = vmatpush1.msra.mxu0 0.0
    %1613 = vmatprep.subr.mxu0 0.0
    %1614 = vmatpush1.msra.mxu0 0.0
    %1615 = vmatprep.subr.mxu0 0.0
    %1616 = vmatpush1.msra.mxu0 0.0
    %1617 = vmatprep.subr.mxu0 0.0
    %1618 = vmatpush1.msra.mxu0 0.0
    %1619 = vmatprep.subr.mxu0 0.0
    %1620 = vmatpush1.msra.mxu0 0.0
    %1621 = vmatprep.subr.mxu0 0.0
    %1622 = vmatpush1.msra.mxu0 0.0
    %1623 = vmatprep.subr.mxu0 0.0
    %1624 = vmatpush1.msra.mxu0 0.0
    %1625 = vmatprep.subr.mxu0 0.0
    %1626 = vmatpush1.msra.mxu0 0.0
    %1627 = vmatprep.subr.mxu0 0.0
    %1628 = vmatpush1.msra.mxu0 0.0
    %1629 = vmatprep.subr.mxu0 0.0
    %1630 = vmatpush1.msra.mxu0 0.0
    %1631 = vmatprep.subr.mxu0 0.0
    %1632 = vmatpush1.msra.mxu0 0.0
    %1633 = vmatprep.subr.mxu0 0.0
    %1634 = vmatpush1.msra.mxu0 0.0
    %1635 = vmatprep.subr.mxu0 0.0
    %1636 = vmatpush1.msra.mxu0 0.0
    %1637 = vmatprep.subr.mxu0 0.0
    %1638 = vmatpush1.msra.mxu0 0.0
    %1639 = vmatprep.mubr.f32.mxu0 0.0
    %1640 = vmatmul.mubr.f32.gmra.mrb[0].mxu0 %v1573
    %v1641 = vpop.f32.mrb[0].mxu0
    %v1642 = vadd.f32 0.0, %v1641
    %v1643 = vpop.f32.mrb[0].mxu0
    %1644 = vdwg.mxu0
    %v1646 = vsel %vm311, %v1407, 0
    %1648 = vmatprep.subr.mxu0 0.0
    %1649 = vmatpush1.msra.mxu0 %v293
    %1650 = vmatprep.subr.mxu0 0.0
    %1651 = vmatpush1.msra.mxu0 %v294
    %1652 = vmatprep.subr.mxu0 0.0
    %1653 = vmatpush1.msra.mxu0 0.0
    %1654 = vmatprep.subr.mxu0 0.0
    %1655 = vmatpush1.msra.mxu0 0.0
    %1656 = vmatprep.subr.mxu0 0.0
    %1657 = vmatpush1.msra.mxu0 0.0
    %1658 = vmatprep.subr.mxu0 0.0
    %1659 = vmatpush1.msra.mxu0 0.0
    %1660 = vmatprep.subr.mxu0 0.0
    %1661 = vmatpush1.msra.mxu0 0.0
    %1662 = vmatprep.subr.mxu0 0.0
    %1663 = vmatpush1.msra.mxu0 0.0
    %1664 = vmatprep.subr.mxu0 0.0
    %1665 = vmatpush1.msra.mxu0 0.0
    %1666 = vmatprep.subr.mxu0 0.0
    %1667 = vmatpush1.msra.mxu0 0.0
    %1668 = vmatprep.subr.mxu0 0.0
    %1669 = vmatpush1.msra.mxu0 0.0
    %1670 = vmatprep.subr.mxu0 0.0
    %1671 = vmatpush1.msra.mxu0 0.0
    %1672 = vmatprep.subr.mxu0 0.0
    %1673 = vmatpush1.msra.mxu0 0.0
    %1674 = vmatprep.subr.mxu0 0.0
    %1675 = vmatpush1.msra.mxu0 0.0
    %1676 = vmatprep.subr.mxu0 0.0
    %1677 = vmatpush1.msra.mxu0 0.0
    %1678 = vmatprep.subr.mxu0 0.0
    %1679 = vmatpush1.msra.mxu0 0.0
    %1680 = vmatprep.subr.mxu0 0.0
    %1681 = vmatpush1.msra.mxu0 0.0
    %1682 = vmatprep.subr.mxu0 0.0
    %1683 = vmatpush1.msra.mxu0 0.0
    %1684 = vmatprep.subr.mxu0 0.0
    %1685 = vmatpush1.msra.mxu0 0.0
    %1686 = vmatprep.subr.mxu0 0.0
    %1687 = vmatpush1.msra.mxu0 0.0
    %1688 = vmatprep.subr.mxu0 0.0
    %1689 = vmatpush1.msra.mxu0 0.0
    %1690 = vmatprep.subr.mxu0 0.0
    %1691 = vmatpush1.msra.mxu0 0.0
    %1692 = vmatprep.subr.mxu0 0.0
    %1693 = vmatpush1.msra.mxu0 0.0
    %1694 = vmatprep.subr.mxu0 0.0
    %1695 = vmatpush1.msra.mxu0 0.0
    %1696 = vmatprep.subr.mxu0 0.0
    %1697 = vmatpush1.msra.mxu0 0.0
    %1698 = vmatprep.subr.mxu0 0.0
    %1699 = vmatpush1.msra.mxu0 0.0
    %1700 = vmatprep.subr.mxu0 0.0
    %1701 = vmatpush1.msra.mxu0 0.0
    %1702 = vmatprep.subr.mxu0 0.0
    %1703 = vmatpush1.msra.mxu0 0.0
    %1704 = vmatprep.subr.mxu0 0.0
    %1705 = vmatpush1.msra.mxu0 0.0
    %1706 = vmatprep.subr.mxu0 0.0
    %1707 = vmatpush1.msra.mxu0 0.0
    %1708 = vmatprep.subr.mxu0 0.0
    %1709 = vmatpush1.msra.mxu0 0.0
    %1710 = vmatprep.subr.mxu0 0.0
    %1711 = vmatpush1.msra.mxu0 0.0
    %1712 = vmatprep.mubr.f32.mxu0 0.0
    %1713 = vmatmul.mubr.f32.gmra.mrb[0].mxu0 %v1646
    %v1714 = vpop.f32.mrb[0].mxu0
    %v1715 = vadd.f32 %v1642, %v1714
    %v1716 = vpop.f32.mrb[0].mxu0
    %1717 = vdwg.mxu0
    %1718 = vrot.lane.b32.xlu0 %v292, 96
    %v1719 = vpop.permute.xlu0 %1718
    %1720 = vrot.lane.b32.xlu0 %v292, 32
    %v1721 = vpop.permute.xlu0 %1720
    %v1722 = vsel %vm311, %v1719, 0
    %v1724 = vsel %vm311, %v1721, 0
    %1726 = vmatprep.subr.mxu0 0.0
    %1727 = vmatpush1.xpose.msra.mxu0 %v1724
    %1728 = vmatprep.subr.mxu0 0.0
    %1729 = vmatpush1.xpose.msra.mxu0 0.0
    %1730 = vmatprep.subr.mxu0 0.0
    %1731 = vmatpush1.xpose.msra.mxu0 0.0
    %1732 = vmatprep.subr.mxu0 0.0
    %1733 = vmatpush1.xpose.msra.mxu0 0.0
    %1734 = vmatprep.subr.mxu0 0.0
    %1735 = vmatpush1.xpose.msra.mxu0 0.0
    %1736 = vmatprep.subr.mxu0 0.0
    %1737 = vmatpush1.xpose.msra.mxu0 0.0
    %1738 = vmatprep.subr.mxu0 0.0
    %1739 = vmatpush1.xpose.msra.mxu0 0.0
    %1740 = vmatprep.subr.mxu0 0.0
    %1741 = vmatpush1.xpose.msra.mxu0 0.0
    %1742 = vmatprep.subr.mxu0 0.0
    %1743 = vmatpush1.xpose.msra.mxu0 0.0
    %1744 = vmatprep.subr.mxu0 0.0
    %1745 = vmatpush1.xpose.msra.mxu0 0.0
    %1746 = vmatprep.subr.mxu0 0.0
    %1747 = vmatpush1.xpose.msra.mxu0 0.0
    %1748 = vmatprep.subr.mxu0 0.0
    %1749 = vmatpush1.xpose.msra.mxu0 0.0
    %1750 = vmatprep.subr.mxu0 0.0
    %1751 = vmatpush1.xpose.msra.mxu0 0.0
    %1752 = vmatprep.subr.mxu0 0.0
    %1753 = vmatpush1.xpose.msra.mxu0 0.0
    %1754 = vmatprep.subr.mxu0 0.0
    %1755 = vmatpush1.xpose.msra.mxu0 0.0
    %1756 = vmatprep.subr.mxu0 0.0
    %1757 = vmatpush1.xpose.msra.mxu0 0.0
    %1758 = vmatprep.subr.mxu0 0.0
    %1759 = vmatpush1.xpose.msra.mxu0 0.0
    %1760 = vmatprep.subr.mxu0 0.0
    %1761 = vmatpush1.xpose.msra.mxu0 0.0
    %1762 = vmatprep.subr.mxu0 0.0
    %1763 = vmatpush1.xpose.msra.mxu0 0.0
    %1764 = vmatprep.subr.mxu0 0.0
    %1765 = vmatpush1.xpose.msra.mxu0 0.0
    %1766 = vmatprep.subr.mxu0 0.0
    %1767 = vmatpush1.xpose.msra.mxu0 0.0
    %1768 = vmatprep.subr.mxu0 0.0
    %1769 = vmatpush1.xpose.msra.mxu0 0.0
    %1770 = vmatprep.subr.mxu0 0.0
    %1771 = vmatpush1.xpose.msra.mxu0 0.0
    %1772 = vmatprep.subr.mxu0 0.0
    %1773 = vmatpush1.xpose.msra.mxu0 0.0
    %1774 = vmatprep.subr.mxu0 0.0
    %1775 = vmatpush1.xpose.msra.mxu0 0.0
    %1776 = vmatprep.subr.mxu0 0.0
    %1777 = vmatpush1.xpose.msra.mxu0 0.0
    %1778 = vmatprep.subr.mxu0 0.0
    %1779 = vmatpush1.xpose.msra.mxu0 0.0
    %1780 = vmatprep.subr.mxu0 0.0
    %1781 = vmatpush1.xpose.msra.mxu0 0.0
    %1782 = vmatprep.subr.mxu0 0.0
    %1783 = vmatpush1.xpose.msra.mxu0 0.0
    %1784 = vmatprep.subr.mxu0 0.0
    %1785 = vmatpush1.xpose.msra.mxu0 0.0
    %1786 = vmatprep.subr.mxu0 0.0
    %1787 = vmatpush1.xpose.msra.mxu0 0.0
    %1788 = vmatprep.subr.mxu0 0.0
    %1789 = vmatpush1.xpose.msra.mxu0 0.0
    %1790 = vmatprep.mubr.f32.mxu0 0.0
    %1791 = vmatmul.mubr.f32.gmra.mrb[0].mxu0 %v1722
    %v1792 = vpop.f32.mrb[0].mxu0
    %v1793 = vadd.f32 %v1251, %v1792
    %v1794 = vpop.f32.mrb[0].mxu0
    %1795 = vdwg.mxu0
    %v1796 = vmul.f32 %v1793, 1.442695
    %v1797 = vpow.pop %v1796
    %v1798 = vsel %vm388, %v1797, 0.0
    %1799 = vadd.xlane.f32.xlu0 %v1798
    %v1800 = vpop.xlane.xlu0 %1799
    %v1801 = vrcp.pop %v1800
    %v1802 = vmul.f32 %v1797, %v1801
    %1803 = vrot.lane.b32.xlu0 %v284, 96
    %v1804 = vpop.permute.xlu0 %1803
    %v1807 = vsel %vm388, %v1802, 0
    %1809 = vmatprep.subr.mxu0 0.0
    %1810 = vmatpush1.msra.mxu0 %v1804
    %1811 = vmatprep.subr.mxu0 0.0
    %1812 = vmatpush1.msra.mxu0 0.0
    %1813 = vmatprep.subr.mxu0 0.0
    %1814 = vmatpush1.msra.mxu0 0.0
    %1815 = vmatprep.subr.mxu0 0.0
    %1816 = vmatpush1.msra.mxu0 0.0
    %1817 = vmatprep.subr.mxu0 0.0
    %1818 = vmatpush1.msra.mxu0 0.0
    %1819 = vmatprep.subr.mxu0 0.0
    %1820 = vmatpush1.msra.mxu0 0.0
    %1821 = vmatprep.subr.mxu0 0.0
    %1822 = vmatpush1.msra.mxu0 0.0
    %1823 = vmatprep.subr.mxu0 0.0
    %1824 = vmatpush1.msra.mxu0 0.0
    %1825 = vmatprep.subr.mxu0 0.0
    %1826 = vmatpush1.msra.mxu0 0.0
    %1827 = vmatprep.subr.mxu0 0.0
    %1828 = vmatpush1.msra.mxu0 0.0
    %1829 = vmatprep.subr.mxu0 0.0
    %1830 = vmatpush1.msra.mxu0 0.0
    %1831 = vmatprep.subr.mxu0 0.0
    %1832 = vmatpush1.msra.mxu0 0.0
    %1833 = vmatprep.subr.mxu0 0.0
    %1834 = vmatpush1.msra.mxu0 0.0
    %1835 = vmatprep.subr.mxu0 0.0
    %1836 = vmatpush1.msra.mxu0 0.0
    %1837 = vmatprep.subr.mxu0 0.0
    %1838 = vmatpush1.msra.mxu0 0.0
    %1839 = vmatprep.subr.mxu0 0.0
    %1840 = vmatpush1.msra.mxu0 0.0
    %1841 = vmatprep.subr.mxu0 0.0
    %1842 = vmatpush1.msra.mxu0 0.0
    %1843 = vmatprep.subr.mxu0 0.0
    %1844 = vmatpush1.msra.mxu0 0.0
    %1845 = vmatprep.subr.mxu0 0.0
    %1846 = vmatpush1.msra.mxu0 0.0
    %1847 = vmatprep.subr.mxu0 0.0
    %1848 = vmatpush1.msra.mxu0 0.0
    %1849 = vmatprep.subr.mxu0 0.0
    %1850 = vmatpush1.msra.mxu0 0.0
    %1851 = vmatprep.subr.mxu0 0.0
    %1852 = vmatpush1.msra.mxu0 0.0
    %1853 = vmatprep.subr.mxu0 0.0
    %1854 = vmatpush1.msra.mxu0 0.0
    %1855 = vmatprep.subr.mxu0 0.0
    %1856 = vmatpush1.msra.mxu0 0.0
    %1857 = vmatprep.subr.mxu0 0.0
    %1858 = vmatpush1.msra.mxu0 0.0
    %1859 = vmatprep.subr.mxu0 0.0
    %1860 = vmatpush1.msra.mxu0 0.0
    %1861 = vmatprep.subr.mxu0 0.0
    %1862 = vmatpush1.msra.mxu0 0.0
    %1863 = vmatprep.subr.mxu0 0.0
    %1864 = vmatpush1.msra.mxu0 0.0
    %1865 = vmatprep.subr.mxu0 0.0
    %1866 = vmatpush1.msra.mxu0 0.0
    %1867 = vmatprep.subr.mxu0 0.0
    %1868 = vmatpush1.msra.mxu0 0.0
    %1869 = vmatprep.subr.mxu0 0.0
    %1870 = vmatpush1.msra.mxu0 0.0
    %1871 = vmatprep.subr.mxu0 0.0
    %1872 = vmatpush1.msra.mxu0 0.0
    %1873 = vmatprep.mubr.f32.mxu0 0.0
    %1874 = vmatmul.mubr.f32.gmra.mrb[0].mxu0 %v1807
    %v1875 = vpop.f32.mrb[0].mxu0
    %v1876 = vadd.f32 0.0, %v1875
    %v1877 = vpop.f32.mrb[0].mxu0
    %1878 = vdwg.mxu0
    %v1880 = vsel %vm311, %v1876, 0
    %1882 = vmatprep.subr.mxu0 0.0
    %1883 = vmatpush1.msra.mxu0 %v297
    %1884 = vmatprep.subr.mxu0 0.0
    %1885 = vmatpush1.msra.mxu0 %v298
    %1886 = vmatprep.subr.mxu0 0.0
    %1887 = vmatpush1.msra.mxu0 0.0
    %1888 = vmatprep.subr.mxu0 0.0
    %1889 = vmatpush1.msra.mxu0 0.0
    %1890 = vmatprep.subr.mxu0 0.0
    %1891 = vmatpush1.msra.mxu0 0.0
    %1892 = vmatprep.subr.mxu0 0.0
    %1893 = vmatpush1.msra.mxu0 0.0
    %1894 = vmatprep.subr.mxu0 0.0
    %1895 = vmatpush1.msra.mxu0 0.0
    %1896 = vmatprep.subr.mxu0 0.0
    %1897 = vmatpush1.msra.mxu0 0.0
    %1898 = vmatprep.subr.mxu0 0.0
    %1899 = vmatpush1.msra.mxu0 0.0
    %1900 = vmatprep.subr.mxu0 0.0
    %1901 = vmatpush1.msra.mxu0 0.0
    %1902 = vmatprep.subr.mxu0 0.0
    %1903 = vmatpush1.msra.mxu0 0.0
    %1904 = vmatprep.subr.mxu0 0.0
    %1905 = vmatpush1.msra.mxu0 0.0
    %1906 = vmatprep.subr.mxu0 0.0
    %1907 = vmatpush1.msra.mxu0 0.0
    %1908 = vmatprep.subr.mxu0 0.0
    %1909 = vmatpush1.msra.mxu0 0.0
    %1910 = vmatprep.subr.mxu0 0.0
    %1911 = vmatpush1.msra.mxu0 0.0
    %1912 = vmatprep.subr.mxu0 0.0
    %1913 = vmatpush1.msra.mxu0 0.0
    %1914 = vmatprep.subr.mxu0 0.0
    %1915 = vmatpush1.msra.mxu0 0.0
    %1916 = vmatprep.subr.mxu0 0.0
    %1917 = vmatpush1.msra.mxu0 0.0
    %1918 = vmatprep.subr.mxu0 0.0
    %1919 = vmatpush1.msra.mxu0 0.0
    %1920 = vmatprep.subr.mxu0 0.0
    %1921 = vmatpush1.msra.mxu0 0.0
    %1922 = vmatprep.subr.mxu0 0.0
    %1923 = vmatpush1.msra.mxu0 0.0
    %1924 = vmatprep.subr.mxu0 0.0
    %1925 = vmatpush1.msra.mxu0 0.0
    %1926 = vmatprep.subr.mxu0 0.0
    %1927 = vmatpush1.msra.mxu0 0.0
    %1928 = vmatprep.subr.mxu0 0.0
    %1929 = vmatpush1.msra.mxu0 0.0
    %1930 = vmatprep.subr.mxu0 0.0
    %1931 = vmatpush1.msra.mxu0 0.0
    %1932 = vmatprep.subr.mxu0 0.0
    %1933 = vmatpush1.msra.mxu0 0.0
    %1934 = vmatprep.subr.mxu0 0.0
    %1935 = vmatpush1.msra.mxu0 0.0
    %1936 = vmatprep.subr.mxu0 0.0
    %1937 = vmatpush1.msra.mxu0 0.0
    %1938 = vmatprep.subr.mxu0 0.0
    %1939 = vmatpush1.msra.mxu0 0.0
    %1940 = vmatprep.subr.mxu0 0.0
    %1941 = vmatpush1.msra.mxu0 0.0
    %1942 = vmatprep.subr.mxu0 0.0
    %1943 = vmatpush1.msra.mxu0 0.0
    %1944 = vmatprep.subr.mxu0 0.0
    %1945 = vmatpush1.msra.mxu0 0.0
    %1946 = vmatprep.mubr.f32.mxu0 0.0
    %1947 = vmatmul.mubr.f32.gmra.mrb[0].mxu0 %v1880
    %v1948 = vpop.f32.mrb[0].mxu0
    %v1949 = vadd.f32 0.0, %v1948
    %v1950 = vpop.f32.mrb[0].mxu0
    %1951 = vdwg.mxu0
    %v1952 = vadd.f32 %v1715, %v1949
    %1953 = vrot.lane.b32.xlu0 %v292, 80
    %v1954 = vpop.permute.xlu0 %1953
    %1955 = vrot.lane.b32.xlu0 %v292, 16
    %v1956 = vpop.permute.xlu0 %1955
    %v1957 = vsel %vm311, %v1954, 0
    %v1959 = vsel %vm311, %v1956, 0
    %1961 = vmatprep.subr.mxu0 0.0
    %1962 = vmatpush1.xpose.msra.mxu0 %v1959
    %1963 = vmatprep.subr.mxu0 0.0
    %1964 = vmatpush1.xpose.msra.mxu0 0.0
    %1965 = vmatprep.subr.mxu0 0.0
    %1966 = vmatpush1.xpose.msra.mxu0 0.0
    %1967 = vmatprep.subr.mxu0 0.0
    %1968 = vmatpush1.xpose.msra.mxu0 0.0
    %1969 = vmatprep.subr.mxu0 0.0
    %1970 = vmatpush1.xpose.msra.mxu0 0.0
    %1971 = vmatprep.subr.mxu0 0.0
    %1972 = vmatpush1.xpose.msra.mxu0 0.0
    %1973 = vmatprep.subr.mxu0 0.0
    %1974 = vmatpush1.xpose.msra.mxu0 0.0
    %1975 = vmatprep.subr.mxu0 0.0
    %1976 = vmatpush1.xpose.msra.mxu0 0.0
    %1977 = vmatprep.subr.mxu0 0.0
    %1978 = vmatpush1.xpose.msra.mxu0 0.0
    %1979 = vmatprep.subr.mxu0 0.0
    %1980 = vmatpush1.xpose.msra.mxu0 0.0
    %1981 = vmatprep.subr.mxu0 0.0
    %1982 = vmatpush1.xpose.msra.mxu0 0.0
    %1983 = vmatprep.subr.mxu0 0.0
    %1984 = vmatpush1.xpose.msra.mxu0 0.0
    %1985 = vmatprep.subr.mxu0 0.0
    %1986 = vmatpush1.xpose.msra.mxu0 0.0
    %1987 = vmatprep.subr.mxu0 0.0
    %1988 = vmatpush1.xpose.msra.mxu0 0.0
    %1989 = vmatprep.subr.mxu0 0.0
    %1990 = vmatpush1.xpose.msra.mxu0 0.0
    %1991 = vmatprep.subr.mxu0 0.0
    %1992 = vmatpush1.xpose.msra.mxu0 0.0
    %1993 = vmatprep.subr.mxu0 0.0
    %1994 = vmatpush1.xpose.msra.mxu0 0.0
    %1995 = vmatprep.subr.mxu0 0.0
    %1996 = vmatpush1.xpose.msra.mxu0 0.0
    %1997 = vmatprep.subr.mxu0 0.0
    %1998 = vmatpush1.xpose.msra.mxu0 0.0
    %1999 = vmatprep.subr.mxu0 0.0
    %2000 = vmatpush1.xpose.msra.mxu0 0.0
    %2001 = vmatprep.subr.mxu0 0.0
    %2002 = vmatpush1.xpose.msra.mxu0 0.0
    %2003 = vmatprep.subr.mxu0 0.0
    %2004 = vmatpush1.xpose.msra.mxu0 0.0
    %2005 = vmatprep.subr.mxu0 0.0
    %2006 = vmatpush1.xpose.msra.mxu0 0.0
    %2007 = vmatprep.subr.mxu0 0.0
    %2008 = vmatpush1.xpose.msra.mxu0 0.0
    %2009 = vmatprep.subr.mxu0 0.0
    %2010 = vmatpush1.xpose.msra.mxu0 0.0
    %2011 = vmatprep.subr.mxu0 0.0
    %2012 = vmatpush1.xpose.msra.mxu0 0.0
    %2013 = vmatprep.subr.mxu0 0.0
    %2014 = vmatpush1.xpose.msra.mxu0 0.0
    %2015 = vmatprep.subr.mxu0 0.0
    %2016 = vmatpush1.xpose.msra.mxu0 0.0
    %2017 = vmatprep.subr.mxu0 0.0
    %2018 = vmatpush1.xpose.msra.mxu0 0.0
    %2019 = vmatprep.subr.mxu0 0.0
    %2020 = vmatpush1.xpose.msra.mxu0 0.0
    %2021 = vmatprep.subr.mxu0 0.0
    %2022 = vmatpush1.xpose.msra.mxu0 0.0
    %2023 = vmatprep.subr.mxu0 0.0
    %2024 = vmatpush1.xpose.msra.mxu0 0.0
    %2025 = vmatprep.mubr.f32.mxu0 0.0
    %2026 = vmatmul.mubr.f32.gmra.mrb[0].mxu0 %v1957
    %v2027 = vpop.f32.mrb[0].mxu0
    %v2028 = vadd.f32 %v1251, %v2027
    %v2029 = vpop.f32.mrb[0].mxu0
    %2030 = vdwg.mxu0
    %v2031 = vmul.f32 %v2028, 1.442695
    %v2032 = vpow.pop %v2031
    %v2033 = vsel %vm388, %v2032, 0.0
    %2034 = vadd.xlane.f32.xlu0 %v2033
    %v2035 = vpop.xlane.xlu0 %2034
    %v2036 = vrcp.pop %v2035
    %v2037 = vmul.f32 %v2032, %v2036
    %2038 = vrot.lane.b32.xlu0 %v284, 80
    %v2039 = vpop.permute.xlu0 %2038
    %v2042 = vsel %vm388, %v2037, 0
    %2044 = vmatprep.subr.mxu0 0.0
    %2045 = vmatpush1.msra.mxu0 %v2039
    %2046 = vmatprep.subr.mxu0 0.0
    %2047 = vmatpush1.msra.mxu0 0.0
    %2048 = vmatprep.subr.mxu0 0.0
    %2049 = vmatpush1.msra.mxu0 0.0
    %2050 = vmatprep.subr.mxu0 0.0
    %2051 = vmatpush1.msra.mxu0 0.0
    %2052 = vmatprep.subr.mxu0 0.0
    %2053 = vmatpush1.msra.mxu0 0.0
    %2054 = vmatprep.subr.mxu0 0.0
    %2055 = vmatpush1.msra.mxu0 0.0
    %2056 = vmatprep.subr.mxu0 0.0
    %2057 = vmatpush1.msra.mxu0 0.0
    %2058 = vmatprep.subr.mxu0 0.0
    %2059 = vmatpush1.msra.mxu0 0.0
    %2060 = vmatprep.subr.mxu0 0.0
    %2061 = vmatpush1.msra.mxu0 0.0
    %2062 = vmatprep.subr.mxu0 0.0
    %2063 = vmatpush1.msra.mxu0 0.0
    %2064 = vmatprep.subr.mxu0 0.0
    %2065 = vmatpush1.msra.mxu0 0.0
    %2066 = vmatprep.subr.mxu0 0.0
    %2067 = vmatpush1.msra.mxu0 0.0
    %2068 = vmatprep.subr.mxu0 0.0
    %2069 = vmatpush1.msra.mxu0 0.0
    %2070 = vmatprep.subr.mxu0 0.0
    %2071 = vmatpush1.msra.mxu0 0.0
    %2072 = vmatprep.subr.mxu0 0.0
    %2073 = vmatpush1.msra.mxu0 0.0
    %2074 = vmatprep.subr.mxu0 0.0
    %2075 = vmatpush1.msra.mxu0 0.0
    %2076 = vmatprep.subr.mxu0 0.0
    %2077 = vmatpush1.msra.mxu0 0.0
    %2078 = vmatprep.subr.mxu0 0.0
    %2079 = vmatpush1.msra.mxu0 0.0
    %2080 = vmatprep.subr.mxu0 0.0
    %2081 = vmatpush1.msra.mxu0 0.0
    %2082 = vmatprep.subr.mxu0 0.0
    %2083 = vmatpush1.msra.mxu0 0.0
    %2084 = vmatprep.subr.mxu0 0.0
    %2085 = vmatpush1.msra.mxu0 0.0
    %2086 = vmatprep.subr.mxu0 0.0
    %2087 = vmatpush1.msra.mxu0 0.0
    %2088 = vmatprep.subr.mxu0 0.0
    %2089 = vmatpush1.msra.mxu0 0.0
    %2090 = vmatprep.subr.mxu0 0.0
    %2091 = vmatpush1.msra.mxu0 0.0
    %2092 = vmatprep.subr.mxu0 0.0
    %2093 = vmatpush1.msra.mxu0 0.0
    %2094 = vmatprep.subr.mxu0 0.0
    %2095 = vmatpush1.msra.mxu0 0.0
    %2096 = vmatprep.subr.mxu0 0.0
    %2097 = vmatpush1.msra.mxu0 0.0
    %2098 = vmatprep.subr.mxu0 0.0
    %2099 = vmatpush1.msra.mxu0 0.0
    %2100 = vmatprep.subr.mxu0 0.0
    %2101 = vmatpush1.msra.mxu0 0.0
    %2102 = vmatprep.subr.mxu0 0.0
    %2103 = vmatpush1.msra.mxu0 0.0
    %2104 = vmatprep.subr.mxu0 0.0
    %2105 = vmatpush1.msra.mxu0 0.0
    %2106 = vmatprep.subr.mxu0 0.0
    %2107 = vmatpush1.msra.mxu0 0.0
    %2108 = vmatprep.mubr.f32.mxu0 0.0
    %2109 = vmatmul.mubr.f32.gmra.mrb[0].mxu0 %v2042
    %v2110 = vpop.f32.mrb[0].mxu0
    %v2111 = vadd.f32 0.0, %v2110
    %v2112 = vpop.f32.mrb[0].mxu0
    %2113 = vdwg.mxu0
    %v2115 = vsel %vm311, %v2111, 0
    %2117 = vmatprep.subr.mxu0 0.0
    %2118 = vmatpush1.msra.mxu0 %v299
    %2119 = vmatprep.subr.mxu0 0.0
    %2120 = vmatpush1.msra.mxu0 %v300
    %2121 = vmatprep.subr.mxu0 0.0
    %2122 = vmatpush1.msra.mxu0 0.0
    %2123 = vmatprep.subr.mxu0 0.0
    %2124 = vmatpush1.msra.mxu0 0.0
    %2125 = vmatprep.subr.mxu0 0.0
    %2126 = vmatpush1.msra.mxu0 0.0
    %2127 = vmatprep.subr.mxu0 0.0
    %2128 = vmatpush1.msra.mxu0 0.0
    %2129 = vmatprep.subr.mxu0 0.0
    %2130 = vmatpush1.msra.mxu0 0.0
    %2131 = vmatprep.subr.mxu0 0.0
    %2132 = vmatpush1.msra.mxu0 0.0
    %2133 = vmatprep.subr.mxu0 0.0
    %2134 = vmatpush1.msra.mxu0 0.0
    %2135 = vmatprep.subr.mxu0 0.0
    %2136 = vmatpush1.msra.mxu0 0.0
    %2137 = vmatprep.subr.mxu0 0.0
    %2138 = vmatpush1.msra.mxu0 0.0
    %2139 = vmatprep.subr.mxu0 0.0
    %2140 = vmatpush1.msra.mxu0 0.0
    %2141 = vmatprep.subr.mxu0 0.0
    %2142 = vmatpush1.msra.mxu0 0.0
    %2143 = vmatprep.subr.mxu0 0.0
    %2144 = vmatpush1.msra.mxu0 0.0
    %2145 = vmatprep.subr.mxu0 0.0
    %2146 = vmatpush1.msra.mxu0 0.0
    %2147 = vmatprep.subr.mxu0 0.0
    %2148 = vmatpush1.msra.mxu0 0.0
    %2149 = vmatprep.subr.mxu0 0.0
    %2150 = vmatpush1.msra.mxu0 0.0
    %2151 = vmatprep.subr.mxu0 0.0
    %2152 = vmatpush1.msra.mxu0 0.0
    %2153 = vmatprep.subr.mxu0 0.0
    %2154 = vmatpush1.msra.mxu0 0.0
    %2155 = vmatprep.subr.mxu0 0.0
    %2156 = vmatpush1.msra.mxu0 0.0
    %2157 = vmatprep.subr.mxu0 0.0
    %2158 = vmatpush1.msra.mxu0 0.0
    %2159 = vmatprep.subr.mxu0 0.0
    %2160 = vmatpush1.msra.mxu0 0.0
    %2161 = vmatprep.subr.mxu0 0.0
    %2162 = vmatpush1.msra.mxu0 0.0
    %2163 = vmatprep.subr.mxu0 0.0
    %2164 = vmatpush1.msra.mxu0 0.0
    %2165 = vmatprep.subr.mxu0 0.0
    %2166 = vmatpush1.msra.mxu0 0.0
    %2167 = vmatprep.subr.mxu0 0.0
    %2168 = vmatpush1.msra.mxu0 0.0
    %2169 = vmatprep.subr.mxu0 0.0
    %2170 = vmatpush1.msra.mxu0 0.0
    %2171 = vmatprep.subr.mxu0 0.0
    %2172 = vmatpush1.msra.mxu0 0.0
    %2173 = vmatprep.subr.mxu0 0.0
    %2174 = vmatpush1.msra.mxu0 0.0
    %2175 = vmatprep.subr.mxu0 0.0
    %2176 = vmatpush1.msra.mxu0 0.0
    %2177 = vmatprep.subr.mxu0 0.0
    %2178 = vmatpush1.msra.mxu0 0.0
    %2179 = vmatprep.subr.mxu0 0.0
    %2180 = vmatpush1.msra.mxu0 0.0
    %2181 = vmatprep.mubr.f32.mxu0 0.0
    %2182 = vmatmul.mubr.f32.gmra.mrb[0].mxu0 %v2115
    %v2183 = vpop.f32.mrb[0].mxu0
    %v2184 = vadd.f32 0.0, %v2183
    %v2185 = vpop.f32.mrb[0].mxu0
    %2186 = vdwg.mxu0
    %v2187 = vadd.f32 %v1952, %v2184
    %v2188 = vadd.f32 %v74, %v1244
    %v2189 = vadd.f32 %v75, %v2187
    %v2190 = vmul.f32 %v2188, %v2188
    %v2191 = vmul.f32 %v2189, %v2189
    %v2192 = vsel %vm83, %v2190, 0.0
    %2193 = vadd.xlane.f32.xlu0 %v2192
    %v2194 = vpop.xlane.xlu0 %2193
    %v2195 = vsel %vm83, %v2191, 0.0
    %2196 = vadd.xlane.f32.xlu0 %v2195
    %v2197 = vpop.xlane.xlu0 %2196
    %v2198 = vmul.f32 %v2194, %v90
    %v2199 = vmul.f32 %v2197, %v90
    %v2200 = vadd.f32 %v2198, 1e-06
    %v2201 = vadd.f32 %v2199, 1e-06
    %v2202 = vrsqrt.pop %v2200
    %v2203 = vrsqrt.pop %v2201
    %v2204 = vmul.f32 %v2188, %v2202
    %v2205 = vmul.f32 %v2189, %v2203
    %v2206 = vlaneseq
    %v2207 = vshrl.u32 %v2206, 7
    %v2208 = vsub.s32 1, %v2207
    %v2209 = vrot.slane %v80, %v2208
    %v2210 = vmul.f32 %v2204, %v2209
    %v2211 = vmul.f32 %v2205, %v2209
    %v2212 = vld [vmem:[#allocation5] sm:$0xff]
    %v2213 = vld [vmem:[#allocation5 + $0x8] sm:$0xff]
    %v2214 = vld [vmem:[#allocation5 + $0x10] sm:$0xff]
    %v2215 = vld [vmem:[#allocation5 + $0x18] sm:$0xff]
    %v2216 = vld [vmem:[#allocation5 + $0x20] sm:$0xff]
    %v2217 = vld [vmem:[#allocation5 + $0x28] sm:$0xff]
    %v2218 = vld [vmem:[#allocation5 + $0x30] sm:$0xff]
    %v2219 = vld [vmem:[#allocation5 + $0x38] sm:$0xff]
    %v2220 = vld [vmem:[#allocation5 + $0x40] sm:$0xff]
    %v2221 = vld [vmem:[#allocation5 + $0x48] sm:$0xff]
    %v2222 = vld [vmem:[#allocation5 + $0x50] sm:$0xff]
    %v2223 = vld [vmem:[#allocation5 + $0x58] sm:$0xff]
    %v2224 = vld [vmem:[#allocation5 + $0x60] sm:$0xff]
    %v2225 = vld [vmem:[#allocation5 + $0x68] sm:$0xff]
    %v2226 = vld [vmem:[#allocation5 + $0x70] sm:$0xff]
    %v2227 = vld [vmem:[#allocation5 + $0x78] sm:$0xff]
    %v2229 = vsel %vm83, %v2210, 0
    %v2232 = vsel %vm83, %v2211, 0
    %2234 = vmatprep.subr.mxu0 %v2213
    %2235 = vmatpush1.msra.mxu0 %v2212
    %2236 = vmatprep.subr.mxu0 %v2215
    %2237 = vmatpush1.msra.mxu0 %v2214
    %2238 = vmatprep.subr.mxu0 %v2217
    %2239 = vmatpush1.msra.mxu0 %v2216
    %2240 = vmatprep.subr.mxu0 %v2219
    %2241 = vmatpush1.msra.mxu0 %v2218
    %2242 = vmatprep.subr.mxu0 %v2221
    %2243 = vmatpush1.msra.mxu0 %v2220
    %2244 = vmatprep.subr.mxu0 %v2223
    %2245 = vmatpush1.msra.mxu0 %v2222
    %2246 = vmatprep.subr.mxu0 %v2225
    %2247 = vmatpush1.msra.mxu0 %v2224
    %2248 = vmatprep.subr.mxu0 %v2227
    %2249 = vmatpush1.msra.mxu0 %v2226
    %2250 = vmatprep.subr.mxu0 0.0
    %2251 = vmatpush1.msra.mxu0 0.0
    %2252 = vmatprep.subr.mxu0 0.0
    %2253 = vmatpush1.msra.mxu0 0.0
    %2254 = vmatprep.subr.mxu0 0.0
    %2255 = vmatpush1.msra.mxu0 0.0
    %2256 = vmatprep.subr.mxu0 0.0
    %2257 = vmatpush1.msra.mxu0 0.0
    %2258 = vmatprep.subr.mxu0 0.0
    %2259 = vmatpush1.msra.mxu0 0.0
    %2260 = vmatprep.subr.mxu0 0.0
    %2261 = vmatpush1.msra.mxu0 0.0
    %2262 = vmatprep.subr.mxu0 0.0
    %2263 = vmatpush1.msra.mxu0 0.0
    %2264 = vmatprep.subr.mxu0 0.0
    %2265 = vmatpush1.msra.mxu0 0.0
    %2266 = vmatprep.subr.mxu0 0.0
    %2267 = vmatpush1.msra.mxu0 0.0
    %2268 = vmatprep.subr.mxu0 0.0
    %2269 = vmatpush1.msra.mxu0 0.0
    %2270 = vmatprep.subr.mxu0 0.0
    %2271 = vmatpush1.msra.mxu0 0.0
    %2272 = vmatprep.subr.mxu0 0.0
    %2273 = vmatpush1.msra.mxu0 0.0
    %2274 = vmatprep.subr.mxu0 0.0
    %2275 = vmatpush1.msra.mxu0 0.0
    %2276 = vmatprep.subr.mxu0 0.0
    %2277 = vmatpush1.msra.mxu0 0.0
    %2278 = vmatprep.subr.mxu0 0.0
    %2279 = vmatpush1.msra.mxu0 0.0
    %2280 = vmatprep.subr.mxu0 0.0
    %2281 = vmatpush1.msra.mxu0 0.0
    %2282 = vmatprep.subr.mxu0 0.0
    %2283 = vmatpush1.msra.mxu0 0.0
    %2284 = vmatprep.subr.mxu0 0.0
    %2285 = vmatpush1.msra.mxu0 0.0
    %2286 = vmatprep.subr.mxu0 0.0
    %2287 = vmatpush1.msra.mxu0 0.0
    %2288 = vmatprep.subr.mxu0 0.0
    %2289 = vmatpush1.msra.mxu0 0.0
    %2290 = vmatprep.subr.mxu0 0.0
    %2291 = vmatpush1.msra.mxu0 0.0
    %2292 = vmatprep.subr.mxu0 0.0
    %2293 = vmatpush1.msra.mxu0 0.0
    %2294 = vmatprep.subr.mxu0 0.0
    %2295 = vmatpush1.msra.mxu0 0.0
    %2296 = vmatprep.subr.mxu0 0.0
    %2297 = vmatpush1.msra.mxu0 0.0
    %2298 = vmatprep.mubr.f32.mxu0 0.0
    %2299 = vmatmul.mubr.f32.gmra.mrb[0].mxu0 %v2229
    %v2300 = vpop.f32.mrb[0].mxu0
    %v2301 = vadd.f32 0.0, %v2300
    %v2302 = vpop.f32.mrb[0].mxu0
    %v2303 = vadd.f32 0.0, %v2302
    %2304 = vmatprep.mubr.f32.mxu0 0.0
    %2305 = vmatmul.mubr.f32.gmra.mrb[0].mxu0 %v2232
    %v2306 = vpop.f32.mrb[0].mxu0
    %v2307 = vadd.f32 0.0, %v2306
    %v2308 = vpop.f32.mrb[0].mxu0
    %v2309 = vadd.f32 0.0, %v2308
    %2310 = vdwg.mxu0
    %v2311 = vxor.u32 %v2301, 2147483648
    %v2312 = vxor.u32 %v2307, 2147483648
    %v2313 = vmul.f32 %v2311, 1.442695
    %v2314 = vpow.pop %v2313
    %v2315 = vmul.f32 %v2312, 1.442695
    %v2316 = vpow.pop %v2315
    %v2317 = vadd.f32 %v2314, 1.0
    %v2318 = vadd.f32 %v2316, 1.0
    %v2319 = vrcp.pop %v2317
    %v2320 = vmul.f32 1.0, %v2319
    %v2321 = vrcp.pop %v2318
    %v2322 = vmul.f32 1.0, %v2321
    %v2323 = vmul.f32 %v2301, %v2320
    %v2324 = vmul.f32 %v2307, %v2322
    %v2325 = vmul.f32 %v2323, %v2303
    %v2326 = vmul.f32 %v2324, %v2309
    %v2327 = vld [vmem:[#allocation7] sm:$0xff]
    %v2328 = vld [vmem:[#allocation7 + $0x8] sm:$0xff]
    %v2329 = vld [vmem:[#allocation7 + $0x10] sm:$0xff]
    %v2330 = vld [vmem:[#allocation7 + $0x18] sm:$0xff]
    %v2331 = vld [vmem:[#allocation7 + $0x20] sm:$0xff]
    %v2332 = vld [vmem:[#allocation7 + $0x28] sm:$0xff]
    %v2333 = vld [vmem:[#allocation7 + $0x30] sm:$0xff]
    %v2334 = vld [vmem:[#allocation7 + $0x38] sm:$0xff]
    %v2335 = vld [vmem:[#allocation7 + $0x40] sm:$0xff]
    %v2336 = vld [vmem:[#allocation7 + $0x48] sm:$0xff]
    %v2337 = vld [vmem:[#allocation7 + $0x50] sm:$0xff]
    %v2338 = vld [vmem:[#allocation7 + $0x58] sm:$0xff]
    %v2339 = vld [vmem:[#allocation7 + $0x60] sm:$0xff]
    %v2340 = vld [vmem:[#allocation7 + $0x68] sm:$0xff]
    %v2341 = vld [vmem:[#allocation7 + $0x70] sm:$0xff]
    %v2342 = vld [vmem:[#allocation7 + $0x78] sm:$0xff]
    %2343 = vmatprep.subr.mxu0 0.0
    %2344 = vmatpush1.msra.mxu0 %v2327
    %2345 = vmatprep.subr.mxu0 0.0
    %2346 = vmatpush1.msra.mxu0 %v2328
    %2347 = vmatprep.subr.mxu0 0.0
    %2348 = vmatpush1.msra.mxu0 %v2329
    %2349 = vmatprep.subr.mxu0 0.0
    %2350 = vmatpush1.msra.mxu0 %v2330
    %2351 = vmatprep.subr.mxu0 0.0
    %2352 = vmatpush1.msra.mxu0 %v2331
    %2353 = vmatprep.subr.mxu0 0.0
    %2354 = vmatpush1.msra.mxu0 %v2332
    %2355 = vmatprep.subr.mxu0 0.0
    %2356 = vmatpush1.msra.mxu0 %v2333
    %2357 = vmatprep.subr.mxu0 0.0
    %2358 = vmatpush1.msra.mxu0 %v2334
    %2359 = vmatprep.subr.mxu0 0.0
    %2360 = vmatpush1.msra.mxu0 %v2335
    %2361 = vmatprep.subr.mxu0 0.0
    %2362 = vmatpush1.msra.mxu0 %v2336
    %2363 = vmatprep.subr.mxu0 0.0
    %2364 = vmatpush1.msra.mxu0 %v2337
    %2365 = vmatprep.subr.mxu0 0.0
    %2366 = vmatpush1.msra.mxu0 %v2338
    %2367 = vmatprep.subr.mxu0 0.0
    %2368 = vmatpush1.msra.mxu0 %v2339
    %2369 = vmatprep.subr.mxu0 0.0
    %2370 = vmatpush1.msra.mxu0 %v2340
    %2371 = vmatprep.subr.mxu0 0.0
    %2372 = vmatpush1.msra.mxu0 %v2341
    %2373 = vmatprep.subr.mxu0 0.0
    %2374 = vmatpush1.msra.mxu0 %v2342
    %2375 = vmatprep.subr.mxu0 0.0
    %2376 = vmatpush1.msra.mxu0 0.0
    %2377 = vmatprep.subr.mxu0 0.0
    %2378 = vmatpush1.msra.mxu0 0.0
    %2379 = vmatprep.subr.mxu0 0.0
    %2380 = vmatpush1.msra.mxu0 0.0
    %2381 = vmatprep.subr.mxu0 0.0
    %2382 = vmatpush1.msra.mxu0 0.0
    %2383 = vmatprep.subr.mxu0 0.0
    %2384 = vmatpush1.msra.mxu0 0.0
    %2385 = vmatprep.subr.mxu0 0.0
    %2386 = vmatpush1.msra.mxu0 0.0
    %2387 = vmatprep.subr.mxu0 0.0
    %2388 = vmatpush1.msra.mxu0 0.0
    %2389 = vmatprep.subr.mxu0 0.0
    %2390 = vmatpush1.msra.mxu0 0.0
    %2391 = vmatprep.subr.mxu0 0.0
    %2392 = vmatpush1.msra.mxu0 0.0
    %2393 = vmatprep.subr.mxu0 0.0
    %2394 = vmatpush1.msra.mxu0 0.0
    %2395 = vmatprep.subr.mxu0 0.0
    %2396 = vmatpush1.msra.mxu0 0.0
    %2397 = vmatprep.subr.mxu0 0.0
    %2398 = vmatpush1.msra.mxu0 0.0
    %2399 = vmatprep.subr.mxu0 0.0
    %2400 = vmatpush1.msra.mxu0 0.0
    %2401 = vmatprep.subr.mxu0 0.0
    %2402 = vmatpush1.msra.mxu0 0.0
    %2403 = vmatprep.subr.mxu0 0.0
    %2404 = vmatpush1.msra.mxu0 0.0
    %2405 = vmatprep.subr.mxu0 0.0
    %2406 = vmatpush1.msra.mxu0 0.0
    %2407 = vmatprep.mubr.f32.mxu0 0.0
    %2408 = vmatmul.mubr.f32.gmra.mrb[0].mxu0 %v2325
    %v2409 = vpop.f32.mrb[0].mxu0
    %v2410 = vadd.f32 0.0, %v2409
    %v2411 = vpop.f32.mrb[0].mxu0
    %2412 = vmatprep.mubr.f32.mxu0 0.0
    %2413 = vmatmul.mubr.f32.gmra.mrb[0].mxu0 %v2326
    %v2414 = vpop.f32.mrb[0].mxu0
    %v2415 = vadd.f32 0.0, %v2414
    %v2416 = vpop.f32.mrb[0].mxu0
    %2417 = vdwg.mxu0
    %v2418 = vadd.f32 %v2188, %v2410
    %v2419 = vadd.f32 %v2189, %v2415
    %v2420 = vmul.f32 %v2418, %v2418
    %v2421 = vmul.f32 %v2419, %v2419
    %v2422 = vsel %vm83, %v2420, 0.0
    %2423 = vadd.xlane.f32.xlu0 %v2422
    %v2424 = vpop.xlane.xlu0 %2423
    %v2425 = vsel %vm83, %v2421, 0.0
    %2426 = vadd.xlane.f32.xlu0 %v2425
    %v2427 = vpop.xlane.xlu0 %2426
    %v2428 = vmul.f32 %v2424, %v90
    %v2429 = vmul.f32 %v2427, %v90
    %v2430 = vadd.f32 %v2428, 1e-06
    %v2431 = vadd.f32 %v2429, 1e-06
    %v2432 = vrsqrt.pop %v2430
    %v2433 = vrsqrt.pop %v2431
    %v2434 = vmul.f32 %v2418, %v2432
    %v2435 = vmul.f32 %v2419, %v2433
    %v2436 = vlaneseq
    %v2437 = vshrl.u32 %v2436, 7
    %v2438 = vsub.s32 2, %v2437
    %v2439 = vrot.slane %v80, %v2438
    %v2440 = vmul.f32 %v2434, %v2439
    %v2441 = vmul.f32 %v2435, %v2439
    %s2442 = scalar_lea.vmem [#allocation2], 192
    %v2443 = vld [vmem:[%s2442] sm:$0xff]
    %v2444 = vld [vmem:[%s2442 + $0x8] sm:$0xff]
    %v2445 = vld [vmem:[%s2442 + $0x10] sm:$0xff]
    %v2446 = vld [vmem:[%s2442 + $0x18] sm:$0xff]
    %v2447 = vld [vmem:[%s2442 + $0x20] sm:$0xff]
    %v2448 = vld [vmem:[%s2442 + $0x28] sm:$0xff]
    %v2449 = vld [vmem:[%s2442 + $0x30] sm:$0xff]
    %v2450 = vld [vmem:[%s2442 + $0x38] sm:$0xff]
    %v2451 = vld [vmem:[%s2442 + $0x40] sm:$0xff]
    %v2452 = vld [vmem:[%s2442 + $0x48] sm:$0xff]
    %v2453 = vld [vmem:[%s2442 + $0x50] sm:$0xff]
    %v2454 = vld [vmem:[%s2442 + $0x58] sm:$0xff]
    %v2455 = vld [vmem:[%s2442 + $0x60] sm:$0xff]
    %v2456 = vld [vmem:[%s2442 + $0x68] sm:$0xff]
    %v2457 = vld [vmem:[%s2442 + $0x70] sm:$0xff]
    %v2458 = vld [vmem:[%s2442 + $0x78] sm:$0xff]
    %v2459 = vld [vmem:[%s2442 + $0x80] sm:$0xff]
    %v2460 = vld [vmem:[%s2442 + $0x88] sm:$0xff]
    %v2461 = vld [vmem:[%s2442 + $0x90] sm:$0xff]
    %v2462 = vld [vmem:[%s2442 + $0x98] sm:$0xff]
    %v2463 = vld [vmem:[%s2442 + $0xa0] sm:$0xff]
    %v2464 = vld [vmem:[%s2442 + $0xa8] sm:$0xff]
    %v2465 = vld [vmem:[%s2442 + $0xb0] sm:$0xff]
    %v2466 = vld [vmem:[%s2442 + $0xb8] sm:$0xff]
    %v2468 = vsel %vm83, %v2440, 0
    %v2471 = vsel %vm83, %v2441, 0
    %2473 = vmatprep.subr.mxu0 %v2444
    %2474 = vmatpush1.msra.mxu0 %v2443
    %2475 = vmatprep.subr.mxu0 %v2447
    %2476 = vmatpush1.msra.mxu0 %v2446
    %2477 = vmatprep.subr.mxu0 %v2450
    %2478 = vmatpush1.msra.mxu0 %v2449
    %2479 = vmatprep.subr.mxu0 %v2453
    %2480 = vmatpush1.msra.mxu0 %v2452
    %2481 = vmatprep.subr.mxu0 %v2456
    %2482 = vmatpush1.msra.mxu0 %v2455
    %2483 = vmatprep.subr.mxu0 %v2459
    %2484 = vmatpush1.msra.mxu0 %v2458
    %2485 = vmatprep.subr.mxu0 %v2462
    %2486 = vmatpush1.msra.mxu0 %v2461
    %2487 = vmatprep.subr.mxu0 %v2465
    %2488 = vmatpush1.msra.mxu0 %v2464
    %2489 = vmatprep.subr.mxu0 0.0
    %2490 = vmatpush1.msra.mxu0 0.0
    %2491 = vmatprep.subr.mxu0 0.0
    %2492 = vmatpush1.msra.mxu0 0.0
    %2493 = vmatprep.subr.mxu0 0.0
    %2494 = vmatpush1.msra.mxu0 0.0
    %2495 = vmatprep.subr.mxu0 0.0
    %2496 = vmatpush1.msra.mxu0 0.0
    %2497 = vmatprep.subr.mxu0 0.0
    %2498 = vmatpush1.msra.mxu0 0.0
    %2499 = vmatprep.subr.mxu0 0.0
    %2500 = vmatpush1.msra.mxu0 0.0
    %2501 = vmatprep.subr.mxu0 0.0
    %2502 = vmatpush1.msra.mxu0 0.0
    %2503 = vmatprep.subr.mxu0 0.0
    %2504 = vmatpush1.msra.mxu0 0.0
    %2505 = vmatprep.subr.mxu0 0.0
    %2506 = vmatpush1.msra.mxu0 0.0
    %2507 = vmatprep.subr.mxu0 0.0
    %2508 = vmatpush1.msra.mxu0 0.0
    %2509 = vmatprep.subr.mxu0 0.0
    %2510 = vmatpush1.msra.mxu0 0.0
    %2511 = vmatprep.subr.mxu0 0.0
    %2512 = vmatpush1.msra.mxu0 0.0
    %2513 = vmatprep.subr.mxu0 0.0
    %2514 = vmatpush1.msra.mxu0 0.0
    %2515 = vmatprep.subr.mxu0 0.0
    %2516 = vmatpush1.msra.mxu0 0.0
    %2517 = vmatprep.subr.mxu0 0.0
    %2518 = vmatpush1.msra.mxu0 0.0
    %2519 = vmatprep.subr.mxu0 0.0
    %2520 = vmatpush1.msra.mxu0 0.0
    %2521 = vmatprep.subr.mxu0 0.0
    %2522 = vmatpush1.msra.mxu0 0.0
    %2523 = vmatprep.subr.mxu0 0.0
    %2524 = vmatpush1.msra.mxu0 0.0
    %2525 = vmatprep.subr.mxu0 0.0
    %2526 = vmatpush1.msra.mxu0 0.0
    %2527 = vmatprep.subr.mxu0 0.0
    %2528 = vmatpush1.msra.mxu0 0.0
    %2529 = vmatprep.subr.mxu0 0.0
    %2530 = vmatpush1.msra.mxu0 0.0
    %2531 = vmatprep.subr.mxu0 0.0
    %2532 = vmatpush1.msra.mxu0 0.0
    %2533 = vmatprep.subr.mxu0 0.0
    %2534 = vmatpush1.msra.mxu0 0.0
    %2535 = vmatprep.subr.mxu0 0.0
    %2536 = vmatpush1.msra.mxu0 0.0
    %2537 = vmatprep.mubr.f32.mxu0 0.0
    %2538 = vmatmul.mubr.f32.gmra.mrb[0].mxu0 %v2468
    %v2539 = vpop.f32.mrb[0].mxu0
    %v2540 = vadd.f32 0.0, %v2539
    %v2541 = vpop.f32.mrb[0].mxu0
    %v2542 = vadd.f32 0.0, %v2541
    %2543 = vmatprep.mubr.f32.mxu0 0.0
    %2544 = vmatmul.mubr.f32.gmra.mrb[0].mxu0 %v2471
    %v2545 = vpop.f32.mrb[0].mxu0
    %v2546 = vadd.f32 0.0, %v2545
    %v2547 = vpop.f32.mrb[0].mxu0
    %v2548 = vadd.f32 0.0, %v2547
    %2549 = vdwg.mxu0
    %2550 = vmatprep.subr.mxu0 0.0
    %2551 = vmatpush1.msra.mxu0 %v2445
    %2552 = vmatprep.subr.mxu0 0.0
    %2553 = vmatpush1.msra.mxu0 %v2448
    %2554 = vmatprep.subr.mxu0 0.0
    %2555 = vmatpush1.msra.mxu0 %v2451
    %2556 = vmatprep.subr.mxu0 0.0
    %2557 = vmatpush1.msra.mxu0 %v2454
    %2558 = vmatprep.subr.mxu0 0.0
    %2559 = vmatpush1.msra.mxu0 %v2457
    %2560 = vmatprep.subr.mxu0 0.0
    %2561 = vmatpush1.msra.mxu0 %v2460
    %2562 = vmatprep.subr.mxu0 0.0
    %2563 = vmatpush1.msra.mxu0 %v2463
    %2564 = vmatprep.subr.mxu0 0.0
    %2565 = vmatpush1.msra.mxu0 %v2466
    %2566 = vmatprep.subr.mxu0 0.0
    %2567 = vmatpush1.msra.mxu0 0.0
    %2568 = vmatprep.subr.mxu0 0.0
    %2569 = vmatpush1.msra.mxu0 0.0
    %2570 = vmatprep.subr.mxu0 0.0
    %2571 = vmatpush1.msra.mxu0 0.0
    %2572 = vmatprep.subr.mxu0 0.0
    %2573 = vmatpush1.msra.mxu0 0.0
    %2574 = vmatprep.subr.mxu0 0.0
    %2575 = vmatpush1.msra.mxu0 0.0
    %2576 = vmatprep.subr.mxu0 0.0
    %2577 = vmatpush1.msra.mxu0 0.0
    %2578 = vmatprep.subr.mxu0 0.0
    %2579 = vmatpush1.msra.mxu0 0.0
    %2580 = vmatprep.subr.mxu0 0.0
    %2581 = vmatpush1.msra.mxu0 0.0
    %2582 = vmatprep.subr.mxu0 0.0
    %2583 = vmatpush1.msra.mxu0 0.0
    %2584 = vmatprep.subr.mxu0 0.0
    %2585 = vmatpush1.msra.mxu0 0.0
    %2586 = vmatprep.subr.mxu0 0.0
    %2587 = vmatpush1.msra.mxu0 0.0
    %2588 = vmatprep.subr.mxu0 0.0
    %2589 = vmatpush1.msra.mxu0 0.0
    %2590 = vmatprep.subr.mxu0 0.0
    %2591 = vmatpush1.msra.mxu0 0.0
    %2592 = vmatprep.subr.mxu0 0.0
    %2593 = vmatpush1.msra.mxu0 0.0
    %2594 = vmatprep.subr.mxu0 0.0
    %2595 = vmatpush1.msra.mxu0 0.0
    %2596 = vmatprep.subr.mxu0 0.0
    %2597 = vmatpush1.msra.mxu0 0.0
    %2598 = vmatprep.subr.mxu0 0.0
    %2599 = vmatpush1.msra.mxu0 0.0
    %2600 = vmatprep.subr.mxu0 0.0
    %2601 = vmatpush1.msra.mxu0 0.0
    %2602 = vmatprep.subr.mxu0 0.0
    %2603 = vmatpush1.msra.mxu0 0.0
    %2604 = vmatprep.subr.mxu0 0.0
    %2605 = vmatpush1.msra.mxu0 0.0
    %2606 = vmatprep.subr.mxu0 0.0
    %2607 = vmatpush1.msra.mxu0 0.0
    %2608 = vmatprep.subr.mxu0 0.0
    %2609 = vmatpush1.msra.mxu0 0.0
    %2610 = vmatprep.subr.mxu0 0.0
    %2611 = vmatpush1.msra.mxu0 0.0
    %2612 = vmatprep.subr.mxu0 0.0
    %2613 = vmatpush1.msra.mxu0 0.0
    %2614 = vmatprep.mubr.f32.mxu0 0.0
    %2615 = vmatmul.mubr.f32.gmra.mrb[0].mxu0 %v2468
    %v2616 = vpop.f32.mrb[0].mxu0
    %v2617 = vadd.f32 0.0, %v2616
    %v2618 = vpop.f32.mrb[0].mxu0
    %2619 = vmatprep.mubr.f32.mxu0 0.0
    %2620 = vmatmul.mubr.f32.gmra.mrb[0].mxu0 %v2471
    %v2621 = vpop.f32.mrb[0].mxu0
    %v2622 = vadd.f32 0.0, %v2621
    %v2623 = vpop.f32.mrb[0].mxu0
    %2624 = vdwg.mxu0
    %v2625 = vmul.f32 %v2540, %v76
    %v2626 = vmul.f32 %v2546, %v77
    %v2627 = vmul.f32 %v2542, %v78
    %v2628 = vmul.f32 %v2548, %v79
    %v2629 = vadd.f32 %v2625, %v2627
    %v2630 = vadd.f32 %v2626, %v2628
    %s2631 = scalar_lea.vmem %s6, 64
    %v2632 = vld [vmem:[%s2631] sm:$0xff]
    %v2633 = vld [vmem:[%s2631 + $0x8] sm:$0xff]
    %v2634 = vld [vmem:[%s2631 + $0x10] sm:$0xff]
    %v2635 = vld [vmem:[%s2631 + $0x18] sm:$0xff]
    %v2636 = vld [vmem:[%s2631 + $0x20] sm:$0xff]
    %v2637 = vld [vmem:[%s2631 + $0x28] sm:$0xff]
    %v2638 = vld [vmem:[%s2631 + $0x30] sm:$0xff]
    %v2639 = vld [vmem:[%s2631 + $0x38] sm:$0xff]
    %2641 = vrot.lane.b32.xlu0 %v2629, 64
    %v2642 = vpop.permute.xlu0 %2641
    %v2643 = vsel %vm311, %v2629, 0
    %v2645 = vsel %vm311, %v2642, 0
    %2647 = vmatprep.subr.mxu0 0.0
    %2648 = vmatpush1.xpose.msra.mxu0 %v2645
    %2649 = vmatprep.subr.mxu0 0.0
    %2650 = vmatpush1.xpose.msra.mxu0 0.0
    %2651 = vmatprep.subr.mxu0 0.0
    %2652 = vmatpush1.xpose.msra.mxu0 0.0
    %2653 = vmatprep.subr.mxu0 0.0
    %2654 = vmatpush1.xpose.msra.mxu0 0.0
    %2655 = vmatprep.subr.mxu0 0.0
    %2656 = vmatpush1.xpose.msra.mxu0 0.0
    %2657 = vmatprep.subr.mxu0 0.0
    %2658 = vmatpush1.xpose.msra.mxu0 0.0
    %2659 = vmatprep.subr.mxu0 0.0
    %2660 = vmatpush1.xpose.msra.mxu0 0.0
    %2661 = vmatprep.subr.mxu0 0.0
    %2662 = vmatpush1.xpose.msra.mxu0 0.0
    %2663 = vmatprep.subr.mxu0 0.0
    %2664 = vmatpush1.xpose.msra.mxu0 0.0
    %2665 = vmatprep.subr.mxu0 0.0
    %2666 = vmatpush1.xpose.msra.mxu0 0.0
    %2667 = vmatprep.subr.mxu0 0.0
    %2668 = vmatpush1.xpose.msra.mxu0 0.0
    %2669 = vmatprep.subr.mxu0 0.0
    %2670 = vmatpush1.xpose.msra.mxu0 0.0
    %2671 = vmatprep.subr.mxu0 0.0
    %2672 = vmatpush1.xpose.msra.mxu0 0.0
    %2673 = vmatprep.subr.mxu0 0.0
    %2674 = vmatpush1.xpose.msra.mxu0 0.0
    %2675 = vmatprep.subr.mxu0 0.0
    %2676 = vmatpush1.xpose.msra.mxu0 0.0
    %2677 = vmatprep.subr.mxu0 0.0
    %2678 = vmatpush1.xpose.msra.mxu0 0.0
    %2679 = vmatprep.subr.mxu0 0.0
    %2680 = vmatpush1.xpose.msra.mxu0 0.0
    %2681 = vmatprep.subr.mxu0 0.0
    %2682 = vmatpush1.xpose.msra.mxu0 0.0
    %2683 = vmatprep.subr.mxu0 0.0
    %2684 = vmatpush1.xpose.msra.mxu0 0.0
    %2685 = vmatprep.subr.mxu0 0.0
    %2686 = vmatpush1.xpose.msra.mxu0 0.0
    %2687 = vmatprep.subr.mxu0 0.0
    %2688 = vmatpush1.xpose.msra.mxu0 0.0
    %2689 = vmatprep.subr.mxu0 0.0
    %2690 = vmatpush1.xpose.msra.mxu0 0.0
    %2691 = vmatprep.subr.mxu0 0.0
    %2692 = vmatpush1.xpose.msra.mxu0 0.0
    %2693 = vmatprep.subr.mxu0 0.0
    %2694 = vmatpush1.xpose.msra.mxu0 0.0
    %2695 = vmatprep.subr.mxu0 0.0
    %2696 = vmatpush1.xpose.msra.mxu0 0.0
    %2697 = vmatprep.subr.mxu0 0.0
    %2698 = vmatpush1.xpose.msra.mxu0 0.0
    %2699 = vmatprep.subr.mxu0 0.0
    %2700 = vmatpush1.xpose.msra.mxu0 0.0
    %2701 = vmatprep.subr.mxu0 0.0
    %2702 = vmatpush1.xpose.msra.mxu0 0.0
    %2703 = vmatprep.subr.mxu0 0.0
    %2704 = vmatpush1.xpose.msra.mxu0 0.0
    %2705 = vmatprep.subr.mxu0 0.0
    %2706 = vmatpush1.xpose.msra.mxu0 0.0
    %2707 = vmatprep.subr.mxu0 0.0
    %2708 = vmatpush1.xpose.msra.mxu0 0.0
    %2709 = vmatprep.subr.mxu0 0.0
    %2710 = vmatpush1.xpose.msra.mxu0 0.0
    %2711 = vmatprep.mubr.f32.mxu0 0.0
    %2712 = vmatmul.mubr.f32.gmra.mrb[0].mxu0 %v2643
    %v2713 = vpop.f32.mrb[0].mxu0
    %v2714 = vadd.f32 %v306, %v2713
    %v2715 = vpop.f32.mrb[0].mxu0
    %2716 = vdwg.mxu0
    %v2717 = vmul.f32 %v2714, 1.442695
    %v2718 = vpow.pop %v2717
    %v2719 = vsel %vm388, %v2718, 0.0
    %2720 = vadd.xlane.f32.xlu0 %v2719
    %v2721 = vpop.xlane.xlu0 %2720
    %v2722 = vrcp.pop %v2721
    %v2723 = vmul.f32 %v2718, %v2722
    %v2725 = vsel %vm388, %v2723, 0
    %2727 = vmatprep.subr.mxu0 0.0
    %2728 = vmatpush1.msra.mxu0 %v2617
    %2729 = vmatprep.subr.mxu0 0.0
    %2730 = vmatpush1.msra.mxu0 0.0
    %2731 = vmatprep.subr.mxu0 0.0
    %2732 = vmatpush1.msra.mxu0 0.0
    %2733 = vmatprep.subr.mxu0 0.0
    %2734 = vmatpush1.msra.mxu0 0.0
    %2735 = vmatprep.subr.mxu0 0.0
    %2736 = vmatpush1.msra.mxu0 0.0
    %2737 = vmatprep.subr.mxu0 0.0
    %2738 = vmatpush1.msra.mxu0 0.0
    %2739 = vmatprep.subr.mxu0 0.0
    %2740 = vmatpush1.msra.mxu0 0.0
    %2741 = vmatprep.subr.mxu0 0.0
    %2742 = vmatpush1.msra.mxu0 0.0
    %2743 = vmatprep.subr.mxu0 0.0
    %2744 = vmatpush1.msra.mxu0 0.0
    %2745 = vmatprep.subr.mxu0 0.0
    %2746 = vmatpush1.msra.mxu0 0.0
    %2747 = vmatprep.subr.mxu0 0.0
    %2748 = vmatpush1.msra.mxu0 0.0
    %2749 = vmatprep.subr.mxu0 0.0
    %2750 = vmatpush1.msra.mxu0 0.0
    %2751 = vmatprep.subr.mxu0 0.0
    %2752 = vmatpush1.msra.mxu0 0.0
    %2753 = vmatprep.subr.mxu0 0.0
    %2754 = vmatpush1.msra.mxu0 0.0
    %2755 = vmatprep.subr.mxu0 0.0
    %2756 = vmatpush1.msra.mxu0 0.0
    %2757 = vmatprep.subr.mxu0 0.0
    %2758 = vmatpush1.msra.mxu0 0.0
    %2759 = vmatprep.subr.mxu0 0.0
    %2760 = vmatpush1.msra.mxu0 0.0
    %2761 = vmatprep.subr.mxu0 0.0
    %2762 = vmatpush1.msra.mxu0 0.0
    %2763 = vmatprep.subr.mxu0 0.0
    %2764 = vmatpush1.msra.mxu0 0.0
    %2765 = vmatprep.subr.mxu0 0.0
    %2766 = vmatpush1.msra.mxu0 0.0
    %2767 = vmatprep.subr.mxu0 0.0
    %2768 = vmatpush1.msra.mxu0 0.0
    %2769 = vmatprep.subr.mxu0 0.0
    %2770 = vmatpush1.msra.mxu0 0.0
    %2771 = vmatprep.subr.mxu0 0.0
    %2772 = vmatpush1.msra.mxu0 0.0
    %2773 = vmatprep.subr.mxu0 0.0
    %2774 = vmatpush1.msra.mxu0 0.0
    %2775 = vmatprep.subr.mxu0 0.0
    %2776 = vmatpush1.msra.mxu0 0.0
    %2777 = vmatprep.subr.mxu0 0.0
    %2778 = vmatpush1.msra.mxu0 0.0
    %2779 = vmatprep.subr.mxu0 0.0
    %2780 = vmatpush1.msra.mxu0 0.0
    %2781 = vmatprep.subr.mxu0 0.0
    %2782 = vmatpush1.msra.mxu0 0.0
    %2783 = vmatprep.subr.mxu0 0.0
    %2784 = vmatpush1.msra.mxu0 0.0
    %2785 = vmatprep.subr.mxu0 0.0
    %2786 = vmatpush1.msra.mxu0 0.0
    %2787 = vmatprep.subr.mxu0 0.0
    %2788 = vmatpush1.msra.mxu0 0.0
    %2789 = vmatprep.subr.mxu0 0.0
    %2790 = vmatpush1.msra.mxu0 0.0
    %2791 = vmatprep.mubr.f32.mxu0 0.0
    %2792 = vmatmul.mubr.f32.gmra.mrb[0].mxu0 %v2725
    %v2793 = vpop.f32.mrb[0].mxu0
    %v2794 = vadd.f32 0.0, %v2793
    %v2795 = vpop.f32.mrb[0].mxu0
    %2796 = vdwg.mxu0
    %2797 = vrot.lane.b32.xlu0 %v2629, 112
    %v2798 = vpop.permute.xlu0 %2797
    %2799 = vrot.lane.b32.xlu0 %v2629, 48
    %v2800 = vpop.permute.xlu0 %2799
    %v2801 = vsel %vm311, %v2798, 0
    %v2803 = vsel %vm311, %v2800, 0
    %2805 = vmatprep.subr.mxu0 0.0
    %2806 = vmatpush1.xpose.msra.mxu0 %v2803
    %2807 = vmatprep.subr.mxu0 0.0
    %2808 = vmatpush1.xpose.msra.mxu0 0.0
    %2809 = vmatprep.subr.mxu0 0.0
    %2810 = vmatpush1.xpose.msra.mxu0 0.0
    %2811 = vmatprep.subr.mxu0 0.0
    %2812 = vmatpush1.xpose.msra.mxu0 0.0
    %2813 = vmatprep.subr.mxu0 0.0
    %2814 = vmatpush1.xpose.msra.mxu0 0.0
    %2815 = vmatprep.subr.mxu0 0.0
    %2816 = vmatpush1.xpose.msra.mxu0 0.0
    %2817 = vmatprep.subr.mxu0 0.0
    %2818 = vmatpush1.xpose.msra.mxu0 0.0
    %2819 = vmatprep.subr.mxu0 0.0
    %2820 = vmatpush1.xpose.msra.mxu0 0.0
    %2821 = vmatprep.subr.mxu0 0.0
    %2822 = vmatpush1.xpose.msra.mxu0 0.0
    %2823 = vmatprep.subr.mxu0 0.0
    %2824 = vmatpush1.xpose.msra.mxu0 0.0
    %2825 = vmatprep.subr.mxu0 0.0
    %2826 = vmatpush1.xpose.msra.mxu0 0.0
    %2827 = vmatprep.subr.mxu0 0.0
    %2828 = vmatpush1.xpose.msra.mxu0 0.0
    %2829 = vmatprep.subr.mxu0 0.0
    %2830 = vmatpush1.xpose.msra.mxu0 0.0
    %2831 = vmatprep.subr.mxu0 0.0
    %2832 = vmatpush1.xpose.msra.mxu0 0.0
    %2833 = vmatprep.subr.mxu0 0.0
    %2834 = vmatpush1.xpose.msra.mxu0 0.0
    %2835 = vmatprep.subr.mxu0 0.0
    %2836 = vmatpush1.xpose.msra.mxu0 0.0
    %2837 = vmatprep.subr.mxu0 0.0
    %2838 = vmatpush1.xpose.msra.mxu0 0.0
    %2839 = vmatprep.subr.mxu0 0.0
    %2840 = vmatpush1.xpose.msra.mxu0 0.0
    %2841 = vmatprep.subr.mxu0 0.0
    %2842 = vmatpush1.xpose.msra.mxu0 0.0
    %2843 = vmatprep.subr.mxu0 0.0
    %2844 = vmatpush1.xpose.msra.mxu0 0.0
    %2845 = vmatprep.subr.mxu0 0.0
    %2846 = vmatpush1.xpose.msra.mxu0 0.0
    %2847 = vmatprep.subr.mxu0 0.0
    %2848 = vmatpush1.xpose.msra.mxu0 0.0
    %2849 = vmatprep.subr.mxu0 0.0
    %2850 = vmatpush1.xpose.msra.mxu0 0.0
    %2851 = vmatprep.subr.mxu0 0.0
    %2852 = vmatpush1.xpose.msra.mxu0 0.0
    %2853 = vmatprep.subr.mxu0 0.0
    %2854 = vmatpush1.xpose.msra.mxu0 0.0
    %2855 = vmatprep.subr.mxu0 0.0
    %2856 = vmatpush1.xpose.msra.mxu0 0.0
    %2857 = vmatprep.subr.mxu0 0.0
    %2858 = vmatpush1.xpose.msra.mxu0 0.0
    %2859 = vmatprep.subr.mxu0 0.0
    %2860 = vmatpush1.xpose.msra.mxu0 0.0
    %2861 = vmatprep.subr.mxu0 0.0
    %2862 = vmatpush1.xpose.msra.mxu0 0.0
    %2863 = vmatprep.subr.mxu0 0.0
    %2864 = vmatpush1.xpose.msra.mxu0 0.0
    %2865 = vmatprep.subr.mxu0 0.0
    %2866 = vmatpush1.xpose.msra.mxu0 0.0
    %2867 = vmatprep.subr.mxu0 0.0
    %2868 = vmatpush1.xpose.msra.mxu0 0.0
    %2869 = vmatprep.mubr.f32.mxu0 0.0
    %2870 = vmatmul.mubr.f32.gmra.mrb[0].mxu0 %v2801
    %v2871 = vpop.f32.mrb[0].mxu0
    %v2872 = vadd.f32 %v306, %v2871
    %v2873 = vpop.f32.mrb[0].mxu0
    %2874 = vdwg.mxu0
    %v2875 = vmul.f32 %v2872, 1.442695
    %v2876 = vpow.pop %v2875
    %v2877 = vsel %vm388, %v2876, 0.0
    %2878 = vadd.xlane.f32.xlu0 %v2877
    %v2879 = vpop.xlane.xlu0 %2878
    %v2880 = vrcp.pop %v2879
    %v2881 = vmul.f32 %v2876, %v2880
    %2883 = vrot.lane.b32.xlu0 %v2617, 112
    %v2884 = vpop.permute.xlu0 %2883
    %v2887 = vsel %vm388, %v2881, 0
    %2889 = vmatprep.subr.mxu0 0.0
    %2890 = vmatpush1.msra.mxu0 %v2884
    %2891 = vmatprep.subr.mxu0 0.0
    %2892 = vmatpush1.msra.mxu0 0.0
    %2893 = vmatprep.subr.mxu0 0.0
    %2894 = vmatpush1.msra.mxu0 0.0
    %2895 = vmatprep.subr.mxu0 0.0
    %2896 = vmatpush1.msra.mxu0 0.0
    %2897 = vmatprep.subr.mxu0 0.0
    %2898 = vmatpush1.msra.mxu0 0.0
    %2899 = vmatprep.subr.mxu0 0.0
    %2900 = vmatpush1.msra.mxu0 0.0
    %2901 = vmatprep.subr.mxu0 0.0
    %2902 = vmatpush1.msra.mxu0 0.0
    %2903 = vmatprep.subr.mxu0 0.0
    %2904 = vmatpush1.msra.mxu0 0.0
    %2905 = vmatprep.subr.mxu0 0.0
    %2906 = vmatpush1.msra.mxu0 0.0
    %2907 = vmatprep.subr.mxu0 0.0
    %2908 = vmatpush1.msra.mxu0 0.0
    %2909 = vmatprep.subr.mxu0 0.0
    %2910 = vmatpush1.msra.mxu0 0.0
    %2911 = vmatprep.subr.mxu0 0.0
    %2912 = vmatpush1.msra.mxu0 0.0
    %2913 = vmatprep.subr.mxu0 0.0
    %2914 = vmatpush1.msra.mxu0 0.0
    %2915 = vmatprep.subr.mxu0 0.0
    %2916 = vmatpush1.msra.mxu0 0.0
    %2917 = vmatprep.subr.mxu0 0.0
    %2918 = vmatpush1.msra.mxu0 0.0
    %2919 = vmatprep.subr.mxu0 0.0
    %2920 = vmatpush1.msra.mxu0 0.0
    %2921 = vmatprep.subr.mxu0 0.0
    %2922 = vmatpush1.msra.mxu0 0.0
    %2923 = vmatprep.subr.mxu0 0.0
    %2924 = vmatpush1.msra.mxu0 0.0
    %2925 = vmatprep.subr.mxu0 0.0
    %2926 = vmatpush1.msra.mxu0 0.0
    %2927 = vmatprep.subr.mxu0 0.0
    %2928 = vmatpush1.msra.mxu0 0.0
    %2929 = vmatprep.subr.mxu0 0.0
    %2930 = vmatpush1.msra.mxu0 0.0
    %2931 = vmatprep.subr.mxu0 0.0
    %2932 = vmatpush1.msra.mxu0 0.0
    %2933 = vmatprep.subr.mxu0 0.0
    %2934 = vmatpush1.msra.mxu0 0.0
    %2935 = vmatprep.subr.mxu0 0.0
    %2936 = vmatpush1.msra.mxu0 0.0
    %2937 = vmatprep.subr.mxu0 0.0
    %2938 = vmatpush1.msra.mxu0 0.0
    %2939 = vmatprep.subr.mxu0 0.0
    %2940 = vmatpush1.msra.mxu0 0.0
    %2941 = vmatprep.subr.mxu0 0.0
    %2942 = vmatpush1.msra.mxu0 0.0
    %2943 = vmatprep.subr.mxu0 0.0
    %2944 = vmatpush1.msra.mxu0 0.0
    %2945 = vmatprep.subr.mxu0 0.0
    %2946 = vmatpush1.msra.mxu0 0.0
    %2947 = vmatprep.subr.mxu0 0.0
    %2948 = vmatpush1.msra.mxu0 0.0
    %2949 = vmatprep.subr.mxu0 0.0
    %2950 = vmatpush1.msra.mxu0 0.0
    %2951 = vmatprep.subr.mxu0 0.0
    %2952 = vmatpush1.msra.mxu0 0.0
    %2953 = vmatprep.mubr.f32.mxu0 0.0
    %2954 = vmatmul.mubr.f32.gmra.mrb[0].mxu0 %v2887
    %v2955 = vpop.f32.mrb[0].mxu0
    %v2956 = vadd.f32 0.0, %v2955
    %v2957 = vpop.f32.mrb[0].mxu0
    %2958 = vdwg.mxu0
    %v2960 = vsel %vm311, %v2956, 0
    %2962 = vmatprep.subr.mxu0 0.0
    %2963 = vmatpush1.msra.mxu0 %v2634
    %2964 = vmatprep.subr.mxu0 0.0
    %2965 = vmatpush1.msra.mxu0 %v2635
    %2966 = vmatprep.subr.mxu0 0.0
    %2967 = vmatpush1.msra.mxu0 0.0
    %2968 = vmatprep.subr.mxu0 0.0
    %2969 = vmatpush1.msra.mxu0 0.0
    %2970 = vmatprep.subr.mxu0 0.0
    %2971 = vmatpush1.msra.mxu0 0.0
    %2972 = vmatprep.subr.mxu0 0.0
    %2973 = vmatpush1.msra.mxu0 0.0
    %2974 = vmatprep.subr.mxu0 0.0
    %2975 = vmatpush1.msra.mxu0 0.0
    %2976 = vmatprep.subr.mxu0 0.0
    %2977 = vmatpush1.msra.mxu0 0.0
    %2978 = vmatprep.subr.mxu0 0.0
    %2979 = vmatpush1.msra.mxu0 0.0
    %2980 = vmatprep.subr.mxu0 0.0
    %2981 = vmatpush1.msra.mxu0 0.0
    %2982 = vmatprep.subr.mxu0 0.0
    %2983 = vmatpush1.msra.mxu0 0.0
    %2984 = vmatprep.subr.mxu0 0.0
    %2985 = vmatpush1.msra.mxu0 0.0
    %2986 = vmatprep.subr.mxu0 0.0
    %2987 = vmatpush1.msra.mxu0 0.0
    %2988 = vmatprep.subr.mxu0 0.0
    %2989 = vmatpush1.msra.mxu0 0.0
    %2990 = vmatprep.subr.mxu0 0.0
    %2991 = vmatpush1.msra.mxu0 0.0
    %2992 = vmatprep.subr.mxu0 0.0
    %2993 = vmatpush1.msra.mxu0 0.0
    %2994 = vmatprep.subr.mxu0 0.0
    %2995 = vmatpush1.msra.mxu0 0.0
    %2996 = vmatprep.subr.mxu0 0.0
    %2997 = vmatpush1.msra.mxu0 0.0
    %2998 = vmatprep.subr.mxu0 0.0
    %2999 = vmatpush1.msra.mxu0 0.0
    %3000 = vmatprep.subr.mxu0 0.0
    %3001 = vmatpush1.msra.mxu0 0.0
    %3002 = vmatprep.subr.mxu0 0.0
    %3003 = vmatpush1.msra.mxu0 0.0
    %3004 = vmatprep.subr.mxu0 0.0
    %3005 = vmatpush1.msra.mxu0 0.0
    %3006 = vmatprep.subr.mxu0 0.0
    %3007 = vmatpush1.msra.mxu0 0.0
    %3008 = vmatprep.subr.mxu0 0.0
    %3009 = vmatpush1.msra.mxu0 0.0
    %3010 = vmatprep.subr.mxu0 0.0
    %3011 = vmatpush1.msra.mxu0 0.0
    %3012 = vmatprep.subr.mxu0 0.0
    %3013 = vmatpush1.msra.mxu0 0.0
    %3014 = vmatprep.subr.mxu0 0.0
    %3015 = vmatpush1.msra.mxu0 0.0
    %3016 = vmatprep.subr.mxu0 0.0
    %3017 = vmatpush1.msra.mxu0 0.0
    %3018 = vmatprep.subr.mxu0 0.0
    %3019 = vmatpush1.msra.mxu0 0.0
    %3020 = vmatprep.subr.mxu0 0.0
    %3021 = vmatpush1.msra.mxu0 0.0
    %3022 = vmatprep.subr.mxu0 0.0
    %3023 = vmatpush1.msra.mxu0 0.0
    %3024 = vmatprep.subr.mxu0 0.0
    %3025 = vmatpush1.msra.mxu0 0.0
    %3026 = vmatprep.mubr.f32.mxu0 0.0
    %3027 = vmatmul.mubr.f32.gmra.mrb[0].mxu0 %v2960
    %v3028 = vpop.f32.mrb[0].mxu0
    %v3029 = vadd.f32 0.0, %v3028
    %v3030 = vpop.f32.mrb[0].mxu0
    %3031 = vdwg.mxu0
    %v3033 = vsel %vm311, %v2794, 0
    %3035 = vmatprep.subr.mxu0 0.0
    %3036 = vmatpush1.msra.mxu0 %v2632
    %3037 = vmatprep.subr.mxu0 0.0
    %3038 = vmatpush1.msra.mxu0 %v2633
    %3039 = vmatprep.subr.mxu0 0.0
    %3040 = vmatpush1.msra.mxu0 0.0
    %3041 = vmatprep.subr.mxu0 0.0
    %3042 = vmatpush1.msra.mxu0 0.0
    %3043 = vmatprep.subr.mxu0 0.0
    %3044 = vmatpush1.msra.mxu0 0.0
    %3045 = vmatprep.subr.mxu0 0.0
    %3046 = vmatpush1.msra.mxu0 0.0
    %3047 = vmatprep.subr.mxu0 0.0
    %3048 = vmatpush1.msra.mxu0 0.0
    %3049 = vmatprep.subr.mxu0 0.0
    %3050 = vmatpush1.msra.mxu0 0.0
    %3051 = vmatprep.subr.mxu0 0.0
    %3052 = vmatpush1.msra.mxu0 0.0
    %3053 = vmatprep.subr.mxu0 0.0
    %3054 = vmatpush1.msra.mxu0 0.0
    %3055 = vmatprep.subr.mxu0 0.0
    %3056 = vmatpush1.msra.mxu0 0.0
    %3057 = vmatprep.subr.mxu0 0.0
    %3058 = vmatpush1.msra.mxu0 0.0
    %3059 = vmatprep.subr.mxu0 0.0
    %3060 = vmatpush1.msra.mxu0 0.0
    %3061 = vmatprep.subr.mxu0 0.0
    %3062 = vmatpush1.msra.mxu0 0.0
    %3063 = vmatprep.subr.mxu0 0.0
    %3064 = vmatpush1.msra.mxu0 0.0
    %3065 = vmatprep.subr.mxu0 0.0
    %3066 = vmatpush1.msra.mxu0 0.0
    %3067 = vmatprep.subr.mxu0 0.0
    %3068 = vmatpush1.msra.mxu0 0.0
    %3069 = vmatprep.subr.mxu0 0.0
    %3070 = vmatpush1.msra.mxu0 0.0
    %3071 = vmatprep.subr.mxu0 0.0
    %3072 = vmatpush1.msra.mxu0 0.0
    %3073 = vmatprep.subr.mxu0 0.0
    %3074 = vmatpush1.msra.mxu0 0.0
    %3075 = vmatprep.subr.mxu0 0.0
    %3076 = vmatpush1.msra.mxu0 0.0
    %3077 = vmatprep.subr.mxu0 0.0
    %3078 = vmatpush1.msra.mxu0 0.0
    %3079 = vmatprep.subr.mxu0 0.0
    %3080 = vmatpush1.msra.mxu0 0.0
    %3081 = vmatprep.subr.mxu0 0.0
    %3082 = vmatpush1.msra.mxu0 0.0
    %3083 = vmatprep.subr.mxu0 0.0
    %3084 = vmatpush1.msra.mxu0 0.0
    %3085 = vmatprep.subr.mxu0 0.0
    %3086 = vmatpush1.msra.mxu0 0.0
    %3087 = vmatprep.subr.mxu0 0.0
    %3088 = vmatpush1.msra.mxu0 0.0
    %3089 = vmatprep.subr.mxu0 0.0
    %3090 = vmatpush1.msra.mxu0 0.0
    %3091 = vmatprep.subr.mxu0 0.0
    %3092 = vmatpush1.msra.mxu0 0.0
    %3093 = vmatprep.subr.mxu0 0.0
    %3094 = vmatpush1.msra.mxu0 0.0
    %3095 = vmatprep.subr.mxu0 0.0
    %3096 = vmatpush1.msra.mxu0 0.0
    %3097 = vmatprep.subr.mxu0 0.0
    %3098 = vmatpush1.msra.mxu0 0.0
    %3099 = vmatprep.mubr.f32.mxu0 0.0
    %3100 = vmatmul.mubr.f32.gmra.mrb[0].mxu0 %v3033
    %v3101 = vpop.f32.mrb[0].mxu0
    %v3102 = vadd.f32 %v3029, %v3101
    %v3103 = vpop.f32.mrb[0].mxu0
    %3104 = vdwg.mxu0
    %3105 = vrot.lane.b32.xlu0 %v2629, 96
    %v3106 = vpop.permute.xlu0 %3105
    %3107 = vrot.lane.b32.xlu0 %v2629, 32
    %v3108 = vpop.permute.xlu0 %3107
    %v3109 = vsel %vm311, %v3106, 0
    %v3111 = vsel %vm311, %v3108, 0
    %3113 = vmatprep.subr.mxu0 0.0
    %3114 = vmatpush1.xpose.msra.mxu0 %v3111
    %3115 = vmatprep.subr.mxu0 0.0
    %3116 = vmatpush1.xpose.msra.mxu0 0.0
    %3117 = vmatprep.subr.mxu0 0.0
    %3118 = vmatpush1.xpose.msra.mxu0 0.0
    %3119 = vmatprep.subr.mxu0 0.0
    %3120 = vmatpush1.xpose.msra.mxu0 0.0
    %3121 = vmatprep.subr.mxu0 0.0
    %3122 = vmatpush1.xpose.msra.mxu0 0.0
    %3123 = vmatprep.subr.mxu0 0.0
    %3124 = vmatpush1.xpose.msra.mxu0 0.0
    %3125 = vmatprep.subr.mxu0 0.0
    %3126 = vmatpush1.xpose.msra.mxu0 0.0
    %3127 = vmatprep.subr.mxu0 0.0
    %3128 = vmatpush1.xpose.msra.mxu0 0.0
    %3129 = vmatprep.subr.mxu0 0.0
    %3130 = vmatpush1.xpose.msra.mxu0 0.0
    %3131 = vmatprep.subr.mxu0 0.0
    %3132 = vmatpush1.xpose.msra.mxu0 0.0
    %3133 = vmatprep.subr.mxu0 0.0
    %3134 = vmatpush1.xpose.msra.mxu0 0.0
    %3135 = vmatprep.subr.mxu0 0.0
    %3136 = vmatpush1.xpose.msra.mxu0 0.0
    %3137 = vmatprep.subr.mxu0 0.0
    %3138 = vmatpush1.xpose.msra.mxu0 0.0
    %3139 = vmatprep.subr.mxu0 0.0
    %3140 = vmatpush1.xpose.msra.mxu0 0.0
    %3141 = vmatprep.subr.mxu0 0.0
    %3142 = vmatpush1.xpose.msra.mxu0 0.0
    %3143 = vmatprep.subr.mxu0 0.0
    %3144 = vmatpush1.xpose.msra.mxu0 0.0
    %3145 = vmatprep.subr.mxu0 0.0
    %3146 = vmatpush1.xpose.msra.mxu0 0.0
    %3147 = vmatprep.subr.mxu0 0.0
    %3148 = vmatpush1.xpose.msra.mxu0 0.0
    %3149 = vmatprep.subr.mxu0 0.0
    %3150 = vmatpush1.xpose.msra.mxu0 0.0
    %3151 = vmatprep.subr.mxu0 0.0
    %3152 = vmatpush1.xpose.msra.mxu0 0.0
    %3153 = vmatprep.subr.mxu0 0.0
    %3154 = vmatpush1.xpose.msra.mxu0 0.0
    %3155 = vmatprep.subr.mxu0 0.0
    %3156 = vmatpush1.xpose.msra.mxu0 0.0
    %3157 = vmatprep.subr.mxu0 0.0
    %3158 = vmatpush1.xpose.msra.mxu0 0.0
    %3159 = vmatprep.subr.mxu0 0.0
    %3160 = vmatpush1.xpose.msra.mxu0 0.0
    %3161 = vmatprep.subr.mxu0 0.0
    %3162 = vmatpush1.xpose.msra.mxu0 0.0
    %3163 = vmatprep.subr.mxu0 0.0
    %3164 = vmatpush1.xpose.msra.mxu0 0.0
    %3165 = vmatprep.subr.mxu0 0.0
    %3166 = vmatpush1.xpose.msra.mxu0 0.0
    %3167 = vmatprep.subr.mxu0 0.0
    %3168 = vmatpush1.xpose.msra.mxu0 0.0
    %3169 = vmatprep.subr.mxu0 0.0
    %3170 = vmatpush1.xpose.msra.mxu0 0.0
    %3171 = vmatprep.subr.mxu0 0.0
    %3172 = vmatpush1.xpose.msra.mxu0 0.0
    %3173 = vmatprep.subr.mxu0 0.0
    %3174 = vmatpush1.xpose.msra.mxu0 0.0
    %3175 = vmatprep.subr.mxu0 0.0
    %3176 = vmatpush1.xpose.msra.mxu0 0.0
    %3177 = vmatprep.mubr.f32.mxu0 0.0
    %3178 = vmatmul.mubr.f32.gmra.mrb[0].mxu0 %v3109
    %v3179 = vpop.f32.mrb[0].mxu0
    %v3180 = vadd.f32 %v306, %v3179
    %v3181 = vpop.f32.mrb[0].mxu0
    %3182 = vdwg.mxu0
    %v3183 = vmul.f32 %v3180, 1.442695
    %v3184 = vpow.pop %v3183
    %v3185 = vsel %vm388, %v3184, 0.0
    %3186 = vadd.xlane.f32.xlu0 %v3185
    %v3187 = vpop.xlane.xlu0 %3186
    %v3188 = vrcp.pop %v3187
    %v3189 = vmul.f32 %v3184, %v3188
    %3190 = vrot.lane.b32.xlu0 %v2617, 96
    %v3191 = vpop.permute.xlu0 %3190
    %v3194 = vsel %vm388, %v3189, 0
    %3196 = vmatprep.subr.mxu0 0.0
    %3197 = vmatpush1.msra.mxu0 %v3191
    %3198 = vmatprep.subr.mxu0 0.0
    %3199 = vmatpush1.msra.mxu0 0.0
    %3200 = vmatprep.subr.mxu0 0.0
    %3201 = vmatpush1.msra.mxu0 0.0
    %3202 = vmatprep.subr.mxu0 0.0
    %3203 = vmatpush1.msra.mxu0 0.0
    %3204 = vmatprep.subr.mxu0 0.0
    %3205 = vmatpush1.msra.mxu0 0.0
    %3206 = vmatprep.subr.mxu0 0.0
    %3207 = vmatpush1.msra.mxu0 0.0
    %3208 = vmatprep.subr.mxu0 0.0
    %3209 = vmatpush1.msra.mxu0 0.0
    %3210 = vmatprep.subr.mxu0 0.0
    %3211 = vmatpush1.msra.mxu0 0.0
    %3212 = vmatprep.subr.mxu0 0.0
    %3213 = vmatpush1.msra.mxu0 0.0
    %3214 = vmatprep.subr.mxu0 0.0
    %3215 = vmatpush1.msra.mxu0 0.0
    %3216 = vmatprep.subr.mxu0 0.0
    %3217 = vmatpush1.msra.mxu0 0.0
    %3218 = vmatprep.subr.mxu0 0.0
    %3219 = vmatpush1.msra.mxu0 0.0
    %3220 = vmatprep.subr.mxu0 0.0
    %3221 = vmatpush1.msra.mxu0 0.0
    %3222 = vmatprep.subr.mxu0 0.0
    %3223 = vmatpush1.msra.mxu0 0.0
    %3224 = vmatprep.subr.mxu0 0.0
    %3225 = vmatpush1.msra.mxu0 0.0
    %3226 = vmatprep.subr.mxu0 0.0
    %3227 = vmatpush1.msra.mxu0 0.0
    %3228 = vmatprep.subr.mxu0 0.0
    %3229 = vmatpush1.msra.mxu0 0.0
    %3230 = vmatprep.subr.mxu0 0.0
    %3231 = vmatpush1.msra.mxu0 0.0
    %3232 = vmatprep.subr.mxu0 0.0
    %3233 = vmatpush1.msra.mxu0 0.0
    %3234 = vmatprep.subr.mxu0 0.0
    %3235 = vmatpush1.msra.mxu0 0.0
    %3236 = vmatprep.subr.mxu0 0.0
    %3237 = vmatpush1.msra.mxu0 0.0
    %3238 = vmatprep.subr.mxu0 0.0
    %3239 = vmatpush1.msra.mxu0 0.0
    %3240 = vmatprep.subr.mxu0 0.0
    %3241 = vmatpush1.msra.mxu0 0.0
    %3242 = vmatprep.subr.mxu0 0.0
    %3243 = vmatpush1.msra.mxu0 0.0
    %3244 = vmatprep.subr.mxu0 0.0
    %3245 = vmatpush1.msra.mxu0 0.0
    %3246 = vmatprep.subr.mxu0 0.0
    %3247 = vmatpush1.msra.mxu0 0.0
    %3248 = vmatprep.subr.mxu0 0.0
    %3249 = vmatpush1.msra.mxu0 0.0
    %3250 = vmatprep.subr.mxu0 0.0
    %3251 = vmatpush1.msra.mxu0 0.0
    %3252 = vmatprep.subr.mxu0 0.0
    %3253 = vmatpush1.msra.mxu0 0.0
    %3254 = vmatprep.subr.mxu0 0.0
    %3255 = vmatpush1.msra.mxu0 0.0
    %3256 = vmatprep.subr.mxu0 0.0
    %3257 = vmatpush1.msra.mxu0 0.0
    %3258 = vmatprep.subr.mxu0 0.0
    %3259 = vmatpush1.msra.mxu0 0.0
    %3260 = vmatprep.mubr.f32.mxu0 0.0
    %3261 = vmatmul.mubr.f32.gmra.mrb[0].mxu0 %v3194
    %v3262 = vpop.f32.mrb[0].mxu0
    %v3263 = vadd.f32 0.0, %v3262
    %v3264 = vpop.f32.mrb[0].mxu0
    %3265 = vdwg.mxu0
    %v3267 = vsel %vm311, %v3263, 0
    %3269 = vmatprep.subr.mxu0 0.0
    %3270 = vmatpush1.msra.mxu0 %v2636
    %3271 = vmatprep.subr.mxu0 0.0
    %3272 = vmatpush1.msra.mxu0 %v2637
    %3273 = vmatprep.subr.mxu0 0.0
    %3274 = vmatpush1.msra.mxu0 0.0
    %3275 = vmatprep.subr.mxu0 0.0
    %3276 = vmatpush1.msra.mxu0 0.0
    %3277 = vmatprep.subr.mxu0 0.0
    %3278 = vmatpush1.msra.mxu0 0.0
    %3279 = vmatprep.subr.mxu0 0.0
    %3280 = vmatpush1.msra.mxu0 0.0
    %3281 = vmatprep.subr.mxu0 0.0
    %3282 = vmatpush1.msra.mxu0 0.0
    %3283 = vmatprep.subr.mxu0 0.0
    %3284 = vmatpush1.msra.mxu0 0.0
    %3285 = vmatprep.subr.mxu0 0.0
    %3286 = vmatpush1.msra.mxu0 0.0
    %3287 = vmatprep.subr.mxu0 0.0
    %3288 = vmatpush1.msra.mxu0 0.0
    %3289 = vmatprep.subr.mxu0 0.0
    %3290 = vmatpush1.msra.mxu0 0.0
    %3291 = vmatprep.subr.mxu0 0.0
    %3292 = vmatpush1.msra.mxu0 0.0
    %3293 = vmatprep.subr.mxu0 0.0
    %3294 = vmatpush1.msra.mxu0 0.0
    %3295 = vmatprep.subr.mxu0 0.0
    %3296 = vmatpush1.msra.mxu0 0.0
    %3297 = vmatprep.subr.mxu0 0.0
    %3298 = vmatpush1.msra.mxu0 0.0
    %3299 = vmatprep.subr.mxu0 0.0
    %3300 = vmatpush1.msra.mxu0 0.0
    %3301 = vmatprep.subr.mxu0 0.0
    %3302 = vmatpush1.msra.mxu0 0.0
    %3303 = vmatprep.subr.mxu0 0.0
    %3304 = vmatpush1.msra.mxu0 0.0
    %3305 = vmatprep.subr.mxu0 0.0
    %3306 = vmatpush1.msra.mxu0 0.0
    %3307 = vmatprep.subr.mxu0 0.0
    %3308 = vmatpush1.msra.mxu0 0.0
    %3309 = vmatprep.subr.mxu0 0.0
    %3310 = vmatpush1.msra.mxu0 0.0
    %3311 = vmatprep.subr.mxu0 0.0
    %3312 = vmatpush1.msra.mxu0 0.0
    %3313 = vmatprep.subr.mxu0 0.0
    %3314 = vmatpush1.msra.mxu0 0.0
    %3315 = vmatprep.subr.mxu0 0.0
    %3316 = vmatpush1.msra.mxu0 0.0
    %3317 = vmatprep.subr.mxu0 0.0
    %3318 = vmatpush1.msra.mxu0 0.0
    %3319 = vmatprep.subr.mxu0 0.0
    %3320 = vmatpush1.msra.mxu0 0.0
    %3321 = vmatprep.subr.mxu0 0.0
    %3322 = vmatpush1.msra.mxu0 0.0
    %3323 = vmatprep.subr.mxu0 0.0
    %3324 = vmatpush1.msra.mxu0 0.0
    %3325 = vmatprep.subr.mxu0 0.0
    %3326 = vmatpush1.msra.mxu0 0.0
    %3327 = vmatprep.subr.mxu0 0.0
    %3328 = vmatpush1.msra.mxu0 0.0
    %3329 = vmatprep.subr.mxu0 0.0
    %3330 = vmatpush1.msra.mxu0 0.0
    %3331 = vmatprep.subr.mxu0 0.0
    %3332 = vmatpush1.msra.mxu0 0.0
    %3333 = vmatprep.mubr.f32.mxu0 0.0
    %3334 = vmatmul.mubr.f32.gmra.mrb[0].mxu0 %v3267
    %v3335 = vpop.f32.mrb[0].mxu0
    %v3336 = vadd.f32 0.0, %v3335
    %v3337 = vpop.f32.mrb[0].mxu0
    %3338 = vdwg.mxu0
    %v3339 = vadd.f32 %v3102, %v3336
    %3340 = vrot.lane.b32.xlu0 %v2629, 80
    %v3341 = vpop.permute.xlu0 %3340
    %3342 = vrot.lane.b32.xlu0 %v2629, 16
    %v3343 = vpop.permute.xlu0 %3342
    %v3344 = vsel %vm311, %v3341, 0
    %v3346 = vsel %vm311, %v3343, 0
    %3348 = vmatprep.subr.mxu0 0.0
    %3349 = vmatpush1.xpose.msra.mxu0 %v3346
    %3350 = vmatprep.subr.mxu0 0.0
    %3351 = vmatpush1.xpose.msra.mxu0 0.0
    %3352 = vmatprep.subr.mxu0 0.0
    %3353 = vmatpush1.xpose.msra.mxu0 0.0
    %3354 = vmatprep.subr.mxu0 0.0
    %3355 = vmatpush1.xpose.msra.mxu0 0.0
    %3356 = vmatprep.subr.mxu0 0.0
    %3357 = vmatpush1.xpose.msra.mxu0 0.0
    %3358 = vmatprep.subr.mxu0 0.0
    %3359 = vmatpush1.xpose.msra.mxu0 0.0
    %3360 = vmatprep.subr.mxu0 0.0
    %3361 = vmatpush1.xpose.msra.mxu0 0.0
    %3362 = vmatprep.subr.mxu0 0.0
    %3363 = vmatpush1.xpose.msra.mxu0 0.0
    %3364 = vmatprep.subr.mxu0 0.0
    %3365 = vmatpush1.xpose.msra.mxu0 0.0
    %3366 = vmatprep.subr.mxu0 0.0
    %3367 = vmatpush1.xpose.msra.mxu0 0.0
    %3368 = vmatprep.subr.mxu0 0.0
    %3369 = vmatpush1.xpose.msra.mxu0 0.0
    %3370 = vmatprep.subr.mxu0 0.0
    %3371 = vmatpush1.xpose.msra.mxu0 0.0
    %3372 = vmatprep.subr.mxu0 0.0
    %3373 = vmatpush1.xpose.msra.mxu0 0.0
    %3374 = vmatprep.subr.mxu0 0.0
    %3375 = vmatpush1.xpose.msra.mxu0 0.0
    %3376 = vmatprep.subr.mxu0 0.0
    %3377 = vmatpush1.xpose.msra.mxu0 0.0
    %3378 = vmatprep.subr.mxu0 0.0
    %3379 = vmatpush1.xpose.msra.mxu0 0.0
    %3380 = vmatprep.subr.mxu0 0.0
    %3381 = vmatpush1.xpose.msra.mxu0 0.0
    %3382 = vmatprep.subr.mxu0 0.0
    %3383 = vmatpush1.xpose.msra.mxu0 0.0
    %3384 = vmatprep.subr.mxu0 0.0
    %3385 = vmatpush1.xpose.msra.mxu0 0.0
    %3386 = vmatprep.subr.mxu0 0.0
    %3387 = vmatpush1.xpose.msra.mxu0 0.0
    %3388 = vmatprep.subr.mxu0 0.0
    %3389 = vmatpush1.xpose.msra.mxu0 0.0
    %3390 = vmatprep.subr.mxu0 0.0
    %3391 = vmatpush1.xpose.msra.mxu0 0.0
    %3392 = vmatprep.subr.mxu0 0.0
    %3393 = vmatpush1.xpose.msra.mxu0 0.0
    %3394 = vmatprep.subr.mxu0 0.0
    %3395 = vmatpush1.xpose.msra.mxu0 0.0
    %3396 = vmatprep.subr.mxu0 0.0
    %3397 = vmatpush1.xpose.msra.mxu0 0.0
    %3398 = vmatprep.subr.mxu0 0.0
    %3399 = vmatpush1.xpose.msra.mxu0 0.0
    %3400 = vmatprep.subr.mxu0 0.0
    %3401 = vmatpush1.xpose.msra.mxu0 0.0
    %3402 = vmatprep.subr.mxu0 0.0
    %3403 = vmatpush1.xpose.msra.mxu0 0.0
    %3404 = vmatprep.subr.mxu0 0.0
    %3405 = vmatpush1.xpose.msra.mxu0 0.0
    %3406 = vmatprep.subr.mxu0 0.0
    %3407 = vmatpush1.xpose.msra.mxu0 0.0
    %3408 = vmatprep.subr.mxu0 0.0
    %3409 = vmatpush1.xpose.msra.mxu0 0.0
    %3410 = vmatprep.subr.mxu0 0.0
    %3411 = vmatpush1.xpose.msra.mxu0 0.0
    %3412 = vmatprep.mubr.f32.mxu0 0.0
    %3413 = vmatmul.mubr.f32.gmra.mrb[0].mxu0 %v3344
    %v3414 = vpop.f32.mrb[0].mxu0
    %v3415 = vadd.f32 %v306, %v3414
    %v3416 = vpop.f32.mrb[0].mxu0
    %3417 = vdwg.mxu0
    %v3418 = vmul.f32 %v3415, 1.442695
    %v3419 = vpow.pop %v3418
    %v3420 = vsel %vm388, %v3419, 0.0
    %3421 = vadd.xlane.f32.xlu0 %v3420
    %v3422 = vpop.xlane.xlu0 %3421
    %v3423 = vrcp.pop %v3422
    %v3424 = vmul.f32 %v3419, %v3423
    %3425 = vrot.lane.b32.xlu0 %v2617, 80
    %v3426 = vpop.permute.xlu0 %3425
    %v3429 = vsel %vm388, %v3424, 0
    %3431 = vmatprep.subr.mxu0 0.0
    %3432 = vmatpush1.msra.mxu0 %v3426
    %3433 = vmatprep.subr.mxu0 0.0
    %3434 = vmatpush1.msra.mxu0 0.0
    %3435 = vmatprep.subr.mxu0 0.0
    %3436 = vmatpush1.msra.mxu0 0.0
    %3437 = vmatprep.subr.mxu0 0.0
    %3438 = vmatpush1.msra.mxu0 0.0
    %3439 = vmatprep.subr.mxu0 0.0
    %3440 = vmatpush1.msra.mxu0 0.0
    %3441 = vmatprep.subr.mxu0 0.0
    %3442 = vmatpush1.msra.mxu0 0.0
    %3443 = vmatprep.subr.mxu0 0.0
    %3444 = vmatpush1.msra.mxu0 0.0
    %3445 = vmatprep.subr.mxu0 0.0
    %3446 = vmatpush1.msra.mxu0 0.0
    %3447 = vmatprep.subr.mxu0 0.0
    %3448 = vmatpush1.msra.mxu0 0.0
    %3449 = vmatprep.subr.mxu0 0.0
    %3450 = vmatpush1.msra.mxu0 0.0
    %3451 = vmatprep.subr.mxu0 0.0
    %3452 = vmatpush1.msra.mxu0 0.0
    %3453 = vmatprep.subr.mxu0 0.0
    %3454 = vmatpush1.msra.mxu0 0.0
    %3455 = vmatprep.subr.mxu0 0.0
    %3456 = vmatpush1.msra.mxu0 0.0
    %3457 = vmatprep.subr.mxu0 0.0
    %3458 = vmatpush1.msra.mxu0 0.0
    %3459 = vmatprep.subr.mxu0 0.0
    %3460 = vmatpush1.msra.mxu0 0.0
    %3461 = vmatprep.subr.mxu0 0.0
    %3462 = vmatpush1.msra.mxu0 0.0
    %3463 = vmatprep.subr.mxu0 0.0
    %3464 = vmatpush1.msra.mxu0 0.0
    %3465 = vmatprep.subr.mxu0 0.0
    %3466 = vmatpush1.msra.mxu0 0.0
    %3467 = vmatprep.subr.mxu0 0.0
    %3468 = vmatpush1.msra.mxu0 0.0
    %3469 = vmatprep.subr.mxu0 0.0
    %3470 = vmatpush1.msra.mxu0 0.0
    %3471 = vmatprep.subr.mxu0 0.0
    %3472 = vmatpush1.msra.mxu0 0.0
    %3473 = vmatprep.subr.mxu0 0.0
    %3474 = vmatpush1.msra.mxu0 0.0
    %3475 = vmatprep.subr.mxu0 0.0
    %3476 = vmatpush1.msra.mxu0 0.0
    %3477 = vmatprep.subr.mxu0 0.0
    %3478 = vmatpush1.msra.mxu0 0.0
    %3479 = vmatprep.subr.mxu0 0.0
    %3480 = vmatpush1.msra.mxu0 0.0
    %3481 = vmatprep.subr.mxu0 0.0
    %3482 = vmatpush1.msra.mxu0 0.0
    %3483 = vmatprep.subr.mxu0 0.0
    %3484 = vmatpush1.msra.mxu0 0.0
    %3485 = vmatprep.subr.mxu0 0.0
    %3486 = vmatpush1.msra.mxu0 0.0
    %3487 = vmatprep.subr.mxu0 0.0
    %3488 = vmatpush1.msra.mxu0 0.0
    %3489 = vmatprep.subr.mxu0 0.0
    %3490 = vmatpush1.msra.mxu0 0.0
    %3491 = vmatprep.subr.mxu0 0.0
    %3492 = vmatpush1.msra.mxu0 0.0
    %3493 = vmatprep.subr.mxu0 0.0
    %3494 = vmatpush1.msra.mxu0 0.0
    %3495 = vmatprep.mubr.f32.mxu0 0.0
    %3496 = vmatmul.mubr.f32.gmra.mrb[0].mxu0 %v3429
    %v3497 = vpop.f32.mrb[0].mxu0
    %v3498 = vadd.f32 0.0, %v3497
    %v3499 = vpop.f32.mrb[0].mxu0
    %3500 = vdwg.mxu0
    %v3502 = vsel %vm311, %v3498, 0
    %3504 = vmatprep.subr.mxu0 0.0
    %3505 = vmatpush1.msra.mxu0 %v2638
    %3506 = vmatprep.subr.mxu0 0.0
    %3507 = vmatpush1.msra.mxu0 %v2639
    %3508 = vmatprep.subr.mxu0 0.0
    %3509 = vmatpush1.msra.mxu0 0.0
    %3510 = vmatprep.subr.mxu0 0.0
    %3511 = vmatpush1.msra.mxu0 0.0
    %3512 = vmatprep.subr.mxu0 0.0
    %3513 = vmatpush1.msra.mxu0 0.0
    %3514 = vmatprep.subr.mxu0 0.0
    %3515 = vmatpush1.msra.mxu0 0.0
    %3516 = vmatprep.subr.mxu0 0.0
    %3517 = vmatpush1.msra.mxu0 0.0
    %3518 = vmatprep.subr.mxu0 0.0
    %3519 = vmatpush1.msra.mxu0 0.0
    %3520 = vmatprep.subr.mxu0 0.0
    %3521 = vmatpush1.msra.mxu0 0.0
    %3522 = vmatprep.subr.mxu0 0.0
    %3523 = vmatpush1.msra.mxu0 0.0
    %3524 = vmatprep.subr.mxu0 0.0
    %3525 = vmatpush1.msra.mxu0 0.0
    %3526 = vmatprep.subr.mxu0 0.0
    %3527 = vmatpush1.msra.mxu0 0.0
    %3528 = vmatprep.subr.mxu0 0.0
    %3529 = vmatpush1.msra.mxu0 0.0
    %3530 = vmatprep.subr.mxu0 0.0
    %3531 = vmatpush1.msra.mxu0 0.0
    %3532 = vmatprep.subr.mxu0 0.0
    %3533 = vmatpush1.msra.mxu0 0.0
    %3534 = vmatprep.subr.mxu0 0.0
    %3535 = vmatpush1.msra.mxu0 0.0
    %3536 = vmatprep.subr.mxu0 0.0
    %3537 = vmatpush1.msra.mxu0 0.0
    %3538 = vmatprep.subr.mxu0 0.0
    %3539 = vmatpush1.msra.mxu0 0.0
    %3540 = vmatprep.subr.mxu0 0.0
    %3541 = vmatpush1.msra.mxu0 0.0
    %3542 = vmatprep.subr.mxu0 0.0
    %3543 = vmatpush1.msra.mxu0 0.0
    %3544 = vmatprep.subr.mxu0 0.0
    %3545 = vmatpush1.msra.mxu0 0.0
    %3546 = vmatprep.subr.mxu0 0.0
    %3547 = vmatpush1.msra.mxu0 0.0
    %3548 = vmatprep.subr.mxu0 0.0
    %3549 = vmatpush1.msra.mxu0 0.0
    %3550 = vmatprep.subr.mxu0 0.0
    %3551 = vmatpush1.msra.mxu0 0.0
    %3552 = vmatprep.subr.mxu0 0.0
    %3553 = vmatpush1.msra.mxu0 0.0
    %3554 = vmatprep.subr.mxu0 0.0
    %3555 = vmatpush1.msra.mxu0 0.0
    %3556 = vmatprep.subr.mxu0 0.0
    %3557 = vmatpush1.msra.mxu0 0.0
    %3558 = vmatprep.subr.mxu0 0.0
    %3559 = vmatpush1.msra.mxu0 0.0
    %3560 = vmatprep.subr.mxu0 0.0
    %3561 = vmatpush1.msra.mxu0 0.0
    %3562 = vmatprep.subr.mxu0 0.0
    %3563 = vmatpush1.msra.mxu0 0.0
    %3564 = vmatprep.subr.mxu0 0.0
    %3565 = vmatpush1.msra.mxu0 0.0
    %3566 = vmatprep.subr.mxu0 0.0
    %3567 = vmatpush1.msra.mxu0 0.0
    %3568 = vmatprep.mubr.f32.mxu0 0.0
    %3569 = vmatmul.mubr.f32.gmra.mrb[0].mxu0 %v3502
    %v3570 = vpop.f32.mrb[0].mxu0
    %v3571 = vadd.f32 0.0, %v3570
    %v3572 = vpop.f32.mrb[0].mxu0
    %3573 = vdwg.mxu0
    %v3574 = vadd.f32 %v3339, %v3571
    %3576 = vrot.lane.b32.xlu0 %v2630, 64
    %v3577 = vpop.permute.xlu0 %3576
    %v3578 = vsel %vm311, %v2630, 0
    %v3580 = vsel %vm311, %v3577, 0
    %3582 = vmatprep.subr.mxu0 0.0
    %3583 = vmatpush1.xpose.msra.mxu0 %v3580
    %3584 = vmatprep.subr.mxu0 0.0
    %3585 = vmatpush1.xpose.msra.mxu0 0.0
    %3586 = vmatprep.subr.mxu0 0.0
    %3587 = vmatpush1.xpose.msra.mxu0 0.0
    %3588 = vmatprep.subr.mxu0 0.0
    %3589 = vmatpush1.xpose.msra.mxu0 0.0
    %3590 = vmatprep.subr.mxu0 0.0
    %3591 = vmatpush1.xpose.msra.mxu0 0.0
    %3592 = vmatprep.subr.mxu0 0.0
    %3593 = vmatpush1.xpose.msra.mxu0 0.0
    %3594 = vmatprep.subr.mxu0 0.0
    %3595 = vmatpush1.xpose.msra.mxu0 0.0
    %3596 = vmatprep.subr.mxu0 0.0
    %3597 = vmatpush1.xpose.msra.mxu0 0.0
    %3598 = vmatprep.subr.mxu0 0.0
    %3599 = vmatpush1.xpose.msra.mxu0 0.0
    %3600 = vmatprep.subr.mxu0 0.0
    %3601 = vmatpush1.xpose.msra.mxu0 0.0
    %3602 = vmatprep.subr.mxu0 0.0
    %3603 = vmatpush1.xpose.msra.mxu0 0.0
    %3604 = vmatprep.subr.mxu0 0.0
    %3605 = vmatpush1.xpose.msra.mxu0 0.0
    %3606 = vmatprep.subr.mxu0 0.0
    %3607 = vmatpush1.xpose.msra.mxu0 0.0
    %3608 = vmatprep.subr.mxu0 0.0
    %3609 = vmatpush1.xpose.msra.mxu0 0.0
    %3610 = vmatprep.subr.mxu0 0.0
    %3611 = vmatpush1.xpose.msra.mxu0 0.0
    %3612 = vmatprep.subr.mxu0 0.0
    %3613 = vmatpush1.xpose.msra.mxu0 0.0
    %3614 = vmatprep.subr.mxu0 0.0
    %3615 = vmatpush1.xpose.msra.mxu0 0.0
    %3616 = vmatprep.subr.mxu0 0.0
    %3617 = vmatpush1.xpose.msra.mxu0 0.0
    %3618 = vmatprep.subr.mxu0 0.0
    %3619 = vmatpush1.xpose.msra.mxu0 0.0
    %3620 = vmatprep.subr.mxu0 0.0
    %3621 = vmatpush1.xpose.msra.mxu0 0.0
    %3622 = vmatprep.subr.mxu0 0.0
    %3623 = vmatpush1.xpose.msra.mxu0 0.0
    %3624 = vmatprep.subr.mxu0 0.0
    %3625 = vmatpush1.xpose.msra.mxu0 0.0
    %3626 = vmatprep.subr.mxu0 0.0
    %3627 = vmatpush1.xpose.msra.mxu0 0.0
    %3628 = vmatprep.subr.mxu0 0.0
    %3629 = vmatpush1.xpose.msra.mxu0 0.0
    %3630 = vmatprep.subr.mxu0 0.0
    %3631 = vmatpush1.xpose.msra.mxu0 0.0
    %3632 = vmatprep.subr.mxu0 0.0
    %3633 = vmatpush1.xpose.msra.mxu0 0.0
    %3634 = vmatprep.subr.mxu0 0.0
    %3635 = vmatpush1.xpose.msra.mxu0 0.0
    %3636 = vmatprep.subr.mxu0 0.0
    %3637 = vmatpush1.xpose.msra.mxu0 0.0
    %3638 = vmatprep.subr.mxu0 0.0
    %3639 = vmatpush1.xpose.msra.mxu0 0.0
    %3640 = vmatprep.subr.mxu0 0.0
    %3641 = vmatpush1.xpose.msra.mxu0 0.0
    %3642 = vmatprep.subr.mxu0 0.0
    %3643 = vmatpush1.xpose.msra.mxu0 0.0
    %3644 = vmatprep.subr.mxu0 0.0
    %3645 = vmatpush1.xpose.msra.mxu0 0.0
    %3646 = vmatprep.mubr.f32.mxu0 0.0
    %3647 = vmatmul.mubr.f32.gmra.mrb[0].mxu0 %v3578
    %v3648 = vpop.f32.mrb[0].mxu0
    %v3649 = vadd.f32 %v1251, %v3648
    %v3650 = vpop.f32.mrb[0].mxu0
    %3651 = vdwg.mxu0
    %v3652 = vmul.f32 %v3649, 1.442695
    %v3653 = vpow.pop %v3652
    %v3654 = vsel %vm388, %v3653, 0.0
    %3655 = vadd.xlane.f32.xlu0 %v3654
    %v3656 = vpop.xlane.xlu0 %3655
    %v3657 = vrcp.pop %v3656
    %v3658 = vmul.f32 %v3653, %v3657
    %v3660 = vsel %vm388, %v3658, 0
    %3662 = vmatprep.subr.mxu0 0.0
    %3663 = vmatpush1.msra.mxu0 %v2622
    %3664 = vmatprep.subr.mxu0 0.0
    %3665 = vmatpush1.msra.mxu0 0.0
    %3666 = vmatprep.subr.mxu0 0.0
    %3667 = vmatpush1.msra.mxu0 0.0
    %3668 = vmatprep.subr.mxu0 0.0
    %3669 = vmatpush1.msra.mxu0 0.0
    %3670 = vmatprep.subr.mxu0 0.0
    %3671 = vmatpush1.msra.mxu0 0.0
    %3672 = vmatprep.subr.mxu0 0.0
    %3673 = vmatpush1.msra.mxu0 0.0
    %3674 = vmatprep.subr.mxu0 0.0
    %3675 = vmatpush1.msra.mxu0 0.0
    %3676 = vmatprep.subr.mxu0 0.0
    %3677 = vmatpush1.msra.mxu0 0.0
    %3678 = vmatprep.subr.mxu0 0.0
    %3679 = vmatpush1.msra.mxu0 0.0
    %3680 = vmatprep.subr.mxu0 0.0
    %3681 = vmatpush1.msra.mxu0 0.0
    %3682 = vmatprep.subr.mxu0 0.0
    %3683 = vmatpush1.msra.mxu0 0.0
    %3684 = vmatprep.subr.mxu0 0.0
    %3685 = vmatpush1.msra.mxu0 0.0
    %3686 = vmatprep.subr.mxu0 0.0
    %3687 = vmatpush1.msra.mxu0 0.0
    %3688 = vmatprep.subr.mxu0 0.0
    %3689 = vmatpush1.msra.mxu0 0.0
    %3690 = vmatprep.subr.mxu0 0.0
    %3691 = vmatpush1.msra.mxu0 0.0
    %3692 = vmatprep.subr.mxu0 0.0
    %3693 = vmatpush1.msra.mxu0 0.0
    %3694 = vmatprep.subr.mxu0 0.0
    %3695 = vmatpush1.msra.mxu0 0.0
    %3696 = vmatprep.subr.mxu0 0.0
    %3697 = vmatpush1.msra.mxu0 0.0
    %3698 = vmatprep.subr.mxu0 0.0
    %3699 = vmatpush1.msra.mxu0 0.0
    %3700 = vmatprep.subr.mxu0 0.0
    %3701 = vmatpush1.msra.mxu0 0.0
    %3702 = vmatprep.subr.mxu0 0.0
    %3703 = vmatpush1.msra.mxu0 0.0
    %3704 = vmatprep.subr.mxu0 0.0
    %3705 = vmatpush1.msra.mxu0 0.0
    %3706 = vmatprep.subr.mxu0 0.0
    %3707 = vmatpush1.msra.mxu0 0.0
    %3708 = vmatprep.subr.mxu0 0.0
    %3709 = vmatpush1.msra.mxu0 0.0
    %3710 = vmatprep.subr.mxu0 0.0
    %3711 = vmatpush1.msra.mxu0 0.0
    %3712 = vmatprep.subr.mxu0 0.0
    %3713 = vmatpush1.msra.mxu0 0.0
    %3714 = vmatprep.subr.mxu0 0.0
    %3715 = vmatpush1.msra.mxu0 0.0
    %3716 = vmatprep.subr.mxu0 0.0
    %3717 = vmatpush1.msra.mxu0 0.0
    %3718 = vmatprep.subr.mxu0 0.0
    %3719 = vmatpush1.msra.mxu0 0.0
    %3720 = vmatprep.subr.mxu0 0.0
    %3721 = vmatpush1.msra.mxu0 0.0
    %3722 = vmatprep.subr.mxu0 0.0
    %3723 = vmatpush1.msra.mxu0 0.0
    %3724 = vmatprep.subr.mxu0 0.0
    %3725 = vmatpush1.msra.mxu0 0.0
    %3726 = vmatprep.mubr.f32.mxu0 0.0
    %3727 = vmatmul.mubr.f32.gmra.mrb[0].mxu0 %v3660
    %v3728 = vpop.f32.mrb[0].mxu0
    %v3729 = vadd.f32 0.0, %v3728
    %v3730 = vpop.f32.mrb[0].mxu0
    %3731 = vdwg.mxu0
    %3732 = vrot.lane.b32.xlu0 %v2630, 112
    %v3733 = vpop.permute.xlu0 %3732
    %3734 = vrot.lane.b32.xlu0 %v2630, 48
    %v3735 = vpop.permute.xlu0 %3734
    %v3736 = vsel %vm311, %v3733, 0
    %v3738 = vsel %vm311, %v3735, 0
    %3740 = vmatprep.subr.mxu0 0.0
    %3741 = vmatpush1.xpose.msra.mxu0 %v3738
    %3742 = vmatprep.subr.mxu0 0.0
    %3743 = vmatpush1.xpose.msra.mxu0 0.0
    %3744 = vmatprep.subr.mxu0 0.0
    %3745 = vmatpush1.xpose.msra.mxu0 0.0
    %3746 = vmatprep.subr.mxu0 0.0
    %3747 = vmatpush1.xpose.msra.mxu0 0.0
    %3748 = vmatprep.subr.mxu0 0.0
    %3749 = vmatpush1.xpose.msra.mxu0 0.0
    %3750 = vmatprep.subr.mxu0 0.0
    %3751 = vmatpush1.xpose.msra.mxu0 0.0
    %3752 = vmatprep.subr.mxu0 0.0
    %3753 = vmatpush1.xpose.msra.mxu0 0.0
    %3754 = vmatprep.subr.mxu0 0.0
    %3755 = vmatpush1.xpose.msra.mxu0 0.0
    %3756 = vmatprep.subr.mxu0 0.0
    %3757 = vmatpush1.xpose.msra.mxu0 0.0
    %3758 = vmatprep.subr.mxu0 0.0
    %3759 = vmatpush1.xpose.msra.mxu0 0.0
    %3760 = vmatprep.subr.mxu0 0.0
    %3761 = vmatpush1.xpose.msra.mxu0 0.0
    %3762 = vmatprep.subr.mxu0 0.0
    %3763 = vmatpush1.xpose.msra.mxu0 0.0
    %3764 = vmatprep.subr.mxu0 0.0
    %3765 = vmatpush1.xpose.msra.mxu0 0.0
    %3766 = vmatprep.subr.mxu0 0.0
    %3767 = vmatpush1.xpose.msra.mxu0 0.0
    %3768 = vmatprep.subr.mxu0 0.0
    %3769 = vmatpush1.xpose.msra.mxu0 0.0
    %3770 = vmatprep.subr.mxu0 0.0
    %3771 = vmatpush1.xpose.msra.mxu0 0.0
    %3772 = vmatprep.subr.mxu0 0.0
    %3773 = vmatpush1.xpose.msra.mxu0 0.0
    %3774 = vmatprep.subr.mxu0 0.0
    %3775 = vmatpush1.xpose.msra.mxu0 0.0
    %3776 = vmatprep.subr.mxu0 0.0
    %3777 = vmatpush1.xpose.msra.mxu0 0.0
    %3778 = vmatprep.subr.mxu0 0.0
    %3779 = vmatpush1.xpose.msra.mxu0 0.0
    %3780 = vmatprep.subr.mxu0 0.0
    %3781 = vmatpush1.xpose.msra.mxu0 0.0
    %3782 = vmatprep.subr.mxu0 0.0
    %3783 = vmatpush1.xpose.msra.mxu0 0.0
    %3784 = vmatprep.subr.mxu0 0.0
    %3785 = vmatpush1.xpose.msra.mxu0 0.0
    %3786 = vmatprep.subr.mxu0 0.0
    %3787 = vmatpush1.xpose.msra.mxu0 0.0
    %3788 = vmatprep.subr.mxu0 0.0
    %3789 = vmatpush1.xpose.msra.mxu0 0.0
    %3790 = vmatprep.subr.mxu0 0.0
    %3791 = vmatpush1.xpose.msra.mxu0 0.0
    %3792 = vmatprep.subr.mxu0 0.0
    %3793 = vmatpush1.xpose.msra.mxu0 0.0
    %3794 = vmatprep.subr.mxu0 0.0
    %3795 = vmatpush1.xpose.msra.mxu0 0.0
    %3796 = vmatprep.subr.mxu0 0.0
    %3797 = vmatpush1.xpose.msra.mxu0 0.0
    %3798 = vmatprep.subr.mxu0 0.0
    %3799 = vmatpush1.xpose.msra.mxu0 0.0
    %3800 = vmatprep.subr.mxu0 0.0
    %3801 = vmatpush1.xpose.msra.mxu0 0.0
    %3802 = vmatprep.subr.mxu0 0.0
    %3803 = vmatpush1.xpose.msra.mxu0 0.0
    %3804 = vmatprep.mubr.f32.mxu0 0.0
    %3805 = vmatmul.mubr.f32.gmra.mrb[0].mxu0 %v3736
    %v3806 = vpop.f32.mrb[0].mxu0
    %v3807 = vadd.f32 %v1251, %v3806
    %v3808 = vpop.f32.mrb[0].mxu0
    %3809 = vdwg.mxu0
    %v3810 = vmul.f32 %v3807, 1.442695
    %v3811 = vpow.pop %v3810
    %v3812 = vsel %vm388, %v3811, 0.0
    %3813 = vadd.xlane.f32.xlu0 %v3812
    %v3814 = vpop.xlane.xlu0 %3813
    %v3815 = vrcp.pop %v3814
    %v3816 = vmul.f32 %v3811, %v3815
    %3818 = vrot.lane.b32.xlu0 %v2622, 112
    %v3819 = vpop.permute.xlu0 %3818
    %v3822 = vsel %vm388, %v3816, 0
    %3824 = vmatprep.subr.mxu0 0.0
    %3825 = vmatpush1.msra.mxu0 %v3819
    %3826 = vmatprep.subr.mxu0 0.0
    %3827 = vmatpush1.msra.mxu0 0.0
    %3828 = vmatprep.subr.mxu0 0.0
    %3829 = vmatpush1.msra.mxu0 0.0
    %3830 = vmatprep.subr.mxu0 0.0
    %3831 = vmatpush1.msra.mxu0 0.0
    %3832 = vmatprep.subr.mxu0 0.0
    %3833 = vmatpush1.msra.mxu0 0.0
    %3834 = vmatprep.subr.mxu0 0.0
    %3835 = vmatpush1.msra.mxu0 0.0
    %3836 = vmatprep.subr.mxu0 0.0
    %3837 = vmatpush1.msra.mxu0 0.0
    %3838 = vmatprep.subr.mxu0 0.0
    %3839 = vmatpush1.msra.mxu0 0.0
    %3840 = vmatprep.subr.mxu0 0.0
    %3841 = vmatpush1.msra.mxu0 0.0
    %3842 = vmatprep.subr.mxu0 0.0
    %3843 = vmatpush1.msra.mxu0 0.0
    %3844 = vmatprep.subr.mxu0 0.0
    %3845 = vmatpush1.msra.mxu0 0.0
    %3846 = vmatprep.subr.mxu0 0.0
    %3847 = vmatpush1.msra.mxu0 0.0
    %3848 = vmatprep.subr.mxu0 0.0
    %3849 = vmatpush1.msra.mxu0 0.0
    %3850 = vmatprep.subr.mxu0 0.0
    %3851 = vmatpush1.msra.mxu0 0.0
    %3852 = vmatprep.subr.mxu0 0.0
    %3853 = vmatpush1.msra.mxu0 0.0
    %3854 = vmatprep.subr.mxu0 0.0
    %3855 = vmatpush1.msra.mxu0 0.0
    %3856 = vmatprep.subr.mxu0 0.0
    %3857 = vmatpush1.msra.mxu0 0.0
    %3858 = vmatprep.subr.mxu0 0.0
    %3859 = vmatpush1.msra.mxu0 0.0
    %3860 = vmatprep.subr.mxu0 0.0
    %3861 = vmatpush1.msra.mxu0 0.0
    %3862 = vmatprep.subr.mxu0 0.0
    %3863 = vmatpush1.msra.mxu0 0.0
    %3864 = vmatprep.subr.mxu0 0.0
    %3865 = vmatpush1.msra.mxu0 0.0
    %3866 = vmatprep.subr.mxu0 0.0
    %3867 = vmatpush1.msra.mxu0 0.0
    %3868 = vmatprep.subr.mxu0 0.0
    %3869 = vmatpush1.msra.mxu0 0.0
    %3870 = vmatprep.subr.mxu0 0.0
    %3871 = vmatpush1.msra.mxu0 0.0
    %3872 = vmatprep.subr.mxu0 0.0
    %3873 = vmatpush1.msra.mxu0 0.0
    %3874 = vmatprep.subr.mxu0 0.0
    %3875 = vmatpush1.msra.mxu0 0.0
    %3876 = vmatprep.subr.mxu0 0.0
    %3877 = vmatpush1.msra.mxu0 0.0
    %3878 = vmatprep.subr.mxu0 0.0
    %3879 = vmatpush1.msra.mxu0 0.0
    %3880 = vmatprep.subr.mxu0 0.0
    %3881 = vmatpush1.msra.mxu0 0.0
    %3882 = vmatprep.subr.mxu0 0.0
    %3883 = vmatpush1.msra.mxu0 0.0
    %3884 = vmatprep.subr.mxu0 0.0
    %3885 = vmatpush1.msra.mxu0 0.0
    %3886 = vmatprep.subr.mxu0 0.0
    %3887 = vmatpush1.msra.mxu0 0.0
    %3888 = vmatprep.mubr.f32.mxu0 0.0
    %3889 = vmatmul.mubr.f32.gmra.mrb[0].mxu0 %v3822
    %v3890 = vpop.f32.mrb[0].mxu0
    %v3891 = vadd.f32 0.0, %v3890
    %v3892 = vpop.f32.mrb[0].mxu0
    %3893 = vdwg.mxu0
    %v3895 = vsel %vm311, %v3891, 0
    %3897 = vmatprep.subr.mxu0 0.0
    %3898 = vmatpush1.msra.mxu0 %v2634
    %3899 = vmatprep.subr.mxu0 0.0
    %3900 = vmatpush1.msra.mxu0 %v2635
    %3901 = vmatprep.subr.mxu0 0.0
    %3902 = vmatpush1.msra.mxu0 0.0
    %3903 = vmatprep.subr.mxu0 0.0
    %3904 = vmatpush1.msra.mxu0 0.0
    %3905 = vmatprep.subr.mxu0 0.0
    %3906 = vmatpush1.msra.mxu0 0.0
    %3907 = vmatprep.subr.mxu0 0.0
    %3908 = vmatpush1.msra.mxu0 0.0
    %3909 = vmatprep.subr.mxu0 0.0
    %3910 = vmatpush1.msra.mxu0 0.0
    %3911 = vmatprep.subr.mxu0 0.0
    %3912 = vmatpush1.msra.mxu0 0.0
    %3913 = vmatprep.subr.mxu0 0.0
    %3914 = vmatpush1.msra.mxu0 0.0
    %3915 = vmatprep.subr.mxu0 0.0
    %3916 = vmatpush1.msra.mxu0 0.0
    %3917 = vmatprep.subr.mxu0 0.0
    %3918 = vmatpush1.msra.mxu0 0.0
    %3919 = vmatprep.subr.mxu0 0.0
    %3920 = vmatpush1.msra.mxu0 0.0
    %3921 = vmatprep.subr.mxu0 0.0
    %3922 = vmatpush1.msra.mxu0 0.0
    %3923 = vmatprep.subr.mxu0 0.0
    %3924 = vmatpush1.msra.mxu0 0.0
    %3925 = vmatprep.subr.mxu0 0.0
    %3926 = vmatpush1.msra.mxu0 0.0
    %3927 = vmatprep.subr.mxu0 0.0
    %3928 = vmatpush1.msra.mxu0 0.0
    %3929 = vmatprep.subr.mxu0 0.0
    %3930 = vmatpush1.msra.mxu0 0.0
    %3931 = vmatprep.subr.mxu0 0.0
    %3932 = vmatpush1.msra.mxu0 0.0
    %3933 = vmatprep.subr.mxu0 0.0
    %3934 = vmatpush1.msra.mxu0 0.0
    %3935 = vmatprep.subr.mxu0 0.0
    %3936 = vmatpush1.msra.mxu0 0.0
    %3937 = vmatprep.subr.mxu0 0.0
    %3938 = vmatpush1.msra.mxu0 0.0
    %3939 = vmatprep.subr.mxu0 0.0
    %3940 = vmatpush1.msra.mxu0 0.0
    %3941 = vmatprep.subr.mxu0 0.0
    %3942 = vmatpush1.msra.mxu0 0.0
    %3943 = vmatprep.subr.mxu0 0.0
    %3944 = vmatpush1.msra.mxu0 0.0
    %3945 = vmatprep.subr.mxu0 0.0
    %3946 = vmatpush1.msra.mxu0 0.0
    %3947 = vmatprep.subr.mxu0 0.0
    %3948 = vmatpush1.msra.mxu0 0.0
    %3949 = vmatprep.subr.mxu0 0.0
    %3950 = vmatpush1.msra.mxu0 0.0
    %3951 = vmatprep.subr.mxu0 0.0
    %3952 = vmatpush1.msra.mxu0 0.0
    %3953 = vmatprep.subr.mxu0 0.0
    %3954 = vmatpush1.msra.mxu0 0.0
    %3955 = vmatprep.subr.mxu0 0.0
    %3956 = vmatpush1.msra.mxu0 0.0
    %3957 = vmatprep.subr.mxu0 0.0
    %3958 = vmatpush1.msra.mxu0 0.0
    %3959 = vmatprep.subr.mxu0 0.0
    %3960 = vmatpush1.msra.mxu0 0.0
    %3961 = vmatprep.mubr.f32.mxu0 0.0
    %3962 = vmatmul.mubr.f32.gmra.mrb[0].mxu0 %v3895
    %v3963 = vpop.f32.mrb[0].mxu0
    %v3964 = vadd.f32 0.0, %v3963
    %v3965 = vpop.f32.mrb[0].mxu0
    %3966 = vdwg.mxu0
    %v3968 = vsel %vm311, %v3729, 0
    %3970 = vmatprep.subr.mxu0 0.0
    %3971 = vmatpush1.msra.mxu0 %v2632
    %3972 = vmatprep.subr.mxu0 0.0
    %3973 = vmatpush1.msra.mxu0 %v2633
    %3974 = vmatprep.subr.mxu0 0.0
    %3975 = vmatpush1.msra.mxu0 0.0
    %3976 = vmatprep.subr.mxu0 0.0
    %3977 = vmatpush1.msra.mxu0 0.0
    %3978 = vmatprep.subr.mxu0 0.0
    %3979 = vmatpush1.msra.mxu0 0.0
    %3980 = vmatprep.subr.mxu0 0.0
    %3981 = vmatpush1.msra.mxu0 0.0
    %3982 = vmatprep.subr.mxu0 0.0
    %3983 = vmatpush1.msra.mxu0 0.0
    %3984 = vmatprep.subr.mxu0 0.0
    %3985 = vmatpush1.msra.mxu0 0.0
    %3986 = vmatprep.subr.mxu0 0.0
    %3987 = vmatpush1.msra.mxu0 0.0
    %3988 = vmatprep.subr.mxu0 0.0
    %3989 = vmatpush1.msra.mxu0 0.0
    %3990 = vmatprep.subr.mxu0 0.0
    %3991 = vmatpush1.msra.mxu0 0.0
    %3992 = vmatprep.subr.mxu0 0.0
    %3993 = vmatpush1.msra.mxu0 0.0
    %3994 = vmatprep.subr.mxu0 0.0
    %3995 = vmatpush1.msra.mxu0 0.0
    %3996 = vmatprep.subr.mxu0 0.0
    %3997 = vmatpush1.msra.mxu0 0.0
    %3998 = vmatprep.subr.mxu0 0.0
    %3999 = vmatpush1.msra.mxu0 0.0
    %4000 = vmatprep.subr.mxu0 0.0
    %4001 = vmatpush1.msra.mxu0 0.0
    %4002 = vmatprep.subr.mxu0 0.0
    %4003 = vmatpush1.msra.mxu0 0.0
    %4004 = vmatprep.subr.mxu0 0.0
    %4005 = vmatpush1.msra.mxu0 0.0
    %4006 = vmatprep.subr.mxu0 0.0
    %4007 = vmatpush1.msra.mxu0 0.0
    %4008 = vmatprep.subr.mxu0 0.0
    %4009 = vmatpush1.msra.mxu0 0.0
    %4010 = vmatprep.subr.mxu0 0.0
    %4011 = vmatpush1.msra.mxu0 0.0
    %4012 = vmatprep.subr.mxu0 0.0
    %4013 = vmatpush1.msra.mxu0 0.0
    %4014 = vmatprep.subr.mxu0 0.0
    %4015 = vmatpush1.msra.mxu0 0.0
    %4016 = vmatprep.subr.mxu0 0.0
    %4017 = vmatpush1.msra.mxu0 0.0
    %4018 = vmatprep.subr.mxu0 0.0
    %4019 = vmatpush1.msra.mxu0 0.0
    %4020 = vmatprep.subr.mxu0 0.0
    %4021 = vmatpush1.msra.mxu0 0.0
    %4022 = vmatprep.subr.mxu0 0.0
    %4023 = vmatpush1.msra.mxu0 0.0
    %4024 = vmatprep.subr.mxu0 0.0
    %4025 = vmatpush1.msra.mxu0 0.0
    %4026 = vmatprep.subr.mxu0 0.0
    %4027 = vmatpush1.msra.mxu0 0.0
    %4028 = vmatprep.subr.mxu0 0.0
    %4029 = vmatpush1.msra.mxu0 0.0
    %4030 = vmatprep.subr.mxu0 0.0
    %4031 = vmatpush1.msra.mxu0 0.0
    %4032 = vmatprep.subr.mxu0 0.0
    %4033 = vmatpush1.msra.mxu0 0.0
    %4034 = vmatprep.mubr.f32.mxu0 0.0
    %4035 = vmatmul.mubr.f32.gmra.mrb[0].mxu0 %v3968
    %v4036 = vpop.f32.mrb[0].mxu0
    %v4037 = vadd.f32 %v3964, %v4036
    %v4038 = vpop.f32.mrb[0].mxu0
    %4039 = vdwg.mxu0
    %4040 = vrot.lane.b32.xlu0 %v2630, 96
    %v4041 = vpop.permute.xlu0 %4040
    %4042 = vrot.lane.b32.xlu0 %v2630, 32
    %v4043 = vpop.permute.xlu0 %4042
    %v4044 = vsel %vm311, %v4041, 0
    %v4046 = vsel %vm311, %v4043, 0
    %4048 = vmatprep.subr.mxu0 0.0
    %4049 = vmatpush1.xpose.msra.mxu0 %v4046
    %4050 = vmatprep.subr.mxu0 0.0
    %4051 = vmatpush1.xpose.msra.mxu0 0.0
    %4052 = vmatprep.subr.mxu0 0.0
    %4053 = vmatpush1.xpose.msra.mxu0 0.0
    %4054 = vmatprep.subr.mxu0 0.0
    %4055 = vmatpush1.xpose.msra.mxu0 0.0
    %4056 = vmatprep.subr.mxu0 0.0
    %4057 = vmatpush1.xpose.msra.mxu0 0.0
    %4058 = vmatprep.subr.mxu0 0.0
    %4059 = vmatpush1.xpose.msra.mxu0 0.0
    %4060 = vmatprep.subr.mxu0 0.0
    %4061 = vmatpush1.xpose.msra.mxu0 0.0
    %4062 = vmatprep.subr.mxu0 0.0
    %4063 = vmatpush1.xpose.msra.mxu0 0.0
    %4064 = vmatprep.subr.mxu0 0.0
    %4065 = vmatpush1.xpose.msra.mxu0 0.0
    %4066 = vmatprep.subr.mxu0 0.0
    %4067 = vmatpush1.xpose.msra.mxu0 0.0
    %4068 = vmatprep.subr.mxu0 0.0
    %4069 = vmatpush1.xpose.msra.mxu0 0.0
    %4070 = vmatprep.subr.mxu0 0.0
    %4071 = vmatpush1.xpose.msra.mxu0 0.0
    %4072 = vmatprep.subr.mxu0 0.0
    %4073 = vmatpush1.xpose.msra.mxu0 0.0
    %4074 = vmatprep.subr.mxu0 0.0
    %4075 = vmatpush1.xpose.msra.mxu0 0.0
    %4076 = vmatprep.subr.mxu0 0.0
    %4077 = vmatpush1.xpose.msra.mxu0 0.0
    %4078 = vmatprep.subr.mxu0 0.0
    %4079 = vmatpush1.xpose.msra.mxu0 0.0
    %4080 = vmatprep.subr.mxu0 0.0
    %4081 = vmatpush1.xpose.msra.mxu0 0.0
    %4082 = vmatprep.subr.mxu0 0.0
    %4083 = vmatpush1.xpose.msra.mxu0 0.0
    %4084 = vmatprep.subr.mxu0 0.0
    %4085 = vmatpush1.xpose.msra.mxu0 0.0
    %4086 = vmatprep.subr.mxu0 0.0
    %4087 = vmatpush1.xpose.msra.mxu0 0.0
    %4088 = vmatprep.subr.mxu0 0.0
    %4089 = vmatpush1.xpose.msra.mxu0 0.0
    %4090 = vmatprep.subr.mxu0 0.0
    %4091 = vmatpush1.xpose.msra.mxu0 0.0
    %4092 = vmatprep.subr.mxu0 0.0
    %4093 = vmatpush1.xpose.msra.mxu0 0.0
    %4094 = vmatprep.subr.mxu0 0.0
    %4095 = vmatpush1.xpose.msra.mxu0 0.0
    %4096 = vmatprep.subr.mxu0 0.0
    %4097 = vmatpush1.xpose.msra.mxu0 0.0
    %4098 = vmatprep.subr.mxu0 0.0
    %4099 = vmatpush1.xpose.msra.mxu0 0.0
    %4100 = vmatprep.subr.mxu0 0.0
    %4101 = vmatpush1.xpose.msra.mxu0 0.0
    %4102 = vmatprep.subr.mxu0 0.0
    %4103 = vmatpush1.xpose.msra.mxu0 0.0
    %4104 = vmatprep.subr.mxu0 0.0
    %4105 = vmatpush1.xpose.msra.mxu0 0.0
    %4106 = vmatprep.subr.mxu0 0.0
    %4107 = vmatpush1.xpose.msra.mxu0 0.0
    %4108 = vmatprep.subr.mxu0 0.0
    %4109 = vmatpush1.xpose.msra.mxu0 0.0
    %4110 = vmatprep.subr.mxu0 0.0
    %4111 = vmatpush1.xpose.msra.mxu0 0.0
    %4112 = vmatprep.mubr.f32.mxu0 0.0
    %4113 = vmatmul.mubr.f32.gmra.mrb[0].mxu0 %v4044
    %v4114 = vpop.f32.mrb[0].mxu0
    %v4115 = vadd.f32 %v1251, %v4114
    %v4116 = vpop.f32.mrb[0].mxu0
    %4117 = vdwg.mxu0
    %v4118 = vmul.f32 %v4115, 1.442695
    %v4119 = vpow.pop %v4118
    %v4120 = vsel %vm388, %v4119, 0.0
    %4121 = vadd.xlane.f32.xlu0 %v4120
    %v4122 = vpop.xlane.xlu0 %4121
    %v4123 = vrcp.pop %v4122
    %v4124 = vmul.f32 %v4119, %v4123
    %4125 = vrot.lane.b32.xlu0 %v2622, 96
    %v4126 = vpop.permute.xlu0 %4125
    %v4129 = vsel %vm388, %v4124, 0
    %4131 = vmatprep.subr.mxu0 0.0
    %4132 = vmatpush1.msra.mxu0 %v4126
    %4133 = vmatprep.subr.mxu0 0.0
    %4134 = vmatpush1.msra.mxu0 0.0
    %4135 = vmatprep.subr.mxu0 0.0
    %4136 = vmatpush1.msra.mxu0 0.0
    %4137 = vmatprep.subr.mxu0 0.0
    %4138 = vmatpush1.msra.mxu0 0.0
    %4139 = vmatprep.subr.mxu0 0.0
    %4140 = vmatpush1.msra.mxu0 0.0
    %4141 = vmatprep.subr.mxu0 0.0
    %4142 = vmatpush1.msra.mxu0 0.0
    %4143 = vmatprep.subr.mxu0 0.0
    %4144 = vmatpush1.msra.mxu0 0.0
    %4145 = vmatprep.subr.mxu0 0.0
    %4146 = vmatpush1.msra.mxu0 0.0
    %4147 = vmatprep.subr.mxu0 0.0
    %4148 = vmatpush1.msra.mxu0 0.0
    %4149 = vmatprep.subr.mxu0 0.0
    %4150 = vmatpush1.msra.mxu0 0.0
    %4151 = vmatprep.subr.mxu0 0.0
    %4152 = vmatpush1.msra.mxu0 0.0
    %4153 = vmatprep.subr.mxu0 0.0
    %4154 = vmatpush1.msra.mxu0 0.0
    %4155 = vmatprep.subr.mxu0 0.0
    %4156 = vmatpush1.msra.mxu0 0.0
    %4157 = vmatprep.subr.mxu0 0.0
    %4158 = vmatpush1.msra.mxu0 0.0
    %4159 = vmatprep.subr.mxu0 0.0
    %4160 = vmatpush1.msra.mxu0 0.0
    %4161 = vmatprep.subr.mxu0 0.0
    %4162 = vmatpush1.msra.mxu0 0.0
    %4163 = vmatprep.subr.mxu0 0.0
    %4164 = vmatpush1.msra.mxu0 0.0
    %4165 = vmatprep.subr.mxu0 0.0
    %4166 = vmatpush1.msra.mxu0 0.0
    %4167 = vmatprep.subr.mxu0 0.0
    %4168 = vmatpush1.msra.mxu0 0.0
    %4169 = vmatprep.subr.mxu0 0.0
    %4170 = vmatpush1.msra.mxu0 0.0
    %4171 = vmatprep.subr.mxu0 0.0
    %4172 = vmatpush1.msra.mxu0 0.0
    %4173 = vmatprep.subr.mxu0 0.0
    %4174 = vmatpush1.msra.mxu0 0.0
    %4175 = vmatprep.subr.mxu0 0.0
    %4176 = vmatpush1.msra.mxu0 0.0
    %4177 = vmatprep.subr.mxu0 0.0
    %4178 = vmatpush1.msra.mxu0 0.0
    %4179 = vmatprep.subr.mxu0 0.0
    %4180 = vmatpush1.msra.mxu0 0.0
    %4181 = vmatprep.subr.mxu0 0.0
    %4182 = vmatpush1.msra.mxu0 0.0
    %4183 = vmatprep.subr.mxu0 0.0
    %4184 = vmatpush1.msra.mxu0 0.0
    %4185 = vmatprep.subr.mxu0 0.0
    %4186 = vmatpush1.msra.mxu0 0.0
    %4187 = vmatprep.subr.mxu0 0.0
    %4188 = vmatpush1.msra.mxu0 0.0
    %4189 = vmatprep.subr.mxu0 0.0
    %4190 = vmatpush1.msra.mxu0 0.0
    %4191 = vmatprep.subr.mxu0 0.0
    %4192 = vmatpush1.msra.mxu0 0.0
    %4193 = vmatprep.subr.mxu0 0.0
    %4194 = vmatpush1.msra.mxu0 0.0
    %4195 = vmatprep.mubr.f32.mxu0 0.0
    %4196 = vmatmul.mubr.f32.gmra.mrb[0].mxu0 %v4129
    %v4197 = vpop.f32.mrb[0].mxu0
    %v4198 = vadd.f32 0.0, %v4197
    %v4199 = vpop.f32.mrb[0].mxu0
    %4200 = vdwg.mxu0
    %v4202 = vsel %vm311, %v4198, 0
    %4204 = vmatprep.subr.mxu0 0.0
    %4205 = vmatpush1.msra.mxu0 %v2636
    %4206 = vmatprep.subr.mxu0 0.0
    %4207 = vmatpush1.msra.mxu0 %v2637
    %4208 = vmatprep.subr.mxu0 0.0
    %4209 = vmatpush1.msra.mxu0 0.0
    %4210 = vmatprep.subr.mxu0 0.0
    %4211 = vmatpush1.msra.mxu0 0.0
    %4212 = vmatprep.subr.mxu0 0.0
    %4213 = vmatpush1.msra.mxu0 0.0
    %4214 = vmatprep.subr.mxu0 0.0
    %4215 = vmatpush1.msra.mxu0 0.0
    %4216 = vmatprep.subr.mxu0 0.0
    %4217 = vmatpush1.msra.mxu0 0.0
    %4218 = vmatprep.subr.mxu0 0.0
    %4219 = vmatpush1.msra.mxu0 0.0
    %4220 = vmatprep.subr.mxu0 0.0
    %4221 = vmatpush1.msra.mxu0 0.0
    %4222 = vmatprep.subr.mxu0 0.0
    %4223 = vmatpush1.msra.mxu0 0.0
    %4224 = vmatprep.subr.mxu0 0.0
    %4225 = vmatpush1.msra.mxu0 0.0
    %4226 = vmatprep.subr.mxu0 0.0
    %4227 = vmatpush1.msra.mxu0 0.0
    %4228 = vmatprep.subr.mxu0 0.0
    %4229 = vmatpush1.msra.mxu0 0.0
    %4230 = vmatprep.subr.mxu0 0.0
    %4231 = vmatpush1.msra.mxu0 0.0
    %4232 = vmatprep.subr.mxu0 0.0
    %4233 = vmatpush1.msra.mxu0 0.0
    %4234 = vmatprep.subr.mxu0 0.0
    %4235 = vmatpush1.msra.mxu0 0.0
    %4236 = vmatprep.subr.mxu0 0.0
    %4237 = vmatpush1.msra.mxu0 0.0
    %4238 = vmatprep.subr.mxu0 0.0
    %4239 = vmatpush1.msra.mxu0 0.0
    %4240 = vmatprep.subr.mxu0 0.0
    %4241 = vmatpush1.msra.mxu0 0.0
    %4242 = vmatprep.subr.mxu0 0.0
    %4243 = vmatpush1.msra.mxu0 0.0
    %4244 = vmatprep.subr.mxu0 0.0
    %4245 = vmatpush1.msra.mxu0 0.0
    %4246 = vmatprep.subr.mxu0 0.0
    %4247 = vmatpush1.msra.mxu0 0.0
    %4248 = vmatprep.subr.mxu0 0.0
    %4249 = vmatpush1.msra.mxu0 0.0
    %4250 = vmatprep.subr.mxu0 0.0
    %4251 = vmatpush1.msra.mxu0 0.0
    %4252 = vmatprep.subr.mxu0 0.0
    %4253 = vmatpush1.msra.mxu0 0.0
    %4254 = vmatprep.subr.mxu0 0.0
    %4255 = vmatpush1.msra.mxu0 0.0
    %4256 = vmatprep.subr.mxu0 0.0
    %4257 = vmatpush1.msra.mxu0 0.0
    %4258 = vmatprep.subr.mxu0 0.0
    %4259 = vmatpush1.msra.mxu0 0.0
    %4260 = vmatprep.subr.mxu0 0.0
    %4261 = vmatpush1.msra.mxu0 0.0
    %4262 = vmatprep.subr.mxu0 0.0
    %4263 = vmatpush1.msra.mxu0 0.0
    %4264 = vmatprep.subr.mxu0 0.0
    %4265 = vmatpush1.msra.mxu0 0.0
    %4266 = vmatprep.subr.mxu0 0.0
    %4267 = vmatpush1.msra.mxu0 0.0
    %4268 = vmatprep.mubr.f32.mxu0 0.0
    %4269 = vmatmul.mubr.f32.gmra.mrb[0].mxu0 %v4202
    %v4270 = vpop.f32.mrb[0].mxu0
    %v4271 = vadd.f32 0.0, %v4270
    %v4272 = vpop.f32.mrb[0].mxu0
    %4273 = vdwg.mxu0
    %v4274 = vadd.f32 %v4037, %v4271
    %4275 = vrot.lane.b32.xlu0 %v2630, 80
    %v4276 = vpop.permute.xlu0 %4275
    %4277 = vrot.lane.b32.xlu0 %v2630, 16
    %v4278 = vpop.permute.xlu0 %4277
    %v4279 = vsel %vm311, %v4276, 0
    %v4281 = vsel %vm311, %v4278, 0
    %4283 = vmatprep.subr.mxu0 0.0
    %4284 = vmatpush1.xpose.msra.mxu0 %v4281
    %4285 = vmatprep.subr.mxu0 0.0
    %4286 = vmatpush1.xpose.msra.mxu0 0.0
    %4287 = vmatprep.subr.mxu0 0.0
    %4288 = vmatpush1.xpose.msra.mxu0 0.0
    %4289 = vmatprep.subr.mxu0 0.0
    %4290 = vmatpush1.xpose.msra.mxu0 0.0
    %4291 = vmatprep.subr.mxu0 0.0
    %4292 = vmatpush1.xpose.msra.mxu0 0.0
    %4293 = vmatprep.subr.mxu0 0.0
    %4294 = vmatpush1.xpose.msra.mxu0 0.0
    %4295 = vmatprep.subr.mxu0 0.0
    %4296 = vmatpush1.xpose.msra.mxu0 0.0
    %4297 = vmatprep.subr.mxu0 0.0
    %4298 = vmatpush1.xpose.msra.mxu0 0.0
    %4299 = vmatprep.subr.mxu0 0.0
    %4300 = vmatpush1.xpose.msra.mxu0 0.0
    %4301 = vmatprep.subr.mxu0 0.0
    %4302 = vmatpush1.xpose.msra.mxu0 0.0
    %4303 = vmatprep.subr.mxu0 0.0
    %4304 = vmatpush1.xpose.msra.mxu0 0.0
    %4305 = vmatprep.subr.mxu0 0.0
    %4306 = vmatpush1.xpose.msra.mxu0 0.0
    %4307 = vmatprep.subr.mxu0 0.0
    %4308 = vmatpush1.xpose.msra.mxu0 0.0
    %4309 = vmatprep.subr.mxu0 0.0
    %4310 = vmatpush1.xpose.msra.mxu0 0.0
    %4311 = vmatprep.subr.mxu0 0.0
    %4312 = vmatpush1.xpose.msra.mxu0 0.0
    %4313 = vmatprep.subr.mxu0 0.0
    %4314 = vmatpush1.xpose.msra.mxu0 0.0
    %4315 = vmatprep.subr.mxu0 0.0
    %4316 = vmatpush1.xpose.msra.mxu0 0.0
    %4317 = vmatprep.subr.mxu0 0.0
    %4318 = vmatpush1.xpose.msra.mxu0 0.0
    %4319 = vmatprep.subr.mxu0 0.0
    %4320 = vmatpush1.xpose.msra.mxu0 0.0
    %4321 = vmatprep.subr.mxu0 0.0
    %4322 = vmatpush1.xpose.msra.mxu0 0.0
    %4323 = vmatprep.subr.mxu0 0.0
    %4324 = vmatpush1.xpose.msra.mxu0 0.0
    %4325 = vmatprep.subr.mxu0 0.0
    %4326 = vmatpush1.xpose.msra.mxu0 0.0
    %4327 = vmatprep.subr.mxu0 0.0
    %4328 = vmatpush1.xpose.msra.mxu0 0.0
    %4329 = vmatprep.subr.mxu0 0.0
    %4330 = vmatpush1.xpose.msra.mxu0 0.0
    %4331 = vmatprep.subr.mxu0 0.0
    %4332 = vmatpush1.xpose.msra.mxu0 0.0
    %4333 = vmatprep.subr.mxu0 0.0
    %4334 = vmatpush1.xpose.msra.mxu0 0.0
    %4335 = vmatprep.subr.mxu0 0.0
    %4336 = vmatpush1.xpose.msra.mxu0 0.0
    %4337 = vmatprep.subr.mxu0 0.0
    %4338 = vmatpush1.xpose.msra.mxu0 0.0
    %4339 = vmatprep.subr.mxu0 0.0
    %4340 = vmatpush1.xpose.msra.mxu0 0.0
    %4341 = vmatprep.subr.mxu0 0.0
    %4342 = vmatpush1.xpose.msra.mxu0 0.0
    %4343 = vmatprep.subr.mxu0 0.0
    %4344 = vmatpush1.xpose.msra.mxu0 0.0
    %4345 = vmatprep.subr.mxu0 0.0
    %4346 = vmatpush1.xpose.msra.mxu0 0.0
    %4347 = vmatprep.mubr.f32.mxu0 0.0
    %4348 = vmatmul.mubr.f32.gmra.mrb[0].mxu0 %v4279
    %v4349 = vpop.f32.mrb[0].mxu0
    %v4350 = vadd.f32 %v1251, %v4349
    %v4351 = vpop.f32.mrb[0].mxu0
    %4352 = vdwg.mxu0
    %v4353 = vmul.f32 %v4350, 1.442695
    %v4354 = vpow.pop %v4353
    %v4355 = vsel %vm388, %v4354, 0.0
    %4356 = vadd.xlane.f32.xlu0 %v4355
    %v4357 = vpop.xlane.xlu0 %4356
    %v4358 = vrcp.pop %v4357
    %v4359 = vmul.f32 %v4354, %v4358
    %4360 = vrot.lane.b32.xlu0 %v2622, 80
    %v4361 = vpop.permute.xlu0 %4360
    %v4364 = vsel %vm388, %v4359, 0
    %4366 = vmatprep.subr.mxu0 0.0
    %4367 = vmatpush1.msra.mxu0 %v4361
    %4368 = vmatprep.subr.mxu0 0.0
    %4369 = vmatpush1.msra.mxu0 0.0
    %4370 = vmatprep.subr.mxu0 0.0
    %4371 = vmatpush1.msra.mxu0 0.0
    %4372 = vmatprep.subr.mxu0 0.0
    %4373 = vmatpush1.msra.mxu0 0.0
    %4374 = vmatprep.subr.mxu0 0.0
    %4375 = vmatpush1.msra.mxu0 0.0
    %4376 = vmatprep.subr.mxu0 0.0
    %4377 = vmatpush1.msra.mxu0 0.0
    %4378 = vmatprep.subr.mxu0 0.0
    %4379 = vmatpush1.msra.mxu0 0.0
    %4380 = vmatprep.subr.mxu0 0.0
    %4381 = vmatpush1.msra.mxu0 0.0
    %4382 = vmatprep.subr.mxu0 0.0
    %4383 = vmatpush1.msra.mxu0 0.0
    %4384 = vmatprep.subr.mxu0 0.0
    %4385 = vmatpush1.msra.mxu0 0.0
    %4386 = vmatprep.subr.mxu0 0.0
    %4387 = vmatpush1.msra.mxu0 0.0
    %4388 = vmatprep.subr.mxu0 0.0
    %4389 = vmatpush1.msra.mxu0 0.0
    %4390 = vmatprep.subr.mxu0 0.0
    %4391 = vmatpush1.msra.mxu0 0.0
    %4392 = vmatprep.subr.mxu0 0.0
    %4393 = vmatpush1.msra.mxu0 0.0
    %4394 = vmatprep.subr.mxu0 0.0
    %4395 = vmatpush1.msra.mxu0 0.0
    %4396 = vmatprep.subr.mxu0 0.0
    %4397 = vmatpush1.msra.mxu0 0.0
    %4398 = vmatprep.subr.mxu0 0.0
    %4399 = vmatpush1.msra.mxu0 0.0
    %4400 = vmatprep.subr.mxu0 0.0
    %4401 = vmatpush1.msra.mxu0 0.0
    %4402 = vmatprep.subr.mxu0 0.0
    %4403 = vmatpush1.msra.mxu0 0.0
    %4404 = vmatprep.subr.mxu0 0.0
    %4405 = vmatpush1.msra.mxu0 0.0
    %4406 = vmatprep.subr.mxu0 0.0
    %4407 = vmatpush1.msra.mxu0 0.0
    %4408 = vmatprep.subr.mxu0 0.0
    %4409 = vmatpush1.msra.mxu0 0.0
    %4410 = vmatprep.subr.mxu0 0.0
    %4411 = vmatpush1.msra.mxu0 0.0
    %4412 = vmatprep.subr.mxu0 0.0
    %4413 = vmatpush1.msra.mxu0 0.0
    %4414 = vmatprep.subr.mxu0 0.0
    %4415 = vmatpush1.msra.mxu0 0.0
    %4416 = vmatprep.subr.mxu0 0.0
    %4417 = vmatpush1.msra.mxu0 0.0
    %4418 = vmatprep.subr.mxu0 0.0
    %4419 = vmatpush1.msra.mxu0 0.0
    %4420 = vmatprep.subr.mxu0 0.0
    %4421 = vmatpush1.msra.mxu0 0.0
    %4422 = vmatprep.subr.mxu0 0.0
    %4423 = vmatpush1.msra.mxu0 0.0
    %4424 = vmatprep.subr.mxu0 0.0
    %4425 = vmatpush1.msra.mxu0 0.0
    %4426 = vmatprep.subr.mxu0 0.0
    %4427 = vmatpush1.msra.mxu0 0.0
    %4428 = vmatprep.subr.mxu0 0.0
    %4429 = vmatpush1.msra.mxu0 0.0
    %4430 = vmatprep.mubr.f32.mxu0 0.0
    %4431 = vmatmul.mubr.f32.gmra.mrb[0].mxu0 %v4364
    %v4432 = vpop.f32.mrb[0].mxu0
    %v4433 = vadd.f32 0.0, %v4432
    %v4434 = vpop.f32.mrb[0].mxu0
    %4435 = vdwg.mxu0
    %v4437 = vsel %vm311, %v4433, 0
    %4439 = vmatprep.subr.mxu0 0.0
    %4440 = vmatpush1.msra.mxu0 %v2638
    %4441 = vmatprep.subr.mxu0 0.0
    %4442 = vmatpush1.msra.mxu0 %v2639
    %4443 = vmatprep.subr.mxu0 0.0
    %4444 = vmatpush1.msra.mxu0 0.0
    %4445 = vmatprep.subr.mxu0 0.0
    %4446 = vmatpush1.msra.mxu0 0.0
    %4447 = vmatprep.subr.mxu0 0.0
    %4448 = vmatpush1.msra.mxu0 0.0
    %4449 = vmatprep.subr.mxu0 0.0
    %4450 = vmatpush1.msra.mxu0 0.0
    %4451 = vmatprep.subr.mxu0 0.0
    %4452 = vmatpush1.msra.mxu0 0.0
    %4453 = vmatprep.subr.mxu0 0.0
    %4454 = vmatpush1.msra.mxu0 0.0
    %4455 = vmatprep.subr.mxu0 0.0
    %4456 = vmatpush1.msra.mxu0 0.0
    %4457 = vmatprep.subr.mxu0 0.0
    %4458 = vmatpush1.msra.mxu0 0.0
    %4459 = vmatprep.subr.mxu0 0.0
    %4460 = vmatpush1.msra.mxu0 0.0
    %4461 = vmatprep.subr.mxu0 0.0
    %4462 = vmatpush1.msra.mxu0 0.0
    %4463 = vmatprep.subr.mxu0 0.0
    %4464 = vmatpush1.msra.mxu0 0.0
    %4465 = vmatprep.subr.mxu0 0.0
    %4466 = vmatpush1.msra.mxu0 0.0
    %4467 = vmatprep.subr.mxu0 0.0
    %4468 = vmatpush1.msra.mxu0 0.0
    %4469 = vmatprep.subr.mxu0 0.0
    %4470 = vmatpush1.msra.mxu0 0.0
    %4471 = vmatprep.subr.mxu0 0.0
    %4472 = vmatpush1.msra.mxu0 0.0
    %4473 = vmatprep.subr.mxu0 0.0
    %4474 = vmatpush1.msra.mxu0 0.0
    %4475 = vmatprep.subr.mxu0 0.0
    %4476 = vmatpush1.msra.mxu0 0.0
    %4477 = vmatprep.subr.mxu0 0.0
    %4478 = vmatpush1.msra.mxu0 0.0
    %4479 = vmatprep.subr.mxu0 0.0
    %4480 = vmatpush1.msra.mxu0 0.0
    %4481 = vmatprep.subr.mxu0 0.0
    %4482 = vmatpush1.msra.mxu0 0.0
    %4483 = vmatprep.subr.mxu0 0.0
    %4484 = vmatpush1.msra.mxu0 0.0
    %4485 = vmatprep.subr.mxu0 0.0
    %4486 = vmatpush1.msra.mxu0 0.0
    %4487 = vmatprep.subr.mxu0 0.0
    %4488 = vmatpush1.msra.mxu0 0.0
    %4489 = vmatprep.subr.mxu0 0.0
    %4490 = vmatpush1.msra.mxu0 0.0
    %4491 = vmatprep.subr.mxu0 0.0
    %4492 = vmatpush1.msra.mxu0 0.0
    %4493 = vmatprep.subr.mxu0 0.0
    %4494 = vmatpush1.msra.mxu0 0.0
    %4495 = vmatprep.subr.mxu0 0.0
    %4496 = vmatpush1.msra.mxu0 0.0
    %4497 = vmatprep.subr.mxu0 0.0
    %4498 = vmatpush1.msra.mxu0 0.0
    %4499 = vmatprep.subr.mxu0 0.0
    %4500 = vmatpush1.msra.mxu0 0.0
    %4501 = vmatprep.subr.mxu0 0.0
    %4502 = vmatpush1.msra.mxu0 0.0
    %4503 = vmatprep.mubr.f32.mxu0 0.0
    %4504 = vmatmul.mubr.f32.gmra.mrb[0].mxu0 %v4437
    %v4505 = vpop.f32.mrb[0].mxu0
    %v4506 = vadd.f32 0.0, %v4505
    %v4507 = vpop.f32.mrb[0].mxu0
    %4508 = vdwg.mxu0
    %v4509 = vadd.f32 %v4274, %v4506
    %v4510 = vadd.f32 %v2418, %v3574
    %v4511 = vadd.f32 %v2419, %v4509
    %v4512 = vmul.f32 %v4510, %v4510
    %v4513 = vmul.f32 %v4511, %v4511
    %v4514 = vsel %vm83, %v4512, 0.0
    %4515 = vadd.xlane.f32.xlu0 %v4514
    %v4516 = vpop.xlane.xlu0 %4515
    %v4517 = vsel %vm83, %v4513, 0.0
    %4518 = vadd.xlane.f32.xlu0 %v4517
    %v4519 = vpop.xlane.xlu0 %4518
    %v4520 = vmul.f32 %v4516, %v90
    %v4521 = vmul.f32 %v4519, %v90
    %v4522 = vadd.f32 %v4520, 1e-06
    %v4523 = vadd.f32 %v4521, 1e-06
    %v4524 = vrsqrt.pop %v4522
    %v4525 = vrsqrt.pop %v4523
    %v4526 = vmul.f32 %v4510, %v4524
    %v4527 = vmul.f32 %v4511, %v4525
    %v4528 = vlaneseq
    %v4529 = vshrl.u32 %v4528, 7
    %v4530 = vsub.s32 3, %v4529
    %v4531 = vrot.slane %v80, %v4530
    %v4532 = vmul.f32 %v4526, %v4531
    %v4533 = vmul.f32 %v4527, %v4531
    %s4534 = scalar_lea.vmem [#allocation5], 128
    %v4535 = vld [vmem:[%s4534] sm:$0xff]
    %v4536 = vld [vmem:[%s4534 + $0x8] sm:$0xff]
    %v4537 = vld [vmem:[%s4534 + $0x10] sm:$0xff]
    %v4538 = vld [vmem:[%s4534 + $0x18] sm:$0xff]
    %v4539 = vld [vmem:[%s4534 + $0x20] sm:$0xff]
    %v4540 = vld [vmem:[%s4534 + $0x28] sm:$0xff]
    %v4541 = vld [vmem:[%s4534 + $0x30] sm:$0xff]
    %v4542 = vld [vmem:[%s4534 + $0x38] sm:$0xff]
    %v4543 = vld [vmem:[%s4534 + $0x40] sm:$0xff]
    %v4544 = vld [vmem:[%s4534 + $0x48] sm:$0xff]
    %v4545 = vld [vmem:[%s4534 + $0x50] sm:$0xff]
    %v4546 = vld [vmem:[%s4534 + $0x58] sm:$0xff]
    %v4547 = vld [vmem:[%s4534 + $0x60] sm:$0xff]
    %v4548 = vld [vmem:[%s4534 + $0x68] sm:$0xff]
    %v4549 = vld [vmem:[%s4534 + $0x70] sm:$0xff]
    %v4550 = vld [vmem:[%s4534 + $0x78] sm:$0xff]
    %v4552 = vsel %vm83, %v4532, 0
    %v4555 = vsel %vm83, %v4533, 0
    %4557 = vmatprep.subr.mxu0 %v4536
    %4558 = vmatpush1.msra.mxu0 %v4535
    %4559 = vmatprep.subr.mxu0 %v4538
    %4560 = vmatpush1.msra.mxu0 %v4537
    %4561 = vmatprep.subr.mxu0 %v4540
    %4562 = vmatpush1.msra.mxu0 %v4539
    %4563 = vmatprep.subr.mxu0 %v4542
    %4564 = vmatpush1.msra.mxu0 %v4541
    %4565 = vmatprep.subr.mxu0 %v4544
    %4566 = vmatpush1.msra.mxu0 %v4543
    %4567 = vmatprep.subr.mxu0 %v4546
    %4568 = vmatpush1.msra.mxu0 %v4545
    %4569 = vmatprep.subr.mxu0 %v4548
    %4570 = vmatpush1.msra.mxu0 %v4547
    %4571 = vmatprep.subr.mxu0 %v4550
    %4572 = vmatpush1.msra.mxu0 %v4549
    %4573 = vmatprep.subr.mxu0 0.0
    %4574 = vmatpush1.msra.mxu0 0.0
    %4575 = vmatprep.subr.mxu0 0.0
    %4576 = vmatpush1.msra.mxu0 0.0
    %4577 = vmatprep.subr.mxu0 0.0
    %4578 = vmatpush1.msra.mxu0 0.0
    %4579 = vmatprep.subr.mxu0 0.0
    %4580 = vmatpush1.msra.mxu0 0.0
    %4581 = vmatprep.subr.mxu0 0.0
    %4582 = vmatpush1.msra.mxu0 0.0
    %4583 = vmatprep.subr.mxu0 0.0
    %4584 = vmatpush1.msra.mxu0 0.0
    %4585 = vmatprep.subr.mxu0 0.0
    %4586 = vmatpush1.msra.mxu0 0.0
    %4587 = vmatprep.subr.mxu0 0.0
    %4588 = vmatpush1.msra.mxu0 0.0
    %4589 = vmatprep.subr.mxu0 0.0
    %4590 = vmatpush1.msra.mxu0 0.0
    %4591 = vmatprep.subr.mxu0 0.0
    %4592 = vmatpush1.msra.mxu0 0.0
    %4593 = vmatprep.subr.mxu0 0.0
    %4594 = vmatpush1.msra.mxu0 0.0
    %4595 = vmatprep.subr.mxu0 0.0
    %4596 = vmatpush1.msra.mxu0 0.0
    %4597 = vmatprep.subr.mxu0 0.0
    %4598 = vmatpush1.msra.mxu0 0.0
    %4599 = vmatprep.subr.mxu0 0.0
    %4600 = vmatpush1.msra.mxu0 0.0
    %4601 = vmatprep.subr.mxu0 0.0
    %4602 = vmatpush1.msra.mxu0 0.0
    %4603 = vmatprep.subr.mxu0 0.0
    %4604 = vmatpush1.msra.mxu0 0.0
    %4605 = vmatprep.subr.mxu0 0.0
    %4606 = vmatpush1.msra.mxu0 0.0
    %4607 = vmatprep.subr.mxu0 0.0
    %4608 = vmatpush1.msra.mxu0 0.0
    %4609 = vmatprep.subr.mxu0 0.0
    %4610 = vmatpush1.msra.mxu0 0.0
    %4611 = vmatprep.subr.mxu0 0.0
    %4612 = vmatpush1.msra.mxu0 0.0
    %4613 = vmatprep.subr.mxu0 0.0
    %4614 = vmatpush1.msra.mxu0 0.0
    %4615 = vmatprep.subr.mxu0 0.0
    %4616 = vmatpush1.msra.mxu0 0.0
    %4617 = vmatprep.subr.mxu0 0.0
    %4618 = vmatpush1.msra.mxu0 0.0
    %4619 = vmatprep.subr.mxu0 0.0
    %4620 = vmatpush1.msra.mxu0 0.0
    %4621 = vmatprep.mubr.f32.mxu0 0.0
    %4622 = vmatmul.mubr.f32.gmra.mrb[0].mxu0 %v4552
    %v4623 = vpop.f32.mrb[0].mxu0
    %v4624 = vadd.f32 0.0, %v4623
    %v4625 = vpop.f32.mrb[0].mxu0
    %v4626 = vadd.f32 0.0, %v4625
    %4627 = vmatprep.mubr.f32.mxu0 0.0
    %4628 = vmatmul.mubr.f32.gmra.mrb[0].mxu0 %v4555
    %v4629 = vpop.f32.mrb[0].mxu0
    %v4630 = vadd.f32 0.0, %v4629
    %v4631 = vpop.f32.mrb[0].mxu0
    %v4632 = vadd.f32 0.0, %v4631
    %4633 = vdwg.mxu0
    %v4634 = vxor.u32 %v4624, 2147483648
    %v4635 = vxor.u32 %v4630, 2147483648
    %v4636 = vmul.f32 %v4634, 1.442695
    %v4637 = vpow.pop %v4636
    %v4638 = vmul.f32 %v4635, 1.442695
    %v4639 = vpow.pop %v4638
    %v4640 = vadd.f32 %v4637, 1.0
    %v4641 = vadd.f32 %v4639, 1.0
    %v4642 = vrcp.pop %v4640
    %v4643 = vmul.f32 1.0, %v4642
    %v4644 = vrcp.pop %v4641
    %v4645 = vmul.f32 1.0, %v4644
    %v4646 = vmul.f32 %v4624, %v4643
    %v4647 = vmul.f32 %v4630, %v4645
    %v4648 = vmul.f32 %v4646, %v4626
    %v4649 = vmul.f32 %v4647, %v4632
    %s4650 = scalar_lea.vmem [#allocation7], 128
    %v4651 = vld [vmem:[%s4650] sm:$0xff]
    %v4652 = vld [vmem:[%s4650 + $0x8] sm:$0xff]
    %v4653 = vld [vmem:[%s4650 + $0x10] sm:$0xff]
    %v4654 = vld [vmem:[%s4650 + $0x18] sm:$0xff]
    %v4655 = vld [vmem:[%s4650 + $0x20] sm:$0xff]
    %v4656 = vld [vmem:[%s4650 + $0x28] sm:$0xff]
    %v4657 = vld [vmem:[%s4650 + $0x30] sm:$0xff]
    %v4658 = vld [vmem:[%s4650 + $0x38] sm:$0xff]
    %v4659 = vld [vmem:[%s4650 + $0x40] sm:$0xff]
    %v4660 = vld [vmem:[%s4650 + $0x48] sm:$0xff]
    %v4661 = vld [vmem:[%s4650 + $0x50] sm:$0xff]
    %v4662 = vld [vmem:[%s4650 + $0x58] sm:$0xff]
    %v4663 = vld [vmem:[%s4650 + $0x60] sm:$0xff]
    %v4664 = vld [vmem:[%s4650 + $0x68] sm:$0xff]
    %v4665 = vld [vmem:[%s4650 + $0x70] sm:$0xff]
    %v4666 = vld [vmem:[%s4650 + $0x78] sm:$0xff]
    %4667 = vmatprep.subr.mxu0 0.0
    %4668 = vmatpush1.msra.mxu0 %v4651
    %4669 = vmatprep.subr.mxu0 0.0
    %4670 = vmatpush1.msra.mxu0 %v4652
    %4671 = vmatprep.subr.mxu0 0.0
    %4672 = vmatpush1.msra.mxu0 %v4653
    %4673 = vmatprep.subr.mxu0 0.0
    %4674 = vmatpush1.msra.mxu0 %v4654
    %4675 = vmatprep.subr.mxu0 0.0
    %4676 = vmatpush1.msra.mxu0 %v4655
    %4677 = vmatprep.subr.mxu0 0.0
    %4678 = vmatpush1.msra.mxu0 %v4656
    %4679 = vmatprep.subr.mxu0 0.0
    %4680 = vmatpush1.msra.mxu0 %v4657
    %4681 = vmatprep.subr.mxu0 0.0
    %4682 = vmatpush1.msra.mxu0 %v4658
    %4683 = vmatprep.subr.mxu0 0.0
    %4684 = vmatpush1.msra.mxu0 %v4659
    %4685 = vmatprep.subr.mxu0 0.0
    %4686 = vmatpush1.msra.mxu0 %v4660
    %4687 = vmatprep.subr.mxu0 0.0
    %4688 = vmatpush1.msra.mxu0 %v4661
    %4689 = vmatprep.subr.mxu0 0.0
    %4690 = vmatpush1.msra.mxu0 %v4662
    %4691 = vmatprep.subr.mxu0 0.0
    %4692 = vmatpush1.msra.mxu0 %v4663
    %4693 = vmatprep.subr.mxu0 0.0
    %4694 = vmatpush1.msra.mxu0 %v4664
    %4695 = vmatprep.subr.mxu0 0.0
    %4696 = vmatpush1.msra.mxu0 %v4665
    %4697 = vmatprep.subr.mxu0 0.0
    %4698 = vmatpush1.msra.mxu0 %v4666
    %4699 = vmatprep.subr.mxu0 0.0
    %4700 = vmatpush1.msra.mxu0 0.0
    %4701 = vmatprep.subr.mxu0 0.0
    %4702 = vmatpush1.msra.mxu0 0.0
    %4703 = vmatprep.subr.mxu0 0.0
    %4704 = vmatpush1.msra.mxu0 0.0
    %4705 = vmatprep.subr.mxu0 0.0
    %4706 = vmatpush1.msra.mxu0 0.0
    %4707 = vmatprep.subr.mxu0 0.0
    %4708 = vmatpush1.msra.mxu0 0.0
    %4709 = vmatprep.subr.mxu0 0.0
    %4710 = vmatpush1.msra.mxu0 0.0
    %4711 = vmatprep.subr.mxu0 0.0
    %4712 = vmatpush1.msra.mxu0 0.0
    %4713 = vmatprep.subr.mxu0 0.0
    %4714 = vmatpush1.msra.mxu0 0.0
    %4715 = vmatprep.subr.mxu0 0.0
    %4716 = vmatpush1.msra.mxu0 0.0
    %4717 = vmatprep.subr.mxu0 0.0
    %4718 = vmatpush1.msra.mxu0 0.0
    %4719 = vmatprep.subr.mxu0 0.0
    %4720 = vmatpush1.msra.mxu0 0.0
    %4721 = vmatprep.subr.mxu0 0.0
    %4722 = vmatpush1.msra.mxu0 0.0
    %4723 = vmatprep.subr.mxu0 0.0
    %4724 = vmatpush1.msra.mxu0 0.0
    %4725 = vmatprep.subr.mxu0 0.0
    %4726 = vmatpush1.msra.mxu0 0.0
    %4727 = vmatprep.subr.mxu0 0.0
    %4728 = vmatpush1.msra.mxu0 0.0
    %4729 = vmatprep.subr.mxu0 0.0
    %4730 = vmatpush1.msra.mxu0 0.0
    %4731 = vmatprep.mubr.f32.mxu0 0.0
    %4732 = vmatmul.mubr.f32.gmra.mrb[0].mxu0 %v4648
    %v4733 = vpop.f32.mrb[0].mxu0
    %v4734 = vadd.f32 0.0, %v4733
    %v4735 = vpop.f32.mrb[0].mxu0
    %4736 = vmatprep.mubr.f32.mxu0 0.0
    %4737 = vmatmul.mubr.f32.gmra.mrb[0].mxu0 %v4649
    %v4738 = vpop.f32.mrb[0].mxu0
    %v4739 = vadd.f32 0.0, %v4738
    %v4740 = vpop.f32.mrb[0].mxu0
    %4741 = vdwg.mxu0
    %v4742 = vadd.f32 %v4510, %v4734
    %v4743 = vadd.f32 %v4511, %v4739
    %v4744 = vmul.f32 %v4742, %v4742
    %v4745 = vmul.f32 %v4743, %v4743
    %v4746 = vsel %vm83, %v4744, 0.0
    %4747 = vadd.xlane.f32.xlu0 %v4746
    %v4748 = vpop.xlane.xlu0 %4747
    %v4749 = vsel %vm83, %v4745, 0.0
    %4750 = vadd.xlane.f32.xlu0 %v4749
    %v4751 = vpop.xlane.xlu0 %4750
    %v4752 = vmul.f32 %v4748, %v90
    %v4753 = vmul.f32 %v4751, %v90
    %v4754 = vadd.f32 %v4752, 1e-06
    %v4755 = vadd.f32 %v4753, 1e-06
    %v4756 = vrsqrt.pop %v4754
    %v4757 = vrsqrt.pop %v4755
    %v4758 = vmul.f32 %v4742, %v4756
    %v4759 = vmul.f32 %v4743, %v4757
    %v4760 = vlaneseq
    %v4761 = vshrl.u32 %v4760, 7
    %v4762 = vsub.s32 4, %v4761
    %v4763 = vrot.slane %v80, %v4762
    %v4764 = vmul.f32 %v4758, %v4763
    %v4765 = vmul.f32 %v4759, %v4763
    %s4766 = scalar_lea.vmem [#allocation2], 384
    %v4767 = vld [vmem:[%s4766] sm:$0xff]
    %v4768 = vld [vmem:[%s4766 + $0x8] sm:$0xff]
    %v4769 = vld [vmem:[%s4766 + $0x10] sm:$0xff]
    %v4770 = vld [vmem:[%s4766 + $0x18] sm:$0xff]
    %v4771 = vld [vmem:[%s4766 + $0x20] sm:$0xff]
    %v4772 = vld [vmem:[%s4766 + $0x28] sm:$0xff]
    %v4773 = vld [vmem:[%s4766 + $0x30] sm:$0xff]
    %v4774 = vld [vmem:[%s4766 + $0x38] sm:$0xff]
    %v4775 = vld [vmem:[%s4766 + $0x40] sm:$0xff]
    %v4776 = vld [vmem:[%s4766 + $0x48] sm:$0xff]
    %v4777 = vld [vmem:[%s4766 + $0x50] sm:$0xff]
    %v4778 = vld [vmem:[%s4766 + $0x58] sm:$0xff]
    %v4779 = vld [vmem:[%s4766 + $0x60] sm:$0xff]
    %v4780 = vld [vmem:[%s4766 + $0x68] sm:$0xff]
    %v4781 = vld [vmem:[%s4766 + $0x70] sm:$0xff]
    %v4782 = vld [vmem:[%s4766 + $0x78] sm:$0xff]
    %v4783 = vld [vmem:[%s4766 + $0x80] sm:$0xff]
    %v4784 = vld [vmem:[%s4766 + $0x88] sm:$0xff]
    %v4785 = vld [vmem:[%s4766 + $0x90] sm:$0xff]
    %v4786 = vld [vmem:[%s4766 + $0x98] sm:$0xff]
    %v4787 = vld [vmem:[%s4766 + $0xa0] sm:$0xff]
    %v4788 = vld [vmem:[%s4766 + $0xa8] sm:$0xff]
    %v4789 = vld [vmem:[%s4766 + $0xb0] sm:$0xff]
    %v4790 = vld [vmem:[%s4766 + $0xb8] sm:$0xff]
    %v4792 = vsel %vm83, %v4764, 0
    %v4795 = vsel %vm83, %v4765, 0
    %4797 = vmatprep.subr.mxu0 %v4768
    %4798 = vmatpush1.msra.mxu0 %v4767
    %4799 = vmatprep.subr.mxu0 %v4771
    %4800 = vmatpush1.msra.mxu0 %v4770
    %4801 = vmatprep.subr.mxu0 %v4774
    %4802 = vmatpush1.msra.mxu0 %v4773
    %4803 = vmatprep.subr.mxu0 %v4777
    %4804 = vmatpush1.msra.mxu0 %v4776
    %4805 = vmatprep.subr.mxu0 %v4780
    %4806 = vmatpush1.msra.mxu0 %v4779
    %4807 = vmatprep.subr.mxu0 %v4783
    %4808 = vmatpush1.msra.mxu0 %v4782
    %4809 = vmatprep.subr.mxu0 %v4786
    %4810 = vmatpush1.msra.mxu0 %v4785
    %4811 = vmatprep.subr.mxu0 %v4789
    %4812 = vmatpush1.msra.mxu0 %v4788
    %4813 = vmatprep.subr.mxu0 0.0
    %4814 = vmatpush1.msra.mxu0 0.0
    %4815 = vmatprep.subr.mxu0 0.0
    %4816 = vmatpush1.msra.mxu0 0.0
    %4817 = vmatprep.subr.mxu0 0.0
    %4818 = vmatpush1.msra.mxu0 0.0
    %4819 = vmatprep.subr.mxu0 0.0
    %4820 = vmatpush1.msra.mxu0 0.0
    %4821 = vmatprep.subr.mxu0 0.0
    %4822 = vmatpush1.msra.mxu0 0.0
    %4823 = vmatprep.subr.mxu0 0.0
    %4824 = vmatpush1.msra.mxu0 0.0
    %4825 = vmatprep.subr.mxu0 0.0
    %4826 = vmatpush1.msra.mxu0 0.0
    %4827 = vmatprep.subr.mxu0 0.0
    %4828 = vmatpush1.msra.mxu0 0.0
    %4829 = vmatprep.subr.mxu0 0.0
    %4830 = vmatpush1.msra.mxu0 0.0
    %4831 = vmatprep.subr.mxu0 0.0
    %4832 = vmatpush1.msra.mxu0 0.0
    %4833 = vmatprep.subr.mxu0 0.0
    %4834 = vmatpush1.msra.mxu0 0.0
    %4835 = vmatprep.subr.mxu0 0.0
    %4836 = vmatpush1.msra.mxu0 0.0
    %4837 = vmatprep.subr.mxu0 0.0
    %4838 = vmatpush1.msra.mxu0 0.0
    %4839 = vmatprep.subr.mxu0 0.0
    %4840 = vmatpush1.msra.mxu0 0.0
    %4841 = vmatprep.subr.mxu0 0.0
    %4842 = vmatpush1.msra.mxu0 0.0
    %4843 = vmatprep.subr.mxu0 0.0
    %4844 = vmatpush1.msra.mxu0 0.0
    %4845 = vmatprep.subr.mxu0 0.0
    %4846 = vmatpush1.msra.mxu0 0.0
    %4847 = vmatprep.subr.mxu0 0.0
    %4848 = vmatpush1.msra.mxu0 0.0
    %4849 = vmatprep.subr.mxu0 0.0
    %4850 = vmatpush1.msra.mxu0 0.0
    %4851 = vmatprep.subr.mxu0 0.0
    %4852 = vmatpush1.msra.mxu0 0.0
    %4853 = vmatprep.subr.mxu0 0.0
    %4854 = vmatpush1.msra.mxu0 0.0
    %4855 = vmatprep.subr.mxu0 0.0
    %4856 = vmatpush1.msra.mxu0 0.0
    %4857 = vmatprep.subr.mxu0 0.0
    %4858 = vmatpush1.msra.mxu0 0.0
    %4859 = vmatprep.subr.mxu0 0.0
    %4860 = vmatpush1.msra.mxu0 0.0
    %4861 = vmatprep.mubr.f32.mxu0 0.0
    %4862 = vmatmul.mubr.f32.gmra.mrb[0].mxu0 %v4792
    %v4863 = vpop.f32.mrb[0].mxu0
    %v4864 = vadd.f32 0.0, %v4863
    %v4865 = vpop.f32.mrb[0].mxu0
    %v4866 = vadd.f32 0.0, %v4865
    %4867 = vmatprep.mubr.f32.mxu0 0.0
    %4868 = vmatmul.mubr.f32.gmra.mrb[0].mxu0 %v4795
    %v4869 = vpop.f32.mrb[0].mxu0
    %v4870 = vadd.f32 0.0, %v4869
    %v4871 = vpop.f32.mrb[0].mxu0
    %v4872 = vadd.f32 0.0, %v4871
    %4873 = vdwg.mxu0
    %4874 = vmatprep.subr.mxu0 0.0
    %4875 = vmatpush1.msra.mxu0 %v4769
    %4876 = vmatprep.subr.mxu0 0.0
    %4877 = vmatpush1.msra.mxu0 %v4772
    %4878 = vmatprep.subr.mxu0 0.0
    %4879 = vmatpush1.msra.mxu0 %v4775
    %4880 = vmatprep.subr.mxu0 0.0
    %4881 = vmatpush1.msra.mxu0 %v4778
    %4882 = vmatprep.subr.mxu0 0.0
    %4883 = vmatpush1.msra.mxu0 %v4781
    %4884 = vmatprep.subr.mxu0 0.0
    %4885 = vmatpush1.msra.mxu0 %v4784
    %4886 = vmatprep.subr.mxu0 0.0
    %4887 = vmatpush1.msra.mxu0 %v4787
    %4888 = vmatprep.subr.mxu0 0.0
    %4889 = vmatpush1.msra.mxu0 %v4790
    %4890 = vmatprep.subr.mxu0 0.0
    %4891 = vmatpush1.msra.mxu0 0.0
    %4892 = vmatprep.subr.mxu0 0.0
    %4893 = vmatpush1.msra.mxu0 0.0
    %4894 = vmatprep.subr.mxu0 0.0
    %4895 = vmatpush1.msra.mxu0 0.0
    %4896 = vmatprep.subr.mxu0 0.0
    %4897 = vmatpush1.msra.mxu0 0.0
    %4898 = vmatprep.subr.mxu0 0.0
    %4899 = vmatpush1.msra.mxu0 0.0
    %4900 = vmatprep.subr.mxu0 0.0
    %4901 = vmatpush1.msra.mxu0 0.0
    %4902 = vmatprep.subr.mxu0 0.0
    %4903 = vmatpush1.msra.mxu0 0.0
    %4904 = vmatprep.subr.mxu0 0.0
    %4905 = vmatpush1.msra.mxu0 0.0
    %4906 = vmatprep.subr.mxu0 0.0
    %4907 = vmatpush1.msra.mxu0 0.0
    %4908 = vmatprep.subr.mxu0 0.0
    %4909 = vmatpush1.msra.mxu0 0.0
    %4910 = vmatprep.subr.mxu0 0.0
    %4911 = vmatpush1.msra.mxu0 0.0
    %4912 = vmatprep.subr.mxu0 0.0
    %4913 = vmatpush1.msra.mxu0 0.0
    %4914 = vmatprep.subr.mxu0 0.0
    %4915 = vmatpush1.msra.mxu0 0.0
    %4916 = vmatprep.subr.mxu0 0.0
    %4917 = vmatpush1.msra.mxu0 0.0
    %4918 = vmatprep.subr.mxu0 0.0
    %4919 = vmatpush1.msra.mxu0 0.0
    %4920 = vmatprep.subr.mxu0 0.0
    %4921 = vmatpush1.msra.mxu0 0.0
    %4922 = vmatprep.subr.mxu0 0.0
    %4923 = vmatpush1.msra.mxu0 0.0
    %4924 = vmatprep.subr.mxu0 0.0
    %4925 = vmatpush1.msra.mxu0 0.0
    %4926 = vmatprep.subr.mxu0 0.0
    %4927 = vmatpush1.msra.mxu0 0.0
    %4928 = vmatprep.subr.mxu0 0.0
    %4929 = vmatpush1.msra.mxu0 0.0
    %4930 = vmatprep.subr.mxu0 0.0
    %4931 = vmatpush1.msra.mxu0 0.0
    %4932 = vmatprep.subr.mxu0 0.0
    %4933 = vmatpush1.msra.mxu0 0.0
    %4934 = vmatprep.subr.mxu0 0.0
    %4935 = vmatpush1.msra.mxu0 0.0
    %4936 = vmatprep.subr.mxu0 0.0
    %4937 = vmatpush1.msra.mxu0 0.0
    %4938 = vmatprep.mubr.f32.mxu0 0.0
    %4939 = vmatmul.mubr.f32.gmra.mrb[0].mxu0 %v4792
    %v4940 = vpop.f32.mrb[0].mxu0
    %v4941 = vadd.f32 0.0, %v4940
    %v4942 = vpop.f32.mrb[0].mxu0
    %4943 = vmatprep.mubr.f32.mxu0 0.0
    %4944 = vmatmul.mubr.f32.gmra.mrb[0].mxu0 %v4795
    %v4945 = vpop.f32.mrb[0].mxu0
    %v4946 = vadd.f32 0.0, %v4945
    %v4947 = vpop.f32.mrb[0].mxu0
    %4948 = vdwg.mxu0
    %v4949 = vmul.f32 %v4864, %v76
    %v4950 = vmul.f32 %v4870, %v77
    %v4951 = vmul.f32 %v4866, %v78
    %v4952 = vmul.f32 %v4872, %v79
    %v4953 = vadd.f32 %v4949, %v4951
    %v4954 = vadd.f32 %v4950, %v4952
    %s4955 = scalar_lea.vmem %s6, 128
    %v4956 = vld [vmem:[%s4955] sm:$0xff]
    %v4957 = vld [vmem:[%s4955 + $0x8] sm:$0xff]
    %v4958 = vld [vmem:[%s4955 + $0x10] sm:$0xff]
    %v4959 = vld [vmem:[%s4955 + $0x18] sm:$0xff]
    %v4960 = vld [vmem:[%s4955 + $0x20] sm:$0xff]
    %v4961 = vld [vmem:[%s4955 + $0x28] sm:$0xff]
    %v4962 = vld [vmem:[%s4955 + $0x30] sm:$0xff]
    %v4963 = vld [vmem:[%s4955 + $0x38] sm:$0xff]
    %4965 = vrot.lane.b32.xlu0 %v4953, 64
    %v4966 = vpop.permute.xlu0 %4965
    %v4967 = vsel %vm311, %v4953, 0
    %v4969 = vsel %vm311, %v4966, 0
    %4971 = vmatprep.subr.mxu0 0.0
    %4972 = vmatpush1.xpose.msra.mxu0 %v4969
    %4973 = vmatprep.subr.mxu0 0.0
    %4974 = vmatpush1.xpose.msra.mxu0 0.0
    %4975 = vmatprep.subr.mxu0 0.0
    %4976 = vmatpush1.xpose.msra.mxu0 0.0
    %4977 = vmatprep.subr.mxu0 0.0
    %4978 = vmatpush1.xpose.msra.mxu0 0.0
    %4979 = vmatprep.subr.mxu0 0.0
    %4980 = vmatpush1.xpose.msra.mxu0 0.0
    %4981 = vmatprep.subr.mxu0 0.0
    %4982 = vmatpush1.xpose.msra.mxu0 0.0
    %4983 = vmatprep.subr.mxu0 0.0
    %4984 = vmatpush1.xpose.msra.mxu0 0.0
    %4985 = vmatprep.subr.mxu0 0.0
    %4986 = vmatpush1.xpose.msra.mxu0 0.0
    %4987 = vmatprep.subr.mxu0 0.0
    %4988 = vmatpush1.xpose.msra.mxu0 0.0
    %4989 = vmatprep.subr.mxu0 0.0
    %4990 = vmatpush1.xpose.msra.mxu0 0.0
    %4991 = vmatprep.subr.mxu0 0.0
    %4992 = vmatpush1.xpose.msra.mxu0 0.0
    %4993 = vmatprep.subr.mxu0 0.0
    %4994 = vmatpush1.xpose.msra.mxu0 0.0
    %4995 = vmatprep.subr.mxu0 0.0
    %4996 = vmatpush1.xpose.msra.mxu0 0.0
    %4997 = vmatprep.subr.mxu0 0.0
    %4998 = vmatpush1.xpose.msra.mxu0 0.0
    %4999 = vmatprep.subr.mxu0 0.0
    %5000 = vmatpush1.xpose.msra.mxu0 0.0
    %5001 = vmatprep.subr.mxu0 0.0
    %5002 = vmatpush1.xpose.msra.mxu0 0.0
    %5003 = vmatprep.subr.mxu0 0.0
    %5004 = vmatpush1.xpose.msra.mxu0 0.0
    %5005 = vmatprep.subr.mxu0 0.0
    %5006 = vmatpush1.xpose.msra.mxu0 0.0
    %5007 = vmatprep.subr.mxu0 0.0
    %5008 = vmatpush1.xpose.msra.mxu0 0.0
    %5009 = vmatprep.subr.mxu0 0.0
    %5010 = vmatpush1.xpose.msra.mxu0 0.0
    %5011 = vmatprep.subr.mxu0 0.0
    %5012 = vmatpush1.xpose.msra.mxu0 0.0
    %5013 = vmatprep.subr.mxu0 0.0
    %5014 = vmatpush1.xpose.msra.mxu0 0.0
    %5015 = vmatprep.subr.mxu0 0.0
    %5016 = vmatpush1.xpose.msra.mxu0 0.0
    %5017 = vmatprep.subr.mxu0 0.0
    %5018 = vmatpush1.xpose.msra.mxu0 0.0
    %5019 = vmatprep.subr.mxu0 0.0
    %5020 = vmatpush1.xpose.msra.mxu0 0.0
    %5021 = vmatprep.subr.mxu0 0.0
    %5022 = vmatpush1.xpose.msra.mxu0 0.0
    %5023 = vmatprep.subr.mxu0 0.0
    %5024 = vmatpush1.xpose.msra.mxu0 0.0
    %5025 = vmatprep.subr.mxu0 0.0
    %5026 = vmatpush1.xpose.msra.mxu0 0.0
    %5027 = vmatprep.subr.mxu0 0.0
    %5028 = vmatpush1.xpose.msra.mxu0 0.0
    %5029 = vmatprep.subr.mxu0 0.0
    %5030 = vmatpush1.xpose.msra.mxu0 0.0
    %5031 = vmatprep.subr.mxu0 0.0
    %5032 = vmatpush1.xpose.msra.mxu0 0.0
    %5033 = vmatprep.subr.mxu0 0.0
    %5034 = vmatpush1.xpose.msra.mxu0 0.0
    %5035 = vmatprep.mubr.f32.mxu0 0.0
    %5036 = vmatmul.mubr.f32.gmra.mrb[0].mxu0 %v4967
    %v5037 = vpop.f32.mrb[0].mxu0
    %v5038 = vadd.f32 %v306, %v5037
    %v5039 = vpop.f32.mrb[0].mxu0
    %5040 = vdwg.mxu0
    %v5041 = vmul.f32 %v5038, 1.442695
    %v5042 = vpow.pop %v5041
    %v5043 = vsel %vm388, %v5042, 0.0
    %5044 = vadd.xlane.f32.xlu0 %v5043
    %v5045 = vpop.xlane.xlu0 %5044
    %v5046 = vrcp.pop %v5045
    %v5047 = vmul.f32 %v5042, %v5046
    %v5049 = vsel %vm388, %v5047, 0
    %5051 = vmatprep.subr.mxu0 0.0
    %5052 = vmatpush1.msra.mxu0 %v4941
    %5053 = vmatprep.subr.mxu0 0.0
    %5054 = vmatpush1.msra.mxu0 0.0
    %5055 = vmatprep.subr.mxu0 0.0
    %5056 = vmatpush1.msra.mxu0 0.0
    %5057 = vmatprep.subr.mxu0 0.0
    %5058 = vmatpush1.msra.mxu0 0.0
    %5059 = vmatprep.subr.mxu0 0.0
    %5060 = vmatpush1.msra.mxu0 0.0
    %5061 = vmatprep.subr.mxu0 0.0
    %5062 = vmatpush1.msra.mxu0 0.0
    %5063 = vmatprep.subr.mxu0 0.0
    %5064 = vmatpush1.msra.mxu0 0.0
    %5065 = vmatprep.subr.mxu0 0.0
    %5066 = vmatpush1.msra.mxu0 0.0
    %5067 = vmatprep.subr.mxu0 0.0
    %5068 = vmatpush1.msra.mxu0 0.0
    %5069 = vmatprep.subr.mxu0 0.0
    %5070 = vmatpush1.msra.mxu0 0.0
    %5071 = vmatprep.subr.mxu0 0.0
    %5072 = vmatpush1.msra.mxu0 0.0
    %5073 = vmatprep.subr.mxu0 0.0
    %5074 = vmatpush1.msra.mxu0 0.0
    %5075 = vmatprep.subr.mxu0 0.0
    %5076 = vmatpush1.msra.mxu0 0.0
    %5077 = vmatprep.subr.mxu0 0.0
    %5078 = vmatpush1.msra.mxu0 0.0
    %5079 = vmatprep.subr.mxu0 0.0
    %5080 = vmatpush1.msra.mxu0 0.0
    %5081 = vmatprep.subr.mxu0 0.0
    %5082 = vmatpush1.msra.mxu0 0.0
    %5083 = vmatprep.subr.mxu0 0.0
    %5084 = vmatpush1.msra.mxu0 0.0
    %5085 = vmatprep.subr.mxu0 0.0
    %5086 = vmatpush1.msra.mxu0 0.0
    %5087 = vmatprep.subr.mxu0 0.0
    %5088 = vmatpush1.msra.mxu0 0.0
    %5089 = vmatprep.subr.mxu0 0.0
    %5090 = vmatpush1.msra.mxu0 0.0
    %5091 = vmatprep.subr.mxu0 0.0
    %5092 = vmatpush1.msra.mxu0 0.0
    %5093 = vmatprep.subr.mxu0 0.0
    %5094 = vmatpush1.msra.mxu0 0.0
    %5095 = vmatprep.subr.mxu0 0.0
    %5096 = vmatpush1.msra.mxu0 0.0
    %5097 = vmatprep.subr.mxu0 0.0
    %5098 = vmatpush1.msra.mxu0 0.0
    %5099 = vmatprep.subr.mxu0 0.0
    %5100 = vmatpush1.msra.mxu0 0.0
    %5101 = vmatprep.subr.mxu0 0.0
    %5102 = vmatpush1.msra.mxu0 0.0
    %5103 = vmatprep.subr.mxu0 0.0
    %5104 = vmatpush1.msra.mxu0 0.0
    %5105 = vmatprep.subr.mxu0 0.0
    %5106 = vmatpush1.msra.mxu0 0.0
    %5107 = vmatprep.subr.mxu0 0.0
    %5108 = vmatpush1.msra.mxu0 0.0
    %5109 = vmatprep.subr.mxu0 0.0
    %5110 = vmatpush1.msra.mxu0 0.0
    %5111 = vmatprep.subr.mxu0 0.0
    %5112 = vmatpush1.msra.mxu0 0.0
    %5113 = vmatprep.subr.mxu0 0.0
    %5114 = vmatpush1.msra.mxu0 0.0
    %5115 = vmatprep.mubr.f32.mxu0 0.0
    %5116 = vmatmul.mubr.f32.gmra.mrb[0].mxu0 %v5049
    %v5117 = vpop.f32.mrb[0].mxu0
    %v5118 = vadd.f32 0.0, %v5117
    %v5119 = vpop.f32.mrb[0].mxu0
    %5120 = vdwg.mxu0
    %5121 = vrot.lane.b32.xlu0 %v4953, 112
    %v5122 = vpop.permute.xlu0 %5121
    %5123 = vrot.lane.b32.xlu0 %v4953, 48
    %v5124 = vpop.permute.xlu0 %5123
    %v5125 = vsel %vm311, %v5122, 0
    %v5127 = vsel %vm311, %v5124, 0
    %5129 = vmatprep.subr.mxu0 0.0
    %5130 = vmatpush1.xpose.msra.mxu0 %v5127
    %5131 = vmatprep.subr.mxu0 0.0
    %5132 = vmatpush1.xpose.msra.mxu0 0.0
    %5133 = vmatprep.subr.mxu0 0.0
    %5134 = vmatpush1.xpose.msra.mxu0 0.0
    %5135 = vmatprep.subr.mxu0 0.0
    %5136 = vmatpush1.xpose.msra.mxu0 0.0
    %5137 = vmatprep.subr.mxu0 0.0
    %5138 = vmatpush1.xpose.msra.mxu0 0.0
    %5139 = vmatprep.subr.mxu0 0.0
    %5140 = vmatpush1.xpose.msra.mxu0 0.0
    %5141 = vmatprep.subr.mxu0 0.0
    %5142 = vmatpush1.xpose.msra.mxu0 0.0
    %5143 = vmatprep.subr.mxu0 0.0
    %5144 = vmatpush1.xpose.msra.mxu0 0.0
    %5145 = vmatprep.subr.mxu0 0.0
    %5146 = vmatpush1.xpose.msra.mxu0 0.0
    %5147 = vmatprep.subr.mxu0 0.0
    %5148 = vmatpush1.xpose.msra.mxu0 0.0
    %5149 = vmatprep.subr.mxu0 0.0
    %5150 = vmatpush1.xpose.msra.mxu0 0.0
    %5151 = vmatprep.subr.mxu0 0.0
    %5152 = vmatpush1.xpose.msra.mxu0 0.0
    %5153 = vmatprep.subr.mxu0 0.0
    %5154 = vmatpush1.xpose.msra.mxu0 0.0
    %5155 = vmatprep.subr.mxu0 0.0
    %5156 = vmatpush1.xpose.msra.mxu0 0.0
    %5157 = vmatprep.subr.mxu0 0.0
    %5158 = vmatpush1.xpose.msra.mxu0 0.0
    %5159 = vmatprep.subr.mxu0 0.0
    %5160 = vmatpush1.xpose.msra.mxu0 0.0
    %5161 = vmatprep.subr.mxu0 0.0
    %5162 = vmatpush1.xpose.msra.mxu0 0.0
    %5163 = vmatprep.subr.mxu0 0.0
    %5164 = vmatpush1.xpose.msra.mxu0 0.0
    %5165 = vmatprep.subr.mxu0 0.0
    %5166 = vmatpush1.xpose.msra.mxu0 0.0
    %5167 = vmatprep.subr.mxu0 0.0
    %5168 = vmatpush1.xpose.msra.mxu0 0.0
    %5169 = vmatprep.subr.mxu0 0.0
    %5170 = vmatpush1.xpose.msra.mxu0 0.0
    %5171 = vmatprep.subr.mxu0 0.0
    %5172 = vmatpush1.xpose.msra.mxu0 0.0
    %5173 = vmatprep.subr.mxu0 0.0
    %5174 = vmatpush1.xpose.msra.mxu0 0.0
    %5175 = vmatprep.subr.mxu0 0.0
    %5176 = vmatpush1.xpose.msra.mxu0 0.0
    %5177 = vmatprep.subr.mxu0 0.0
    %5178 = vmatpush1.xpose.msra.mxu0 0.0
    %5179 = vmatprep.subr.mxu0 0.0
    %5180 = vmatpush1.xpose.msra.mxu0 0.0
    %5181 = vmatprep.subr.mxu0 0.0
    %5182 = vmatpush1.xpose.msra.mxu0 0.0
    %5183 = vmatprep.subr.mxu0 0.0
    %5184 = vmatpush1.xpose.msra.mxu0 0.0
    %5185 = vmatprep.subr.mxu0 0.0
    %5186 = vmatpush1.xpose.msra.mxu0 0.0
    %5187 = vmatprep.subr.mxu0 0.0
    %5188 = vmatpush1.xpose.msra.mxu0 0.0
    %5189 = vmatprep.subr.mxu0 0.0
    %5190 = vmatpush1.xpose.msra.mxu0 0.0
    %5191 = vmatprep.subr.mxu0 0.0
    %5192 = vmatpush1.xpose.msra.mxu0 0.0
    %5193 = vmatprep.mubr.f32.mxu0 0.0
    %5194 = vmatmul.mubr.f32.gmra.mrb[0].mxu0 %v5125
    %v5195 = vpop.f32.mrb[0].mxu0
    %v5196 = vadd.f32 %v306, %v5195
    %v5197 = vpop.f32.mrb[0].mxu0
    %5198 = vdwg.mxu0
    %v5199 = vmul.f32 %v5196, 1.442695
    %v5200 = vpow.pop %v5199
    %v5201 = vsel %vm388, %v5200, 0.0
    %5202 = vadd.xlane.f32.xlu0 %v5201
    %v5203 = vpop.xlane.xlu0 %5202
    %v5204 = vrcp.pop %v5203
    %v5205 = vmul.f32 %v5200, %v5204
    %5207 = vrot.lane.b32.xlu0 %v4941, 112
    %v5208 = vpop.permute.xlu0 %5207
    %v5211 = vsel %vm388, %v5205, 0
    %5213 = vmatprep.subr.mxu0 0.0
    %5214 = vmatpush1.msra.mxu0 %v5208
    %5215 = vmatprep.subr.mxu0 0.0
    %5216 = vmatpush1.msra.mxu0 0.0
    %5217 = vmatprep.subr.mxu0 0.0
    %5218 = vmatpush1.msra.mxu0 0.0
    %5219 = vmatprep.subr.mxu0 0.0
    %5220 = vmatpush1.msra.mxu0 0.0
    %5221 = vmatprep.subr.mxu0 0.0
    %5222 = vmatpush1.msra.mxu0 0.0
    %5223 = vmatprep.subr.mxu0 0.0
    %5224 = vmatpush1.msra.mxu0 0.0
    %5225 = vmatprep.subr.mxu0 0.0
    %5226 = vmatpush1.msra.mxu0 0.0
    %5227 = vmatprep.subr.mxu0 0.0
    %5228 = vmatpush1.msra.mxu0 0.0
    %5229 = vmatprep.subr.mxu0 0.0
    %5230 = vmatpush1.msra.mxu0 0.0
    %5231 = vmatprep.subr.mxu0 0.0
    %5232 = vmatpush1.msra.mxu0 0.0
    %5233 = vmatprep.subr.mxu0 0.0
    %5234 = vmatpush1.msra.mxu0 0.0
    %5235 = vmatprep.subr.mxu0 0.0
    %5236 = vmatpush1.msra.mxu0 0.0
    %5237 = vmatprep.subr.mxu0 0.0
    %5238 = vmatpush1.msra.mxu0 0.0
    %5239 = vmatprep.subr.mxu0 0.0
    %5240 = vmatpush1.msra.mxu0 0.0
    %5241 = vmatprep.subr.mxu0 0.0
    %5242 = vmatpush1.msra.mxu0 0.0
    %5243 = vmatprep.subr.mxu0 0.0
    %5244 = vmatpush1.msra.mxu0 0.0
    %5245 = vmatprep.subr.mxu0 0.0
    %5246 = vmatpush1.msra.mxu0 0.0
    %5247 = vmatprep.subr.mxu0 0.0
    %5248 = vmatpush1.msra.mxu0 0.0
    %5249 = vmatprep.subr.mxu0 0.0
    %5250 = vmatpush1.msra.mxu0 0.0
    %5251 = vmatprep.subr.mxu0 0.0
    %5252 = vmatpush1.msra.mxu0 0.0
    %5253 = vmatprep.subr.mxu0 0.0
    %5254 = vmatpush1.msra.mxu0 0.0
    %5255 = vmatprep.subr.mxu0 0.0
    %5256 = vmatpush1.msra.mxu0 0.0
    %5257 = vmatprep.subr.mxu0 0.0
    %5258 = vmatpush1.msra.mxu0 0.0
    %5259 = vmatprep.subr.mxu0 0.0
    %5260 = vmatpush1.msra.mxu0 0.0
    %5261 = vmatprep.subr.mxu0 0.0
    %5262 = vmatpush1.msra.mxu0 0.0
    %5263 = vmatprep.subr.mxu0 0.0
    %5264 = vmatpush1.msra.mxu0 0.0
    %5265 = vmatprep.subr.mxu0 0.0
    %5266 = vmatpush1.msra.mxu0 0.0
    %5267 = vmatprep.subr.mxu0 0.0
    %5268 = vmatpush1.msra.mxu0 0.0
    %5269 = vmatprep.subr.mxu0 0.0
    %5270 = vmatpush1.msra.mxu0 0.0
    %5271 = vmatprep.subr.mxu0 0.0
    %5272 = vmatpush1.msra.mxu0 0.0
    %5273 = vmatprep.subr.mxu0 0.0
    %5274 = vmatpush1.msra.mxu0 0.0
    %5275 = vmatprep.subr.mxu0 0.0
    %5276 = vmatpush1.msra.mxu0 0.0
    %5277 = vmatprep.mubr.f32.mxu0 0.0
    %5278 = vmatmul.mubr.f32.gmra.mrb[0].mxu0 %v5211
    %v5279 = vpop.f32.mrb[0].mxu0
    %v5280 = vadd.f32 0.0, %v5279
    %v5281 = vpop.f32.mrb[0].mxu0
    %5282 = vdwg.mxu0
    %v5284 = vsel %vm311, %v5280, 0
    %5286 = vmatprep.subr.mxu0 0.0
    %5287 = vmatpush1.msra.mxu0 %v4958
    %5288 = vmatprep.subr.mxu0 0.0
    %5289 = vmatpush1.msra.mxu0 %v4959
    %5290 = vmatprep.subr.mxu0 0.0
    %5291 = vmatpush1.msra.mxu0 0.0
    %5292 = vmatprep.subr.mxu0 0.0
    %5293 = vmatpush1.msra.mxu0 0.0
    %5294 = vmatprep.subr.mxu0 0.0
    %5295 = vmatpush1.msra.mxu0 0.0
    %5296 = vmatprep.subr.mxu0 0.0
    %5297 = vmatpush1.msra.mxu0 0.0
    %5298 = vmatprep.subr.mxu0 0.0
    %5299 = vmatpush1.msra.mxu0 0.0
    %5300 = vmatprep.subr.mxu0 0.0
    %5301 = vmatpush1.msra.mxu0 0.0
    %5302 = vmatprep.subr.mxu0 0.0
    %5303 = vmatpush1.msra.mxu0 0.0
    %5304 = vmatprep.subr.mxu0 0.0
    %5305 = vmatpush1.msra.mxu0 0.0
    %5306 = vmatprep.subr.mxu0 0.0
    %5307 = vmatpush1.msra.mxu0 0.0
    %5308 = vmatprep.subr.mxu0 0.0
    %5309 = vmatpush1.msra.mxu0 0.0
    %5310 = vmatprep.subr.mxu0 0.0
    %5311 = vmatpush1.msra.mxu0 0.0
    %5312 = vmatprep.subr.mxu0 0.0
    %5313 = vmatpush1.msra.mxu0 0.0
    %5314 = vmatprep.subr.mxu0 0.0
    %5315 = vmatpush1.msra.mxu0 0.0
    %5316 = vmatprep.subr.mxu0 0.0
    %5317 = vmatpush1.msra.mxu0 0.0
    %5318 = vmatprep.subr.mxu0 0.0
    %5319 = vmatpush1.msra.mxu0 0.0
    %5320 = vmatprep.subr.mxu0 0.0
    %5321 = vmatpush1.msra.mxu0 0.0
    %5322 = vmatprep.subr.mxu0 0.0
    %5323 = vmatpush1.msra.mxu0 0.0
    %5324 = vmatprep.subr.mxu0 0.0
    %5325 = vmatpush1.msra.mxu0 0.0
    %5326 = vmatprep.subr.mxu0 0.0
    %5327 = vmatpush1.msra.mxu0 0.0
    %5328 = vmatprep.subr.mxu0 0.0
    %5329 = vmatpush1.msra.mxu0 0.0
    %5330 = vmatprep.subr.mxu0 0.0
    %5331 = vmatpush1.msra.mxu0 0.0
    %5332 = vmatprep.subr.mxu0 0.0
    %5333 = vmatpush1.msra.mxu0 0.0
    %5334 = vmatprep.subr.mxu0 0.0
    %5335 = vmatpush1.msra.mxu0 0.0
    %5336 = vmatprep.subr.mxu0 0.0
    %5337 = vmatpush1.msra.mxu0 0.0
    %5338 = vmatprep.subr.mxu0 0.0
    %5339 = vmatpush1.msra.mxu0 0.0
    %5340 = vmatprep.subr.mxu0 0.0
    %5341 = vmatpush1.msra.mxu0 0.0
    %5342 = vmatprep.subr.mxu0 0.0
    %5343 = vmatpush1.msra.mxu0 0.0
    %5344 = vmatprep.subr.mxu0 0.0
    %5345 = vmatpush1.msra.mxu0 0.0
    %5346 = vmatprep.subr.mxu0 0.0
    %5347 = vmatpush1.msra.mxu0 0.0
    %5348 = vmatprep.subr.mxu0 0.0
    %5349 = vmatpush1.msra.mxu0 0.0
    %5350 = vmatprep.mubr.f32.mxu0 0.0
    %5351 = vmatmul.mubr.f32.gmra.mrb[0].mxu0 %v5284
    %v5352 = vpop.f32.mrb[0].mxu0
    %v5353 = vadd.f32 0.0, %v5352
    %v5354 = vpop.f32.mrb[0].mxu0
    %5355 = vdwg.mxu0
    %v5357 = vsel %vm311, %v5118, 0
    %5359 = vmatprep.subr.mxu0 0.0
    %5360 = vmatpush1.msra.mxu0 %v4956
    %5361 = vmatprep.subr.mxu0 0.0
    %5362 = vmatpush1.msra.mxu0 %v4957
    %5363 = vmatprep.subr.mxu0 0.0
    %5364 = vmatpush1.msra.mxu0 0.0
    %5365 = vmatprep.subr.mxu0 0.0
    %5366 = vmatpush1.msra.mxu0 0.0
    %5367 = vmatprep.subr.mxu0 0.0
    %5368 = vmatpush1.msra.mxu0 0.0
    %5369 = vmatprep.subr.mxu0 0.0
    %5370 = vmatpush1.msra.mxu0 0.0
    %5371 = vmatprep.subr.mxu0 0.0
    %5372 = vmatpush1.msra.mxu0 0.0
    %5373 = vmatprep.subr.mxu0 0.0
    %5374 = vmatpush1.msra.mxu0 0.0
    %5375 = vmatprep.subr.mxu0 0.0
    %5376 = vmatpush1.msra.mxu0 0.0
    %5377 = vmatprep.subr.mxu0 0.0
    %5378 = vmatpush1.msra.mxu0 0.0
    %5379 = vmatprep.subr.mxu0 0.0
    %5380 = vmatpush1.msra.mxu0 0.0
    %5381 = vmatprep.subr.mxu0 0.0
    %5382 = vmatpush1.msra.mxu0 0.0
    %5383 = vmatprep.subr.mxu0 0.0
    %5384 = vmatpush1.msra.mxu0 0.0
    %5385 = vmatprep.subr.mxu0 0.0
    %5386 = vmatpush1.msra.mxu0 0.0
    %5387 = vmatprep.subr.mxu0 0.0
    %5388 = vmatpush1.msra.mxu0 0.0
    %5389 = vmatprep.subr.mxu0 0.0
    %5390 = vmatpush1.msra.mxu0 0.0
    %5391 = vmatprep.subr.mxu0 0.0
    %5392 = vmatpush1.msra.mxu0 0.0
    %5393 = vmatprep.subr.mxu0 0.0
    %5394 = vmatpush1.msra.mxu0 0.0
    %5395 = vmatprep.subr.mxu0 0.0
    %5396 = vmatpush1.msra.mxu0 0.0
    %5397 = vmatprep.subr.mxu0 0.0
    %5398 = vmatpush1.msra.mxu0 0.0
    %5399 = vmatprep.subr.mxu0 0.0
    %5400 = vmatpush1.msra.mxu0 0.0
    %5401 = vmatprep.subr.mxu0 0.0
    %5402 = vmatpush1.msra.mxu0 0.0
    %5403 = vmatprep.subr.mxu0 0.0
    %5404 = vmatpush1.msra.mxu0 0.0
    %5405 = vmatprep.subr.mxu0 0.0
    %5406 = vmatpush1.msra.mxu0 0.0
    %5407 = vmatprep.subr.mxu0 0.0
    %5408 = vmatpush1.msra.mxu0 0.0
    %5409 = vmatprep.subr.mxu0 0.0
    %5410 = vmatpush1.msra.mxu0 0.0
    %5411 = vmatprep.subr.mxu0 0.0
    %5412 = vmatpush1.msra.mxu0 0.0
    %5413 = vmatprep.subr.mxu0 0.0
    %5414 = vmatpush1.msra.mxu0 0.0
    %5415 = vmatprep.subr.mxu0 0.0
    %5416 = vmatpush1.msra.mxu0 0.0
    %5417 = vmatprep.subr.mxu0 0.0
    %5418 = vmatpush1.msra.mxu0 0.0
    %5419 = vmatprep.subr.mxu0 0.0
    %5420 = vmatpush1.msra.mxu0 0.0
    %5421 = vmatprep.subr.mxu0 0.0
    %5422 = vmatpush1.msra.mxu0 0.0
    %5423 = vmatprep.mubr.f32.mxu0 0.0
    %5424 = vmatmul.mubr.f32.gmra.mrb[0].mxu0 %v5357
    %v5425 = vpop.f32.mrb[0].mxu0
    %v5426 = vadd.f32 %v5353, %v5425
    %v5427 = vpop.f32.mrb[0].mxu0
    %5428 = vdwg.mxu0
    %5429 = vrot.lane.b32.xlu0 %v4953, 96
    %v5430 = vpop.permute.xlu0 %5429
    %5431 = vrot.lane.b32.xlu0 %v4953, 32
    %v5432 = vpop.permute.xlu0 %5431
    %v5433 = vsel %vm311, %v5430, 0
    %v5435 = vsel %vm311, %v5432, 0
    %5437 = vmatprep.subr.mxu0 0.0
    %5438 = vmatpush1.xpose.msra.mxu0 %v5435
    %5439 = vmatprep.subr.mxu0 0.0
    %5440 = vmatpush1.xpose.msra.mxu0 0.0
    %5441 = vmatprep.subr.mxu0 0.0
    %5442 = vmatpush1.xpose.msra.mxu0 0.0
    %5443 = vmatprep.subr.mxu0 0.0
    %5444 = vmatpush1.xpose.msra.mxu0 0.0
    %5445 = vmatprep.subr.mxu0 0.0
    %5446 = vmatpush1.xpose.msra.mxu0 0.0
    %5447 = vmatprep.subr.mxu0 0.0
    %5448 = vmatpush1.xpose.msra.mxu0 0.0
    %5449 = vmatprep.subr.mxu0 0.0
    %5450 = vmatpush1.xpose.msra.mxu0 0.0
    %5451 = vmatprep.subr.mxu0 0.0
    %5452 = vmatpush1.xpose.msra.mxu0 0.0
    %5453 = vmatprep.subr.mxu0 0.0
    %5454 = vmatpush1.xpose.msra.mxu0 0.0
    %5455 = vmatprep.subr.mxu0 0.0
    %5456 = vmatpush1.xpose.msra.mxu0 0.0
    %5457 = vmatprep.subr.mxu0 0.0
    %5458 = vmatpush1.xpose.msra.mxu0 0.0
    %5459 = vmatprep.subr.mxu0 0.0
    %5460 = vmatpush1.xpose.msra.mxu0 0.0
    %5461 = vmatprep.subr.mxu0 0.0
    %5462 = vmatpush1.xpose.msra.mxu0 0.0
    %5463 = vmatprep.subr.mxu0 0.0
    %5464 = vmatpush1.xpose.msra.mxu0 0.0
    %5465 = vmatprep.subr.mxu0 0.0
    %5466 = vmatpush1.xpose.msra.mxu0 0.0
    %5467 = vmatprep.subr.mxu0 0.0
    %5468 = vmatpush1.xpose.msra.mxu0 0.0
    %5469 = vmatprep.subr.mxu0 0.0
    %5470 = vmatpush1.xpose.msra.mxu0 0.0
    %5471 = vmatprep.subr.mxu0 0.0
    %5472 = vmatpush1.xpose.msra.mxu0 0.0
    %5473 = vmatprep.subr.mxu0 0.0
    %5474 = vmatpush1.xpose.msra.mxu0 0.0
    %5475 = vmatprep.subr.mxu0 0.0
    %5476 = vmatpush1.xpose.msra.mxu0 0.0
    %5477 = vmatprep.subr.mxu0 0.0
    %5478 = vmatpush1.xpose.msra.mxu0 0.0
    %5479 = vmatprep.subr.mxu0 0.0
    %5480 = vmatpush1.xpose.msra.mxu0 0.0
    %5481 = vmatprep.subr.mxu0 0.0
    %5482 = vmatpush1.xpose.msra.mxu0 0.0
    %5483 = vmatprep.subr.mxu0 0.0
    %5484 = vmatpush1.xpose.msra.mxu0 0.0
    %5485 = vmatprep.subr.mxu0 0.0
    %5486 = vmatpush1.xpose.msra.mxu0 0.0
    %5487 = vmatprep.subr.mxu0 0.0
    %5488 = vmatpush1.xpose.msra.mxu0 0.0
    %5489 = vmatprep.subr.mxu0 0.0
    %5490 = vmatpush1.xpose.msra.mxu0 0.0
    %5491 = vmatprep.subr.mxu0 0.0
    %5492 = vmatpush1.xpose.msra.mxu0 0.0
    %5493 = vmatprep.subr.mxu0 0.0
    %5494 = vmatpush1.xpose.msra.mxu0 0.0
    %5495 = vmatprep.subr.mxu0 0.0
    %5496 = vmatpush1.xpose.msra.mxu0 0.0
    %5497 = vmatprep.subr.mxu0 0.0
    %5498 = vmatpush1.xpose.msra.mxu0 0.0
    %5499 = vmatprep.subr.mxu0 0.0
    %5500 = vmatpush1.xpose.msra.mxu0 0.0
    %5501 = vmatprep.mubr.f32.mxu0 0.0
    %5502 = vmatmul.mubr.f32.gmra.mrb[0].mxu0 %v5433
    %v5503 = vpop.f32.mrb[0].mxu0
    %v5504 = vadd.f32 %v306, %v5503
    %v5505 = vpop.f32.mrb[0].mxu0
    %5506 = vdwg.mxu0
    %v5507 = vmul.f32 %v5504, 1.442695
    %v5508 = vpow.pop %v5507
    %v5509 = vsel %vm388, %v5508, 0.0
    %5510 = vadd.xlane.f32.xlu0 %v5509
    %v5511 = vpop.xlane.xlu0 %5510
    %v5512 = vrcp.pop %v5511
    %v5513 = vmul.f32 %v5508, %v5512
    %5514 = vrot.lane.b32.xlu0 %v4941, 96
    %v5515 = vpop.permute.xlu0 %5514
    %v5518 = vsel %vm388, %v5513, 0
    %5520 = vmatprep.subr.mxu0 0.0
    %5521 = vmatpush1.msra.mxu0 %v5515
    %5522 = vmatprep.subr.mxu0 0.0
    %5523 = vmatpush1.msra.mxu0 0.0
    %5524 = vmatprep.subr.mxu0 0.0
    %5525 = vmatpush1.msra.mxu0 0.0
    %5526 = vmatprep.subr.mxu0 0.0
    %5527 = vmatpush1.msra.mxu0 0.0
    %5528 = vmatprep.subr.mxu0 0.0
    %5529 = vmatpush1.msra.mxu0 0.0
    %5530 = vmatprep.subr.mxu0 0.0
    %5531 = vmatpush1.msra.mxu0 0.0
    %5532 = vmatprep.subr.mxu0 0.0
    %5533 = vmatpush1.msra.mxu0 0.0
    %5534 = vmatprep.subr.mxu0 0.0
    %5535 = vmatpush1.msra.mxu0 0.0
    %5536 = vmatprep.subr.mxu0 0.0
    %5537 = vmatpush1.msra.mxu0 0.0
    %5538 = vmatprep.subr.mxu0 0.0
    %5539 = vmatpush1.msra.mxu0 0.0
    %5540 = vmatprep.subr.mxu0 0.0
    %5541 = vmatpush1.msra.mxu0 0.0
    %5542 = vmatprep.subr.mxu0 0.0
    %5543 = vmatpush1.msra.mxu0 0.0
    %5544 = vmatprep.subr.mxu0 0.0
    %5545 = vmatpush1.msra.mxu0 0.0
    %5546 = vmatprep.subr.mxu0 0.0
    %5547 = vmatpush1.msra.mxu0 0.0
    %5548 = vmatprep.subr.mxu0 0.0
    %5549 = vmatpush1.msra.mxu0 0.0
    %5550 = vmatprep.subr.mxu0 0.0
    %5551 = vmatpush1.msra.mxu0 0.0
    %5552 = vmatprep.subr.mxu0 0.0
    %5553 = vmatpush1.msra.mxu0 0.0
    %5554 = vmatprep.subr.mxu0 0.0
    %5555 = vmatpush1.msra.mxu0 0.0
    %5556 = vmatprep.subr.mxu0 0.0
    %5557 = vmatpush1.msra.mxu0 0.0
    %5558 = vmatprep.subr.mxu0 0.0
    %5559 = vmatpush1.msra.mxu0 0.0
    %5560 = vmatprep.subr.mxu0 0.0
    %5561 = vmatpush1.msra.mxu0 0.0
    %5562 = vmatprep.subr.mxu0 0.0
    %5563 = vmatpush1.msra.mxu0 0.0
    %5564 = vmatprep.subr.mxu0 0.0
    %5565 = vmatpush1.msra.mxu0 0.0
    %5566 = vmatprep.subr.mxu0 0.0
    %5567 = vmatpush1.msra.mxu0 0.0
    %5568 = vmatprep.subr.mxu0 0.0
    %5569 = vmatpush1.msra.mxu0 0.0
    %5570 = vmatprep.subr.mxu0 0.0
    %5571 = vmatpush1.msra.mxu0 0.0
    %5572 = vmatprep.subr.mxu0 0.0
    %5573 = vmatpush1.msra.mxu0 0.0
    %5574 = vmatprep.subr.mxu0 0.0
    %5575 = vmatpush1.msra.mxu0 0.0
    %5576 = vmatprep.subr.mxu0 0.0
    %5577 = vmatpush1.msra.mxu0 0.0
    %5578 = vmatprep.subr.mxu0 0.0
    %5579 = vmatpush1.msra.mxu0 0.0
    %5580 = vmatprep.subr.mxu0 0.0
    %5581 = vmatpush1.msra.mxu0 0.0
    %5582 = vmatprep.subr.mxu0 0.0
    %5583 = vmatpush1.msra.mxu0 0.0
    %5584 = vmatprep.mubr.f32.mxu0 0.0
    %5585 = vmatmul.mubr.f32.gmra.mrb[0].mxu0 %v5518
    %v5586 = vpop.f32.mrb[0].mxu0
    %v5587 = vadd.f32 0.0, %v5586
    %v5588 = vpop.f32.mrb[0].mxu0
    %5589 = vdwg.mxu0
    %v5591 = vsel %vm311, %v5587, 0
    %5593 = vmatprep.subr.mxu0 0.0
    %5594 = vmatpush1.msra.mxu0 %v4960
    %5595 = vmatprep.subr.mxu0 0.0
    %5596 = vmatpush1.msra.mxu0 %v4961
    %5597 = vmatprep.subr.mxu0 0.0
    %5598 = vmatpush1.msra.mxu0 0.0
    %5599 = vmatprep.subr.mxu0 0.0
    %5600 = vmatpush1.msra.mxu0 0.0
    %5601 = vmatprep.subr.mxu0 0.0
    %5602 = vmatpush1.msra.mxu0 0.0
    %5603 = vmatprep.subr.mxu0 0.0
    %5604 = vmatpush1.msra.mxu0 0.0
    %5605 = vmatprep.subr.mxu0 0.0
    %5606 = vmatpush1.msra.mxu0 0.0
    %5607 = vmatprep.subr.mxu0 0.0
    %5608 = vmatpush1.msra.mxu0 0.0
    %5609 = vmatprep.subr.mxu0 0.0
    %5610 = vmatpush1.msra.mxu0 0.0
    %5611 = vmatprep.subr.mxu0 0.0
    %5612 = vmatpush1.msra.mxu0 0.0
    %5613 = vmatprep.subr.mxu0 0.0
    %5614 = vmatpush1.msra.mxu0 0.0
    %5615 = vmatprep.subr.mxu0 0.0
    %5616 = vmatpush1.msra.mxu0 0.0
    %5617 = vmatprep.subr.mxu0 0.0
    %5618 = vmatpush1.msra.mxu0 0.0
    %5619 = vmatprep.subr.mxu0 0.0
    %5620 = vmatpush1.msra.mxu0 0.0
    %5621 = vmatprep.subr.mxu0 0.0
    %5622 = vmatpush1.msra.mxu0 0.0
    %5623 = vmatprep.subr.mxu0 0.0
    %5624 = vmatpush1.msra.mxu0 0.0
    %5625 = vmatprep.subr.mxu0 0.0
    %5626 = vmatpush1.msra.mxu0 0.0
    %5627 = vmatprep.subr.mxu0 0.0
    %5628 = vmatpush1.msra.mxu0 0.0
    %5629 = vmatprep.subr.mxu0 0.0
    %5630 = vmatpush1.msra.mxu0 0.0
    %5631 = vmatprep.subr.mxu0 0.0
    %5632 = vmatpush1.msra.mxu0 0.0
    %5633 = vmatprep.subr.mxu0 0.0
    %5634 = vmatpush1.msra.mxu0 0.0
    %5635 = vmatprep.subr.mxu0 0.0
    %5636 = vmatpush1.msra.mxu0 0.0
    %5637 = vmatprep.subr.mxu0 0.0
    %5638 = vmatpush1.msra.mxu0 0.0
    %5639 = vmatprep.subr.mxu0 0.0
    %5640 = vmatpush1.msra.mxu0 0.0
    %5641 = vmatprep.subr.mxu0 0.0
    %5642 = vmatpush1.msra.mxu0 0.0
    %5643 = vmatprep.subr.mxu0 0.0
    %5644 = vmatpush1.msra.mxu0 0.0
    %5645 = vmatprep.subr.mxu0 0.0
    %5646 = vmatpush1.msra.mxu0 0.0
    %5647 = vmatprep.subr.mxu0 0.0
    %5648 = vmatpush1.msra.mxu0 0.0
    %5649 = vmatprep.subr.mxu0 0.0
    %5650 = vmatpush1.msra.mxu0 0.0
    %5651 = vmatprep.subr.mxu0 0.0
    %5652 = vmatpush1.msra.mxu0 0.0
    %5653 = vmatprep.subr.mxu0 0.0
    %5654 = vmatpush1.msra.mxu0 0.0
    %5655 = vmatprep.subr.mxu0 0.0
    %5656 = vmatpush1.msra.mxu0 0.0
    %5657 = vmatprep.mubr.f32.mxu0 0.0
    %5658 = vmatmul.mubr.f32.gmra.mrb[0].mxu0 %v5591
    %v5659 = vpop.f32.mrb[0].mxu0
    %v5660 = vadd.f32 0.0, %v5659
    %v5661 = vpop.f32.mrb[0].mxu0
    %5662 = vdwg.mxu0
    %v5663 = vadd.f32 %v5426, %v5660
    %5664 = vrot.lane.b32.xlu0 %v4953, 80
    %v5665 = vpop.permute.xlu0 %5664
    %5666 = vrot.lane.b32.xlu0 %v4953, 16
    %v5667 = vpop.permute.xlu0 %5666
    %v5668 = vsel %vm311, %v5665, 0
    %v5670 = vsel %vm311, %v5667, 0
    %5672 = vmatprep.subr.mxu0 0.0
    %5673 = vmatpush1.xpose.msra.mxu0 %v5670
    %5674 = vmatprep.subr.mxu0 0.0
    %5675 = vmatpush1.xpose.msra.mxu0 0.0
    %5676 = vmatprep.subr.mxu0 0.0
    %5677 = vmatpush1.xpose.msra.mxu0 0.0
    %5678 = vmatprep.subr.mxu0 0.0
    %5679 = vmatpush1.xpose.msra.mxu0 0.0
    %5680 = vmatprep.subr.mxu0 0.0
    %5681 = vmatpush1.xpose.msra.mxu0 0.0
    %5682 = vmatprep.subr.mxu0 0.0
    %5683 = vmatpush1.xpose.msra.mxu0 0.0
    %5684 = vmatprep.subr.mxu0 0.0
    %5685 = vmatpush1.xpose.msra.mxu0 0.0
    %5686 = vmatprep.subr.mxu0 0.0
    %5687 = vmatpush1.xpose.msra.mxu0 0.0
    %5688 = vmatprep.subr.mxu0 0.0
    %5689 = vmatpush1.xpose.msra.mxu0 0.0
    %5690 = vmatprep.subr.mxu0 0.0
    %5691 = vmatpush1.xpose.msra.mxu0 0.0
    %5692 = vmatprep.subr.mxu0 0.0
    %5693 = vmatpush1.xpose.msra.mxu0 0.0
    %5694 = vmatprep.subr.mxu0 0.0
    %5695 = vmatpush1.xpose.msra.mxu0 0.0
    %5696 = vmatprep.subr.mxu0 0.0
    %5697 = vmatpush1.xpose.msra.mxu0 0.0
    %5698 = vmatprep.subr.mxu0 0.0
    %5699 = vmatpush1.xpose.msra.mxu0 0.0
    %5700 = vmatprep.subr.mxu0 0.0
    %5701 = vmatpush1.xpose.msra.mxu0 0.0
    %5702 = vmatprep.subr.mxu0 0.0
    %5703 = vmatpush1.xpose.msra.mxu0 0.0
    %5704 = vmatprep.subr.mxu0 0.0
    %5705 = vmatpush1.xpose.msra.mxu0 0.0
    %5706 = vmatprep.subr.mxu0 0.0
    %5707 = vmatpush1.xpose.msra.mxu0 0.0
    %5708 = vmatprep.subr.mxu0 0.0
    %5709 = vmatpush1.xpose.msra.mxu0 0.0
    %5710 = vmatprep.subr.mxu0 0.0
    %5711 = vmatpush1.xpose.msra.mxu0 0.0
    %5712 = vmatprep.subr.mxu0 0.0
    %5713 = vmatpush1.xpose.msra.mxu0 0.0
    %5714 = vmatprep.subr.mxu0 0.0
    %5715 = vmatpush1.xpose.msra.mxu0 0.0
    %5716 = vmatprep.subr.mxu0 0.0
    %5717 = vmatpush1.xpose.msra.mxu0 0.0
    %5718 = vmatprep.subr.mxu0 0.0
    %5719 = vmatpush1.xpose.msra.mxu0 0.0
    %5720 = vmatprep.subr.mxu0 0.0
    %5721 = vmatpush1.xpose.msra.mxu0 0.0
    %5722 = vmatprep.subr.mxu0 0.0
    %5723 = vmatpush1.xpose.msra.mxu0 0.0
    %5724 = vmatprep.subr.mxu0 0.0
    %5725 = vmatpush1.xpose.msra.mxu0 0.0
    %5726 = vmatprep.subr.mxu0 0.0
    %5727 = vmatpush1.xpose.msra.mxu0 0.0
    %5728 = vmatprep.subr.mxu0 0.0
    %5729 = vmatpush1.xpose.msra.mxu0 0.0
    %5730 = vmatprep.subr.mxu0 0.0
    %5731 = vmatpush1.xpose.msra.mxu0 0.0
    %5732 = vmatprep.subr.mxu0 0.0
    %5733 = vmatpush1.xpose.msra.mxu0 0.0
    %5734 = vmatprep.subr.mxu0 0.0
    %5735 = vmatpush1.xpose.msra.mxu0 0.0
    %5736 = vmatprep.mubr.f32.mxu0 0.0
    %5737 = vmatmul.mubr.f32.gmra.mrb[0].mxu0 %v5668
    %v5738 = vpop.f32.mrb[0].mxu0
    %v5739 = vadd.f32 %v306, %v5738
    %v5740 = vpop.f32.mrb[0].mxu0
    %5741 = vdwg.mxu0
    %v5742 = vmul.f32 %v5739, 1.442695
    %v5743 = vpow.pop %v5742
    %v5744 = vsel %vm388, %v5743, 0.0
    %5745 = vadd.xlane.f32.xlu0 %v5744
    %v5746 = vpop.xlane.xlu0 %5745
    %v5747 = vrcp.pop %v5746
    %v5748 = vmul.f32 %v5743, %v5747
    %5749 = vrot.lane.b32.xlu0 %v4941, 80
    %v5750 = vpop.permute.xlu0 %5749
    %v5753 = vsel %vm388, %v5748, 0
    %5755 = vmatprep.subr.mxu0 0.0
    %5756 = vmatpush1.msra.mxu0 %v5750
    %5757 = vmatprep.subr.mxu0 0.0
    %5758 = vmatpush1.msra.mxu0 0.0
    %5759 = vmatprep.subr.mxu0 0.0
    %5760 = vmatpush1.msra.mxu0 0.0
    %5761 = vmatprep.subr.mxu0 0.0
    %5762 = vmatpush1.msra.mxu0 0.0
    %5763 = vmatprep.subr.mxu0 0.0
    %5764 = vmatpush1.msra.mxu0 0.0
    %5765 = vmatprep.subr.mxu0 0.0
    %5766 = vmatpush1.msra.mxu0 0.0
    %5767 = vmatprep.subr.mxu0 0.0
    %5768 = vmatpush1.msra.mxu0 0.0
    %5769 = vmatprep.subr.mxu0 0.0
    %5770 = vmatpush1.msra.mxu0 0.0
    %5771 = vmatprep.subr.mxu0 0.0
    %5772 = vmatpush1.msra.mxu0 0.0
    %5773 = vmatprep.subr.mxu0 0.0
    %5774 = vmatpush1.msra.mxu0 0.0
    %5775 = vmatprep.subr.mxu0 0.0
    %5776 = vmatpush1.msra.mxu0 0.0
    %5777 = vmatprep.subr.mxu0 0.0
    %5778 = vmatpush1.msra.mxu0 0.0
    %5779 = vmatprep.subr.mxu0 0.0
    %5780 = vmatpush1.msra.mxu0 0.0
    %5781 = vmatprep.subr.mxu0 0.0
    %5782 = vmatpush1.msra.mxu0 0.0
    %5783 = vmatprep.subr.mxu0 0.0
    %5784 = vmatpush1.msra.mxu0 0.0
    %5785 = vmatprep.subr.mxu0 0.0
    %5786 = vmatpush1.msra.mxu0 0.0
    %5787 = vmatprep.subr.mxu0 0.0
    %5788 = vmatpush1.msra.mxu0 0.0
    %5789 = vmatprep.subr.mxu0 0.0
    %5790 = vmatpush1.msra.mxu0 0.0
    %5791 = vmatprep.subr.mxu0 0.0
    %5792 = vmatpush1.msra.mxu0 0.0
    %5793 = vmatprep.subr.mxu0 0.0
    %5794 = vmatpush1.msra.mxu0 0.0
    %5795 = vmatprep.subr.mxu0 0.0
    %5796 = vmatpush1.msra.mxu0 0.0
    %5797 = vmatprep.subr.mxu0 0.0
    %5798 = vmatpush1.msra.mxu0 0.0
    %5799 = vmatprep.subr.mxu0 0.0
    %5800 = vmatpush1.msra.mxu0 0.0
    %5801 = vmatprep.subr.mxu0 0.0
    %5802 = vmatpush1.msra.mxu0 0.0
    %5803 = vmatprep.subr.mxu0 0.0
    %5804 = vmatpush1.msra.mxu0 0.0
    %5805 = vmatprep.subr.mxu0 0.0
    %5806 = vmatpush1.msra.mxu0 0.0
    %5807 = vmatprep.subr.mxu0 0.0
    %5808 = vmatpush1.msra.mxu0 0.0
    %5809 = vmatprep.subr.mxu0 0.0
    %5810 = vmatpush1.msra.mxu0 0.0
    %5811 = vmatprep.subr.mxu0 0.0
    %5812 = vmatpush1.msra.mxu0 0.0
    %5813 = vmatprep.subr.mxu0 0.0
    %5814 = vmatpush1.msra.mxu0 0.0
    %5815 = vmatprep.subr.mxu0 0.0
    %5816 = vmatpush1.msra.mxu0 0.0
    %5817 = vmatprep.subr.mxu0 0.0
    %5818 = vmatpush1.msra.mxu0 0.0
    %5819 = vmatprep.mubr.f32.mxu0 0.0
    %5820 = vmatmul.mubr.f32.gmra.mrb[0].mxu0 %v5753
    %v5821 = vpop.f32.mrb[0].mxu0
    %v5822 = vadd.f32 0.0, %v5821
    %v5823 = vpop.f32.mrb[0].mxu0
    %5824 = vdwg.mxu0
    %v5826 = vsel %vm311, %v5822, 0
    %5828 = vmatprep.subr.mxu0 0.0
    %5829 = vmatpush1.msra.mxu0 %v4962
    %5830 = vmatprep.subr.mxu0 0.0
    %5831 = vmatpush1.msra.mxu0 %v4963
    %5832 = vmatprep.subr.mxu0 0.0
    %5833 = vmatpush1.msra.mxu0 0.0
    %5834 = vmatprep.subr.mxu0 0.0
    %5835 = vmatpush1.msra.mxu0 0.0
    %5836 = vmatprep.subr.mxu0 0.0
    %5837 = vmatpush1.msra.mxu0 0.0
    %5838 = vmatprep.subr.mxu0 0.0
    %5839 = vmatpush1.msra.mxu0 0.0
    %5840 = vmatprep.subr.mxu0 0.0
    %5841 = vmatpush1.msra.mxu0 0.0
    %5842 = vmatprep.subr.mxu0 0.0
    %5843 = vmatpush1.msra.mxu0 0.0
    %5844 = vmatprep.subr.mxu0 0.0
    %5845 = vmatpush1.msra.mxu0 0.0
    %5846 = vmatprep.subr.mxu0 0.0
    %5847 = vmatpush1.msra.mxu0 0.0
    %5848 = vmatprep.subr.mxu0 0.0
    %5849 = vmatpush1.msra.mxu0 0.0
    %5850 = vmatprep.subr.mxu0 0.0
    %5851 = vmatpush1.msra.mxu0 0.0
    %5852 = vmatprep.subr.mxu0 0.0
    %5853 = vmatpush1.msra.mxu0 0.0
    %5854 = vmatprep.subr.mxu0 0.0
    %5855 = vmatpush1.msra.mxu0 0.0
    %5856 = vmatprep.subr.mxu0 0.0
    %5857 = vmatpush1.msra.mxu0 0.0
    %5858 = vmatprep.subr.mxu0 0.0
    %5859 = vmatpush1.msra.mxu0 0.0
    %5860 = vmatprep.subr.mxu0 0.0
    %5861 = vmatpush1.msra.mxu0 0.0
    %5862 = vmatprep.subr.mxu0 0.0
    %5863 = vmatpush1.msra.mxu0 0.0
    %5864 = vmatprep.subr.mxu0 0.0
    %5865 = vmatpush1.msra.mxu0 0.0
    %5866 = vmatprep.subr.mxu0 0.0
    %5867 = vmatpush1.msra.mxu0 0.0
    %5868 = vmatprep.subr.mxu0 0.0
    %5869 = vmatpush1.msra.mxu0 0.0
    %5870 = vmatprep.subr.mxu0 0.0
    %5871 = vmatpush1.msra.mxu0 0.0
    %5872 = vmatprep.subr.mxu0 0.0
    %5873 = vmatpush1.msra.mxu0 0.0
    %5874 = vmatprep.subr.mxu0 0.0
    %5875 = vmatpush1.msra.mxu0 0.0
    %5876 = vmatprep.subr.mxu0 0.0
    %5877 = vmatpush1.msra.mxu0 0.0
    %5878 = vmatprep.subr.mxu0 0.0
    %5879 = vmatpush1.msra.mxu0 0.0
    %5880 = vmatprep.subr.mxu0 0.0
    %5881 = vmatpush1.msra.mxu0 0.0
    %5882 = vmatprep.subr.mxu0 0.0
    %5883 = vmatpush1.msra.mxu0 0.0
    %5884 = vmatprep.subr.mxu0 0.0
    %5885 = vmatpush1.msra.mxu0 0.0
    %5886 = vmatprep.subr.mxu0 0.0
    %5887 = vmatpush1.msra.mxu0 0.0
    %5888 = vmatprep.subr.mxu0 0.0
    %5889 = vmatpush1.msra.mxu0 0.0
    %5890 = vmatprep.subr.mxu0 0.0
    %5891 = vmatpush1.msra.mxu0 0.0
    %5892 = vmatprep.mubr.f32.mxu0 0.0
    %5893 = vmatmul.mubr.f32.gmra.mrb[0].mxu0 %v5826
    %v5894 = vpop.f32.mrb[0].mxu0
    %v5895 = vadd.f32 0.0, %v5894
    %v5896 = vpop.f32.mrb[0].mxu0
    %5897 = vdwg.mxu0
    %v5898 = vadd.f32 %v5663, %v5895
    %5900 = vrot.lane.b32.xlu0 %v4954, 64
    %v5901 = vpop.permute.xlu0 %5900
    %v5902 = vsel %vm311, %v4954, 0
    %v5904 = vsel %vm311, %v5901, 0
    %5906 = vmatprep.subr.mxu0 0.0
    %5907 = vmatpush1.xpose.msra.mxu0 %v5904
    %5908 = vmatprep.subr.mxu0 0.0
    %5909 = vmatpush1.xpose.msra.mxu0 0.0
    %5910 = vmatprep.subr.mxu0 0.0
    %5911 = vmatpush1.xpose.msra.mxu0 0.0
    %5912 = vmatprep.subr.mxu0 0.0
    %5913 = vmatpush1.xpose.msra.mxu0 0.0
    %5914 = vmatprep.subr.mxu0 0.0
    %5915 = vmatpush1.xpose.msra.mxu0 0.0
    %5916 = vmatprep.subr.mxu0 0.0
    %5917 = vmatpush1.xpose.msra.mxu0 0.0
    %5918 = vmatprep.subr.mxu0 0.0
    %5919 = vmatpush1.xpose.msra.mxu0 0.0
    %5920 = vmatprep.subr.mxu0 0.0
    %5921 = vmatpush1.xpose.msra.mxu0 0.0
    %5922 = vmatprep.subr.mxu0 0.0
    %5923 = vmatpush1.xpose.msra.mxu0 0.0
    %5924 = vmatprep.subr.mxu0 0.0
    %5925 = vmatpush1.xpose.msra.mxu0 0.0
    %5926 = vmatprep.subr.mxu0 0.0
    %5927 = vmatpush1.xpose.msra.mxu0 0.0
    %5928 = vmatprep.subr.mxu0 0.0
    %5929 = vmatpush1.xpose.msra.mxu0 0.0
    %5930 = vmatprep.subr.mxu0 0.0
    %5931 = vmatpush1.xpose.msra.mxu0 0.0
    %5932 = vmatprep.subr.mxu0 0.0
    %5933 = vmatpush1.xpose.msra.mxu0 0.0
    %5934 = vmatprep.subr.mxu0 0.0
    %5935 = vmatpush1.xpose.msra.mxu0 0.0
    %5936 = vmatprep.subr.mxu0 0.0
    %5937 = vmatpush1.xpose.msra.mxu0 0.0
    %5938 = vmatprep.subr.mxu0 0.0
    %5939 = vmatpush1.xpose.msra.mxu0 0.0
    %5940 = vmatprep.subr.mxu0 0.0
    %5941 = vmatpush1.xpose.msra.mxu0 0.0
    %5942 = vmatprep.subr.mxu0 0.0
    %5943 = vmatpush1.xpose.msra.mxu0 0.0
    %5944 = vmatprep.subr.mxu0 0.0
    %5945 = vmatpush1.xpose.msra.mxu0 0.0
    %5946 = vmatprep.subr.mxu0 0.0
    %5947 = vmatpush1.xpose.msra.mxu0 0.0
    %5948 = vmatprep.subr.mxu0 0.0
    %5949 = vmatpush1.xpose.msra.mxu0 0.0
    %5950 = vmatprep.subr.mxu0 0.0
    %5951 = vmatpush1.xpose.msra.mxu0 0.0
    %5952 = vmatprep.subr.mxu0 0.0
    %5953 = vmatpush1.xpose.msra.mxu0 0.0
    %5954 = vmatprep.subr.mxu0 0.0
    %5955 = vmatpush1.xpose.msra.mxu0 0.0
    %5956 = vmatprep.subr.mxu0 0.0
    %5957 = vmatpush1.xpose.msra.mxu0 0.0
    %5958 = vmatprep.subr.mxu0 0.0
    %5959 = vmatpush1.xpose.msra.mxu0 0.0
    %5960 = vmatprep.subr.mxu0 0.0
    %5961 = vmatpush1.xpose.msra.mxu0 0.0
    %5962 = vmatprep.subr.mxu0 0.0
    %5963 = vmatpush1.xpose.msra.mxu0 0.0
    %5964 = vmatprep.subr.mxu0 0.0
    %5965 = vmatpush1.xpose.msra.mxu0 0.0
    %5966 = vmatprep.subr.mxu0 0.0
    %5967 = vmatpush1.xpose.msra.mxu0 0.0
    %5968 = vmatprep.subr.mxu0 0.0
    %5969 = vmatpush1.xpose.msra.mxu0 0.0
    %5970 = vmatprep.mubr.f32.mxu0 0.0
    %5971 = vmatmul.mubr.f32.gmra.mrb[0].mxu0 %v5902
    %v5972 = vpop.f32.mrb[0].mxu0
    %v5973 = vadd.f32 %v1251, %v5972
    %v5974 = vpop.f32.mrb[0].mxu0
    %5975 = vdwg.mxu0
    %v5976 = vmul.f32 %v5973, 1.442695
    %v5977 = vpow.pop %v5976
    %v5978 = vsel %vm388, %v5977, 0.0
    %5979 = vadd.xlane.f32.xlu0 %v5978
    %v5980 = vpop.xlane.xlu0 %5979
    %v5981 = vrcp.pop %v5980
    %v5982 = vmul.f32 %v5977, %v5981
    %v5984 = vsel %vm388, %v5982, 0
    %5986 = vmatprep.subr.mxu0 0.0
    %5987 = vmatpush1.msra.mxu0 %v4946
    %5988 = vmatprep.subr.mxu0 0.0
    %5989 = vmatpush1.msra.mxu0 0.0
    %5990 = vmatprep.subr.mxu0 0.0
    %5991 = vmatpush1.msra.mxu0 0.0
    %5992 = vmatprep.subr.mxu0 0.0
    %5993 = vmatpush1.msra.mxu0 0.0
    %5994 = vmatprep.subr.mxu0 0.0
    %5995 = vmatpush1.msra.mxu0 0.0
    %5996 = vmatprep.subr.mxu0 0.0
    %5997 = vmatpush1.msra.mxu0 0.0
    %5998 = vmatprep.subr.mxu0 0.0
    %5999 = vmatpush1.msra.mxu0 0.0
    %6000 = vmatprep.subr.mxu0 0.0
    %6001 = vmatpush1.msra.mxu0 0.0
    %6002 = vmatprep.subr.mxu0 0.0
    %6003 = vmatpush1.msra.mxu0 0.0
    %6004 = vmatprep.subr.mxu0 0.0
    %6005 = vmatpush1.msra.mxu0 0.0
    %6006 = vmatprep.subr.mxu0 0.0
    %6007 = vmatpush1.msra.mxu0 0.0
    %6008 = vmatprep.subr.mxu0 0.0
    %6009 = vmatpush1.msra.mxu0 0.0
    %6010 = vmatprep.subr.mxu0 0.0
    %6011 = vmatpush1.msra.mxu0 0.0
    %6012 = vmatprep.subr.mxu0 0.0
    %6013 = vmatpush1.msra.mxu0 0.0
    %6014 = vmatprep.subr.mxu0 0.0
    %6015 = vmatpush1.msra.mxu0 0.0
    %6016 = vmatprep.subr.mxu0 0.0
    %6017 = vmatpush1.msra.mxu0 0.0
    %6018 = vmatprep.subr.mxu0 0.0
    %6019 = vmatpush1.msra.mxu0 0.0
    %6020 = vmatprep.subr.mxu0 0.0
    %6021 = vmatpush1.msra.mxu0 0.0
    %6022 = vmatprep.subr.mxu0 0.0
    %6023 = vmatpush1.msra.mxu0 0.0
    %6024 = vmatprep.subr.mxu0 0.0
    %6025 = vmatpush1.msra.mxu0 0.0
    %6026 = vmatprep.subr.mxu0 0.0
    %6027 = vmatpush1.msra.mxu0 0.0
    %6028 = vmatprep.subr.mxu0 0.0
    %6029 = vmatpush1.msra.mxu0 0.0
    %6030 = vmatprep.subr.mxu0 0.0
    %6031 = vmatpush1.msra.mxu0 0.0
    %6032 = vmatprep.subr.mxu0 0.0
    %6033 = vmatpush1.msra.mxu0 0.0
    %6034 = vmatprep.subr.mxu0 0.0
    %6035 = vmatpush1.msra.mxu0 0.0
    %6036 = vmatprep.subr.mxu0 0.0
    %6037 = vmatpush1.msra.mxu0 0.0
    %6038 = vmatprep.subr.mxu0 0.0
    %6039 = vmatpush1.msra.mxu0 0.0
    %6040 = vmatprep.subr.mxu0 0.0
    %6041 = vmatpush1.msra.mxu0 0.0
    %6042 = vmatprep.subr.mxu0 0.0
    %6043 = vmatpush1.msra.mxu0 0.0
    %6044 = vmatprep.subr.mxu0 0.0
    %6045 = vmatpush1.msra.mxu0 0.0
    %6046 = vmatprep.subr.mxu0 0.0
    %6047 = vmatpush1.msra.mxu0 0.0
    %6048 = vmatprep.subr.mxu0 0.0
    %6049 = vmatpush1.msra.mxu0 0.0
    %6050 = vmatprep.mubr.f32.mxu0 0.0
    %6051 = vmatmul.mubr.f32.gmra.mrb[0].mxu0 %v5984
    %v6052 = vpop.f32.mrb[0].mxu0
    %v6053 = vadd.f32 0.0, %v6052
    %v6054 = vpop.f32.mrb[0].mxu0
    %6055 = vdwg.mxu0
    %6056 = vrot.lane.b32.xlu0 %v4954, 112
    %v6057 = vpop.permute.xlu0 %6056
    %6058 = vrot.lane.b32.xlu0 %v4954, 48
    %v6059 = vpop.permute.xlu0 %6058
    %v6060 = vsel %vm311, %v6057, 0
    %v6062 = vsel %vm311, %v6059, 0
    %6064 = vmatprep.subr.mxu0 0.0
    %6065 = vmatpush1.xpose.msra.mxu0 %v6062
    %6066 = vmatprep.subr.mxu0 0.0
    %6067 = vmatpush1.xpose.msra.mxu0 0.0
    %6068 = vmatprep.subr.mxu0 0.0
    %6069 = vmatpush1.xpose.msra.mxu0 0.0
    %6070 = vmatprep.subr.mxu0 0.0
    %6071 = vmatpush1.xpose.msra.mxu0 0.0
    %6072 = vmatprep.subr.mxu0 0.0
    %6073 = vmatpush1.xpose.msra.mxu0 0.0
    %6074 = vmatprep.subr.mxu0 0.0
    %6075 = vmatpush1.xpose.msra.mxu0 0.0
    %6076 = vmatprep.subr.mxu0 0.0
    %6077 = vmatpush1.xpose.msra.mxu0 0.0
    %6078 = vmatprep.subr.mxu0 0.0
    %6079 = vmatpush1.xpose.msra.mxu0 0.0
    %6080 = vmatprep.subr.mxu0 0.0
    %6081 = vmatpush1.xpose.msra.mxu0 0.0
    %6082 = vmatprep.subr.mxu0 0.0
    %6083 = vmatpush1.xpose.msra.mxu0 0.0
    %6084 = vmatprep.subr.mxu0 0.0
    %6085 = vmatpush1.xpose.msra.mxu0 0.0
    %6086 = vmatprep.subr.mxu0 0.0
    %6087 = vmatpush1.xpose.msra.mxu0 0.0
    %6088 = vmatprep.subr.mxu0 0.0
    %6089 = vmatpush1.xpose.msra.mxu0 0.0
    %6090 = vmatprep.subr.mxu0 0.0
    %6091 = vmatpush1.xpose.msra.mxu0 0.0
    %6092 = vmatprep.subr.mxu0 0.0
    %6093 = vmatpush1.xpose.msra.mxu0 0.0
    %6094 = vmatprep.subr.mxu0 0.0
    %6095 = vmatpush1.xpose.msra.mxu0 0.0
    %6096 = vmatprep.subr.mxu0 0.0
    %6097 = vmatpush1.xpose.msra.mxu0 0.0
    %6098 = vmatprep.subr.mxu0 0.0
    %6099 = vmatpush1.xpose.msra.mxu0 0.0
    %6100 = vmatprep.subr.mxu0 0.0
    %6101 = vmatpush1.xpose.msra.mxu0 0.0
    %6102 = vmatprep.subr.mxu0 0.0
    %6103 = vmatpush1.xpose.msra.mxu0 0.0
    %6104 = vmatprep.subr.mxu0 0.0
    %6105 = vmatpush1.xpose.msra.mxu0 0.0
    %6106 = vmatprep.subr.mxu0 0.0
    %6107 = vmatpush1.xpose.msra.mxu0 0.0
    %6108 = vmatprep.subr.mxu0 0.0
    %6109 = vmatpush1.xpose.msra.mxu0 0.0
    %6110 = vmatprep.subr.mxu0 0.0
    %6111 = vmatpush1.xpose.msra.mxu0 0.0
    %6112 = vmatprep.subr.mxu0 0.0
    %6113 = vmatpush1.xpose.msra.mxu0 0.0
    %6114 = vmatprep.subr.mxu0 0.0
    %6115 = vmatpush1.xpose.msra.mxu0 0.0
    %6116 = vmatprep.subr.mxu0 0.0
    %6117 = vmatpush1.xpose.msra.mxu0 0.0
    %6118 = vmatprep.subr.mxu0 0.0
    %6119 = vmatpush1.xpose.msra.mxu0 0.0
    %6120 = vmatprep.subr.mxu0 0.0
    %6121 = vmatpush1.xpose.msra.mxu0 0.0
    %6122 = vmatprep.subr.mxu0 0.0
    %6123 = vmatpush1.xpose.msra.mxu0 0.0
    %6124 = vmatprep.subr.mxu0 0.0
    %6125 = vmatpush1.xpose.msra.mxu0 0.0
    %6126 = vmatprep.subr.mxu0 0.0
    %6127 = vmatpush1.xpose.msra.mxu0 0.0
    %6128 = vmatprep.mubr.f32.mxu0 0.0
    %6129 = vmatmul.mubr.f32.gmra.mrb[0].mxu0 %v6060
    %v6130 = vpop.f32.mrb[0].mxu0
    %v6131 = vadd.f32 %v1251, %v6130
    %v6132 = vpop.f32.mrb[0].mxu0
    %6133 = vdwg.mxu0
    %v6134 = vmul.f32 %v6131, 1.442695
    %v6135 = vpow.pop %v6134
    %v6136 = vsel %vm388, %v6135, 0.0
    %6137 = vadd.xlane.f32.xlu0 %v6136
    %v6138 = vpop.xlane.xlu0 %6137
    %v6139 = vrcp.pop %v6138
    %v6140 = vmul.f32 %v6135, %v6139
    %6142 = vrot.lane.b32.xlu0 %v4946, 112
    %v6143 = vpop.permute.xlu0 %6142
    %v6146 = vsel %vm388, %v6140, 0
    %6148 = vmatprep.subr.mxu0 0.0
    %6149 = vmatpush1.msra.mxu0 %v6143
    %6150 = vmatprep.subr.mxu0 0.0
    %6151 = vmatpush1.msra.mxu0 0.0
    %6152 = vmatprep.subr.mxu0 0.0
    %6153 = vmatpush1.msra.mxu0 0.0
    %6154 = vmatprep.subr.mxu0 0.0
    %6155 = vmatpush1.msra.mxu0 0.0
    %6156 = vmatprep.subr.mxu0 0.0
    %6157 = vmatpush1.msra.mxu0 0.0
    %6158 = vmatprep.subr.mxu0 0.0
    %6159 = vmatpush1.msra.mxu0 0.0
    %6160 = vmatprep.subr.mxu0 0.0
    %6161 = vmatpush1.msra.mxu0 0.0
    %6162 = vmatprep.subr.mxu0 0.0
    %6163 = vmatpush1.msra.mxu0 0.0
    %6164 = vmatprep.subr.mxu0 0.0
    %6165 = vmatpush1.msra.mxu0 0.0
    %6166 = vmatprep.subr.mxu0 0.0
    %6167 = vmatpush1.msra.mxu0 0.0
    %6168 = vmatprep.subr.mxu0 0.0
    %6169 = vmatpush1.msra.mxu0 0.0
    %6170 = vmatprep.subr.mxu0 0.0
    %6171 = vmatpush1.msra.mxu0 0.0
    %6172 = vmatprep.subr.mxu0 0.0
    %6173 = vmatpush1.msra.mxu0 0.0
    %6174 = vmatprep.subr.mxu0 0.0
    %6175 = vmatpush1.msra.mxu0 0.0
    %6176 = vmatprep.subr.mxu0 0.0
    %6177 = vmatpush1.msra.mxu0 0.0
    %6178 = vmatprep.subr.mxu0 0.0
    %6179 = vmatpush1.msra.mxu0 0.0
    %6180 = vmatprep.subr.mxu0 0.0
    %6181 = vmatpush1.msra.mxu0 0.0
    %6182 = vmatprep.subr.mxu0 0.0
    %6183 = vmatpush1.msra.mxu0 0.0
    %6184 = vmatprep.subr.mxu0 0.0
    %6185 = vmatpush1.msra.mxu0 0.0
    %6186 = vmatprep.subr.mxu0 0.0
    %6187 = vmatpush1.msra.mxu0 0.0
    %6188 = vmatprep.subr.mxu0 0.0
    %6189 = vmatpush1.msra.mxu0 0.0
    %6190 = vmatprep.subr.mxu0 0.0
    %6191 = vmatpush1.msra.mxu0 0.0
    %6192 = vmatprep.subr.mxu0 0.0
    %6193 = vmatpush1.msra.mxu0 0.0
    %6194 = vmatprep.subr.mxu0 0.0
    %6195 = vmatpush1.msra.mxu0 0.0
    %6196 = vmatprep.subr.mxu0 0.0
    %6197 = vmatpush1.msra.mxu0 0.0
    %6198 = vmatprep.subr.mxu0 0.0
    %6199 = vmatpush1.msra.mxu0 0.0
    %6200 = vmatprep.subr.mxu0 0.0
    %6201 = vmatpush1.msra.mxu0 0.0
    %6202 = vmatprep.subr.mxu0 0.0
    %6203 = vmatpush1.msra.mxu0 0.0
    %6204 = vmatprep.subr.mxu0 0.0
    %6205 = vmatpush1.msra.mxu0 0.0
    %6206 = vmatprep.subr.mxu0 0.0
    %6207 = vmatpush1.msra.mxu0 0.0
    %6208 = vmatprep.subr.mxu0 0.0
    %6209 = vmatpush1.msra.mxu0 0.0
    %6210 = vmatprep.subr.mxu0 0.0
    %6211 = vmatpush1.msra.mxu0 0.0
    %6212 = vmatprep.mubr.f32.mxu0 0.0
    %6213 = vmatmul.mubr.f32.gmra.mrb[0].mxu0 %v6146
    %v6214 = vpop.f32.mrb[0].mxu0
    %v6215 = vadd.f32 0.0, %v6214
    %v6216 = vpop.f32.mrb[0].mxu0
    %6217 = vdwg.mxu0
    %v6219 = vsel %vm311, %v6215, 0
    %6221 = vmatprep.subr.mxu0 0.0
    %6222 = vmatpush1.msra.mxu0 %v4958
    %6223 = vmatprep.subr.mxu0 0.0
    %6224 = vmatpush1.msra.mxu0 %v4959
    %6225 = vmatprep.subr.mxu0 0.0
    %6226 = vmatpush1.msra.mxu0 0.0
    %6227 = vmatprep.subr.mxu0 0.0
    %6228 = vmatpush1.msra.mxu0 0.0
    %6229 = vmatprep.subr.mxu0 0.0
    %6230 = vmatpush1.msra.mxu0 0.0
    %6231 = vmatprep.subr.mxu0 0.0
    %6232 = vmatpush1.msra.mxu0 0.0
    %6233 = vmatprep.subr.mxu0 0.0
    %6234 = vmatpush1.msra.mxu0 0.0
    %6235 = vmatprep.subr.mxu0 0.0
    %6236 = vmatpush1.msra.mxu0 0.0
    %6237 = vmatprep.subr.mxu0 0.0
    %6238 = vmatpush1.msra.mxu0 0.0
    %6239 = vmatprep.subr.mxu0 0.0
    %6240 = vmatpush1.msra.mxu0 0.0
    %6241 = vmatprep.subr.mxu0 0.0
    %6242 = vmatpush1.msra.mxu0 0.0
    %6243 = vmatprep.subr.mxu0 0.0
    %6244 = vmatpush1.msra.mxu0 0.0
    %6245 = vmatprep.subr.mxu0 0.0
    %6246 = vmatpush1.msra.mxu0 0.0
    %6247 = vmatprep.subr.mxu0 0.0
    %6248 = vmatpush1.msra.mxu0 0.0
    %6249 = vmatprep.subr.mxu0 0.0
    %6250 = vmatpush1.msra.mxu0 0.0
    %6251 = vmatprep.subr.mxu0 0.0
    %6252 = vmatpush1.msra.mxu0 0.0
    %6253 = vmatprep.subr.mxu0 0.0
    %6254 = vmatpush1.msra.mxu0 0.0
    %6255 = vmatprep.subr.mxu0 0.0
    %6256 = vmatpush1.msra.mxu0 0.0
    %6257 = vmatprep.subr.mxu0 0.0
    %6258 = vmatpush1.msra.mxu0 0.0
    %6259 = vmatprep.subr.mxu0 0.0
    %6260 = vmatpush1.msra.mxu0 0.0
    %6261 = vmatprep.subr.mxu0 0.0
    %6262 = vmatpush1.msra.mxu0 0.0
    %6263 = vmatprep.subr.mxu0 0.0
    %6264 = vmatpush1.msra.mxu0 0.0
    %6265 = vmatprep.subr.mxu0 0.0
    %6266 = vmatpush1.msra.mxu0 0.0
    %6267 = vmatprep.subr.mxu0 0.0
    %6268 = vmatpush1.msra.mxu0 0.0
    %6269 = vmatprep.subr.mxu0 0.0
    %6270 = vmatpush1.msra.mxu0 0.0
    %6271 = vmatprep.subr.mxu0 0.0
    %6272 = vmatpush1.msra.mxu0 0.0
    %6273 = vmatprep.subr.mxu0 0.0
    %6274 = vmatpush1.msra.mxu0 0.0
    %6275 = vmatprep.subr.mxu0 0.0
    %6276 = vmatpush1.msra.mxu0 0.0
    %6277 = vmatprep.subr.mxu0 0.0
    %6278 = vmatpush1.msra.mxu0 0.0
    %6279 = vmatprep.subr.mxu0 0.0
    %6280 = vmatpush1.msra.mxu0 0.0
    %6281 = vmatprep.subr.mxu0 0.0
    %6282 = vmatpush1.msra.mxu0 0.0
    %6283 = vmatprep.subr.mxu0 0.0
    %6284 = vmatpush1.msra.mxu0 0.0
    %6285 = vmatprep.mubr.f32.mxu0 0.0
    %6286 = vmatmul.mubr.f32.gmra.mrb[0].mxu0 %v6219
    %v6287 = vpop.f32.mrb[0].mxu0
    %v6288 = vadd.f32 0.0, %v6287
    %v6289 = vpop.f32.mrb[0].mxu0
    %6290 = vdwg.mxu0
    %v6292 = vsel %vm311, %v6053, 0
    %6294 = vmatprep.subr.mxu0 0.0
    %6295 = vmatpush1.msra.mxu0 %v4956
    %6296 = vmatprep.subr.mxu0 0.0
    %6297 = vmatpush1.msra.mxu0 %v4957
    %6298 = vmatprep.subr.mxu0 0.0
    %6299 = vmatpush1.msra.mxu0 0.0
    %6300 = vmatprep.subr.mxu0 0.0
    %6301 = vmatpush1.msra.mxu0 0.0
    %6302 = vmatprep.subr.mxu0 0.0
    %6303 = vmatpush1.msra.mxu0 0.0
    %6304 = vmatprep.subr.mxu0 0.0
    %6305 = vmatpush1.msra.mxu0 0.0
    %6306 = vmatprep.subr.mxu0 0.0
    %6307 = vmatpush1.msra.mxu0 0.0
    %6308 = vmatprep.subr.mxu0 0.0
    %6309 = vmatpush1.msra.mxu0 0.0
    %6310 = vmatprep.subr.mxu0 0.0
    %6311 = vmatpush1.msra.mxu0 0.0
    %6312 = vmatprep.subr.mxu0 0.0
    %6313 = vmatpush1.msra.mxu0 0.0
    %6314 = vmatprep.subr.mxu0 0.0
    %6315 = vmatpush1.msra.mxu0 0.0
    %6316 = vmatprep.subr.mxu0 0.0
    %6317 = vmatpush1.msra.mxu0 0.0
    %6318 = vmatprep.subr.mxu0 0.0
    %6319 = vmatpush1.msra.mxu0 0.0
    %6320 = vmatprep.subr.mxu0 0.0
    %6321 = vmatpush1.msra.mxu0 0.0
    %6322 = vmatprep.subr.mxu0 0.0
    %6323 = vmatpush1.msra.mxu0 0.0
    %6324 = vmatprep.subr.mxu0 0.0
    %6325 = vmatpush1.msra.mxu0 0.0
    %6326 = vmatprep.subr.mxu0 0.0
    %6327 = vmatpush1.msra.mxu0 0.0
    %6328 = vmatprep.subr.mxu0 0.0
    %6329 = vmatpush1.msra.mxu0 0.0
    %6330 = vmatprep.subr.mxu0 0.0
    %6331 = vmatpush1.msra.mxu0 0.0
    %6332 = vmatprep.subr.mxu0 0.0
    %6333 = vmatpush1.msra.mxu0 0.0
    %6334 = vmatprep.subr.mxu0 0.0
    %6335 = vmatpush1.msra.mxu0 0.0
    %6336 = vmatprep.subr.mxu0 0.0
    %6337 = vmatpush1.msra.mxu0 0.0
    %6338 = vmatprep.subr.mxu0 0.0
    %6339 = vmatpush1.msra.mxu0 0.0
    %6340 = vmatprep.subr.mxu0 0.0
    %6341 = vmatpush1.msra.mxu0 0.0
    %6342 = vmatprep.subr.mxu0 0.0
    %6343 = vmatpush1.msra.mxu0 0.0
    %6344 = vmatprep.subr.mxu0 0.0
    %6345 = vmatpush1.msra.mxu0 0.0
    %6346 = vmatprep.subr.mxu0 0.0
    %6347 = vmatpush1.msra.mxu0 0.0
    %6348 = vmatprep.subr.mxu0 0.0
    %6349 = vmatpush1.msra.mxu0 0.0
    %6350 = vmatprep.subr.mxu0 0.0
    %6351 = vmatpush1.msra.mxu0 0.0
    %6352 = vmatprep.subr.mxu0 0.0
    %6353 = vmatpush1.msra.mxu0 0.0
    %6354 = vmatprep.subr.mxu0 0.0
    %6355 = vmatpush1.msra.mxu0 0.0
    %6356 = vmatprep.subr.mxu0 0.0
    %6357 = vmatpush1.msra.mxu0 0.0
    %6358 = vmatprep.mubr.f32.mxu0 0.0
    %6359 = vmatmul.mubr.f32.gmra.mrb[0].mxu0 %v6292
    %v6360 = vpop.f32.mrb[0].mxu0
    %v6361 = vadd.f32 %v6288, %v6360
    %v6362 = vpop.f32.mrb[0].mxu0
    %6363 = vdwg.mxu0
    %6364 = vrot.lane.b32.xlu0 %v4954, 96
    %v6365 = vpop.permute.xlu0 %6364
    %6366 = vrot.lane.b32.xlu0 %v4954, 32
    %v6367 = vpop.permute.xlu0 %6366
    %v6368 = vsel %vm311, %v6365, 0
    %v6370 = vsel %vm311, %v6367, 0
    %6372 = vmatprep.subr.mxu0 0.0
    %6373 = vmatpush1.xpose.msra.mxu0 %v6370
    %6374 = vmatprep.subr.mxu0 0.0
    %6375 = vmatpush1.xpose.msra.mxu0 0.0
    %6376 = vmatprep.subr.mxu0 0.0
    %6377 = vmatpush1.xpose.msra.mxu0 0.0
    %6378 = vmatprep.subr.mxu0 0.0
    %6379 = vmatpush1.xpose.msra.mxu0 0.0
    %6380 = vmatprep.subr.mxu0 0.0
    %6381 = vmatpush1.xpose.msra.mxu0 0.0
    %6382 = vmatprep.subr.mxu0 0.0
    %6383 = vmatpush1.xpose.msra.mxu0 0.0
    %6384 = vmatprep.subr.mxu0 0.0
    %6385 = vmatpush1.xpose.msra.mxu0 0.0
    %6386 = vmatprep.subr.mxu0 0.0
    %6387 = vmatpush1.xpose.msra.mxu0 0.0
    %6388 = vmatprep.subr.mxu0 0.0
    %6389 = vmatpush1.xpose.msra.mxu0 0.0
    %6390 = vmatprep.subr.mxu0 0.0
    %6391 = vmatpush1.xpose.msra.mxu0 0.0
    %6392 = vmatprep.subr.mxu0 0.0
    %6393 = vmatpush1.xpose.msra.mxu0 0.0
    %6394 = vmatprep.subr.mxu0 0.0
    %6395 = vmatpush1.xpose.msra.mxu0 0.0
    %6396 = vmatprep.subr.mxu0 0.0
    %6397 = vmatpush1.xpose.msra.mxu0 0.0
    %6398 = vmatprep.subr.mxu0 0.0
    %6399 = vmatpush1.xpose.msra.mxu0 0.0
    %6400 = vmatprep.subr.mxu0 0.0
    %6401 = vmatpush1.xpose.msra.mxu0 0.0
    %6402 = vmatprep.subr.mxu0 0.0
    %6403 = vmatpush1.xpose.msra.mxu0 0.0
    %6404 = vmatprep.subr.mxu0 0.0
    %6405 = vmatpush1.xpose.msra.mxu0 0.0
    %6406 = vmatprep.subr.mxu0 0.0
    %6407 = vmatpush1.xpose.msra.mxu0 0.0
    %6408 = vmatprep.subr.mxu0 0.0
    %6409 = vmatpush1.xpose.msra.mxu0 0.0
    %6410 = vmatprep.subr.mxu0 0.0
    %6411 = vmatpush1.xpose.msra.mxu0 0.0
    %6412 = vmatprep.subr.mxu0 0.0
    %6413 = vmatpush1.xpose.msra.mxu0 0.0
    %6414 = vmatprep.subr.mxu0 0.0
    %6415 = vmatpush1.xpose.msra.mxu0 0.0
    %6416 = vmatprep.subr.mxu0 0.0
    %6417 = vmatpush1.xpose.msra.mxu0 0.0
    %6418 = vmatprep.subr.mxu0 0.0
    %6419 = vmatpush1.xpose.msra.mxu0 0.0
    %6420 = vmatprep.subr.mxu0 0.0
    %6421 = vmatpush1.xpose.msra.mxu0 0.0
    %6422 = vmatprep.subr.mxu0 0.0
    %6423 = vmatpush1.xpose.msra.mxu0 0.0
    %6424 = vmatprep.subr.mxu0 0.0
    %6425 = vmatpush1.xpose.msra.mxu0 0.0
    %6426 = vmatprep.subr.mxu0 0.0
    %6427 = vmatpush1.xpose.msra.mxu0 0.0
    %6428 = vmatprep.subr.mxu0 0.0
    %6429 = vmatpush1.xpose.msra.mxu0 0.0
    %6430 = vmatprep.subr.mxu0 0.0
    %6431 = vmatpush1.xpose.msra.mxu0 0.0
    %6432 = vmatprep.subr.mxu0 0.0
    %6433 = vmatpush1.xpose.msra.mxu0 0.0
    %6434 = vmatprep.subr.mxu0 0.0
    %6435 = vmatpush1.xpose.msra.mxu0 0.0
    %6436 = vmatprep.mubr.f32.mxu0 0.0
    %6437 = vmatmul.mubr.f32.gmra.mrb[0].mxu0 %v6368
    %v6438 = vpop.f32.mrb[0].mxu0
    %v6439 = vadd.f32 %v1251, %v6438
    %v6440 = vpop.f32.mrb[0].mxu0
    %6441 = vdwg.mxu0
    %v6442 = vmul.f32 %v6439, 1.442695
    %v6443 = vpow.pop %v6442
    %v6444 = vsel %vm388, %v6443, 0.0
    %6445 = vadd.xlane.f32.xlu0 %v6444
    %v6446 = vpop.xlane.xlu0 %6445
    %v6447 = vrcp.pop %v6446
    %v6448 = vmul.f32 %v6443, %v6447
    %6449 = vrot.lane.b32.xlu0 %v4946, 96
    %v6450 = vpop.permute.xlu0 %6449
    %v6453 = vsel %vm388, %v6448, 0
    %6455 = vmatprep.subr.mxu0 0.0
    %6456 = vmatpush1.msra.mxu0 %v6450
    %6457 = vmatprep.subr.mxu0 0.0
    %6458 = vmatpush1.msra.mxu0 0.0
    %6459 = vmatprep.subr.mxu0 0.0
    %6460 = vmatpush1.msra.mxu0 0.0
    %6461 = vmatprep.subr.mxu0 0.0
    %6462 = vmatpush1.msra.mxu0 0.0
    %6463 = vmatprep.subr.mxu0 0.0
    %6464 = vmatpush1.msra.mxu0 0.0
    %6465 = vmatprep.subr.mxu0 0.0
    %6466 = vmatpush1.msra.mxu0 0.0
    %6467 = vmatprep.subr.mxu0 0.0
    %6468 = vmatpush1.msra.mxu0 0.0
    %6469 = vmatprep.subr.mxu0 0.0
    %6470 = vmatpush1.msra.mxu0 0.0
    %6471 = vmatprep.subr.mxu0 0.0
    %6472 = vmatpush1.msra.mxu0 0.0
    %6473 = vmatprep.subr.mxu0 0.0
    %6474 = vmatpush1.msra.mxu0 0.0
    %6475 = vmatprep.subr.mxu0 0.0
    %6476 = vmatpush1.msra.mxu0 0.0
    %6477 = vmatprep.subr.mxu0 0.0
    %6478 = vmatpush1.msra.mxu0 0.0
    %6479 = vmatprep.subr.mxu0 0.0
    %6480 = vmatpush1.msra.mxu0 0.0
    %6481 = vmatprep.subr.mxu0 0.0
    %6482 = vmatpush1.msra.mxu0 0.0
    %6483 = vmatprep.subr.mxu0 0.0
    %6484 = vmatpush1.msra.mxu0 0.0
    %6485 = vmatprep.subr.mxu0 0.0
    %6486 = vmatpush1.msra.mxu0 0.0
    %6487 = vmatprep.subr.mxu0 0.0
    %6488 = vmatpush1.msra.mxu0 0.0
    %6489 = vmatprep.subr.mxu0 0.0
    %6490 = vmatpush1.msra.mxu0 0.0
    %6491 = vmatprep.subr.mxu0 0.0
    %6492 = vmatpush1.msra.mxu0 0.0
    %6493 = vmatprep.subr.mxu0 0.0
    %6494 = vmatpush1.msra.mxu0 0.0
    %6495 = vmatprep.subr.mxu0 0.0
    %6496 = vmatpush1.msra.mxu0 0.0
    %6497 = vmatprep.subr.mxu0 0.0
    %6498 = vmatpush1.msra.mxu0 0.0
    %6499 = vmatprep.subr.mxu0 0.0
    %6500 = vmatpush1.msra.mxu0 0.0
    %6501 = vmatprep.subr.mxu0 0.0
    %6502 = vmatpush1.msra.mxu0 0.0
    %6503 = vmatprep.subr.mxu0 0.0
    %6504 = vmatpush1.msra.mxu0 0.0
    %6505 = vmatprep.subr.mxu0 0.0
    %6506 = vmatpush1.msra.mxu0 0.0
    %6507 = vmatprep.subr.mxu0 0.0
    %6508 = vmatpush1.msra.mxu0 0.0
    %6509 = vmatprep.subr.mxu0 0.0
    %6510 = vmatpush1.msra.mxu0 0.0
    %6511 = vmatprep.subr.mxu0 0.0
    %6512 = vmatpush1.msra.mxu0 0.0
    %6513 = vmatprep.subr.mxu0 0.0
    %6514 = vmatpush1.msra.mxu0 0.0
    %6515 = vmatprep.subr.mxu0 0.0
    %6516 = vmatpush1.msra.mxu0 0.0
    %6517 = vmatprep.subr.mxu0 0.0
    %6518 = vmatpush1.msra.mxu0 0.0
    %6519 = vmatprep.mubr.f32.mxu0 0.0
    %6520 = vmatmul.mubr.f32.gmra.mrb[0].mxu0 %v6453
    %v6521 = vpop.f32.mrb[0].mxu0
    %v6522 = vadd.f32 0.0, %v6521
    %v6523 = vpop.f32.mrb[0].mxu0
    %6524 = vdwg.mxu0
    %v6526 = vsel %vm311, %v6522, 0
    %6528 = vmatprep.subr.mxu0 0.0
    %6529 = vmatpush1.msra.mxu0 %v4960
    %6530 = vmatprep.subr.mxu0 0.0
    %6531 = vmatpush1.msra.mxu0 %v4961
    %6532 = vmatprep.subr.mxu0 0.0
    %6533 = vmatpush1.msra.mxu0 0.0
    %6534 = vmatprep.subr.mxu0 0.0
    %6535 = vmatpush1.msra.mxu0 0.0
    %6536 = vmatprep.subr.mxu0 0.0
    %6537 = vmatpush1.msra.mxu0 0.0
    %6538 = vmatprep.subr.mxu0 0.0
    %6539 = vmatpush1.msra.mxu0 0.0
    %6540 = vmatprep.subr.mxu0 0.0
    %6541 = vmatpush1.msra.mxu0 0.0
    %6542 = vmatprep.subr.mxu0 0.0
    %6543 = vmatpush1.msra.mxu0 0.0
    %6544 = vmatprep.subr.mxu0 0.0
    %6545 = vmatpush1.msra.mxu0 0.0
    %6546 = vmatprep.subr.mxu0 0.0
    %6547 = vmatpush1.msra.mxu0 0.0
    %6548 = vmatprep.subr.mxu0 0.0
    %6549 = vmatpush1.msra.mxu0 0.0
    %6550 = vmatprep.subr.mxu0 0.0
    %6551 = vmatpush1.msra.mxu0 0.0
    %6552 = vmatprep.subr.mxu0 0.0
    %6553 = vmatpush1.msra.mxu0 0.0
    %6554 = vmatprep.subr.mxu0 0.0
    %6555 = vmatpush1.msra.mxu0 0.0
    %6556 = vmatprep.subr.mxu0 0.0
    %6557 = vmatpush1.msra.mxu0 0.0
    %6558 = vmatprep.subr.mxu0 0.0
    %6559 = vmatpush1.msra.mxu0 0.0
    %6560 = vmatprep.subr.mxu0 0.0
    %6561 = vmatpush1.msra.mxu0 0.0
    %6562 = vmatprep.subr.mxu0 0.0
    %6563 = vmatpush1.msra.mxu0 0.0
    %6564 = vmatprep.subr.mxu0 0.0
    %6565 = vmatpush1.msra.mxu0 0.0
    %6566 = vmatprep.subr.mxu0 0.0
    %6567 = vmatpush1.msra.mxu0 0.0
    %6568 = vmatprep.subr.mxu0 0.0
    %6569 = vmatpush1.msra.mxu0 0.0
    %6570 = vmatprep.subr.mxu0 0.0
    %6571 = vmatpush1.msra.mxu0 0.0
    %6572 = vmatprep.subr.mxu0 0.0
    %6573 = vmatpush1.msra.mxu0 0.0
    %6574 = vmatprep.subr.mxu0 0.0
    %6575 = vmatpush1.msra.mxu0 0.0
    %6576 = vmatprep.subr.mxu0 0.0
    %6577 = vmatpush1.msra.mxu0 0.0
    %6578 = vmatprep.subr.mxu0 0.0
    %6579 = vmatpush1.msra.mxu0 0.0
    %6580 = vmatprep.subr.mxu0 0.0
    %6581 = vmatpush1.msra.mxu0 0.0
    %6582 = vmatprep.subr.mxu0 0.0
    %6583 = vmatpush1.msra.mxu0 0.0
    %6584 = vmatprep.subr.mxu0 0.0
    %6585 = vmatpush1.msra.mxu0 0.0
    %6586 = vmatprep.subr.mxu0 0.0
    %6587 = vmatpush1.msra.mxu0 0.0
    %6588 = vmatprep.subr.mxu0 0.0
    %6589 = vmatpush1.msra.mxu0 0.0
    %6590 = vmatprep.subr.mxu0 0.0
    %6591 = vmatpush1.msra.mxu0 0.0
    %6592 = vmatprep.mubr.f32.mxu0 0.0
    %6593 = vmatmul.mubr.f32.gmra.mrb[0].mxu0 %v6526
    %v6594 = vpop.f32.mrb[0].mxu0
    %v6595 = vadd.f32 0.0, %v6594
    %v6596 = vpop.f32.mrb[0].mxu0
    %6597 = vdwg.mxu0
    %v6598 = vadd.f32 %v6361, %v6595
    %6599 = vrot.lane.b32.xlu0 %v4954, 80
    %v6600 = vpop.permute.xlu0 %6599
    %6601 = vrot.lane.b32.xlu0 %v4954, 16
    %v6602 = vpop.permute.xlu0 %6601
    %v6603 = vsel %vm311, %v6600, 0
    %v6605 = vsel %vm311, %v6602, 0
    %6607 = vmatprep.subr.mxu0 0.0
    %6608 = vmatpush1.xpose.msra.mxu0 %v6605
    %6609 = vmatprep.subr.mxu0 0.0
    %6610 = vmatpush1.xpose.msra.mxu0 0.0
    %6611 = vmatprep.subr.mxu0 0.0
    %6612 = vmatpush1.xpose.msra.mxu0 0.0
    %6613 = vmatprep.subr.mxu0 0.0
    %6614 = vmatpush1.xpose.msra.mxu0 0.0
    %6615 = vmatprep.subr.mxu0 0.0
    %6616 = vmatpush1.xpose.msra.mxu0 0.0
    %6617 = vmatprep.subr.mxu0 0.0
    %6618 = vmatpush1.xpose.msra.mxu0 0.0
    %6619 = vmatprep.subr.mxu0 0.0
    %6620 = vmatpush1.xpose.msra.mxu0 0.0
    %6621 = vmatprep.subr.mxu0 0.0
    %6622 = vmatpush1.xpose.msra.mxu0 0.0
    %6623 = vmatprep.subr.mxu0 0.0
    %6624 = vmatpush1.xpose.msra.mxu0 0.0
    %6625 = vmatprep.subr.mxu0 0.0
    %6626 = vmatpush1.xpose.msra.mxu0 0.0
    %6627 = vmatprep.subr.mxu0 0.0
    %6628 = vmatpush1.xpose.msra.mxu0 0.0
    %6629 = vmatprep.subr.mxu0 0.0
    %6630 = vmatpush1.xpose.msra.mxu0 0.0
    %6631 = vmatprep.subr.mxu0 0.0
    %6632 = vmatpush1.xpose.msra.mxu0 0.0
    %6633 = vmatprep.subr.mxu0 0.0
    %6634 = vmatpush1.xpose.msra.mxu0 0.0
    %6635 = vmatprep.subr.mxu0 0.0
    %6636 = vmatpush1.xpose.msra.mxu0 0.0
    %6637 = vmatprep.subr.mxu0 0.0
    %6638 = vmatpush1.xpose.msra.mxu0 0.0
    %6639 = vmatprep.subr.mxu0 0.0
    %6640 = vmatpush1.xpose.msra.mxu0 0.0
    %6641 = vmatprep.subr.mxu0 0.0
    %6642 = vmatpush1.xpose.msra.mxu0 0.0
    %6643 = vmatprep.subr.mxu0 0.0
    %6644 = vmatpush1.xpose.msra.mxu0 0.0
    %6645 = vmatprep.subr.mxu0 0.0
    %6646 = vmatpush1.xpose.msra.mxu0 0.0
    %6647 = vmatprep.subr.mxu0 0.0
    %6648 = vmatpush1.xpose.msra.mxu0 0.0
    %6649 = vmatprep.subr.mxu0 0.0
    %6650 = vmatpush1.xpose.msra.mxu0 0.0
    %6651 = vmatprep.subr.mxu0 0.0
    %6652 = vmatpush1.xpose.msra.mxu0 0.0
    %6653 = vmatprep.subr.mxu0 0.0
    %6654 = vmatpush1.xpose.msra.mxu0 0.0
    %6655 = vmatprep.subr.mxu0 0.0
    %6656 = vmatpush1.xpose.msra.mxu0 0.0
    %6657 = vmatprep.subr.mxu0 0.0
    %6658 = vmatpush1.xpose.msra.mxu0 0.0
    %6659 = vmatprep.subr.mxu0 0.0
    %6660 = vmatpush1.xpose.msra.mxu0 0.0
    %6661 = vmatprep.subr.mxu0 0.0
    %6662 = vmatpush1.xpose.msra.mxu0 0.0
    %6663 = vmatprep.subr.mxu0 0.0
    %6664 = vmatpush1.xpose.msra.mxu0 0.0
    %6665 = vmatprep.subr.mxu0 0.0
    %6666 = vmatpush1.xpose.msra.mxu0 0.0
    %6667 = vmatprep.subr.mxu0 0.0
    %6668 = vmatpush1.xpose.msra.mxu0 0.0
    %6669 = vmatprep.subr.mxu0 0.0
    %6670 = vmatpush1.xpose.msra.mxu0 0.0
    %6671 = vmatprep.mubr.f32.mxu0 0.0
    %6672 = vmatmul.mubr.f32.gmra.mrb[0].mxu0 %v6603
    %v6673 = vpop.f32.mrb[0].mxu0
    %v6674 = vadd.f32 %v1251, %v6673
    %v6675 = vpop.f32.mrb[0].mxu0
    %6676 = vdwg.mxu0
    %v6677 = vmul.f32 %v6674, 1.442695
    %v6678 = vpow.pop %v6677
    %v6679 = vsel %vm388, %v6678, 0.0
    %6680 = vadd.xlane.f32.xlu0 %v6679
    %v6681 = vpop.xlane.xlu0 %6680
    %v6682 = vrcp.pop %v6681
    %v6683 = vmul.f32 %v6678, %v6682
    %6684 = vrot.lane.b32.xlu0 %v4946, 80
    %v6685 = vpop.permute.xlu0 %6684
    %v6688 = vsel %vm388, %v6683, 0
    %6690 = vmatprep.subr.mxu0 0.0
    %6691 = vmatpush1.msra.mxu0 %v6685
    %6692 = vmatprep.subr.mxu0 0.0
    %6693 = vmatpush1.msra.mxu0 0.0
    %6694 = vmatprep.subr.mxu0 0.0
    %6695 = vmatpush1.msra.mxu0 0.0
    %6696 = vmatprep.subr.mxu0 0.0
    %6697 = vmatpush1.msra.mxu0 0.0
    %6698 = vmatprep.subr.mxu0 0.0
    %6699 = vmatpush1.msra.mxu0 0.0
    %6700 = vmatprep.subr.mxu0 0.0
    %6701 = vmatpush1.msra.mxu0 0.0
    %6702 = vmatprep.subr.mxu0 0.0
    %6703 = vmatpush1.msra.mxu0 0.0
    %6704 = vmatprep.subr.mxu0 0.0
    %6705 = vmatpush1.msra.mxu0 0.0
    %6706 = vmatprep.subr.mxu0 0.0
    %6707 = vmatpush1.msra.mxu0 0.0
    %6708 = vmatprep.subr.mxu0 0.0
    %6709 = vmatpush1.msra.mxu0 0.0
    %6710 = vmatprep.subr.mxu0 0.0
    %6711 = vmatpush1.msra.mxu0 0.0
    %6712 = vmatprep.subr.mxu0 0.0
    %6713 = vmatpush1.msra.mxu0 0.0
    %6714 = vmatprep.subr.mxu0 0.0
    %6715 = vmatpush1.msra.mxu0 0.0
    %6716 = vmatprep.subr.mxu0 0.0
    %6717 = vmatpush1.msra.mxu0 0.0
    %6718 = vmatprep.subr.mxu0 0.0
    %6719 = vmatpush1.msra.mxu0 0.0
    %6720 = vmatprep.subr.mxu0 0.0
    %6721 = vmatpush1.msra.mxu0 0.0
    %6722 = vmatprep.subr.mxu0 0.0
    %6723 = vmatpush1.msra.mxu0 0.0
    %6724 = vmatprep.subr.mxu0 0.0
    %6725 = vmatpush1.msra.mxu0 0.0
    %6726 = vmatprep.subr.mxu0 0.0
    %6727 = vmatpush1.msra.mxu0 0.0
    %6728 = vmatprep.subr.mxu0 0.0
    %6729 = vmatpush1.msra.mxu0 0.0
    %6730 = vmatprep.subr.mxu0 0.0
    %6731 = vmatpush1.msra.mxu0 0.0
    %6732 = vmatprep.subr.mxu0 0.0
    %6733 = vmatpush1.msra.mxu0 0.0
    %6734 = vmatprep.subr.mxu0 0.0
    %6735 = vmatpush1.msra.mxu0 0.0
    %6736 = vmatprep.subr.mxu0 0.0
    %6737 = vmatpush1.msra.mxu0 0.0
    %6738 = vmatprep.subr.mxu0 0.0
    %6739 = vmatpush1.msra.mxu0 0.0
    %6740 = vmatprep.subr.mxu0 0.0
    %6741 = vmatpush1.msra.mxu0 0.0
    %6742 = vmatprep.subr.mxu0 0.0
    %6743 = vmatpush1.msra.mxu0 0.0
    %6744 = vmatprep.subr.mxu0 0.0
    %6745 = vmatpush1.msra.mxu0 0.0
    %6746 = vmatprep.subr.mxu0 0.0
    %6747 = vmatpush1.msra.mxu0 0.0
    %6748 = vmatprep.subr.mxu0 0.0
    %6749 = vmatpush1.msra.mxu0 0.0
    %6750 = vmatprep.subr.mxu0 0.0
    %6751 = vmatpush1.msra.mxu0 0.0
    %6752 = vmatprep.subr.mxu0 0.0
    %6753 = vmatpush1.msra.mxu0 0.0
    %6754 = vmatprep.mubr.f32.mxu0 0.0
    %6755 = vmatmul.mubr.f32.gmra.mrb[0].mxu0 %v6688
    %v6756 = vpop.f32.mrb[0].mxu0
    %v6757 = vadd.f32 0.0, %v6756
    %v6758 = vpop.f32.mrb[0].mxu0
    %6759 = vdwg.mxu0
    %v6761 = vsel %vm311, %v6757, 0
    %6763 = vmatprep.subr.mxu0 0.0
    %6764 = vmatpush1.msra.mxu0 %v4962
    %6765 = vmatprep.subr.mxu0 0.0
    %6766 = vmatpush1.msra.mxu0 %v4963
    %6767 = vmatprep.subr.mxu0 0.0
    %6768 = vmatpush1.msra.mxu0 0.0
    %6769 = vmatprep.subr.mxu0 0.0
    %6770 = vmatpush1.msra.mxu0 0.0
    %6771 = vmatprep.subr.mxu0 0.0
    %6772 = vmatpush1.msra.mxu0 0.0
    %6773 = vmatprep.subr.mxu0 0.0
    %6774 = vmatpush1.msra.mxu0 0.0
    %6775 = vmatprep.subr.mxu0 0.0
    %6776 = vmatpush1.msra.mxu0 0.0
    %6777 = vmatprep.subr.mxu0 0.0
    %6778 = vmatpush1.msra.mxu0 0.0
    %6779 = vmatprep.subr.mxu0 0.0
    %6780 = vmatpush1.msra.mxu0 0.0
    %6781 = vmatprep.subr.mxu0 0.0
    %6782 = vmatpush1.msra.mxu0 0.0
    %6783 = vmatprep.subr.mxu0 0.0
    %6784 = vmatpush1.msra.mxu0 0.0
    %6785 = vmatprep.subr.mxu0 0.0
    %6786 = vmatpush1.msra.mxu0 0.0
    %6787 = vmatprep.subr.mxu0 0.0
    %6788 = vmatpush1.msra.mxu0 0.0
    %6789 = vmatprep.subr.mxu0 0.0
    %6790 = vmatpush1.msra.mxu0 0.0
    %6791 = vmatprep.subr.mxu0 0.0
    %6792 = vmatpush1.msra.mxu0 0.0
    %6793 = vmatprep.subr.mxu0 0.0
    %6794 = vmatpush1.msra.mxu0 0.0
    %6795 = vmatprep.subr.mxu0 0.0
    %6796 = vmatpush1.msra.mxu0 0.0
    %6797 = vmatprep.subr.mxu0 0.0
    %6798 = vmatpush1.msra.mxu0 0.0
    %6799 = vmatprep.subr.mxu0 0.0
    %6800 = vmatpush1.msra.mxu0 0.0
    %6801 = vmatprep.subr.mxu0 0.0
    %6802 = vmatpush1.msra.mxu0 0.0
    %6803 = vmatprep.subr.mxu0 0.0
    %6804 = vmatpush1.msra.mxu0 0.0
    %6805 = vmatprep.subr.mxu0 0.0
    %6806 = vmatpush1.msra.mxu0 0.0
    %6807 = vmatprep.subr.mxu0 0.0
    %6808 = vmatpush1.msra.mxu0 0.0
    %6809 = vmatprep.subr.mxu0 0.0
    %6810 = vmatpush1.msra.mxu0 0.0
    %6811 = vmatprep.subr.mxu0 0.0
    %6812 = vmatpush1.msra.mxu0 0.0
    %6813 = vmatprep.subr.mxu0 0.0
    %6814 = vmatpush1.msra.mxu0 0.0
    %6815 = vmatprep.subr.mxu0 0.0
    %6816 = vmatpush1.msra.mxu0 0.0
    %6817 = vmatprep.subr.mxu0 0.0
    %6818 = vmatpush1.msra.mxu0 0.0
    %6819 = vmatprep.subr.mxu0 0.0
    %6820 = vmatpush1.msra.mxu0 0.0
    %6821 = vmatprep.subr.mxu0 0.0
    %6822 = vmatpush1.msra.mxu0 0.0
    %6823 = vmatprep.subr.mxu0 0.0
    %6824 = vmatpush1.msra.mxu0 0.0
    %6825 = vmatprep.subr.mxu0 0.0
    %6826 = vmatpush1.msra.mxu0 0.0
    %6827 = vmatprep.mubr.f32.mxu0 0.0
    %6828 = vmatmul.mubr.f32.gmra.mrb[0].mxu0 %v6761
    %v6829 = vpop.f32.mrb[0].mxu0
    %v6830 = vadd.f32 0.0, %v6829
    %v6831 = vpop.f32.mrb[0].mxu0
    %6832 = vdwg.mxu0
    %v6833 = vadd.f32 %v6598, %v6830
    %v6834 = vadd.f32 %v4742, %v5898
    %v6835 = vadd.f32 %v4743, %v6833
    %v6836 = vmul.f32 %v6834, %v6834
    %v6837 = vmul.f32 %v6835, %v6835
    %v6838 = vsel %vm83, %v6836, 0.0
    %6839 = vadd.xlane.f32.xlu0 %v6838
    %v6840 = vpop.xlane.xlu0 %6839
    %v6841 = vsel %vm83, %v6837, 0.0
    %6842 = vadd.xlane.f32.xlu0 %v6841
    %v6843 = vpop.xlane.xlu0 %6842
    %v6844 = vmul.f32 %v6840, %v90
    %v6845 = vmul.f32 %v6843, %v90
    %v6846 = vadd.f32 %v6844, 1e-06
    %v6847 = vadd.f32 %v6845, 1e-06
    %v6848 = vrsqrt.pop %v6846
    %v6849 = vrsqrt.pop %v6847
    %v6850 = vmul.f32 %v6834, %v6848
    %v6851 = vmul.f32 %v6835, %v6849
    %v6852 = vlaneseq
    %v6853 = vshrl.u32 %v6852, 7
    %v6854 = vsub.s32 5, %v6853
    %v6855 = vrot.slane %v80, %v6854
    %v6856 = vmul.f32 %v6850, %v6855
    %v6857 = vmul.f32 %v6851, %v6855
    %s6858 = scalar_lea.vmem [#allocation5], 256
    %v6859 = vld [vmem:[%s6858] sm:$0xff]
    %v6860 = vld [vmem:[%s6858 + $0x8] sm:$0xff]
    %v6861 = vld [vmem:[%s6858 + $0x10] sm:$0xff]
    %v6862 = vld [vmem:[%s6858 + $0x18] sm:$0xff]
    %v6863 = vld [vmem:[%s6858 + $0x20] sm:$0xff]
    %v6864 = vld [vmem:[%s6858 + $0x28] sm:$0xff]
    %v6865 = vld [vmem:[%s6858 + $0x30] sm:$0xff]
    %v6866 = vld [vmem:[%s6858 + $0x38] sm:$0xff]
    %v6867 = vld [vmem:[%s6858 + $0x40] sm:$0xff]
    %v6868 = vld [vmem:[%s6858 + $0x48] sm:$0xff]
    %v6869 = vld [vmem:[%s6858 + $0x50] sm:$0xff]
    %v6870 = vld [vmem:[%s6858 + $0x58] sm:$0xff]
    %v6871 = vld [vmem:[%s6858 + $0x60] sm:$0xff]
    %v6872 = vld [vmem:[%s6858 + $0x68] sm:$0xff]
    %v6873 = vld [vmem:[%s6858 + $0x70] sm:$0xff]
    %v6874 = vld [vmem:[%s6858 + $0x78] sm:$0xff]
    %v6876 = vsel %vm83, %v6856, 0
    %v6879 = vsel %vm83, %v6857, 0
    %6881 = vmatprep.subr.mxu0 %v6860
    %6882 = vmatpush1.msra.mxu0 %v6859
    %6883 = vmatprep.subr.mxu0 %v6862
    %6884 = vmatpush1.msra.mxu0 %v6861
    %6885 = vmatprep.subr.mxu0 %v6864
    %6886 = vmatpush1.msra.mxu0 %v6863
    %6887 = vmatprep.subr.mxu0 %v6866
    %6888 = vmatpush1.msra.mxu0 %v6865
    %6889 = vmatprep.subr.mxu0 %v6868
    %6890 = vmatpush1.msra.mxu0 %v6867
    %6891 = vmatprep.subr.mxu0 %v6870
    %6892 = vmatpush1.msra.mxu0 %v6869
    %6893 = vmatprep.subr.mxu0 %v6872
    %6894 = vmatpush1.msra.mxu0 %v6871
    %6895 = vmatprep.subr.mxu0 %v6874
    %6896 = vmatpush1.msra.mxu0 %v6873
    %6897 = vmatprep.subr.mxu0 0.0
    %6898 = vmatpush1.msra.mxu0 0.0
    %6899 = vmatprep.subr.mxu0 0.0
    %6900 = vmatpush1.msra.mxu0 0.0
    %6901 = vmatprep.subr.mxu0 0.0
    %6902 = vmatpush1.msra.mxu0 0.0
    %6903 = vmatprep.subr.mxu0 0.0
    %6904 = vmatpush1.msra.mxu0 0.0
    %6905 = vmatprep.subr.mxu0 0.0
    %6906 = vmatpush1.msra.mxu0 0.0
    %6907 = vmatprep.subr.mxu0 0.0
    %6908 = vmatpush1.msra.mxu0 0.0
    %6909 = vmatprep.subr.mxu0 0.0
    %6910 = vmatpush1.msra.mxu0 0.0
    %6911 = vmatprep.subr.mxu0 0.0
    %6912 = vmatpush1.msra.mxu0 0.0
    %6913 = vmatprep.subr.mxu0 0.0
    %6914 = vmatpush1.msra.mxu0 0.0
    %6915 = vmatprep.subr.mxu0 0.0
    %6916 = vmatpush1.msra.mxu0 0.0
    %6917 = vmatprep.subr.mxu0 0.0
    %6918 = vmatpush1.msra.mxu0 0.0
    %6919 = vmatprep.subr.mxu0 0.0
    %6920 = vmatpush1.msra.mxu0 0.0
    %6921 = vmatprep.subr.mxu0 0.0
    %6922 = vmatpush1.msra.mxu0 0.0
    %6923 = vmatprep.subr.mxu0 0.0
    %6924 = vmatpush1.msra.mxu0 0.0
    %6925 = vmatprep.subr.mxu0 0.0
    %6926 = vmatpush1.msra.mxu0 0.0
    %6927 = vmatprep.subr.mxu0 0.0
    %6928 = vmatpush1.msra.mxu0 0.0
    %6929 = vmatprep.subr.mxu0 0.0
    %6930 = vmatpush1.msra.mxu0 0.0
    %6931 = vmatprep.subr.mxu0 0.0
    %6932 = vmatpush1.msra.mxu0 0.0
    %6933 = vmatprep.subr.mxu0 0.0
    %6934 = vmatpush1.msra.mxu0 0.0
    %6935 = vmatprep.subr.mxu0 0.0
    %6936 = vmatpush1.msra.mxu0 0.0
    %6937 = vmatprep.subr.mxu0 0.0
    %6938 = vmatpush1.msra.mxu0 0.0
    %6939 = vmatprep.subr.mxu0 0.0
    %6940 = vmatpush1.msra.mxu0 0.0
    %6941 = vmatprep.subr.mxu0 0.0
    %6942 = vmatpush1.msra.mxu0 0.0
    %6943 = vmatprep.subr.mxu0 0.0
    %6944 = vmatpush1.msra.mxu0 0.0
    %6945 = vmatprep.mubr.f32.mxu0 0.0
    %6946 = vmatmul.mubr.f32.gmra.mrb[0].mxu0 %v6876
    %v6947 = vpop.f32.mrb[0].mxu0
    %v6948 = vadd.f32 0.0, %v6947
    %v6949 = vpop.f32.mrb[0].mxu0
    %v6950 = vadd.f32 0.0, %v6949
    %6951 = vmatprep.mubr.f32.mxu0 0.0
    %6952 = vmatmul.mubr.f32.gmra.mrb[0].mxu0 %v6879
    %v6953 = vpop.f32.mrb[0].mxu0
    %v6954 = vadd.f32 0.0, %v6953
    %v6955 = vpop.f32.mrb[0].mxu0
    %v6956 = vadd.f32 0.0, %v6955
    %6957 = vdwg.mxu0
    %v6958 = vxor.u32 %v6948, 2147483648
    %v6959 = vxor.u32 %v6954, 2147483648
    %v6960 = vmul.f32 %v6958, 1.442695
    %v6961 = vpow.pop %v6960
    %v6962 = vmul.f32 %v6959, 1.442695
    %v6963 = vpow.pop %v6962
    %v6964 = vadd.f32 %v6961, 1.0
    %v6965 = vadd.f32 %v6963, 1.0
    %v6966 = vrcp.pop %v6964
    %v6967 = vmul.f32 1.0, %v6966
    %v6968 = vrcp.pop %v6965
    %v6969 = vmul.f32 1.0, %v6968
    %v6970 = vmul.f32 %v6948, %v6967
    %v6971 = vmul.f32 %v6954, %v6969
    %v6972 = vmul.f32 %v6970, %v6950
    %v6973 = vmul.f32 %v6971, %v6956
    %s6974 = scalar_lea.vmem [#allocation7], 256
    %v6975 = vld [vmem:[%s6974] sm:$0xff]
    %v6976 = vld [vmem:[%s6974 + $0x8] sm:$0xff]
    %v6977 = vld [vmem:[%s6974 + $0x10] sm:$0xff]
    %v6978 = vld [vmem:[%s6974 + $0x18] sm:$0xff]
    %v6979 = vld [vmem:[%s6974 + $0x20] sm:$0xff]
    %v6980 = vld [vmem:[%s6974 + $0x28] sm:$0xff]
    %v6981 = vld [vmem:[%s6974 + $0x30] sm:$0xff]
    %v6982 = vld [vmem:[%s6974 + $0x38] sm:$0xff]
    %v6983 = vld [vmem:[%s6974 + $0x40] sm:$0xff]
    %v6984 = vld [vmem:[%s6974 + $0x48] sm:$0xff]
    %v6985 = vld [vmem:[%s6974 + $0x50] sm:$0xff]
    %v6986 = vld [vmem:[%s6974 + $0x58] sm:$0xff]
    %v6987 = vld [vmem:[%s6974 + $0x60] sm:$0xff]
    %v6988 = vld [vmem:[%s6974 + $0x68] sm:$0xff]
    %v6989 = vld [vmem:[%s6974 + $0x70] sm:$0xff]
    %v6990 = vld [vmem:[%s6974 + $0x78] sm:$0xff]
    %6991 = vmatprep.subr.mxu0 0.0
    %6992 = vmatpush1.msra.mxu0 %v6975
    %6993 = vmatprep.subr.mxu0 0.0
    %6994 = vmatpush1.msra.mxu0 %v6976
    %6995 = vmatprep.subr.mxu0 0.0
    %6996 = vmatpush1.msra.mxu0 %v6977
    %6997 = vmatprep.subr.mxu0 0.0
    %6998 = vmatpush1.msra.mxu0 %v6978
    %6999 = vmatprep.subr.mxu0 0.0
    %7000 = vmatpush1.msra.mxu0 %v6979
    %7001 = vmatprep.subr.mxu0 0.0
    %7002 = vmatpush1.msra.mxu0 %v6980
    %7003 = vmatprep.subr.mxu0 0.0
    %7004 = vmatpush1.msra.mxu0 %v6981
    %7005 = vmatprep.subr.mxu0 0.0
    %7006 = vmatpush1.msra.mxu0 %v6982
    %7007 = vmatprep.subr.mxu0 0.0
    %7008 = vmatpush1.msra.mxu0 %v6983
    %7009 = vmatprep.subr.mxu0 0.0
    %7010 = vmatpush1.msra.mxu0 %v6984
    %7011 = vmatprep.subr.mxu0 0.0
    %7012 = vmatpush1.msra.mxu0 %v6985
    %7013 = vmatprep.subr.mxu0 0.0
    %7014 = vmatpush1.msra.mxu0 %v6986
    %7015 = vmatprep.subr.mxu0 0.0
    %7016 = vmatpush1.msra.mxu0 %v6987
    %7017 = vmatprep.subr.mxu0 0.0
    %7018 = vmatpush1.msra.mxu0 %v6988
    %7019 = vmatprep.subr.mxu0 0.0
    %7020 = vmatpush1.msra.mxu0 %v6989
    %7021 = vmatprep.subr.mxu0 0.0
    %7022 = vmatpush1.msra.mxu0 %v6990
    %7023 = vmatprep.subr.mxu0 0.0
    %7024 = vmatpush1.msra.mxu0 0.0
    %7025 = vmatprep.subr.mxu0 0.0
    %7026 = vmatpush1.msra.mxu0 0.0
    %7027 = vmatprep.subr.mxu0 0.0
    %7028 = vmatpush1.msra.mxu0 0.0
    %7029 = vmatprep.subr.mxu0 0.0
    %7030 = vmatpush1.msra.mxu0 0.0
    %7031 = vmatprep.subr.mxu0 0.0
    %7032 = vmatpush1.msra.mxu0 0.0
    %7033 = vmatprep.subr.mxu0 0.0
    %7034 = vmatpush1.msra.mxu0 0.0
    %7035 = vmatprep.subr.mxu0 0.0
    %7036 = vmatpush1.msra.mxu0 0.0
    %7037 = vmatprep.subr.mxu0 0.0
    %7038 = vmatpush1.msra.mxu0 0.0
    %7039 = vmatprep.subr.mxu0 0.0
    %7040 = vmatpush1.msra.mxu0 0.0
    %7041 = vmatprep.subr.mxu0 0.0
    %7042 = vmatpush1.msra.mxu0 0.0
    %7043 = vmatprep.subr.mxu0 0.0
    %7044 = vmatpush1.msra.mxu0 0.0
    %7045 = vmatprep.subr.mxu0 0.0
    %7046 = vmatpush1.msra.mxu0 0.0
    %7047 = vmatprep.subr.mxu0 0.0
    %7048 = vmatpush1.msra.mxu0 0.0
    %7049 = vmatprep.subr.mxu0 0.0
    %7050 = vmatpush1.msra.mxu0 0.0
    %7051 = vmatprep.subr.mxu0 0.0
    %7052 = vmatpush1.msra.mxu0 0.0
    %7053 = vmatprep.subr.mxu0 0.0
    %7054 = vmatpush1.msra.mxu0 0.0
    %7055 = vmatprep.mubr.f32.mxu0 0.0
    %7056 = vmatmul.mubr.f32.gmra.mrb[0].mxu0 %v6972
    %v7057 = vpop.f32.mrb[0].mxu0
    %v7058 = vadd.f32 0.0, %v7057
    %v7059 = vpop.f32.mrb[0].mxu0
    %7060 = vmatprep.mubr.f32.mxu0 0.0
    %7061 = vmatmul.mubr.f32.gmra.mrb[0].mxu0 %v6973
    %v7062 = vpop.f32.mrb[0].mxu0
    %v7063 = vadd.f32 0.0, %v7062
    %v7064 = vpop.f32.mrb[0].mxu0
    %7065 = vdwg.mxu0
    %v7066 = vadd.f32 %v6834, %v7058
    %v7067 = vadd.f32 %v6835, %v7063
    %v7068 = vmul.f32 %v7066, %v7066
    %v7069 = vmul.f32 %v7067, %v7067
    %v7070 = vsel %vm83, %v7068, 0.0
    %7071 = vadd.xlane.f32.xlu0 %v7070
    %v7072 = vpop.xlane.xlu0 %7071
    %v7073 = vsel %vm83, %v7069, 0.0
    %7074 = vadd.xlane.f32.xlu0 %v7073
    %v7075 = vpop.xlane.xlu0 %7074
    %v7076 = vmul.f32 %v7072, %v90
    %v7077 = vmul.f32 %v7075, %v90
    %v7078 = vadd.f32 %v7076, 1e-06
    %v7079 = vadd.f32 %v7077, 1e-06
    %v7080 = vrsqrt.pop %v7078
    %v7081 = vrsqrt.pop %v7079
    %v7082 = vmul.f32 %v7066, %v7080
    %v7083 = vmul.f32 %v7067, %v7081
    %v7084 = vlaneseq
    %v7085 = vshrl.u32 %v7084, 7
    %v7086 = vsub.s32 6, %v7085
    %v7087 = vrot.slane %v80, %v7086
    %v7088 = vmul.f32 %v7082, %v7087
    %v7089 = vmul.f32 %v7083, %v7087
    %7090 = vst.msk [vmem:[#allocation8] sm:$0xff] %vm83, %v7088
    %7091 = vst.msk [vmem:[#allocation8 + $0x8] sm:$0xff] %vm83, %v7089
    // Predicated region
    $region50: #{_lambda_.1} parent=1 // pred_check
      _
    $region51: #{_lambda_.1} parent=1 // pred_check_branch
      %7093 = sbr.rel (0) target = $region53
    $region52: #{_lambda_.1} parent=1 // pred_region
      %s7095 = ssub.s32 256, 256
      %7096 = vsyncadd [#allocation4], %s7095
      %s7097 = sshll.u32 [#allocation8], 4
      %s7098 = int_to_ptr.vmem [resolvable:$true] %s7097
      %7103 = dma.vmem_to_hbm [thread:$0]  %s7098, 256, %s9, [#allocation4], 128, 128, 8
    $region53: #{_lambda_.1} parent=1 // pred_fallthru
      _
    // Predicated region
    $region54: #{_lambda_.1} parent=1 // pred_check
      _
    $region55: #{_lambda_.1} parent=1 // pred_check_branch
      %7105 = sbr.rel (0) target = $region57
    $region56: #{_lambda_.1} parent=1 // pred_region
      %7106 = dma.done [#allocation4], 256
    $region57: #{_lambda_.1} parent=1 // pred_fallthru
      _
    %7107 = vsyncpa [#allocation3], 1
    %7108 = vsyncpa [#allocation6], 1
    %7109 = vsyncpa [#allocation4], 1

</llo_original>
